<compile_context>
chip_gen: v6e
topology: v6e:2x2x1
jax: 0.10.0
libtpu: 0.0.40
codegen_flags: <defaults>
</compile_context>

<pallas_src>
import functools

import jax
import jax.numpy as jnp
from jax.experimental import pallas as pl
from jax.experimental.pallas import tpu as pltpu

LEAKY_SLOPE = 0.01           # nn.LeakyReLU default
BN_EPS = 1e-5                # nn.BatchNorm2d default
_LANE_TILE_CAP = 16384       # lanes per grid step for the streaming (conv / convT) kernels


def _lrelu(x):
    return jnp.where(x >= 0, x, LEAKY_SLOPE * x)


@functools.lru_cache(maxsize=None)
def _vmem_limit():
    """Scoped-VMEM budget derived from the chip (v7x: 64 MiB physical, v5e/v6e: 128)."""
    try:
        cap = int(pltpu.get_tpu_info().vmem_capacity_bytes)
    except Exception:  # query unavailable (e.g. interpret mode)
        cap = 0
    if not cap or cap < (32 << 20):
        cap = 64 << 20
    return min((3 * cap) // 4, 100 << 20)


def _lane_tile(F, quantum, cap=_LANE_TILE_CAP):
    """Largest lane tile that is a multiple of `quantum`, divides F and is a multiple
    of 128 -- otherwise the whole axis (full-extent blocks are always legal)."""
    if F <= cap:
        return F
    q = max(int(quantum), 1)
    t = (cap // q) * q
    while t >= q:
        if F % t == 0 and t % 128 == 0:
            return t
        t -= q
    return F


# ---------------------------------------------------------------------------
# Kernel 1: 3x3 conv (padding=1) + LeakyReLU (+ optional residual)
#   x arrives once in CF layout (Ci, F); the 9 taps are in-kernel lane rolls with
#   zero-padding edge masks, accumulated as 9 (Co,Ci)@(Ci,TF) MXU dots in f32.
#   Correctness of the rolls across grid blocks: the lane tile is a multiple of H*W
#   (whole images per block), so every wrap-around lands on a masked edge position.
# ---------------------------------------------------------------------------
def _conv3x3_lrelu_kernel(x_ref, w_ref, b_ref, o_ref, *, residual, H, W):
    Ci, TF = x_ref.shape
    Co = o_ref.shape[0]
    x = x_ref[...]                                             # (Ci, TF) f32

    fidx = jax.lax.broadcasted_iota(jnp.int32, (1, TF), 1)
    col = fidx % W
    rr = fidx % (H * W)
    ok_w = {-1: col != 0, 0: None, 1: col != (W - 1)}
    ok_h = {-1: rr >= W, 0: None, 1: rr < (H - 1) * W}

    acc = jnp.zeros((Co, TF), jnp.float32)
    tap = 0
    for dy in (-1, 0, 1):
        for dx in (-1, 0, 1):
            d = dy * W + dx
            xt = x if d == 0 else pltpu.roll(x, (-d) % TF, axis=1)   # xt[f] = x[f + d]
            keep = ok_h[dy]
            if ok_w[dx] is not None:
                keep = ok_w[dx] if keep is None else jnp.logical_and(keep, ok_w[dx])
            if keep is not None:                                     # zero padding
                xt = jnp.where(keep, xt, 0.0)
            acc = acc + jnp.dot(w_ref[tap], xt, preferred_element_type=jnp.float32)
            tap += 1

    y = _lrelu(acc + b_ref[...])
    if residual:                                                     # program = x + lrelu(conv(x))
        y = y + x
    o_ref[...] = y


def conv3x3_lrelu_cf(x_nchw, w_torch, b_torch, *, residual):
    """Returns the conv(+lrelu)(+residual) output in CF layout: (Co, B*H*W) f32."""
    B, Ci, H, W = x_nchw.shape
    Co = w_torch.shape[0]
    F = B * H * W
    if residual:
        assert Ci == Co
    x_cf = jnp.transpose(x_nchw, (1, 0, 2, 3)).reshape(Ci, F).astype(jnp.float32)
    # torch Conv2d weight (Co,Ci,3,3) -> (9, Co, Ci), tap = ky*3 + kx
    wk = jnp.transpose(w_torch, (2, 3, 0, 1)).reshape(9, Co, Ci).astype(jnp.float32)
    bb = b_torch.reshape(Co, 1).astype(jnp.float32)

    TF = _lane_tile(F, quantum=H * W)        # image-aligned blocks (rolls stay in-block)
    return pl.pallas_call(
        functools.partial(_conv3x3_lrelu_kernel, residual=residual, H=H, W=W),
        out_shape=jax.ShapeDtypeStruct((Co, F), jnp.float32),
        grid=(pl.cdiv(F, TF),),
        in_specs=[
            pl.BlockSpec((Ci, TF), lambda f: (0, f)),
            pl.BlockSpec((9, Co, Ci), lambda f: (0, 0, 0)),
            pl.BlockSpec((Co, 1), lambda f: (0, 0)),
        ],
        out_specs=pl.BlockSpec((Co, TF), lambda f: (0, f)),
        compiler_params=pltpu.CompilerParams(
            dimension_semantics=("parallel",),
            vmem_limit_bytes=_vmem_limit()),
    )(x_cf, wk, bb)


# ---------------------------------------------------------------------------
# Kernel 2: fused automata core (softmax / BN / 1x1 convs / k update steps)
#   everything on (C, F) matrices; channels on sublanes, B*H*W on lanes.
# ---------------------------------------------------------------------------
def _automata_core_kernel(prog_ref, mem_ref,
                          g_m_ref, b_m_ref, wm1_ref, bm1_ref, wm2_ref, bm2_ref,
                          g_u1_ref, b_u1_ref, wu1_ref, bu1_ref,
                          wu2_ref, bu2_ref, g_u2_ref, b_u2_ref,
                          out_ref, *, k, res_memory, H, W):
    Cp, F = prog_ref.shape
    Mi = mem_ref.shape[0]
    inv_n = 1.0 / F
    ones_f = jnp.ones((F, 1), jnp.float32)   # hoisted MXU-reduction operand

    def softmax_ch(x):                        # softmax over the channel (sublane) axis
        m = jnp.max(x, axis=0, keepdims=True)
        e = jnp.exp(x - m)
        s = jnp.sum(e, axis=0, keepdims=True)
        return e * pl.reciprocal(s, approx=True)              # divide -> EUP slot

    def bn(x, gamma, beta):                   # training-mode BatchNorm2d over all B*H*W
        # lane reductions offloaded to the (otherwise idle) MXU
        s1 = jnp.dot(x, ones_f, preferred_element_type=jnp.float32)
        s2 = jnp.dot(x * x, ones_f, preferred_element_type=jnp.float32)
        mu = s1 * inv_n
        var = jnp.maximum(s2 * inv_n - mu * mu, 0.0)          # clamp: E[x^2]-E[x]^2 can dip < 0
        return (x - mu) * jax.lax.rsqrt(var + BN_EPS) * gamma + beta

    prog = prog_ref[...]
    mem0 = mem_ref[...]
    g_m, b_m = g_m_ref[...], b_m_ref[...]
    wm1, bm1 = wm1_ref[...], bm1_ref[...]
    wm2, bm2 = wm2_ref[...], bm2_ref[...]
    g_u1, b_u1 = g_u1_ref[...], b_u1_ref[...]
    wu1, bu1 = wu1_ref[...], bu1_ref[...]
    wu2, bu2 = wu2_ref[...], bu2_ref[...]
    g_u2, b_u2 = g_u2_ref[...], b_u2_ref[...]

    # mask head: softmax(program) -> BN -> 1x1 -> LeakyReLU -> 1x1 (one (6*Mi,Cp) dot)
    q = softmax_ch(prog)
    h1 = bn(q, g_m, b_m)
    h1 = _lrelu(jnp.dot(wm1, h1, preferred_element_type=jnp.float32) + bm1)
    mask = jnp.dot(wm2, h1, preferred_element_type=jnp.float32) + bm2
    xn, xm = mask[0 * Mi:1 * Mi], mask[1 * Mi:2 * Mi]
    yn, ym = mask[2 * Mi:3 * Mi], mask[3 * Mi:4 * Mi]
    cc, bias = mask[4 * Mi:5 * Mi], mask[5 * Mi:6 * Mi]

    # Fold the edge-replication fix-ups into the coefficients ONCE (outside the k loop):
    # the inner loop becomes pure roll + FMA, no per-step selects / mask broadcasts.
    fidx = jax.lax.broadcasted_iota(jnp.int32, (1, F), 1)
    col = fidx % W
    rr = fidx % (H * W)
    w0 = (col == 0).astype(jnp.float32)
    wl = (col == W - 1).astype(jnp.float32)
    h0 = (rr < W).astype(jnp.float32)
    hl = (rr >= (H - 1) * W).astype(jnp.float32)
    cc = cc + xn * w0 + xm * wl + yn * h0 + ym * hl
    xn = xn * (1.0 - w0)
    xm = xm * (1.0 - wl)
    yn = yn * (1.0 - h0)
    ym = ym * (1.0 - hl)

    def step(_, mem):
        # neighbour shifts: cyclic lane rotations (XLU); wrap-arounds land on positions
        # whose folded coefficient is zero, so no per-step edge fix-up is needed.
        left = pltpu.roll(mem, 1, axis=1)        # value from column w-1
        right = pltpu.roll(mem, F - 1, axis=1)   # value from column w+1
        up = pltpu.roll(mem, W, axis=1)          # value from row h-1
        down = pltpu.roll(mem, F - W, axis=1)    # value from row h+1
        accum = xn * left + xm * right + yn * up + ym * down + cc * mem + bias

        # update head: BN -> 1x1 -> LeakyReLU -> 1x1 -> BN
        u = bn(accum, g_u1, b_u1)
        u = _lrelu(jnp.dot(wu1, u, preferred_element_type=jnp.float32) + bu1)
        u = jnp.dot(wu2, u, preferred_element_type=jnp.float32) + bu2
        u = bn(u, g_u2, b_u2)
        new = (mem + u) if res_memory else u
        return softmax_ch(_lrelu(new))

    if res_memory:
        mem = jax.lax.fori_loop(0, k, step, mem0, unroll=True)
    else:
        # channel count changes after the first step; only meaningful for k == 1
        mem = mem0
        for i in range(k):
            mem = step(i, mem)

    out_ref[...] = mem.astype(out_ref.dtype)


# ---------------------------------------------------------------------------
# Kernel 3: both ConvTranspose2d(kernel=2, stride=2) heads fused in one call
#   each head is a single (4*Co, Ci) @ (Ci, F) bf16 MXU dot (f32 accumulation);
#   the 2x2 interleave to NCHW is glue.
# ---------------------------------------------------------------------------
def _convt2x2_pair_kernel(xp_ref, wp_ref, bp_ref, xm_ref, wm_ref, bm_ref,
                          op_ref, om_ref):
    xp = xp_ref[...].astype(jnp.bfloat16)          # program stays f32 in HBM; bf16 for MXU
    op_ref[...] = (jnp.dot(wp_ref[...], xp, preferred_element_type=jnp.float32)
                   + bp_ref[...])
    om_ref[...] = (jnp.dot(wm_ref[...], xm_ref[...], preferred_element_type=jnp.float32)
                   + bm_ref[...])


def _pack_convt2x2(w_torch, b_torch):
    """torch ConvTranspose2d weight (Ci,Co,2,2) -> (4*Co, Ci) bf16, row = (a*2+c)*Co + co."""
    Ci, Co = w_torch.shape[0], w_torch.shape[1]
    wk = jnp.transpose(w_torch, (2, 3, 1, 0)).reshape(4 * Co, Ci).astype(jnp.bfloat16)
    bk = jnp.tile(b_torch.reshape(1, Co), (4, 1)).reshape(4 * Co, 1).astype(jnp.float32)
    return wk, bk


def conv_transpose2x2_pair_cf(xp_cf, wkp, bkp, xm_cf, wkm, bkm):
    Cp, F = xp_cf.shape
    Mo = xm_cf.shape[0]
    TF = _lane_tile(F, quantum=128)
    return pl.pallas_call(
        _convt2x2_pair_kernel,
        out_shape=(jax.ShapeDtypeStruct((4 * Cp, F), jnp.float32),
                   jax.ShapeDtypeStruct((4 * Mo, F), jnp.float32)),
        grid=(pl.cdiv(F, TF),),
        in_specs=[
            pl.BlockSpec((Cp, TF), lambda f: (0, f)),
            pl.BlockSpec((4 * Cp, Cp), lambda f: (0, 0)),
            pl.BlockSpec((4 * Cp, 1), lambda f: (0, 0)),
            pl.BlockSpec((Mo, TF), lambda f: (0, f)),
            pl.BlockSpec((4 * Mo, Mo), lambda f: (0, 0)),
            pl.BlockSpec((4 * Mo, 1), lambda f: (0, 0)),
        ],
        out_specs=(pl.BlockSpec((4 * Cp, TF), lambda f: (0, f)),
                   pl.BlockSpec((4 * Mo, TF), lambda f: (0, f))),
        compiler_params=pltpu.CompilerParams(
            dimension_semantics=("parallel",),
            vmem_limit_bytes=_vmem_limit()),
    )(xp_cf, wkp, bkp, xm_cf, wkm, bkm)


def _upsample_from_packed(y_packed, B, Co, H, W):
    """(4*Co, B*H*W) packed convT result -> NCHW (B, Co, 2H, 2W);  out[b,co,2h+a,2w+c]."""
    y = y_packed.reshape(2, 2, Co, B, H, W)            # (a, c, co, b, h, w)
    y = jnp.transpose(y, (3, 2, 4, 0, 5, 1))           # (b, co, h, a, w, c)
    return y.reshape(B, Co, 2 * H, 2 * W)


# ---------------------------------------------------------------------------
# Parameters (deterministic, shapes per AutomataBlockUp.__init__, torch layouts)
# ---------------------------------------------------------------------------
def init_params(key, in_ch, out_ch, mem_in, mem_out):
    ks = jax.random.split(key, 20)

    def nrm(k, shape, scale=0.1):
        return scale * jax.random.normal(k, shape, jnp.float32)

    return dict(
        mp_w=nrm(ks[0], (out_ch, in_ch, 3, 3)), mp_b=nrm(ks[1], (out_ch,)),
        bn_m_g=1.0 + nrm(ks[2], (out_ch,)), bn_m_b=nrm(ks[3], (out_ch,)),
        m1_w=nrm(ks[4], (out_ch, out_ch, 1, 1)), m1_b=nrm(ks[5], (out_ch,)),
        m2_w=nrm(ks[6], (6 * mem_in, out_ch, 1, 1)), m2_b=nrm(ks[7], (6 * mem_in,)),
        bn_u1_g=1.0 + nrm(ks[8], (mem_in,)), bn_u1_b=nrm(ks[9], (mem_in,)),
        u1_w=nrm(ks[10], (mem_out, mem_in, 1, 1)), u1_b=nrm(ks[11], (mem_out,)),
        u2_w=nrm(ks[12], (mem_out, mem_out, 1, 1)), u2_b=nrm(ks[13], (mem_out,)),
        bn_u2_g=1.0 + nrm(ks[14], (mem_out,)), bn_u2_b=nrm(ks[15], (mem_out,)),
        upp_w=nrm(ks[16], (out_ch, out_ch, 2, 2)), upp_b=nrm(ks[17], (out_ch,)),
        upm_w=nrm(ks[18], (mem_out, mem_out, 2, 2)), upm_b=nrm(ks[19], (mem_out,)),
    )


# ---------------------------------------------------------------------------
# Forward: AutomataBlockUp  (NCHW in / NCHW out; kernels run on the CF layout)
# ---------------------------------------------------------------------------
def automata_block_up(params, x_nchw, m_nchw, *, in_ch, out_ch, mem_in, mem_out, k=2):
    x = x_nchw.astype(jnp.float32)
    m = m_nchw.astype(jnp.float32)
    B, _, H, W = x.shape
    F = B * H * W
    Cp, Mi, Mo = out_ch, mem_in, mem_out
    res_program = (in_ch == out_ch)
    res_memory = (mem_in == mem_out)

    # Automata.modify_program (+ residual) -> CF layout program (f32)
    prog_cf = conv3x3_lrelu_cf(x, params["mp_w"], params["mp_b"], residual=res_program)

    # memory NCHW -> CF
    m_cf = jnp.transpose(m, (1, 0, 2, 3)).reshape(Mi, F)

    # packed 1x1-conv weights / BN affine params (channel-major, matching CF layout)
    g_m = params["bn_m_g"].reshape(Cp, 1)
    b_m = params["bn_m_b"].reshape(Cp, 1)
    wm1 = params["m1_w"][:, :, 0, 0]                       # (Cp, Cp)
    bm1 = params["m1_b"].reshape(Cp, 1)
    wm2 = params["m2_w"][:, :, 0, 0]                       # (6*Mi, Cp) fused mask head
    bm2 = params["m2_b"].reshape(6 * Mi, 1)
    g_u1 = params["bn_u1_g"].reshape(Mi, 1)
    b_u1 = params["bn_u1_b"].reshape(Mi, 1)
    wu1 = params["u1_w"][:, :, 0, 0]                       # (Mo, Mi)
    bu1 = params["u1_b"].reshape(Mo, 1)
    wu2 = params["u2_w"][:, :, 0, 0]                       # (Mo, Mo)
    bu2 = params["u2_b"].reshape(Mo, 1)
    g_u2 = params["bn_u2_g"].reshape(Mo, 1)
    b_u2 = params["bn_u2_b"].reshape(Mo, 1)

    mem_cf = pl.pallas_call(
        functools.partial(_automata_core_kernel, k=k, res_memory=res_memory, H=H, W=W),
        out_shape=jax.ShapeDtypeStruct((Mo, F), jnp.bfloat16),
        compiler_params=pltpu.CompilerParams(vmem_limit_bytes=_vmem_limit()),
    )(prog_cf, m_cf, g_m, b_m, wm1, bm1, wm2, bm2,
      g_u1, b_u1, wu1, bu1, wu2, bu2, g_u2, b_u2)

    # both ConvTranspose2d(2,2) heads in a single fused call (lane-dense packed output)
    wkp, bkp = _pack_convt2x2(params["upp_w"], params["upp_b"])
    wkm, bkm = _pack_convt2x2(params["upm_w"], params["upm_b"])
    pp_packed, mm_packed = conv_transpose2x2_pair_cf(prog_cf, wkp, bkp, mem_cf, wkm, bkm)

    prog_up = _upsample_from_packed(pp_packed, B, Cp, H, W)
    mem_up = _upsample_from_packed(mm_packed, B, Mo, H, W)
    return prog_up, mem_up


# ---------------------------------------------------------------------------
# Pure-JAX NCHW reference (mirrors the PyTorch module, training-mode BN)
# ---------------------------------------------------------------------------
def _reference_forward(params, x, m, *, in_ch, out_ch, mem_in, mem_out, k=2):
    HI = jax.lax.Precision.HIGHEST

    def softmax_c(v):
        return jax.nn.softmax(v, axis=1)

    def bn2d(v, g, b):
        mu = jnp.mean(v, axis=(0, 2, 3), keepdims=True)
        var = jnp.mean(jnp.square(v - mu), axis=(0, 2, 3), keepdims=True)
        return ((v - mu) * jax.lax.rsqrt(var + BN_EPS) * g.reshape(1, -1, 1, 1)
                + b.reshape(1, -1, 1, 1))

    def conv3x3(v, w, b):
        out = jax.lax.conv_general_dilated(
            v, w, (1, 1), ((1, 1), (1, 1)),
            dimension_numbers=("NCHW", "OIHW", "NCHW"), precision=HI)
        return out + b.reshape(1, -1, 1, 1)

    def conv1x1(v, w, b):
        return (jnp.einsum("bihw,oi->bohw", v, w[:, :, 0, 0], precision=HI)
                + b.reshape(1, -1, 1, 1))

    def convt2x2(v, w, b):
        Bv, _, Hv, Wv = v.shape
        Co = w.shape[1]
        y = jnp.einsum("bihw,ioac->bohawc", v, w, precision=HI)
        return y.reshape(Bv, Co, 2 * Hv, 2 * Wv) + b.reshape(1, -1, 1, 1)

    res_program = in_ch == out_ch
    res_memory = mem_in == mem_out

    mp = _lrelu(conv3x3(x, params["mp_w"], params["mp_b"]))
    program = x + mp if res_program else mp

    h = bn2d(softmax_c(program), params["bn_m_g"], params["bn_m_b"])
    h = _lrelu(conv1x1(h, params["m1_w"], params["m1_b"]))
    mask = conv1x1(h, params["m2_w"], params["m2_b"])
    Bv, _, Hv, Wv = m.shape
    mask = mask.reshape(Bv, 6, mem_in, Hv, Wv)
    xn, xm, yn, ym, cc, bias = (mask[:, i] for i in range(6))

    memory = m
    for _ in range(k):
        res = memory
        up = jnp.concatenate([memory[:, :, :1, :], memory[:, :, :-1, :]], axis=2)
        down = jnp.concatenate([memory[:, :, 1:, :], memory[:, :, -1:, :]], axis=2)
        left = jnp.concatenate([memory[:, :, :, :1], memory[:, :, :, :-1]], axis=3)
        right = jnp.concatenate([memory[:, :, :, 1:], memory[:, :, :, -1:]], axis=3)
        accum = xn * left + xm * right + yn * up + ym * down + cc * memory + bias
        u = bn2d(accum, params["bn_u1_g"], params["bn_u1_b"])
        u = _lrelu(conv1x1(u, params["u1_w"], params["u1_b"]))
        u = conv1x1(u, params["u2_w"], params["u2_b"])
        u = bn2d(u, params["bn_u2_g"], params["bn_u2_b"])
        memory = res + u if res_memory else u
        memory = softmax_c(_lrelu(memory))

    return (convt2x2(program, params["upp_w"], params["upp_b"]),
            convt2x2(memory, params["upm_w"], params["upm_b"]))


def _assert_close(name, got, ref, rtol=2e-2, atol=2e-3):
    diff = float(jnp.max(jnp.abs(got - ref)))
    scale = float(jnp.max(jnp.abs(ref)))
    assert diff <= atol + rtol * scale, (
        f"{name} mismatch: max|diff|={diff:.3e} vs ref scale {scale:.3e}")


if __name__ == "__main__":
    in_ch, out_ch, mem_in, mem_out = 4, 8, 8, 8
    B, H, W = 2, 16, 16

    key = jax.random.PRNGKey(0)
    kx, km, kp = jax.random.split(key, 3)
    x = jax.random.normal(kx, (B, in_ch, H, W), jnp.float32)      # program
    m = jax.random.normal(km, (B, mem_in, H, W), jnp.float32)     # memory
    params = init_params(kp, in_ch, out_ch, mem_in, mem_out)

    fwd = jax.jit(functools.partial(automata_block_up, in_ch=in_ch, out_ch=out_ch,
                                    mem_in=mem_in, mem_out=mem_out, k=2))
    prog_up, mem_up = fwd(params, x, m)
    jax.block_until_ready((prog_up, mem_up))

    assert prog_up.shape == (B, out_ch, 2 * H, 2 * W), prog_up.shape
    assert mem_up.shape == (B, mem_out, 2 * H, 2 * W), mem_up.shape
    assert bool(jnp.all(jnp.isfinite(prog_up))) and bool(jnp.all(jnp.isfinite(mem_up)))

    # numerics check against a pure-JAX NCHW reference of the PyTorch forward
    ref_fn = jax.jit(functools.partial(_reference_forward, in_ch=in_ch, out_ch=out_ch,
                                       mem_in=mem_in, mem_out=mem_out, k=2))
    ref_p, ref_m = ref_fn(params, x, m)
    jax.block_until_ready((ref_p, ref_m))
    _assert_close("program_up", prog_up, ref_p)
    _assert_close("memory_up", mem_up, ref_m)

    print("KERNEL_OK")
</pallas_src>

<mosaic_0001>
module attributes {stable_mosaic.version = 11 : i64} {
  func.func @_conv3x3_lrelu_kernel(%arg0: i32, %arg1: memref<4x512xf32, #tpu.memory_space<vmem>>, %arg2: memref<9x8x4xf32, #tpu.memory_space<vmem>>, %arg3: memref<8x1xf32, #tpu.memory_space<vmem>>, %arg4: memref<8x512xf32, #tpu.memory_space<vmem>>) attributes {dimension_semantics = [#tpu.dimension_semantics<parallel>], iteration_bounds = array<i64: 1>, scalar_prefetch = 0 : i64, scratch_operands = 0 : i64, tpu.core_type = #tpu.core_type<tc>, window_params = [{transform_indices = @transform_0, window_bounds = array<i64: 4, 512>}, {pipeline_mode = #tpu.pipeline_mode<synchronous>, transform_indices = @transform_1, window_bounds = array<i64: 9, 8, 4>}, {pipeline_mode = #tpu.pipeline_mode<synchronous>, transform_indices = @transform_2, window_bounds = array<i64: 8, 1>}, {transform_indices = @transform_3, window_bounds = array<i64: 8, 512>}]} {
    %c0 = arith.constant 0 : index
    %c0_0 = arith.constant 0 : index
    %0 = vector.load %arg1[%c0, %c0_0] : memref<4x512xf32, #tpu.memory_space<vmem>>, vector<4x512xf32>
    %1 = tpu.iota {dimensions = array<i32: 1>} : vector<1x512xi32>
    %c16_i32 = arith.constant 16 : i32
    %c0_i32 = arith.constant 0 : i32
    %2 = arith.cmpi eq, %c16_i32, %c0_i32 : i32
    %c1_i32 = arith.constant 1 : i32
    %3 = arith.select %2, %c1_i32, %c16_i32 : i32
    %4 = vector.broadcast %3 : i32 to vector<1x512xi32>
    %5 = arith.remsi %1, %4 : vector<1x512xi32>
    %c0_i32_1 = arith.constant 0 : i32
    %6 = vector.broadcast %c0_i32_1 : i32 to vector<1x512xi32>
    %7 = arith.cmpi ne, %5, %6 : vector<1x512xi32>
    %c0_i32_2 = arith.constant 0 : i32
    %8 = vector.broadcast %c0_i32_2 : i32 to vector<1x512xi32>
    %9 = arith.cmpi slt, %5, %8 : vector<1x512xi32>
    %c0_i32_3 = arith.constant 0 : i32
    %10 = arith.cmpi slt, %3, %c0_i32_3 : i32
    %11 = vector.broadcast %10 : i1 to vector<1x512xi1>
    %12 = vector.broadcast %11 : vector<1x512xi1> to vector<1x512xi1>
    %13 = arith.xori %9, %12 : vector<1x512xi1>
    %14 = arith.andi %13, %7 : vector<1x512xi1>
    %15 = vector.broadcast %3 : i32 to vector<1x512xi32>
    %16 = arith.addi %5, %15 : vector<1x512xi32>
    %17 = arith.select %14, %16, %5 : vector<1x512xi1>, vector<1x512xi32>
    %c256_i32 = arith.constant 256 : i32
    %c0_i32_4 = arith.constant 0 : i32
    %18 = arith.cmpi eq, %c256_i32, %c0_i32_4 : i32
    %c1_i32_5 = arith.constant 1 : i32
    %19 = arith.select %18, %c1_i32_5, %c256_i32 : i32
    %20 = vector.broadcast %19 : i32 to vector<1x512xi32>
    %21 = arith.remsi %1, %20 : vector<1x512xi32>
    %c0_i32_6 = arith.constant 0 : i32
    %22 = vector.broadcast %c0_i32_6 : i32 to vector<1x512xi32>
    %23 = arith.cmpi ne, %21, %22 : vector<1x512xi32>
    %c0_i32_7 = arith.constant 0 : i32
    %24 = vector.broadcast %c0_i32_7 : i32 to vector<1x512xi32>
    %25 = arith.cmpi slt, %21, %24 : vector<1x512xi32>
    %c0_i32_8 = arith.constant 0 : i32
    %26 = arith.cmpi slt, %19, %c0_i32_8 : i32
    %27 = vector.broadcast %26 : i1 to vector<1x512xi1>
    %28 = vector.broadcast %27 : vector<1x512xi1> to vector<1x512xi1>
    %29 = arith.xori %25, %28 : vector<1x512xi1>
    %30 = arith.andi %29, %23 : vector<1x512xi1>
    %31 = vector.broadcast %19 : i32 to vector<1x512xi32>
    %32 = arith.addi %21, %31 : vector<1x512xi32>
    %33 = arith.select %30, %32, %21 : vector<1x512xi1>, vector<1x512xi32>
    %c0_i32_9 = arith.constant 0 : i32
    %34 = vector.broadcast %c0_i32_9 : i32 to vector<1x512xi32>
    %35 = arith.cmpi ne, %17, %34 : vector<1x512xi32>
    %c15_i32 = arith.constant 15 : i32
    %36 = vector.broadcast %c15_i32 : i32 to vector<1x512xi32>
    %37 = arith.cmpi ne, %17, %36 : vector<1x512xi32>
    %c16_i32_10 = arith.constant 16 : i32
    %38 = vector.broadcast %c16_i32_10 : i32 to vector<1x512xi32>
    %39 = arith.cmpi sge, %33, %38 : vector<1x512xi32>
    %c240_i32 = arith.constant 240 : i32
    %40 = vector.broadcast %c240_i32 : i32 to vector<1x512xi32>
    %41 = arith.cmpi slt, %33, %40 : vector<1x512xi32>
    %cst = arith.constant 0.000000e+00 : f32
    %42 = vector.broadcast %cst : f32 to vector<8x512xf32>
    %c17_i32 = arith.constant 17 : i32
    %43 = tpu.dynamic_rotate %0 by %c17_i32 dim 1 : vector<4x512xf32>, i32 -> vector<4x512xf32>
    %44 = arith.andi %39, %35 : vector<1x512xi1>
    %cst_11 = arith.constant 0.000000e+00 : f32
    %45 = vector.shape_cast %44 : vector<1x512xi1> to vector<1x512xi1>
    %46 = vector.broadcast %45 : vector<1x512xi1> to vector<4x512xi1>
    %47 = vector.broadcast %cst_11 : f32 to vector<4x512xf32>
    %48 = arith.select %46, %43, %47 : vector<4x512xi1>, vector<4x512xf32>
    %c0_12 = arith.constant 0 : index
    %c0_13 = arith.constant 0 : index
    %c0_14 = arith.constant 0 : index
    %49 = vector.load %arg2[%c0_12, %c0_13, %c0_14] : memref<9x8x4xf32, #tpu.memory_space<vmem>>, vector<1x8x4xf32>
    %50 = vector.shape_cast %49 : vector<1x8x4xf32> to vector<8x4xf32>
    %cst_15 = arith.constant dense<0.000000e+00> : vector<8x512xf32>
    %51 = tpu.matmul %50, %48, %cst_15 {dimension_numbers = #tpu.dot_dimension_numbers<[1], [0], [0], [1], [0, 0, 1, 1], [], []>} : vector<8x4xf32>, vector<4x512xf32>, vector<8x512xf32> -> vector<8x512xf32>
    %52 = arith.addf %42, %51 : vector<8x512xf32>
    %c16_i32_16 = arith.constant 16 : i32
    %53 = tpu.dynamic_rotate %0 by %c16_i32_16 dim 1 : vector<4x512xf32>, i32 -> vector<4x512xf32>
    %cst_17 = arith.constant 0.000000e+00 : f32
    %54 = vector.shape_cast %39 : vector<1x512xi1> to vector<1x512xi1>
    %55 = vector.broadcast %54 : vector<1x512xi1> to vector<4x512xi1>
    %56 = vector.broadcast %cst_17 : f32 to vector<4x512xf32>
    %57 = arith.select %55, %53, %56 : vector<4x512xi1>, vector<4x512xf32>
    %c1 = arith.constant 1 : index
    %c0_18 = arith.constant 0 : index
    %c0_19 = arith.constant 0 : index
    %58 = vector.load %arg2[%c1, %c0_18, %c0_19] : memref<9x8x4xf32, #tpu.memory_space<vmem>>, vector<1x8x4xf32>
    %59 = vector.shape_cast %58 : vector<1x8x4xf32> to vector<8x4xf32>
    %cst_20 = arith.constant dense<0.000000e+00> : vector<8x512xf32>
    %60 = tpu.matmul %59, %57, %cst_20 {dimension_numbers = #tpu.dot_dimension_numbers<[1], [0], [0], [1], [0, 0, 1, 1], [], []>} : vector<8x4xf32>, vector<4x512xf32>, vector<8x512xf32> -> vector<8x512xf32>
    %61 = arith.addf %52, %60 : vector<8x512xf32>
    %c15_i32_21 = arith.constant 15 : i32
    %62 = tpu.dynamic_rotate %0 by %c15_i32_21 dim 1 : vector<4x512xf32>, i32 -> vector<4x512xf32>
    %63 = arith.andi %39, %37 : vector<1x512xi1>
    %cst_22 = arith.constant 0.000000e+00 : f32
    %64 = vector.shape_cast %63 : vector<1x512xi1> to vector<1x512xi1>
    %65 = vector.broadcast %64 : vector<1x512xi1> to vector<4x512xi1>
    %66 = vector.broadcast %cst_22 : f32 to vector<4x512xf32>
    %67 = arith.select %65, %62, %66 : vector<4x512xi1>, vector<4x512xf32>
    %c2 = arith.constant 2 : index
    %c0_23 = arith.constant 0 : index
    %c0_24 = arith.constant 0 : index
    %68 = vector.load %arg2[%c2, %c0_23, %c0_24] : memref<9x8x4xf32, #tpu.memory_space<vmem>>, vector<1x8x4xf32>
    %69 = vector.shape_cast %68 : vector<1x8x4xf32> to vector<8x4xf32>
    %cst_25 = arith.constant dense<0.000000e+00> : vector<8x512xf32>
    %70 = tpu.matmul %69, %67, %cst_25 {dimension_numbers = #tpu.dot_dimension_numbers<[1], [0], [0], [1], [0, 0, 1, 1], [], []>} : vector<8x4xf32>, vector<4x512xf32>, vector<8x512xf32> -> vector<8x512xf32>
    %71 = arith.addf %61, %70 : vector<8x512xf32>
    %c1_i32_26 = arith.constant 1 : i32
    %72 = tpu.dynamic_rotate %0 by %c1_i32_26 dim 1 : vector<4x512xf32>, i32 -> vector<4x512xf32>
    %cst_27 = arith.constant 0.000000e+00 : f32
    %73 = vector.shape_cast %35 : vector<1x512xi1> to vector<1x512xi1>
    %74 = vector.broadcast %73 : vector<1x512xi1> to vector<4x512xi1>
    %75 = vector.broadcast %cst_27 : f32 to vector<4x512xf32>
    %76 = arith.select %74, %72, %75 : vector<4x512xi1>, vector<4x512xf32>
    %c3 = arith.constant 3 : index
    %c0_28 = arith.constant 0 : index
    %c0_29 = arith.constant 0 : index
    %77 = vector.load %arg2[%c3, %c0_28, %c0_29] : memref<9x8x4xf32, #tpu.memory_space<vmem>>, vector<1x8x4xf32>
    %78 = vector.shape_cast %77 : vector<1x8x4xf32> to vector<8x4xf32>
    %cst_30 = arith.constant dense<0.000000e+00> : vector<8x512xf32>
    %79 = tpu.matmul %78, %76, %cst_30 {dimension_numbers = #tpu.dot_dimension_numbers<[1], [0], [0], [1], [0, 0, 1, 1], [], []>} : vector<8x4xf32>, vector<4x512xf32>, vector<8x512xf32> -> vector<8x512xf32>
    %80 = arith.addf %71, %79 : vector<8x512xf32>
    %c4 = arith.constant 4 : index
    %c0_31 = arith.constant 0 : index
    %c0_32 = arith.constant 0 : index
    %81 = vector.load %arg2[%c4, %c0_31, %c0_32] : memref<9x8x4xf32, #tpu.memory_space<vmem>>, vector<1x8x4xf32>
    %82 = vector.shape_cast %81 : vector<1x8x4xf32> to vector<8x4xf32>
    %cst_33 = arith.constant dense<0.000000e+00> : vector<8x512xf32>
    %83 = tpu.matmul %82, %0, %cst_33 {dimension_numbers = #tpu.dot_dimension_numbers<[1], [0], [0], [1], [0, 0, 1, 1], [], []>} : vector<8x4xf32>, vector<4x512xf32>, vector<8x512xf32> -> vector<8x512xf32>
    %84 = arith.addf %80, %83 : vector<8x512xf32>
    %c511_i32 = arith.constant 511 : i32
    %85 = tpu.dynamic_rotate %0 by %c511_i32 dim 1 : vector<4x512xf32>, i32 -> vector<4x512xf32>
    %cst_34 = arith.constant 0.000000e+00 : f32
    %86 = vector.shape_cast %37 : vector<1x512xi1> to vector<1x512xi1>
    %87 = vector.broadcast %86 : vector<1x512xi1> to vector<4x512xi1>
    %88 = vector.broadcast %cst_34 : f32 to vector<4x512xf32>
    %89 = arith.select %87, %85, %88 : vector<4x512xi1>, vector<4x512xf32>
    %c5 = arith.constant 5 : index
    %c0_35 = arith.constant 0 : index
    %c0_36 = arith.constant 0 : index
    %90 = vector.load %arg2[%c5, %c0_35, %c0_36] : memref<9x8x4xf32, #tpu.memory_space<vmem>>, vector<1x8x4xf32>
    %91 = vector.shape_cast %90 : vector<1x8x4xf32> to vector<8x4xf32>
    %cst_37 = arith.constant dense<0.000000e+00> : vector<8x512xf32>
    %92 = tpu.matmul %91, %89, %cst_37 {dimension_numbers = #tpu.dot_dimension_numbers<[1], [0], [0], [1], [0, 0, 1, 1], [], []>} : vector<8x4xf32>, vector<4x512xf32>, vector<8x512xf32> -> vector<8x512xf32>
    %93 = arith.addf %84, %92 : vector<8x512xf32>
    %c497_i32 = arith.constant 497 : i32
    %94 = tpu.dynamic_rotate %0 by %c497_i32 dim 1 : vector<4x512xf32>, i32 -> vector<4x512xf32>
    %95 = arith.andi %41, %35 : vector<1x512xi1>
    %cst_38 = arith.constant 0.000000e+00 : f32
    %96 = vector.shape_cast %95 : vector<1x512xi1> to vector<1x512xi1>
    %97 = vector.broadcast %96 : vector<1x512xi1> to vector<4x512xi1>
    %98 = vector.broadcast %cst_38 : f32 to vector<4x512xf32>
    %99 = arith.select %97, %94, %98 : vector<4x512xi1>, vector<4x512xf32>
    %c6 = arith.constant 6 : index
    %c0_39 = arith.constant 0 : index
    %c0_40 = arith.constant 0 : index
    %100 = vector.load %arg2[%c6, %c0_39, %c0_40] : memref<9x8x4xf32, #tpu.memory_space<vmem>>, vector<1x8x4xf32>
    %101 = vector.shape_cast %100 : vector<1x8x4xf32> to vector<8x4xf32>
    %cst_41 = arith.constant dense<0.000000e+00> : vector<8x512xf32>
    %102 = tpu.matmul %101, %99, %cst_41 {dimension_numbers = #tpu.dot_dimension_numbers<[1], [0], [0], [1], [0, 0, 1, 1], [], []>} : vector<8x4xf32>, vector<4x512xf32>, vector<8x512xf32> -> vector<8x512xf32>
    %103 = arith.addf %93, %102 : vector<8x512xf32>
    %c496_i32 = arith.constant 496 : i32
    %104 = tpu.dynamic_rotate %0 by %c496_i32 dim 1 : vector<4x512xf32>, i32 -> vector<4x512xf32>
    %cst_42 = arith.constant 0.000000e+00 : f32
    %105 = vector.shape_cast %41 : vector<1x512xi1> to vector<1x512xi1>
    %106 = vector.broadcast %105 : vector<1x512xi1> to vector<4x512xi1>
    %107 = vector.broadcast %cst_42 : f32 to vector<4x512xf32>
    %108 = arith.select %106, %104, %107 : vector<4x512xi1>, vector<4x512xf32>
    %c7 = arith.constant 7 : index
    %c0_43 = arith.constant 0 : index
    %c0_44 = arith.constant 0 : index
    %109 = vector.load %arg2[%c7, %c0_43, %c0_44] : memref<9x8x4xf32, #tpu.memory_space<vmem>>, vector<1x8x4xf32>
    %110 = vector.shape_cast %109 : vector<1x8x4xf32> to vector<8x4xf32>
    %cst_45 = arith.constant dense<0.000000e+00> : vector<8x512xf32>
    %111 = tpu.matmul %110, %108, %cst_45 {dimension_numbers = #tpu.dot_dimension_numbers<[1], [0], [0], [1], [0, 0, 1, 1], [], []>} : vector<8x4xf32>, vector<4x512xf32>, vector<8x512xf32> -> vector<8x512xf32>
    %112 = arith.addf %103, %111 : vector<8x512xf32>
    %c495_i32 = arith.constant 495 : i32
    %113 = tpu.dynamic_rotate %0 by %c495_i32 dim 1 : vector<4x512xf32>, i32 -> vector<4x512xf32>
    %114 = arith.andi %41, %37 : vector<1x512xi1>
    %cst_46 = arith.constant 0.000000e+00 : f32
    %115 = vector.shape_cast %114 : vector<1x512xi1> to vector<1x512xi1>
    %116 = vector.broadcast %115 : vector<1x512xi1> to vector<4x512xi1>
    %117 = vector.broadcast %cst_46 : f32 to vector<4x512xf32>
    %118 = arith.select %116, %113, %117 : vector<4x512xi1>, vector<4x512xf32>
    %c8 = arith.constant 8 : index
    %c0_47 = arith.constant 0 : index
    %c0_48 = arith.constant 0 : index
    %119 = vector.load %arg2[%c8, %c0_47, %c0_48] : memref<9x8x4xf32, #tpu.memory_space<vmem>>, vector<1x8x4xf32>
    %120 = vector.shape_cast %119 : vector<1x8x4xf32> to vector<8x4xf32>
    %cst_49 = arith.constant dense<0.000000e+00> : vector<8x512xf32>
    %121 = tpu.matmul %120, %118, %cst_49 {dimension_numbers = #tpu.dot_dimension_numbers<[1], [0], [0], [1], [0, 0, 1, 1], [], []>} : vector<8x4xf32>, vector<4x512xf32>, vector<8x512xf32> -> vector<8x512xf32>
    %122 = arith.addf %112, %121 : vector<8x512xf32>
    %c0_50 = arith.constant 0 : index
    %c0_51 = arith.constant 0 : index
    %123 = vector.load %arg3[%c0_50, %c0_51] : memref<8x1xf32, #tpu.memory_space<vmem>>, vector<8x1xf32>
    %124 = vector.broadcast %123 : vector<8x1xf32> to vector<8x512xf32>
    %125 = arith.addf %122, %124 : vector<8x512xf32>
    %cst_52 = arith.constant 0.000000e+00 : f32
    %126 = vector.broadcast %cst_52 : f32 to vector<8x512xf32>
    %127 = arith.cmpf oge, %125, %126 : vector<8x512xf32>
    %cst_53 = arith.constant 0.00999999977 : f32
    %128 = vector.broadcast %cst_53 : f32 to vector<8x512xf32>
    %129 = arith.mulf %128, %125 : vector<8x512xf32>
    %130 = arith.select %127, %125, %129 : vector<8x512xi1>, vector<8x512xf32>
    %c0_54 = arith.constant 0 : index
    %c0_55 = arith.constant 0 : index
    %131 = vector.load %arg4[%c0_54, %c0_55] : memref<8x512xf32, #tpu.memory_space<vmem>>, vector<8x512xf32>
    tpu.vector_store %arg4[%c0_54, %c0_55], %130 {strides = array<i32>} : memref<8x512xf32, #tpu.memory_space<vmem>>, vector<8x512xf32>,
    return
  }
  func.func @transform_0(%arg0: i32) -> (i32, i32) {
    %c0_i32 = arith.constant 0 : i32
    %c0_i32_0 = arith.constant 0 : i32
    return %c0_i32, %arg0 : i32, i32
  }
  func.func @transform_1(%arg0: i32) -> (i32, i32, i32) {
    %c0_i32 = arith.constant 0 : i32
    %c0_i32_0 = arith.constant 0 : i32
    %c0_i32_1 = arith.constant 0 : i32
    %c0_i32_2 = arith.constant 0 : i32
    return %c0_i32, %c0_i32_0, %c0_i32_1 : i32, i32, i32
  }
  func.func @transform_2(%arg0: i32) -> (i32, i32) {
    %c0_i32 = arith.constant 0 : i32
    %c0_i32_0 = arith.constant 0 : i32
    %c0_i32_1 = arith.constant 0 : i32
    return %c0_i32, %c0_i32_0 : i32, i32
  }
  func.func @transform_3(%arg0: i32) -> (i32, i32) {
    %c0_i32 = arith.constant 0 : i32
    %c0_i32_0 = arith.constant 0 : i32
    return %c0_i32, %arg0 : i32, i32
  }
}

module attributes {stable_mosaic.version = 11 : i64} {
  func.func @_automata_core_kernel(%arg0: memref<8x512xf32, #tpu.memory_space<vmem>>, %arg1: memref<8x512xf32, #tpu.memory_space<vmem>>, %arg2: memref<8x1xf32, #tpu.memory_space<vmem>>, %arg3: memref<8x1xf32, #tpu.memory_space<vmem>>, %arg4: memref<8x8xf32, #tpu.memory_space<vmem>>, %arg5: memref<8x1xf32, #tpu.memory_space<vmem>>, %arg6: memref<48x8xf32, #tpu.memory_space<vmem>>, %arg7: memref<48x1xf32, #tpu.memory_space<vmem>>, %arg8: memref<8x1xf32, #tpu.memory_space<vmem>>, %arg9: memref<8x1xf32, #tpu.memory_space<vmem>>, %arg10: memref<8x8xf32, #tpu.memory_space<vmem>>, %arg11: memref<8x1xf32, #tpu.memory_space<vmem>>, %arg12: memref<8x8xf32, #tpu.memory_space<vmem>>, %arg13: memref<8x1xf32, #tpu.memory_space<vmem>>, %arg14: memref<8x1xf32, #tpu.memory_space<vmem>>, %arg15: memref<8x1xf32, #tpu.memory_space<vmem>>, %arg16: memref<8x512xbf16, #tpu.memory_space<vmem>>) attributes {dimension_semantics = [], scalar_prefetch = 0 : i64, scratch_operands = 0 : i64, tpu.core_type = #tpu.core_type<tc>} {
    %cst = arith.constant 1.000000e+00 : f32
    %0 = vector.broadcast %cst : f32 to vector<512x1xf32>
    %c0 = arith.constant 0 : index
    %c0_0 = arith.constant 0 : index
    %1 = vector.load %arg0[%c0, %c0_0] : memref<8x512xf32, #tpu.memory_space<vmem>>, vector<8x512xf32>
    %c0_1 = arith.constant 0 : index
    %c0_2 = arith.constant 0 : index
    %2 = vector.load %arg1[%c0_1, %c0_2] : memref<8x512xf32, #tpu.memory_space<vmem>>, vector<8x512xf32>
    %c0_3 = arith.constant 0 : index
    %c0_4 = arith.constant 0 : index
    %3 = vector.load %arg2[%c0_3, %c0_4] : memref<8x1xf32, #tpu.memory_space<vmem>>, vector<8x1xf32>
    %c0_5 = arith.constant 0 : index
    %c0_6 = arith.constant 0 : index
    %4 = vector.load %arg3[%c0_5, %c0_6] : memref<8x1xf32, #tpu.memory_space<vmem>>, vector<8x1xf32>
    %c0_7 = arith.constant 0 : index
    %c0_8 = arith.constant 0 : index
    %5 = vector.load %arg4[%c0_7, %c0_8] : memref<8x8xf32, #tpu.memory_space<vmem>>, vector<8x8xf32>
    %c0_9 = arith.constant 0 : index
    %c0_10 = arith.constant 0 : index
    %6 = vector.load %arg5[%c0_9, %c0_10] : memref<8x1xf32, #tpu.memory_space<vmem>>, vector<8x1xf32>
    %c0_11 = arith.constant 0 : index
    %c0_12 = arith.constant 0 : index
    %7 = vector.load %arg6[%c0_11, %c0_12] : memref<48x8xf32, #tpu.memory_space<vmem>>, vector<48x8xf32>
    %c0_13 = arith.constant 0 : index
    %c0_14 = arith.constant 0 : index
    %8 = vector.load %arg7[%c0_13, %c0_14] : memref<48x1xf32, #tpu.memory_space<vmem>>, vector<48x1xf32>
    %c0_15 = arith.constant 0 : index
    %c0_16 = arith.constant 0 : index
    %9 = vector.load %arg8[%c0_15, %c0_16] : memref<8x1xf32, #tpu.memory_space<vmem>>, vector<8x1xf32>
    %c0_17 = arith.constant 0 : index
    %c0_18 = arith.constant 0 : index
    %10 = vector.load %arg9[%c0_17, %c0_18] : memref<8x1xf32, #tpu.memory_space<vmem>>, vector<8x1xf32>
    %c0_19 = arith.constant 0 : index
    %c0_20 = arith.constant 0 : index
    %11 = vector.load %arg10[%c0_19, %c0_20] : memref<8x8xf32, #tpu.memory_space<vmem>>, vector<8x8xf32>
    %c0_21 = arith.constant 0 : index
    %c0_22 = arith.constant 0 : index
    %12 = vector.load %arg11[%c0_21, %c0_22] : memref<8x1xf32, #tpu.memory_space<vmem>>, vector<8x1xf32>
    %c0_23 = arith.constant 0 : index
    %c0_24 = arith.constant 0 : index
    %13 = vector.load %arg12[%c0_23, %c0_24] : memref<8x8xf32, #tpu.memory_space<vmem>>, vector<8x8xf32>
    %c0_25 = arith.constant 0 : index
    %c0_26 = arith.constant 0 : index
    %14 = vector.load %arg13[%c0_25, %c0_26] : memref<8x1xf32, #tpu.memory_space<vmem>>, vector<8x1xf32>
    %c0_27 = arith.constant 0 : index
    %c0_28 = arith.constant 0 : index
    %15 = vector.load %arg14[%c0_27, %c0_28] : memref<8x1xf32, #tpu.memory_space<vmem>>, vector<8x1xf32>
    %c0_29 = arith.constant 0 : index
    %c0_30 = arith.constant 0 : index
    %16 = vector.load %arg15[%c0_29, %c0_30] : memref<8x1xf32, #tpu.memory_space<vmem>>, vector<8x1xf32>
    %cst_31 = arith.constant dense<0xFF800000> : vector<512xf32>
    %17 = vector.multi_reduction <maximumf>, %1, %cst_31 [0] : vector<8x512xf32> to vector<512xf32>
    %18 = vector.shape_cast %17 : vector<512xf32> to vector<1x512xf32>
    %19 = vector.broadcast %18 : vector<1x512xf32> to vector<8x512xf32>
    %20 = arith.subf %1, %19 : vector<8x512xf32>
    %21 = math.exp %20 : vector<8x512xf32>
    %cst_32 = arith.constant dense<0.000000e+00> : vector<512xf32>
    %22 = vector.multi_reduction <add>, %21, %cst_32 [0] : vector<8x512xf32> to vector<512xf32>
    %23 = vector.shape_cast %22 : vector<512xf32> to vector<1x512xf32>
    %24 = tpu.reciprocal %23 {approx = true} : vector<1x512xf32> -> vector<1x512xf32>
    %25 = vector.broadcast %24 : vector<1x512xf32> to vector<8x512xf32>
    %26 = arith.mulf %21, %25 : vector<8x512xf32>
    %cst_33 = arith.constant dense<0.000000e+00> : vector<8x1xf32>
    %27 = tpu.matmul %26, %0, %cst_33 {dimension_numbers = #tpu.dot_dimension_numbers<[1], [0], [0], [1], [0, 0, 1, 1], [], []>} : vector<8x512xf32>, vector<512x1xf32>, vector<8x1xf32> -> vector<8x1xf32>
    %28 = arith.mulf %26, %26 : vector<8x512xf32>
    %cst_34 = arith.constant dense<0.000000e+00> : vector<8x1xf32>
    %29 = tpu.matmul %28, %0, %cst_34 {dimension_numbers = #tpu.dot_dimension_numbers<[1], [0], [0], [1], [0, 0, 1, 1], [], []>} : vector<8x512xf32>, vector<512x1xf32>, vector<8x1xf32> -> vector<8x1xf32>
    %cst_35 = arith.constant 0.001953125 : f32
    %30 = vector.broadcast %cst_35 : f32 to vector<8x1xf32>
    %31 = arith.mulf %27, %30 : vector<8x1xf32>
    %cst_36 = arith.constant 0.001953125 : f32
    %32 = vector.broadcast %cst_36 : f32 to vector<8x1xf32>
    %33 = arith.mulf %29, %32 : vector<8x1xf32>
    %34 = arith.mulf %31, %31 : vector<8x1xf32>
    %35 = arith.subf %33, %34 : vector<8x1xf32>
    %cst_37 = arith.constant 0.000000e+00 : f32
    %36 = vector.broadcast %cst_37 : f32 to vector<8x1xf32>
    %37 = arith.maximumf %35, %36 : vector<8x1xf32>
    %38 = vector.broadcast %31 : vector<8x1xf32> to vector<8x512xf32>
    %39 = arith.subf %26, %38 : vector<8x512xf32>
    %cst_38 = arith.constant 9.99999974E-6 : f32
    %40 = vector.broadcast %cst_38 : f32 to vector<8x1xf32>
    %41 = arith.addf %37, %40 : vector<8x1xf32>
    %42 = math.rsqrt %41 : vector<8x1xf32>
    %43 = vector.broadcast %42 : vector<8x1xf32> to vector<8x512xf32>
    %44 = arith.mulf %39, %43 : vector<8x512xf32>
    %45 = vector.broadcast %3 : vector<8x1xf32> to vector<8x512xf32>
    %46 = arith.mulf %44, %45 : vector<8x512xf32>
    %47 = vector.broadcast %4 : vector<8x1xf32> to vector<8x512xf32>
    %48 = arith.addf %46, %47 : vector<8x512xf32>
    %cst_39 = arith.constant dense<0.000000e+00> : vector<8x512xf32>
    %49 = tpu.matmul %5, %48, %cst_39 {dimension_numbers = #tpu.dot_dimension_numbers<[1], [0], [0], [1], [0, 0, 1, 1], [], []>} : vector<8x8xf32>, vector<8x512xf32>, vector<8x512xf32> -> vector<8x512xf32>
    %50 = vector.broadcast %6 : vector<8x1xf32> to vector<8x512xf32>
    %51 = arith.addf %49, %50 : vector<8x512xf32>
    %cst_40 = arith.constant 0.000000e+00 : f32
    %52 = vector.broadcast %cst_40 : f32 to vector<8x512xf32>
    %53 = arith.cmpf oge, %51, %52 : vector<8x512xf32>
    %cst_41 = arith.constant 0.00999999977 : f32
    %54 = vector.broadcast %cst_41 : f32 to vector<8x512xf32>
    %55 = arith.mulf %54, %51 : vector<8x512xf32>
    %56 = arith.select %53, %51, %55 : vector<8x512xi1>, vector<8x512xf32>
    %cst_42 = arith.constant dense<0.000000e+00> : vector<48x512xf32>
    %57 = tpu.matmul %7, %56, %cst_42 {dimension_numbers = #tpu.dot_dimension_numbers<[1], [0], [0], [1], [0, 0, 1, 1], [], []>} : vector<48x8xf32>, vector<8x512xf32>, vector<48x512xf32> -> vector<48x512xf32>
    %58 = vector.broadcast %8 : vector<48x1xf32> to vector<48x512xf32>
    %59 = arith.addf %57, %58 : vector<48x512xf32>
    %60 = vector.extract_strided_slice %59 {offsets = [0, 0], sizes = [8, 512], strides = [1, 1]} : vector<48x512xf32> to vector<8x512xf32>
    %61 = vector.extract_strided_slice %59 {offsets = [8, 0], sizes = [8, 512], strides = [1, 1]} : vector<48x512xf32> to vector<8x512xf32>
    %62 = vector.extract_strided_slice %59 {offsets = [16, 0], sizes = [8, 512], strides = [1, 1]} : vector<48x512xf32> to vector<8x512xf32>
    %63 = vector.extract_strided_slice %59 {offsets = [24, 0], sizes = [8, 512], strides = [1, 1]} : vector<48x512xf32> to vector<8x512xf32>
    %64 = vector.extract_strided_slice %59 {offsets = [32, 0], sizes = [8, 512], strides = [1, 1]} : vector<48x512xf32> to vector<8x512xf32>
    %65 = vector.extract_strided_slice %59 {offsets = [40, 0], sizes = [8, 512], strides = [1, 1]} : vector<48x512xf32> to vector<8x512xf32>
    %66 = tpu.iota {dimensions = array<i32: 1>} : vector<1x512xi32>
    %c16_i32 = arith.constant 16 : i32
    %c0_i32 = arith.constant 0 : i32
    %67 = arith.cmpi eq, %c16_i32, %c0_i32 : i32
    %c1_i32 = arith.constant 1 : i32
    %68 = arith.select %67, %c1_i32, %c16_i32 : i32
    %69 = vector.broadcast %68 : i32 to vector<1x512xi32>
    %70 = arith.remsi %66, %69 : vector<1x512xi32>
    %c0_i32_43 = arith.constant 0 : i32
    %71 = vector.broadcast %c0_i32_43 : i32 to vector<1x512xi32>
    %72 = arith.cmpi ne, %70, %71 : vector<1x512xi32>
    %c0_i32_44 = arith.constant 0 : i32
    %73 = vector.broadcast %c0_i32_44 : i32 to vector<1x512xi32>
    %74 = arith.cmpi slt, %70, %73 : vector<1x512xi32>
    %c0_i32_45 = arith.constant 0 : i32
    %75 = arith.cmpi slt, %68, %c0_i32_45 : i32
    %76 = vector.broadcast %75 : i1 to vector<1x512xi1>
    %77 = vector.broadcast %76 : vector<1x512xi1> to vector<1x512xi1>
    %78 = arith.xori %74, %77 : vector<1x512xi1>
    %79 = arith.andi %78, %72 : vector<1x512xi1>
    %80 = vector.broadcast %68 : i32 to vector<1x512xi32>
    %81 = arith.addi %70, %80 : vector<1x512xi32>
    %82 = arith.select %79, %81, %70 : vector<1x512xi1>, vector<1x512xi32>
    %c256_i32 = arith.constant 256 : i32
    %c0_i32_46 = arith.constant 0 : i32
    %83 = arith.cmpi eq, %c256_i32, %c0_i32_46 : i32
    %c1_i32_47 = arith.constant 1 : i32
    %84 = arith.select %83, %c1_i32_47, %c256_i32 : i32
    %85 = vector.broadcast %84 : i32 to vector<1x512xi32>
    %86 = arith.remsi %66, %85 : vector<1x512xi32>
    %c0_i32_48 = arith.constant 0 : i32
    %87 = vector.broadcast %c0_i32_48 : i32 to vector<1x512xi32>
    %88 = arith.cmpi ne, %86, %87 : vector<1x512xi32>
    %c0_i32_49 = arith.constant 0 : i32
    %89 = vector.broadcast %c0_i32_49 : i32 to vector<1x512xi32>
    %90 = arith.cmpi slt, %86, %89 : vector<1x512xi32>
    %c0_i32_50 = arith.constant 0 : i32
    %91 = arith.cmpi slt, %84, %c0_i32_50 : i32
    %92 = vector.broadcast %91 : i1 to vector<1x512xi1>
    %93 = vector.broadcast %92 : vector<1x512xi1> to vector<1x512xi1>
    %94 = arith.xori %90, %93 : vector<1x512xi1>
    %95 = arith.andi %94, %88 : vector<1x512xi1>
    %96 = vector.broadcast %84 : i32 to vector<1x512xi32>
    %97 = arith.addi %86, %96 : vector<1x512xi32>
    %98 = arith.select %95, %97, %86 : vector<1x512xi1>, vector<1x512xi32>
    %c0_i32_51 = arith.constant 0 : i32
    %99 = vector.broadcast %c0_i32_51 : i32 to vector<1x512xi32>
    %100 = arith.cmpi eq, %82, %99 : vector<1x512xi32>
    %101 = arith.extui %100 : vector<1x512xi1> to vector<1x512xi32>
    %102 = arith.sitofp %101 : vector<1x512xi32> to vector<1x512xf32>
    %c15_i32 = arith.constant 15 : i32
    %103 = vector.broadcast %c15_i32 : i32 to vector<1x512xi32>
    %104 = arith.cmpi eq, %82, %103 : vector<1x512xi32>
    %105 = arith.extui %104 : vector<1x512xi1> to vector<1x512xi32>
    %106 = arith.sitofp %105 : vector<1x512xi32> to vector<1x512xf32>
    %c16_i32_52 = arith.constant 16 : i32
    %107 = vector.broadcast %c16_i32_52 : i32 to vector<1x512xi32>
    %108 = arith.cmpi slt, %98, %107 : vector<1x512xi32>
    %109 = arith.extui %108 : vector<1x512xi1> to vector<1x512xi32>
    %110 = arith.sitofp %109 : vector<1x512xi32> to vector<1x512xf32>
    %c240_i32 = arith.constant 240 : i32
    %111 = vector.broadcast %c240_i32 : i32 to vector<1x512xi32>
    %112 = arith.cmpi sge, %98, %111 : vector<1x512xi32>
    %113 = arith.extui %112 : vector<1x512xi1> to vector<1x512xi32>
    %114 = arith.sitofp %113 : vector<1x512xi32> to vector<1x512xf32>
    %115 = vector.broadcast %102 : vector<1x512xf32> to vector<8x512xf32>
    %116 = arith.mulf %60, %115 : vector<8x512xf32>
    %117 = arith.addf %64, %116 : vector<8x512xf32>
    %118 = vector.broadcast %106 : vector<1x512xf32> to vector<8x512xf32>
    %119 = arith.mulf %61, %118 : vector<8x512xf32>
    %120 = arith.addf %117, %119 : vector<8x512xf32>
    %121 = vector.broadcast %110 : vector<1x512xf32> to vector<8x512xf32>
    %122 = arith.mulf %62, %121 : vector<8x512xf32>
    %123 = arith.addf %120, %122 : vector<8x512xf32>
    %124 = vector.broadcast %114 : vector<1x512xf32> to vector<8x512xf32>
    %125 = arith.mulf %63, %124 : vector<8x512xf32>
    %126 = arith.addf %123, %125 : vector<8x512xf32>
    %cst_53 = arith.constant 1.000000e+00 : f32
    %127 = vector.broadcast %cst_53 : f32 to vector<1x512xf32>
    %128 = arith.subf %127, %102 : vector<1x512xf32>
    %129 = vector.broadcast %128 : vector<1x512xf32> to vector<8x512xf32>
    %130 = arith.mulf %60, %129 : vector<8x512xf32>
    %cst_54 = arith.constant 1.000000e+00 : f32
    %131 = vector.broadcast %cst_54 : f32 to vector<1x512xf32>
    %132 = arith.subf %131, %106 : vector<1x512xf32>
    %133 = vector.broadcast %132 : vector<1x512xf32> to vector<8x512xf32>
    %134 = arith.mulf %61, %133 : vector<8x512xf32>
    %cst_55 = arith.constant 1.000000e+00 : f32
    %135 = vector.broadcast %cst_55 : f32 to vector<1x512xf32>
    %136 = arith.subf %135, %110 : vector<1x512xf32>
    %137 = vector.broadcast %136 : vector<1x512xf32> to vector<8x512xf32>
    %138 = arith.mulf %62, %137 : vector<8x512xf32>
    %cst_56 = arith.constant 1.000000e+00 : f32
    %139 = vector.broadcast %cst_56 : f32 to vector<1x512xf32>
    %140 = arith.subf %139, %114 : vector<1x512xf32>
    %141 = vector.broadcast %140 : vector<1x512xf32> to vector<8x512xf32>
    %142 = arith.mulf %63, %141 : vector<8x512xf32>
    %c0_i32_57 = arith.constant 0 : i32
    %c1_i32_58 = arith.constant 1 : i32
    %143 = tpu.dynamic_rotate %2 by %c1_i32_58 dim 1 : vector<8x512xf32>, i32 -> vector<8x512xf32>
    %c511_i32 = arith.constant 511 : i32
    %144 = tpu.dynamic_rotate %2 by %c511_i32 dim 1 : vector<8x512xf32>, i32 -> vector<8x512xf32>
    %c16_i32_59 = arith.constant 16 : i32
    %145 = tpu.dynamic_rotate %2 by %c16_i32_59 dim 1 : vector<8x512xf32>, i32 -> vector<8x512xf32>
    %c496_i32 = arith.constant 496 : i32
    %146 = tpu.dynamic_rotate %2 by %c496_i32 dim 1 : vector<8x512xf32>, i32 -> vector<8x512xf32>
    %147 = arith.mulf %130, %143 : vector<8x512xf32>
    %148 = arith.mulf %134, %144 : vector<8x512xf32>
    %149 = arith.addf %147, %148 : vector<8x512xf32>
    %150 = arith.mulf %138, %145 : vector<8x512xf32>
    %151 = arith.addf %149, %150 : vector<8x512xf32>
    %152 = arith.mulf %142, %146 : vector<8x512xf32>
    %153 = arith.addf %151, %152 : vector<8x512xf32>
    %154 = arith.mulf %126, %2 : vector<8x512xf32>
    %155 = arith.addf %153, %154 : vector<8x512xf32>
    %156 = arith.addf %155, %65 : vector<8x512xf32>
    %cst_60 = arith.constant dense<0.000000e+00> : vector<8x1xf32>
    %157 = tpu.matmul %156, %0, %cst_60 {dimension_numbers = #tpu.dot_dimension_numbers<[1], [0], [0], [1], [0, 0, 1, 1], [], []>} : vector<8x512xf32>, vector<512x1xf32>, vector<8x1xf32> -> vector<8x1xf32>
    %158 = arith.mulf %156, %156 : vector<8x512xf32>
    %cst_61 = arith.constant dense<0.000000e+00> : vector<8x1xf32>
    %159 = tpu.matmul %158, %0, %cst_61 {dimension_numbers = #tpu.dot_dimension_numbers<[1], [0], [0], [1], [0, 0, 1, 1], [], []>} : vector<8x512xf32>, vector<512x1xf32>, vector<8x1xf32> -> vector<8x1xf32>
    %cst_62 = arith.constant 0.001953125 : f32
    %160 = vector.broadcast %cst_62 : f32 to vector<8x1xf32>
    %161 = arith.mulf %157, %160 : vector<8x1xf32>
    %cst_63 = arith.constant 0.001953125 : f32
    %162 = vector.broadcast %cst_63 : f32 to vector<8x1xf32>
    %163 = arith.mulf %159, %162 : vector<8x1xf32>
    %164 = arith.mulf %161, %161 : vector<8x1xf32>
    %165 = arith.subf %163, %164 : vector<8x1xf32>
    %cst_64 = arith.constant 0.000000e+00 : f32
    %166 = vector.broadcast %cst_64 : f32 to vector<8x1xf32>
    %167 = arith.maximumf %165, %166 : vector<8x1xf32>
    %168 = vector.broadcast %161 : vector<8x1xf32> to vector<8x512xf32>
    %169 = arith.subf %156, %168 : vector<8x512xf32>
    %cst_65 = arith.constant 9.99999974E-6 : f32
    %170 = vector.broadcast %cst_65 : f32 to vector<8x1xf32>
    %171 = arith.addf %167, %170 : vector<8x1xf32>
    %172 = math.rsqrt %171 : vector<8x1xf32>
    %173 = vector.broadcast %172 : vector<8x1xf32> to vector<8x512xf32>
    %174 = arith.mulf %169, %173 : vector<8x512xf32>
    %175 = vector.broadcast %9 : vector<8x1xf32> to vector<8x512xf32>
    %176 = arith.mulf %174, %175 : vector<8x512xf32>
    %177 = vector.broadcast %10 : vector<8x1xf32> to vector<8x512xf32>
    %178 = arith.addf %176, %177 : vector<8x512xf32>
    %cst_66 = arith.constant dense<0.000000e+00> : vector<8x512xf32>
    %179 = tpu.matmul %11, %178, %cst_66 {dimension_numbers = #tpu.dot_dimension_numbers<[1], [0], [0], [1], [0, 0, 1, 1], [], []>} : vector<8x8xf32>, vector<8x512xf32>, vector<8x512xf32> -> vector<8x512xf32>
    %180 = vector.broadcast %12 : vector<8x1xf32> to vector<8x512xf32>
    %181 = arith.addf %179, %180 : vector<8x512xf32>
    %cst_67 = arith.constant 0.000000e+00 : f32
    %182 = vector.broadcast %cst_67 : f32 to vector<8x512xf32>
    %183 = arith.cmpf oge, %181, %182 : vector<8x512xf32>
    %cst_68 = arith.constant 0.00999999977 : f32
    %184 = vector.broadcast %cst_68 : f32 to vector<8x512xf32>
    %185 = arith.mulf %184, %181 : vector<8x512xf32>
    %186 = arith.select %183, %181, %185 : vector<8x512xi1>, vector<8x512xf32>
    %cst_69 = arith.constant dense<0.000000e+00> : vector<8x512xf32>
    %187 = tpu.matmul %13, %186, %cst_69 {dimension_numbers = #tpu.dot_dimension_numbers<[1], [0], [0], [1], [0, 0, 1, 1], [], []>} : vector<8x8xf32>, vector<8x512xf32>, vector<8x512xf32> -> vector<8x512xf32>
    %188 = vector.broadcast %14 : vector<8x1xf32> to vector<8x512xf32>
    %189 = arith.addf %187, %188 : vector<8x512xf32>
    %cst_70 = arith.constant dense<0.000000e+00> : vector<8x1xf32>
    %190 = tpu.matmul %189, %0, %cst_70 {dimension_numbers = #tpu.dot_dimension_numbers<[1], [0], [0], [1], [0, 0, 1, 1], [], []>} : vector<8x512xf32>, vector<512x1xf32>, vector<8x1xf32> -> vector<8x1xf32>
    %191 = arith.mulf %189, %189 : vector<8x512xf32>
    %cst_71 = arith.constant dense<0.000000e+00> : vector<8x1xf32>
    %192 = tpu.matmul %191, %0, %cst_71 {dimension_numbers = #tpu.dot_dimension_numbers<[1], [0], [0], [1], [0, 0, 1, 1], [], []>} : vector<8x512xf32>, vector<512x1xf32>, vector<8x1xf32> -> vector<8x1xf32>
    %cst_72 = arith.constant 0.001953125 : f32
    %193 = vector.broadcast %cst_72 : f32 to vector<8x1xf32>
    %194 = arith.mulf %190, %193 : vector<8x1xf32>
    %cst_73 = arith.constant 0.001953125 : f32
    %195 = vector.broadcast %cst_73 : f32 to vector<8x1xf32>
    %196 = arith.mulf %192, %195 : vector<8x1xf32>
    %197 = arith.mulf %194, %194 : vector<8x1xf32>
    %198 = arith.subf %196, %197 : vector<8x1xf32>
    %cst_74 = arith.constant 0.000000e+00 : f32
    %199 = vector.broadcast %cst_74 : f32 to vector<8x1xf32>
    %200 = arith.maximumf %198, %199 : vector<8x1xf32>
    %201 = vector.broadcast %194 : vector<8x1xf32> to vector<8x512xf32>
    %202 = arith.subf %189, %201 : vector<8x512xf32>
    %cst_75 = arith.constant 9.99999974E-6 : f32
    %203 = vector.broadcast %cst_75 : f32 to vector<8x1xf32>
    %204 = arith.addf %200, %203 : vector<8x1xf32>
    %205 = math.rsqrt %204 : vector<8x1xf32>
    %206 = vector.broadcast %205 : vector<8x1xf32> to vector<8x512xf32>
    %207 = arith.mulf %202, %206 : vector<8x512xf32>
    %208 = vector.broadcast %15 : vector<8x1xf32> to vector<8x512xf32>
    %209 = arith.mulf %207, %208 : vector<8x512xf32>
    %210 = vector.broadcast %16 : vector<8x1xf32> to vector<8x512xf32>
    %211 = arith.addf %209, %210 : vector<8x512xf32>
    %212 = arith.addf %2, %211 : vector<8x512xf32>
    %cst_76 = arith.constant 0.000000e+00 : f32
    %213 = vector.broadcast %cst_76 : f32 to vector<8x512xf32>
    %214 = arith.cmpf oge, %212, %213 : vector<8x512xf32>
    %cst_77 = arith.constant 0.00999999977 : f32
    %215 = vector.broadcast %cst_77 : f32 to vector<8x512xf32>
    %216 = arith.mulf %215, %212 : vector<8x512xf32>
    %217 = arith.select %214, %212, %216 : vector<8x512xi1>, vector<8x512xf32>
    %cst_78 = arith.constant dense<0xFF800000> : vector<512xf32>
    %218 = vector.multi_reduction <maximumf>, %217, %cst_78 [0] : vector<8x512xf32> to vector<512xf32>
    %219 = vector.shape_cast %218 : vector<512xf32> to vector<1x512xf32>
    %220 = vector.broadcast %219 : vector<1x512xf32> to vector<8x512xf32>
    %221 = arith.subf %217, %220 : vector<8x512xf32>
    %222 = math.exp %221 : vector<8x512xf32>
    %cst_79 = arith.constant dense<0.000000e+00> : vector<512xf32>
    %223 = vector.multi_reduction <add>, %222, %cst_79 [0] : vector<8x512xf32> to vector<512xf32>
    %224 = vector.shape_cast %223 : vector<512xf32> to vector<1x512xf32>
    %225 = tpu.reciprocal %224 {approx = true} : vector<1x512xf32> -> vector<1x512xf32>
    %226 = vector.broadcast %225 : vector<1x512xf32> to vector<8x512xf32>
    %227 = arith.mulf %222, %226 : vector<8x512xf32>
    %c1_i32_80 = arith.constant 1 : i32
    %c1_i32_81 = arith.constant 1 : i32
    %228 = tpu.dynamic_rotate %227 by %c1_i32_81 dim 1 : vector<8x512xf32>, i32 -> vector<8x512xf32>
    %c511_i32_82 = arith.constant 511 : i32
    %229 = tpu.dynamic_rotate %227 by %c511_i32_82 dim 1 : vector<8x512xf32>, i32 -> vector<8x512xf32>
    %c16_i32_83 = arith.constant 16 : i32
    %230 = tpu.dynamic_rotate %227 by %c16_i32_83 dim 1 : vector<8x512xf32>, i32 -> vector<8x512xf32>
    %c496_i32_84 = arith.constant 496 : i32
    %231 = tpu.dynamic_rotate %227 by %c496_i32_84 dim 1 : vector<8x512xf32>, i32 -> vector<8x512xf32>
    %232 = arith.mulf %130, %228 : vector<8x512xf32>
    %233 = arith.mulf %134, %229 : vector<8x512xf32>
    %234 = arith.addf %232, %233 : vector<8x512xf32>
    %235 = arith.mulf %138, %230 : vector<8x512xf32>
    %236 = arith.addf %234, %235 : vector<8x512xf32>
    %237 = arith.mulf %142, %231 : vector<8x512xf32>
    %238 = arith.addf %236, %237 : vector<8x512xf32>
    %239 = arith.mulf %126, %227 : vector<8x512xf32>
    %240 = arith.addf %238, %239 : vector<8x512xf32>
    %241 = arith.addf %240, %65 : vector<8x512xf32>
    %cst_85 = arith.constant dense<0.000000e+00> : vector<8x1xf32>
    %242 = tpu.matmul %241, %0, %cst_85 {dimension_numbers = #tpu.dot_dimension_numbers<[1], [0], [0], [1], [0, 0, 1, 1], [], []>} : vector<8x512xf32>, vector<512x1xf32>, vector<8x1xf32> -> vector<8x1xf32>
    %243 = arith.mulf %241, %241 : vector<8x512xf32>
    %cst_86 = arith.constant dense<0.000000e+00> : vector<8x1xf32>
    %244 = tpu.matmul %243, %0, %cst_86 {dimension_numbers = #tpu.dot_dimension_numbers<[1], [0], [0], [1], [0, 0, 1, 1], [], []>} : vector<8x512xf32>, vector<512x1xf32>, vector<8x1xf32> -> vector<8x1xf32>
    %cst_87 = arith.constant 0.001953125 : f32
    %245 = vector.broadcast %cst_87 : f32 to vector<8x1xf32>
    %246 = arith.mulf %242, %245 : vector<8x1xf32>
    %cst_88 = arith.constant 0.001953125 : f32
    %247 = vector.broadcast %cst_88 : f32 to vector<8x1xf32>
    %248 = arith.mulf %244, %247 : vector<8x1xf32>
    %249 = arith.mulf %246, %246 : vector<8x1xf32>
    %250 = arith.subf %248, %249 : vector<8x1xf32>
    %cst_89 = arith.constant 0.000000e+00 : f32
    %251 = vector.broadcast %cst_89 : f32 to vector<8x1xf32>
    %252 = arith.maximumf %250, %251 : vector<8x1xf32>
    %253 = vector.broadcast %246 : vector<8x1xf32> to vector<8x512xf32>
    %254 = arith.subf %241, %253 : vector<8x512xf32>
    %cst_90 = arith.constant 9.99999974E-6 : f32
    %255 = vector.broadcast %cst_90 : f32 to vector<8x1xf32>
    %256 = arith.addf %252, %255 : vector<8x1xf32>
    %257 = math.rsqrt %256 : vector<8x1xf32>
    %258 = vector.broadcast %257 : vector<8x1xf32> to vector<8x512xf32>
    %259 = arith.mulf %254, %258 : vector<8x512xf32>
    %260 = vector.broadcast %9 : vector<8x1xf32> to vector<8x512xf32>
    %261 = arith.mulf %259, %260 : vector<8x512xf32>
    %262 = vector.broadcast %10 : vector<8x1xf32> to vector<8x512xf32>
    %263 = arith.addf %261, %262 : vector<8x512xf32>
    %cst_91 = arith.constant dense<0.000000e+00> : vector<8x512xf32>
    %264 = tpu.matmul %11, %263, %cst_91 {dimension_numbers = #tpu.dot_dimension_numbers<[1], [0], [0], [1], [0, 0, 1, 1], [], []>} : vector<8x8xf32>, vector<8x512xf32>, vector<8x512xf32> -> vector<8x512xf32>
    %265 = vector.broadcast %12 : vector<8x1xf32> to vector<8x512xf32>
    %266 = arith.addf %264, %265 : vector<8x512xf32>
    %cst_92 = arith.constant 0.000000e+00 : f32
    %267 = vector.broadcast %cst_92 : f32 to vector<8x512xf32>
    %268 = arith.cmpf oge, %266, %267 : vector<8x512xf32>
    %cst_93 = arith.constant 0.00999999977 : f32
    %269 = vector.broadcast %cst_93 : f32 to vector<8x512xf32>
    %270 = arith.mulf %269, %266 : vector<8x512xf32>
    %271 = arith.select %268, %266, %270 : vector<8x512xi1>, vector<8x512xf32>
    %cst_94 = arith.constant dense<0.000000e+00> : vector<8x512xf32>
    %272 = tpu.matmul %13, %271, %cst_94 {dimension_numbers = #tpu.dot_dimension_numbers<[1], [0], [0], [1], [0, 0, 1, 1], [], []>} : vector<8x8xf32>, vector<8x512xf32>, vector<8x512xf32> -> vector<8x512xf32>
    %273 = vector.broadcast %14 : vector<8x1xf32> to vector<8x512xf32>
    %274 = arith.addf %272, %273 : vector<8x512xf32>
    %cst_95 = arith.constant dense<0.000000e+00> : vector<8x1xf32>
    %275 = tpu.matmul %274, %0, %cst_95 {dimension_numbers = #tpu.dot_dimension_numbers<[1], [0], [0], [1], [0, 0, 1, 1], [], []>} : vector<8x512xf32>, vector<512x1xf32>, vector<8x1xf32> -> vector<8x1xf32>
    %276 = arith.mulf %274, %274 : vector<8x512xf32>
    %cst_96 = arith.constant dense<0.000000e+00> : vector<8x1xf32>
    %277 = tpu.matmul %276, %0, %cst_96 {dimension_numbers = #tpu.dot_dimension_numbers<[1], [0], [0], [1], [0, 0, 1, 1], [], []>} : vector<8x512xf32>, vector<512x1xf32>, vector<8x1xf32> -> vector<8x1xf32>
    %cst_97 = arith.constant 0.001953125 : f32
    %278 = vector.broadcast %cst_97 : f32 to vector<8x1xf32>
    %279 = arith.mulf %275, %278 : vector<8x1xf32>
    %cst_98 = arith.constant 0.001953125 : f32
    %280 = vector.broadcast %cst_98 : f32 to vector<8x1xf32>
    %281 = arith.mulf %277, %280 : vector<8x1xf32>
    %282 = arith.mulf %279, %279 : vector<8x1xf32>
    %283 = arith.subf %281, %282 : vector<8x1xf32>
    %cst_99 = arith.constant 0.000000e+00 : f32
    %284 = vector.broadcast %cst_99 : f32 to vector<8x1xf32>
    %285 = arith.maximumf %283, %284 : vector<8x1xf32>
    %286 = vector.broadcast %279 : vector<8x1xf32> to vector<8x512xf32>
    %287 = arith.subf %274, %286 : vector<8x512xf32>
    %cst_100 = arith.constant 9.99999974E-6 : f32
    %288 = vector.broadcast %cst_100 : f32 to vector<8x1xf32>
    %289 = arith.addf %285, %288 : vector<8x1xf32>
    %290 = math.rsqrt %289 : vector<8x1xf32>
    %291 = vector.broadcast %290 : vector<8x1xf32> to vector<8x512xf32>
    %292 = arith.mulf %287, %291 : vector<8x512xf32>
    %293 = vector.broadcast %15 : vector<8x1xf32> to vector<8x512xf32>
    %294 = arith.mulf %292, %293 : vector<8x512xf32>
    %295 = vector.broadcast %16 : vector<8x1xf32> to vector<8x512xf32>
    %296 = arith.addf %294, %295 : vector<8x512xf32>
    %297 = arith.addf %227, %296 : vector<8x512xf32>
    %cst_101 = arith.constant 0.000000e+00 : f32
    %298 = vector.broadcast %cst_101 : f32 to vector<8x512xf32>
    %299 = arith.cmpf oge, %297, %298 : vector<8x512xf32>
    %cst_102 = arith.constant 0.00999999977 : f32
    %300 = vector.broadcast %cst_102 : f32 to vector<8x512xf32>
    %301 = arith.mulf %300, %297 : vector<8x512xf32>
    %302 = arith.select %299, %297, %301 : vector<8x512xi1>, vector<8x512xf32>
    %cst_103 = arith.constant dense<0xFF800000> : vector<512xf32>
    %303 = vector.multi_reduction <maximumf>, %302, %cst_103 [0] : vector<8x512xf32> to vector<512xf32>
    %304 = vector.shape_cast %303 : vector<512xf32> to vector<1x512xf32>
    %305 = vector.broadcast %304 : vector<1x512xf32> to vector<8x512xf32>
    %306 = arith.subf %302, %305 : vector<8x512xf32>
    %307 = math.exp %306 : vector<8x512xf32>
    %cst_104 = arith.constant dense<0.000000e+00> : vector<512xf32>
    %308 = vector.multi_reduction <add>, %307, %cst_104 [0] : vector<8x512xf32> to vector<512xf32>
    %309 = vector.shape_cast %308 : vector<512xf32> to vector<1x512xf32>
    %310 = tpu.reciprocal %309 {approx = true} : vector<1x512xf32> -> vector<1x512xf32>
    %311 = vector.broadcast %310 : vector<1x512xf32> to vector<8x512xf32>
    %312 = arith.mulf %307, %311 : vector<8x512xf32>
    %313 = arith.truncf %312 : vector<8x512xf32> to vector<8x512xbf16>
    %c0_105 = arith.constant 0 : index
    %c0_106 = arith.constant 0 : index
    %314 = vector.load %arg16[%c0_105, %c0_106] : memref<8x512xbf16, #tpu.memory_space<vmem>>, vector<8x512xbf16>
    tpu.vector_store %arg16[%c0_105, %c0_106], %313 {strides = array<i32>} : memref<8x512xbf16, #tpu.memory_space<vmem>>, vector<8x512xbf16>,
    return
  }
}

module attributes {stable_mosaic.version = 11 : i64} {
  func.func @_convt2x2_pair_kernel(%arg0: i32, %arg1: memref<8x512xf32, #tpu.memory_space<vmem>>, %arg2: memref<32x8xbf16, #tpu.memory_space<vmem>>, %arg3: memref<32x1xf32, #tpu.memory_space<vmem>>, %arg4: memref<8x512xbf16, #tpu.memory_space<vmem>>, %arg5: memref<32x8xbf16, #tpu.memory_space<vmem>>, %arg6: memref<32x1xf32, #tpu.memory_space<vmem>>, %arg7: memref<32x512xf32, #tpu.memory_space<vmem>>, %arg8: memref<32x512xf32, #tpu.memory_space<vmem>>) attributes {dimension_semantics = [#tpu.dimension_semantics<parallel>], iteration_bounds = array<i64: 1>, scalar_prefetch = 0 : i64, scratch_operands = 0 : i64, tpu.core_type = #tpu.core_type<tc>, window_params = [{transform_indices = @transform_0, window_bounds = array<i64: 8, 512>}, {pipeline_mode = #tpu.pipeline_mode<synchronous>, transform_indices = @transform_1, window_bounds = array<i64: 32, 8>}, {pipeline_mode = #tpu.pipeline_mode<synchronous>, transform_indices = @transform_2, window_bounds = array<i64: 32, 1>}, {transform_indices = @transform_3, window_bounds = array<i64: 8, 512>}, {pipeline_mode = #tpu.pipeline_mode<synchronous>, transform_indices = @transform_4, window_bounds = array<i64: 32, 8>}, {pipeline_mode = #tpu.pipeline_mode<synchronous>, transform_indices = @transform_5, window_bounds = array<i64: 32, 1>}, {transform_indices = @transform_6, window_bounds = array<i64: 32, 512>}, {transform_indices = @transform_7, window_bounds = array<i64: 32, 512>}]} {
    %c0 = arith.constant 0 : index
    %c0_0 = arith.constant 0 : index
    %0 = vector.load %arg1[%c0, %c0_0] : memref<8x512xf32, #tpu.memory_space<vmem>>, vector<8x512xf32>
    %1 = arith.truncf %0 : vector<8x512xf32> to vector<8x512xbf16>
    %c0_1 = arith.constant 0 : index
    %c0_2 = arith.constant 0 : index
    %2 = vector.load %arg2[%c0_1, %c0_2] : memref<32x8xbf16, #tpu.memory_space<vmem>>, vector<32x8xbf16>
    %cst = arith.constant dense<0.000000e+00> : vector<32x512xf32>
    %3 = tpu.matmul %2, %1, %cst {dimension_numbers = #tpu.dot_dimension_numbers<[1], [0], [0], [1], [0, 0, 1, 1], [], []>} : vector<32x8xbf16>, vector<8x512xbf16>, vector<32x512xf32> -> vector<32x512xf32>
    %c0_3 = arith.constant 0 : index
    %c0_4 = arith.constant 0 : index
    %4 = vector.load %arg3[%c0_3, %c0_4] : memref<32x1xf32, #tpu.memory_space<vmem>>, vector<32x1xf32>
    %5 = vector.broadcast %4 : vector<32x1xf32> to vector<32x512xf32>
    %6 = arith.addf %3, %5 : vector<32x512xf32>
    %c0_5 = arith.constant 0 : index
    %c0_6 = arith.constant 0 : index
    %7 = vector.load %arg7[%c0_5, %c0_6] : memref<32x512xf32, #tpu.memory_space<vmem>>, vector<32x512xf32>
    tpu.vector_store %arg7[%c0_5, %c0_6], %6 {strides = array<i32>} : memref<32x512xf32, #tpu.memory_space<vmem>>, vector<32x512xf32>,
    %c0_7 = arith.constant 0 : index
    %c0_8 = arith.constant 0 : index
    %8 = vector.load %arg5[%c0_7, %c0_8] : memref<32x8xbf16, #tpu.memory_space<vmem>>, vector<32x8xbf16>
    %c0_9 = arith.constant 0 : index
    %c0_10 = arith.constant 0 : index
    %9 = vector.load %arg4[%c0_9, %c0_10] : memref<8x512xbf16, #tpu.memory_space<vmem>>, vector<8x512xbf16>
    %cst_11 = arith.constant dense<0.000000e+00> : vector<32x512xf32>
    %10 = tpu.matmul %8, %9, %cst_11 {dimension_numbers = #tpu.dot_dimension_numbers<[1], [0], [0], [1], [0, 0, 1, 1], [], []>} : vector<32x8xbf16>, vector<8x512xbf16>, vector<32x512xf32> -> vector<32x512xf32>
    %c0_12 = arith.constant 0 : index
    %c0_13 = arith.constant 0 : index
    %11 = vector.load %arg6[%c0_12, %c0_13] : memref<32x1xf32, #tpu.memory_space<vmem>>, vector<32x1xf32>
    %12 = vector.broadcast %11 : vector<32x1xf32> to vector<32x512xf32>
    %13 = arith.addf %10, %12 : vector<32x512xf32>
    %c0_14 = arith.constant 0 : index
    %c0_15 = arith.constant 0 : index
    %14 = vector.load %arg8[%c0_14, %c0_15] : memref<32x512xf32, #tpu.memory_space<vmem>>, vector<32x512xf32>
    tpu.vector_store %arg8[%c0_14, %c0_15], %13 {strides = array<i32>} : memref<32x512xf32, #tpu.memory_space<vmem>>, vector<32x512xf32>,
    return
  }
  func.func @transform_0(%arg0: i32) -> (i32, i32) {
    %c0_i32 = arith.constant 0 : i32
    %c0_i32_0 = arith.constant 0 : i32
    return %c0_i32, %arg0 : i32, i32
  }
  func.func @transform_1(%arg0: i32) -> (i32, i32) {
    %c0_i32 = arith.constant 0 : i32
    %c0_i32_0 = arith.constant 0 : i32
    %c0_i32_1 = arith.constant 0 : i32
    return %c0_i32, %c0_i32_0 : i32, i32
  }
  func.func @transform_2(%arg0: i32) -> (i32, i32) {
    %c0_i32 = arith.constant 0 : i32
    %c0_i32_0 = arith.constant 0 : i32
    %c0_i32_1 = arith.constant 0 : i32
    return %c0_i32, %c0_i32_0 : i32, i32
  }
  func.func @transform_3(%arg0: i32) -> (i32, i32) {
    %c0_i32 = arith.constant 0 : i32
    %c0_i32_0 = arith.constant 0 : i32
    return %c0_i32, %arg0 : i32, i32
  }
  func.func @transform_4(%arg0: i32) -> (i32, i32) {
    %c0_i32 = arith.constant 0 : i32
    %c0_i32_0 = arith.constant 0 : i32
    %c0_i32_1 = arith.constant 0 : i32
    return %c0_i32, %c0_i32_0 : i32, i32
  }
  func.func @transform_5(%arg0: i32) -> (i32, i32) {
    %c0_i32 = arith.constant 0 : i32
    %c0_i32_0 = arith.constant 0 : i32
    %c0_i32_1 = arith.constant 0 : i32
    return %c0_i32, %c0_i32_0 : i32, i32
  }
  func.func @transform_6(%arg0: i32) -> (i32, i32) {
    %c0_i32 = arith.constant 0 : i32
    %c0_i32_0 = arith.constant 0 : i32
    return %c0_i32, %arg0 : i32, i32
  }
  func.func @transform_7(%arg0: i32) -> (i32, i32) {
    %c0_i32 = arith.constant 0 : i32
    %c0_i32_0 = arith.constant 0 : i32
    return %c0_i32, %arg0 : i32, i32
  }
}

</mosaic_0001>

<llo_original>
// kernel: tile.14
$region0: #{tile.14}
  #allocation0 [shape = 's32[1]{0}', space=sflag, size = 0x4, scoped, tag = 'scoped memory for tile.14']
  %s0 = inlined_call_operand.vmem [shape: f32[8], index: 0, kind: input, shape index: {}]
  %s1 = inlined_call_operand.vmem [shape: f32[4,1,1,8], index: 1, kind: output, shape index: {}]
  // Predicated region
  $region2: #{tile.14} parent=0 // pred_check
    _
  $region3: #{tile.14} parent=0 // pred_check_branch
    %3 = sbr.rel (0) target = $region5
  $region4: #{tile.14} parent=0 // pred_region
    _
  $region5: #{tile.14} parent=0 // pred_fallthru
    _
  %v4 = vld [vmem:[%s0] ss:$0 sm:$0xff]
  %5 = vst [vmem:[%s1] sm:$0xf] %v4

// kernel: tile.0
$region0: #{tile.0}
  %s0 = inlined_call_operand.vmem [shape: f32[4,1,1,8], index: 0, kind: input, shape index: {}]
  %s1 = inlined_call_operand.vmem [shape: f32[32,1], index: 1, kind: output, shape index: {}]
  $region1: #{tile.0} parent=0
    #allocation0 [shape = 'u8[4096]{0}', space=vmem, size = 0x1000, scoped, tag = 'scoped mem for input reshape']
    %s3 = sshll.u32 1, 4
    %s4 = ssub.s32 %s3, 1
    %v5 = vld [vmem:[%s0] sm:%s4]
    %6 = vst [vmem:[#allocation0] sm:%s4] %v5
    %v7 = vld [vmem:[#allocation0] sm:$0xf]
    %vm8 = vcmask 7168
    %9 = vst.msk [vmem:[%s1] ss:$8 sm:$0xf] %vm8, %v7
    %v10 = vld [vmem:[#allocation0] sm:$0xf]
    %11 = vrot.lane.b32.xlu0 %v10, 127
    %v12 = vpop.permute.xlu0 %11
    %vm13 = vcmask 7168
    %s14 = scalar_lea.vmem %s1, 1
    %15 = vst.msk [vmem:[%s14] ss:$8 sm:$0xf] %vm13, %v12
    %v16 = vld [vmem:[#allocation0] sm:$0xf]
    %17 = vrot.lane.b32.xlu0 %v16, 126
    %v18 = vpop.permute.xlu0 %17
    %vm19 = vcmask 7168
    %s20 = scalar_lea.vmem %s1, 2
    %21 = vst.msk [vmem:[%s20] ss:$8 sm:$0xf] %vm19, %v18
    %v22 = vld [vmem:[#allocation0] sm:$0xf]
    %23 = vrot.lane.b32.xlu0 %v22, 125
    %v24 = vpop.permute.xlu0 %23
    %vm25 = vcmask 7168
    %s26 = scalar_lea.vmem %s1, 3
    %27 = vst.msk [vmem:[%s26] ss:$8 sm:$0xf] %vm25, %v24
    %v28 = vld [vmem:[#allocation0] sm:$0xf]
    %29 = vrot.lane.b32.xlu0 %v28, 124
    %v30 = vpop.permute.xlu0 %29
    %vm31 = vcmask 7168
    %s32 = scalar_lea.vmem %s1, 4
    %33 = vst.msk [vmem:[%s32] ss:$8 sm:$0xf] %vm31, %v30
    %v34 = vld [vmem:[#allocation0] sm:$0xf]
    %35 = vrot.lane.b32.xlu0 %v34, 123
    %v36 = vpop.permute.xlu0 %35
    %vm37 = vcmask 7168
    %s38 = scalar_lea.vmem %s1, 5
    %39 = vst.msk [vmem:[%s38] ss:$8 sm:$0xf] %vm37, %v36
    %v40 = vld [vmem:[#allocation0] sm:$0xf]
    %41 = vrot.lane.b32.xlu0 %v40, 122
    %v42 = vpop.permute.xlu0 %41
    %vm43 = vcmask 7168
    %s44 = scalar_lea.vmem %s1, 6
    %45 = vst.msk [vmem:[%s44] ss:$8 sm:$0xf] %vm43, %v42
    %v46 = vld [vmem:[#allocation0] sm:$0xf]
    %47 = vrot.lane.b32.xlu0 %v46, 121
    %v48 = vpop.permute.xlu0 %47
    %vm49 = vcmask 7168
    %s50 = scalar_lea.vmem %s1, 7
    %51 = vst.msk [vmem:[%s50] ss:$8 sm:$0xf] %vm49, %v48

// kernel: automata_block_up.5
$region0: #{automata_block_up.5}
  #allocation0 [shape = 'u32[]', space=smem, size = 0x4, offset = 0x4, fixed_abs, tag = 'smem constant byte address 0x4 - core index']
  #allocation1 [shape = 'u32[144,128]{1,0:T(1,128)}', space=vmem, size = 0x12000, scoped, tag = 'internal scratch']
  %s0 = inlined_call_operand.vmem [shape: f32[8,512], index: 0, kind: input, shape index: {}]
  %s1 = inlined_call_operand.vmem [shape: bf16[32,8], index: 1, kind: input, shape index: {}]
  %s2 = inlined_call_operand.vmem [shape: f32[32,1], index: 2, kind: input, shape index: {}]
  %s3 = inlined_call_operand.vmem [shape: bf16[8,512], index: 3, kind: input, shape index: {}]
  %s4 = inlined_call_operand.vmem [shape: bf16[32,8], index: 4, kind: input, shape index: {}]
  %s5 = inlined_call_operand.vmem [shape: f32[32,1], index: 5, kind: input, shape index: {}]
  %s6 = inlined_call_operand.vmem [shape: f32[32,512], index: 6, kind: output, shape index: {0}]
  %s7 = inlined_call_operand.vmem [shape: f32[32,512], index: 7, kind: output, shape index: {1}]
  %8 = xla_tuple %s6, %s7
  %s9 = sld [smem:[#allocation0]]
  $region42: #{automata_block_up.5} parent=0
    _
  %s11 = ssub.s32 1, %s9
  %s12 = scalar_select 0, %s11, %s9
  // Predicated region
  $region2: #{automata_block_up.5} parent=0 // pred_check
    _
  $region3: #{automata_block_up.5} parent=0 // pred_check_branch
    %14 = sbr.rel (0) target = $region5
  $region4: #{automata_block_up.5} parent=0 // pred_region
    _
  $region5: #{automata_block_up.5} parent=0 // pred_fallthru
    _
  // Predicated region
  $region6: #{automata_block_up.5} parent=0 // pred_check
    _
  $region7: #{automata_block_up.5} parent=0 // pred_check_branch
    %16 = sbr.rel (0) target = $region9
  $region8: #{automata_block_up.5} parent=0 // pred_region
    _
  $region9: #{automata_block_up.5} parent=0 // pred_fallthru
    _
  // Predicated region
  $region10: #{automata_block_up.5} parent=0 // pred_check
    _
  $region11: #{automata_block_up.5} parent=0 // pred_check_branch
    %18 = sbr.rel (0) target = $region13
  $region12: #{automata_block_up.5} parent=0 // pred_region
    _
  $region13: #{automata_block_up.5} parent=0 // pred_fallthru
    _
  // Predicated region
  $region14: #{automata_block_up.5} parent=0 // pred_check
    _
  $region15: #{automata_block_up.5} parent=0 // pred_check_branch
    %20 = sbr.rel (0) target = $region17
  $region16: #{automata_block_up.5} parent=0 // pred_region
    _
  $region17: #{automata_block_up.5} parent=0 // pred_fallthru
    _
  // Predicated region
  $region18: #{automata_block_up.5} parent=0 // pred_check
    _
  $region19: #{automata_block_up.5} parent=0 // pred_check_branch
    %22 = sbr.rel (0) target = $region21
  $region20: #{automata_block_up.5} parent=0 // pred_region
    _
  $region21: #{automata_block_up.5} parent=0 // pred_fallthru
    _
  // Predicated region
  $region22: #{automata_block_up.5} parent=0 // pred_check
    _
  $region23: #{automata_block_up.5} parent=0 // pred_check_branch
    %24 = sbr.rel (0) target = $region25
  $region24: #{automata_block_up.5} parent=0 // pred_region
    _
  $region25: #{automata_block_up.5} parent=0 // pred_fallthru
    _
  %v26 = vld [vmem:[%s0] sm:$0xff]
  %v27 = vld [vmem:[%s0 + $0x8] sm:$0xff]
  %v28 = vld [vmem:[%s0 + $0x10] sm:$0xff]
  %v29 = vld [vmem:[%s0 + $0x18] sm:$0xff]
  %v30 = vpack.c.bf16 %v26, %v26
  %v31 = vpack.c.bf16 %v27, %v27
  %v32 = vpack.c.bf16 %v28, %v28
  %v33 = vpack.c.bf16 %v29, %v29
  %v34 = vld [vmem:[%s1] sm:$0xf]
  %v35 = vld [vmem:[%s1 + $0x4] sm:$0xf]
  %v36 = vld [vmem:[%s1 + $0x8] sm:$0xf]
  %v37 = vld [vmem:[%s1 + $0xc] sm:$0xf]
  %v38 = vld [vmem:[%s2] sm:$0xff]
  %v39 = vld [vmem:[%s2 + $0x8] sm:$0xff]
  %v40 = vld [vmem:[%s2 + $0x10] sm:$0xff]
  %v41 = vld [vmem:[%s2 + $0x18] sm:$0xff]
  %43 = vset.pattern.permute.xlu0 0
  %44 = vperm.xlu0 %43, %v38
  %v45 = vpop.permute.xlu0 %44
  %48 = vset.pattern.permute.xlu0 0
  %49 = vperm.xlu0 %48, %v39
  %v50 = vpop.permute.xlu0 %49
  %53 = vset.pattern.permute.xlu0 0
  %54 = vperm.xlu0 %53, %v40
  %v55 = vpop.permute.xlu0 %54
  %58 = vset.pattern.permute.xlu0 0
  %59 = vperm.xlu0 %58, %v41
  %v60 = vpop.permute.xlu0 %59
  %v66 = vunpack.c.l.b16 %v34
  %v67 = vunpack.c.l.b16 %v35
  %v68 = vunpack.c.l.b16 %v36
  %v69 = vunpack.c.l.b16 %v37
  %v70 = vpack.c.b16 %v67, %v66
  %v71 = vpack.c.b16 %v69, %v68
  %vm72 = vcmask 64512
  %v74 = vsel %vm72, %v70, 0
  %v77 = vsel %vm72, %v71, 0
  %vm79 = vcmask 1043456
  %v81 = vsel %vm79, %v30, 0
  %v84 = vsel %vm79, %v31, 0
  %v87 = vsel %vm79, %v32, 0
  %v90 = vsel %vm79, %v33, 0
  %92 = vmatprep.subr.bf16.mxu0 0
  %93 = vmatpush1.bf16.msra.mxu0 0
  %94 = vmatprep.subr.bf16.mxu0 0
  %95 = vmatpush1.bf16.msra.mxu0 0
  %96 = vmatprep.subr.bf16.mxu0 0
  %97 = vmatpush1.bf16.msra.mxu0 0
  %98 = vmatprep.subr.bf16.mxu0 0
  %99 = vmatpush1.bf16.msra.mxu0 0
  %100 = vmatprep.subr.bf16.mxu0 0
  %101 = vmatpush1.bf16.msra.mxu0 0
  %102 = vmatprep.subr.bf16.mxu0 0
  %103 = vmatpush1.bf16.msra.mxu0 0
  %104 = vmatprep.subr.bf16.mxu0 0
  %105 = vmatpush1.bf16.msra.mxu0 0
  %106 = vmatprep.subr.bf16.mxu0 %v84
  %107 = vmatpush1.bf16.msra.mxu0 %v81
  %108 = vmatprep.subr.bf16.mxu0 0
  %109 = vmatpush2.bf16.msra.mxu0 0
  %110 = vmatprep.subr.bf16.mxu0 0
  %111 = vmatpush2.bf16.msra.mxu0 0
  %112 = vmatprep.subr.bf16.mxu0 0
  %113 = vmatpush2.bf16.msra.mxu0 0
  %114 = vmatprep.subr.bf16.mxu0 0
  %115 = vmatpush2.bf16.msra.mxu0 0
  %116 = vmatprep.subr.bf16.mxu0 0
  %117 = vmatpush2.bf16.msra.mxu0 0
  %118 = vmatprep.subr.bf16.mxu0 0
  %119 = vmatpush2.bf16.msra.mxu0 0
  %120 = vmatprep.subr.bf16.mxu0 0
  %121 = vmatpush2.bf16.msra.mxu0 0
  %122 = vmatprep.subr.bf16.mxu0 0
  %123 = vmatpush2.bf16.msra.mxu0 0
  %124 = vmatprep.mubr.bf16.mxu0 0
  %125 = vmatmul.mubr.bf16.gmra.mxu0 %v74
  %v126 = vpop.f32.mrf.mxu0
  %v127 = vadd.f32 %v45, %v126
  %v128 = vpop.f32.mrf.mxu0
  %v129 = vadd.f32 %v45, %v128
  %v130 = vpop.f32.mrf.mxu0
  %v131 = vadd.f32 %v50, %v130
  %v132 = vpop.f32.mrf.mxu0
  %v133 = vadd.f32 %v50, %v132
  %134 = vmatprep.mubr.bf16.mxu0 0
  %135 = vmatmul.mubr.bf16.gmra.mxu0 %v77
  %v136 = vpop.f32.mrf.mxu0
  %v137 = vadd.f32 %v55, %v136
  %v138 = vpop.f32.mrf.mxu0
  %v139 = vadd.f32 %v55, %v138
  %v140 = vpop.f32.mrf.mxu0
  %v141 = vadd.f32 %v60, %v140
  %v142 = vpop.f32.mrf.mxu0
  %v143 = vadd.f32 %v60, %v142
  %144 = vdwg.mxu0
  %145 = vmatprep.subr.bf16.mxu0 0
  %146 = vmatpush1.bf16.msra.mxu0 0
  %147 = vmatprep.subr.bf16.mxu0 0
  %148 = vmatpush1.bf16.msra.mxu0 0
  %149 = vmatprep.subr.bf16.mxu0 0
  %150 = vmatpush1.bf16.msra.mxu0 0
  %151 = vmatprep.subr.bf16.mxu0 0
  %152 = vmatpush1.bf16.msra.mxu0 0
  %153 = vmatprep.subr.bf16.mxu0 0
  %154 = vmatpush1.bf16.msra.mxu0 0
  %155 = vmatprep.subr.bf16.mxu0 0
  %156 = vmatpush1.bf16.msra.mxu0 0
  %157 = vmatprep.subr.bf16.mxu0 0
  %158 = vmatpush1.bf16.msra.mxu0 0
  %159 = vmatprep.subr.bf16.mxu0 %v90
  %160 = vmatpush1.bf16.msra.mxu0 %v87
  %161 = vmatprep.subr.bf16.mxu0 0
  %162 = vmatpush2.bf16.msra.mxu0 0
  %163 = vmatprep.subr.bf16.mxu0 0
  %164 = vmatpush2.bf16.msra.mxu0 0
  %165 = vmatprep.subr.bf16.mxu0 0
  %166 = vmatpush2.bf16.msra.mxu0 0
  %167 = vmatprep.subr.bf16.mxu0 0
  %168 = vmatpush2.bf16.msra.mxu0 0
  %169 = vmatprep.subr.bf16.mxu0 0
  %170 = vmatpush2.bf16.msra.mxu0 0
  %171 = vmatprep.subr.bf16.mxu0 0
  %172 = vmatpush2.bf16.msra.mxu0 0
  %173 = vmatprep.subr.bf16.mxu0 0
  %174 = vmatpush2.bf16.msra.mxu0 0
  %175 = vmatprep.subr.bf16.mxu0 0
  %176 = vmatpush2.bf16.msra.mxu0 0
  %177 = vmatprep.mubr.bf16.mxu0 0
  %178 = vmatmul.mubr.bf16.gmra.mxu0 %v74
  %v179 = vpop.f32.mrf.mxu0
  %v180 = vadd.f32 %v45, %v179
  %v181 = vpop.f32.mrf.mxu0
  %v182 = vadd.f32 %v45, %v181
  %v183 = vpop.f32.mrf.mxu0
  %v184 = vadd.f32 %v50, %v183
  %v185 = vpop.f32.mrf.mxu0
  %v186 = vadd.f32 %v50, %v185
  %187 = vmatprep.mubr.bf16.mxu0 0
  %188 = vmatmul.mubr.bf16.gmra.mxu0 %v77
  %v189 = vpop.f32.mrf.mxu0
  %v190 = vadd.f32 %v55, %v189
  %v191 = vpop.f32.mrf.mxu0
  %v192 = vadd.f32 %v55, %v191
  %v193 = vpop.f32.mrf.mxu0
  %v194 = vadd.f32 %v60, %v193
  %v195 = vpop.f32.mrf.mxu0
  %v196 = vadd.f32 %v60, %v195
  %197 = vdwg.mxu0
  %198 = vst [vmem:[%s6] sm:$0xff] %v127
  %199 = vst [vmem:[%s6 + $0x8] sm:$0xff] %v129
  %200 = vst [vmem:[%s6 + $0x10] sm:$0xff] %v180
  %201 = vst [vmem:[%s6 + $0x18] sm:$0xff] %v182
  %202 = vst [vmem:[%s6 + $0x20] sm:$0xff] %v131
  %203 = vst [vmem:[%s6 + $0x28] sm:$0xff] %v133
  %204 = vst [vmem:[%s6 + $0x30] sm:$0xff] %v184
  %205 = vst [vmem:[%s6 + $0x38] sm:$0xff] %v186
  %206 = vst [vmem:[%s6 + $0x40] sm:$0xff] %v137
  %207 = vst [vmem:[%s6 + $0x48] sm:$0xff] %v139
  %208 = vst [vmem:[%s6 + $0x50] sm:$0xff] %v190
  %209 = vst [vmem:[%s6 + $0x58] sm:$0xff] %v192
  %210 = vst [vmem:[%s6 + $0x60] sm:$0xff] %v141
  %211 = vst [vmem:[%s6 + $0x68] sm:$0xff] %v143
  %212 = vst [vmem:[%s6 + $0x70] sm:$0xff] %v194
  %213 = vst [vmem:[%s6 + $0x78] sm:$0xff] %v196
  %v214 = vld [vmem:[%s4] sm:$0xf]
  %v215 = vld [vmem:[%s4 + $0x4] sm:$0xf]
  %v216 = vld [vmem:[%s4 + $0x8] sm:$0xf]
  %v217 = vld [vmem:[%s4 + $0xc] sm:$0xf]
  %v218 = vld [vmem:[%s3] sm:$0xff]
  %v219 = vld [vmem:[%s3 + $0x8] sm:$0xff]
  %v220 = vld [vmem:[%s5] sm:$0xff]
  %v221 = vld [vmem:[%s5 + $0x8] sm:$0xff]
  %v222 = vld [vmem:[%s5 + $0x10] sm:$0xff]
  %v223 = vld [vmem:[%s5 + $0x18] sm:$0xff]
  %225 = vset.pattern.permute.xlu0 0
  %226 = vperm.xlu0 %225, %v220
  %v227 = vpop.permute.xlu0 %226
  %230 = vset.pattern.permute.xlu0 0
  %231 = vperm.xlu0 %230, %v221
  %v232 = vpop.permute.xlu0 %231
  %235 = vset.pattern.permute.xlu0 0
  %236 = vperm.xlu0 %235, %v222
  %v237 = vpop.permute.xlu0 %236
  %240 = vset.pattern.permute.xlu0 0
  %241 = vperm.xlu0 %240, %v223
  %v242 = vpop.permute.xlu0 %241
  %v248 = vunpack.c.l.b16 %v214
  %v249 = vunpack.c.l.b16 %v215
  %v250 = vunpack.c.l.b16 %v216
  %v251 = vunpack.c.l.b16 %v217
  %v252 = vpack.c.b16 %v249, %v248
  %v253 = vpack.c.b16 %v251, %v250
  %v256 = vunpack.c.l.b16 %v218
  %v257 = vunpack.c.h.b16 %v218
  %v258 = vunpack.c.l.b16 %v219
  %v259 = vunpack.c.h.b16 %v219
  %v260 = vpack.c.b16 %v256, %v256
  %v261 = vpack.c.b16 %v257, %v257
  %v262 = vpack.c.b16 %v258, %v258
  %v263 = vpack.c.b16 %v259, %v259
  %v265 = vsel %vm72, %v252, 0
  %v268 = vsel %vm72, %v253, 0
  %v271 = vsel %vm79, %v260, 0
  %v274 = vsel %vm79, %v261, 0
  %v277 = vsel %vm79, %v262, 0
  %v280 = vsel %vm79, %v263, 0
  %282 = vmatprep.subr.bf16.mxu0 0
  %283 = vmatpush1.bf16.msra.mxu0 0
  %284 = vmatprep.subr.bf16.mxu0 0
  %285 = vmatpush1.bf16.msra.mxu0 0
  %286 = vmatprep.subr.bf16.mxu0 0
  %287 = vmatpush1.bf16.msra.mxu0 0
  %288 = vmatprep.subr.bf16.mxu0 0
  %289 = vmatpush1.bf16.msra.mxu0 0
  %290 = vmatprep.subr.bf16.mxu0 0
  %291 = vmatpush1.bf16.msra.mxu0 0
  %292 = vmatprep.subr.bf16.mxu0 0
  %293 = vmatpush1.bf16.msra.mxu0 0
  %294 = vmatprep.subr.bf16.mxu0 0
  %295 = vmatpush1.bf16.msra.mxu0 0
  %296 = vmatprep.subr.bf16.mxu0 %v274
  %297 = vmatpush1.bf16.msra.mxu0 %v271
  %298 = vmatprep.subr.bf16.mxu0 0
  %299 = vmatpush2.bf16.msra.mxu0 0
  %300 = vmatprep.subr.bf16.mxu0 0
  %301 = vmatpush2.bf16.msra.mxu0 0
  %302 = vmatprep.subr.bf16.mxu0 0
  %303 = vmatpush2.bf16.msra.mxu0 0
  %304 = vmatprep.subr.bf16.mxu0 0
  %305 = vmatpush2.bf16.msra.mxu0 0
  %306 = vmatprep.subr.bf16.mxu0 0
  %307 = vmatpush2.bf16.msra.mxu0 0
  %308 = vmatprep.subr.bf16.mxu0 0
  %309 = vmatpush2.bf16.msra.mxu0 0
  %310 = vmatprep.subr.bf16.mxu0 0
  %311 = vmatpush2.bf16.msra.mxu0 0
  %312 = vmatprep.subr.bf16.mxu0 0
  %313 = vmatpush2.bf16.msra.mxu0 0
  %314 = vmatprep.mubr.bf16.mxu0 0
  %315 = vmatmul.mubr.bf16.gmra.mxu0 %v265
  %v316 = vpop.f32.mrf.mxu0
  %v317 = vadd.f32 %v227, %v316
  %v318 = vpop.f32.mrf.mxu0
  %v319 = vadd.f32 %v227, %v318
  %v320 = vpop.f32.mrf.mxu0
  %v321 = vadd.f32 %v232, %v320
  %v322 = vpop.f32.mrf.mxu0
  %v323 = vadd.f32 %v232, %v322
  %324 = vmatprep.mubr.bf16.mxu0 0
  %325 = vmatmul.mubr.bf16.gmra.mxu0 %v268
  %v326 = vpop.f32.mrf.mxu0
  %v327 = vadd.f32 %v237, %v326
  %v328 = vpop.f32.mrf.mxu0
  %v329 = vadd.f32 %v237, %v328
  %v330 = vpop.f32.mrf.mxu0
  %v331 = vadd.f32 %v242, %v330
  %v332 = vpop.f32.mrf.mxu0
  %v333 = vadd.f32 %v242, %v332
  %334 = vdwg.mxu0
  %335 = vmatprep.subr.bf16.mxu0 0
  %336 = vmatpush1.bf16.msra.mxu0 0
  %337 = vmatprep.subr.bf16.mxu0 0
  %338 = vmatpush1.bf16.msra.mxu0 0
  %339 = vmatprep.subr.bf16.mxu0 0
  %340 = vmatpush1.bf16.msra.mxu0 0
  %341 = vmatprep.subr.bf16.mxu0 0
  %342 = vmatpush1.bf16.msra.mxu0 0
  %343 = vmatprep.subr.bf16.mxu0 0
  %344 = vmatpush1.bf16.msra.mxu0 0
  %345 = vmatprep.subr.bf16.mxu0 0
  %346 = vmatpush1.bf16.msra.mxu0 0
  %347 = vmatprep.subr.bf16.mxu0 0
  %348 = vmatpush1.bf16.msra.mxu0 0
  %349 = vmatprep.subr.bf16.mxu0 %v280
  %350 = vmatpush1.bf16.msra.mxu0 %v277
  %351 = vmatprep.subr.bf16.mxu0 0
  %352 = vmatpush2.bf16.msra.mxu0 0
  %353 = vmatprep.subr.bf16.mxu0 0
  %354 = vmatpush2.bf16.msra.mxu0 0
  %355 = vmatprep.subr.bf16.mxu0 0
  %356 = vmatpush2.bf16.msra.mxu0 0
  %357 = vmatprep.subr.bf16.mxu0 0
  %358 = vmatpush2.bf16.msra.mxu0 0
  %359 = vmatprep.subr.bf16.mxu0 0
  %360 = vmatpush2.bf16.msra.mxu0 0
  %361 = vmatprep.subr.bf16.mxu0 0
  %362 = vmatpush2.bf16.msra.mxu0 0
  %363 = vmatprep.subr.bf16.mxu0 0
  %364 = vmatpush2.bf16.msra.mxu0 0
  %365 = vmatprep.subr.bf16.mxu0 0
  %366 = vmatpush2.bf16.msra.mxu0 0
  %367 = vmatprep.mubr.bf16.mxu0 0
  %368 = vmatmul.mubr.bf16.gmra.mxu0 %v265
  %v369 = vpop.f32.mrf.mxu0
  %v370 = vadd.f32 %v227, %v369
  %v371 = vpop.f32.mrf.mxu0
  %v372 = vadd.f32 %v227, %v371
  %v373 = vpop.f32.mrf.mxu0
  %v374 = vadd.f32 %v232, %v373
  %v375 = vpop.f32.mrf.mxu0
  %v376 = vadd.f32 %v232, %v375
  %377 = vmatprep.mubr.bf16.mxu0 0
  %378 = vmatmul.mubr.bf16.gmra.mxu0 %v268
  %v379 = vpop.f32.mrf.mxu0
  %v380 = vadd.f32 %v237, %v379
  %v381 = vpop.f32.mrf.mxu0
  %v382 = vadd.f32 %v237, %v381
  %v383 = vpop.f32.mrf.mxu0
  %v384 = vadd.f32 %v242, %v383
  %v385 = vpop.f32.mrf.mxu0
  %v386 = vadd.f32 %v242, %v385
  %387 = vdwg.mxu0
  %388 = vst [vmem:[%s7] sm:$0xff] %v317
  %389 = vst [vmem:[%s7 + $0x8] sm:$0xff] %v319
  %390 = vst [vmem:[%s7 + $0x10] sm:$0xff] %v370
  %391 = vst [vmem:[%s7 + $0x18] sm:$0xff] %v372
  %392 = vst [vmem:[%s7 + $0x20] sm:$0xff] %v321
  %393 = vst [vmem:[%s7 + $0x28] sm:$0xff] %v323
  %394 = vst [vmem:[%s7 + $0x30] sm:$0xff] %v374
  %395 = vst [vmem:[%s7 + $0x38] sm:$0xff] %v376
  %396 = vst [vmem:[%s7 + $0x40] sm:$0xff] %v327
  %397 = vst [vmem:[%s7 + $0x48] sm:$0xff] %v329
  %398 = vst [vmem:[%s7 + $0x50] sm:$0xff] %v380
  %399 = vst [vmem:[%s7 + $0x58] sm:$0xff] %v382
  %400 = vst [vmem:[%s7 + $0x60] sm:$0xff] %v331
  %401 = vst [vmem:[%s7 + $0x68] sm:$0xff] %v333
  %402 = vst [vmem:[%s7 + $0x70] sm:$0xff] %v384
  %403 = vst [vmem:[%s7 + $0x78] sm:$0xff] %v386
  // Predicated region
  $region26: #{automata_block_up.5} parent=0 // pred_check
    _
  $region27: #{automata_block_up.5} parent=0 // pred_check_branch
    %405 = sbr.rel (0) target = $region29
  $region28: #{automata_block_up.5} parent=0 // pred_region
    _
  $region29: #{automata_block_up.5} parent=0 // pred_fallthru
    _
  // Predicated region
  $region30: #{automata_block_up.5} parent=0 // pred_check
    _
  $region31: #{automata_block_up.5} parent=0 // pred_check_branch
    %407 = sbr.rel (0) target = $region33
  $region32: #{automata_block_up.5} parent=0 // pred_region
    _
  $region33: #{automata_block_up.5} parent=0 // pred_fallthru
    _
  // Predicated region
  $region34: #{automata_block_up.5} parent=0 // pred_check
    _
  $region35: #{automata_block_up.5} parent=0 // pred_check_branch
    %409 = sbr.rel (0) target = $region37
  $region36: #{automata_block_up.5} parent=0 // pred_region
    _
  $region37: #{automata_block_up.5} parent=0 // pred_fallthru
    _
  // Predicated region
  $region38: #{automata_block_up.5} parent=0 // pred_check
    _
  $region39: #{automata_block_up.5} parent=0 // pred_check_branch
    %411 = sbr.rel (0) target = $region41
  $region40: #{automata_block_up.5} parent=0 // pred_region
    _
  $region41: #{automata_block_up.5} parent=0 // pred_fallthru
    _

// kernel: automata_block_up.3
$region0: #{automata_block_up.3}
  #allocation0 [shape = 'u32[]', space=smem, size = 0x4, offset = 0x4, fixed_abs, tag = 'smem constant byte address 0x4 - core index']
  #allocation1 [shape = 'u32[144,128]{1,0:T(1,128)}', space=vmem, size = 0x12000, scoped, tag = 'internal scratch']
  %s0 = inlined_call_operand.vmem [shape: f32[4,512], index: 0, kind: input, shape index: {}]
  %s1 = inlined_call_operand.vmem [shape: f32[9,8,4], index: 1, kind: input, shape index: {}]
  %s2 = inlined_call_operand.vmem [shape: f32[8,1], index: 2, kind: input, shape index: {}]
  %s3 = inlined_call_operand.vmem [shape: f32[8,512], index: 3, kind: output, shape index: {}]
  %s4 = sld [smem:[#allocation0]]
  $region22: #{automata_block_up.3} parent=0
    _
  %s6 = ssub.s32 1, %s4
  %s7 = scalar_select 0, %s6, %s4
  // Predicated region
  $region2: #{automata_block_up.3} parent=0 // pred_check
    _
  $region3: #{automata_block_up.3} parent=0 // pred_check_branch
    %9 = sbr.rel (0) target = $region5
  $region4: #{automata_block_up.3} parent=0 // pred_region
    _
  $region5: #{automata_block_up.3} parent=0 // pred_fallthru
    _
  // Predicated region
  $region6: #{automata_block_up.3} parent=0 // pred_check
    _
  $region7: #{automata_block_up.3} parent=0 // pred_check_branch
    %11 = sbr.rel (0) target = $region9
  $region8: #{automata_block_up.3} parent=0 // pred_region
    _
  $region9: #{automata_block_up.3} parent=0 // pred_fallthru
    _
  // Predicated region
  $region10: #{automata_block_up.3} parent=0 // pred_check
    _
  $region11: #{automata_block_up.3} parent=0 // pred_check_branch
    %13 = sbr.rel (0) target = $region13
  $region12: #{automata_block_up.3} parent=0 // pred_region
    _
  $region13: #{automata_block_up.3} parent=0 // pred_fallthru
    _
  %v14 = vld [vmem:[%s0] sm:$0xff]
  %v15 = vld [vmem:[%s0 + $0x8] sm:$0xff]
  %v16 = vlaneseq
  %v17 = vand.u32 %v16, 127
  %v18 = vadd.s32 %v17, 128
  %v19 = vadd.s32 %v17, 256
  %v20 = vadd.s32 %v17, 384
  %vm21 = vcmp.lt.s32.totalorder %v17, 0
  %v22 = vsub.s32 0, %v17
  %v23 = vsel %vm21, %v22, %v17
  %v24 = vshrl.u32 %v23, 4
  %v25 = vand.u32 %v23, 15
  %v26 = vsub.s32 0, %v25
  %v27 = vsel %vm21, %v26, %v25
  %vm28 = vcmp.lt.s32.totalorder %v18, 0
  %v29 = vsub.s32 0, %v18
  %v30 = vsel %vm28, %v29, %v18
  %v31 = vshrl.u32 %v30, 4
  %v32 = vand.u32 %v30, 15
  %v33 = vsub.s32 0, %v32
  %v34 = vsel %vm28, %v33, %v32
  %vm35 = vcmp.lt.s32.totalorder %v19, 0
  %v36 = vsub.s32 0, %v19
  %v37 = vsel %vm35, %v36, %v19
  %v38 = vshrl.u32 %v37, 4
  %v39 = vand.u32 %v37, 15
  %v40 = vsub.s32 0, %v39
  %v41 = vsel %vm35, %v40, %v39
  %vm42 = vcmp.lt.s32.totalorder %v20, 0
  %v43 = vsub.s32 0, %v20
  %v44 = vsel %vm42, %v43, %v20
  %v45 = vshrl.u32 %v44, 4
  %v46 = vand.u32 %v44, 15
  %v47 = vsub.s32 0, %v46
  %v48 = vsel %vm42, %v47, %v46
  %vm49 = vcmp.ne.s32.totalorder %v27, 0
  %vm50 = vcmp.ne.s32.totalorder %v34, 0
  %vm51 = vcmp.ne.s32.totalorder %v41, 0
  %vm52 = vcmp.ne.s32.totalorder %v48, 0
  %vm53 = vcmp.lt.s32.totalorder %v27, 0
  %vm54 = vcmp.lt.s32.totalorder %v34, 0
  %vm55 = vcmp.lt.s32.totalorder %v41, 0
  %vm56 = vcmp.lt.s32.totalorder %v48, 0
  %vm57 = vmand %vm53, %vm49
  %vm58 = vmand %vm54, %vm50
  %vm59 = vmand %vm55, %vm51
  %vm60 = vmand %vm56, %vm52
  %v61 = vadd.s32 %v27, 16
  %v62 = vadd.s32 %v34, 16
  %v63 = vadd.s32 %v41, 16
  %v64 = vadd.s32 %v48, 16
  %v65 = vsel %vm57, %v61, %v27
  %v66 = vsel %vm58, %v62, %v34
  %v67 = vsel %vm59, %v63, %v41
  %v68 = vsel %vm60, %v64, %v48
  %vm69 = vcmp.lt.s32.totalorder %v17, 0
  %v70 = vsub.s32 0, %v17
  %v71 = vsel %vm69, %v70, %v17
  %v72 = vshrl.u32 %v71, 8
  %v73 = vand.u32 %v71, 255
  %v74 = vsub.s32 0, %v73
  %v75 = vsel %vm69, %v74, %v73
  %vm76 = vcmp.lt.s32.totalorder %v18, 0
  %v77 = vsub.s32 0, %v18
  %v78 = vsel %vm76, %v77, %v18
  %v79 = vshrl.u32 %v78, 8
  %v80 = vand.u32 %v78, 255
  %v81 = vsub.s32 0, %v80
  %v82 = vsel %vm76, %v81, %v80
  %vm83 = vcmp.lt.s32.totalorder %v19, 0
  %v84 = vsub.s32 0, %v19
  %v85 = vsel %vm83, %v84, %v19
  %v86 = vshrl.u32 %v85, 8
  %v87 = vand.u32 %v85, 255
  %v88 = vsub.s32 0, %v87
  %v89 = vsel %vm83, %v88, %v87
  %vm90 = vcmp.lt.s32.totalorder %v20, 0
  %v91 = vsub.s32 0, %v20
  %v92 = vsel %vm90, %v91, %v20
  %v93 = vshrl.u32 %v92, 8
  %v94 = vand.u32 %v92, 255
  %v95 = vsub.s32 0, %v94
  %v96 = vsel %vm90, %v95, %v94
  %vm97 = vcmp.ne.s32.totalorder %v75, 0
  %vm98 = vcmp.ne.s32.totalorder %v82, 0
  %vm99 = vcmp.ne.s32.totalorder %v89, 0
  %vm100 = vcmp.ne.s32.totalorder %v96, 0
  %vm101 = vcmp.lt.s32.totalorder %v75, 0
  %vm102 = vcmp.lt.s32.totalorder %v82, 0
  %vm103 = vcmp.lt.s32.totalorder %v89, 0
  %vm104 = vcmp.lt.s32.totalorder %v96, 0
  %vm105 = vmand %vm101, %vm97
  %vm106 = vmand %vm102, %vm98
  %vm107 = vmand %vm103, %vm99
  %vm108 = vmand %vm104, %vm100
  %v109 = vadd.s32 %v75, 256
  %v110 = vadd.s32 %v82, 256
  %v111 = vadd.s32 %v89, 256
  %v112 = vadd.s32 %v96, 256
  %v113 = vsel %vm105, %v109, %v75
  %v114 = vsel %vm106, %v110, %v82
  %v115 = vsel %vm107, %v111, %v89
  %v116 = vsel %vm108, %v112, %v96
  %vm117 = vcmp.ne.s32.totalorder %v65, 0
  %vm118 = vcmp.ne.s32.totalorder %v66, 0
  %vm119 = vcmp.ne.s32.totalorder %v67, 0
  %vm120 = vcmp.ne.s32.totalorder %v68, 0
  %vm121 = vcmp.ne.s32.totalorder %v65, 15
  %vm122 = vcmp.ne.s32.totalorder %v66, 15
  %vm123 = vcmp.ne.s32.totalorder %v67, 15
  %vm124 = vcmp.ne.s32.totalorder %v68, 15
  %vm125 = vcmp.ge.s32.totalorder %v113, 16
  %vm126 = vcmp.ge.s32.totalorder %v114, 16
  %vm127 = vcmp.ge.s32.totalorder %v115, 16
  %vm128 = vcmp.ge.s32.totalorder %v116, 16
  %vm129 = vcmp.lt.s32.totalorder %v113, 240
  %vm130 = vcmp.lt.s32.totalorder %v114, 240
  %vm131 = vcmp.lt.s32.totalorder %v115, 240
  %vm132 = vcmp.lt.s32.totalorder %v116, 240
  %v135 = vcombine.high %v14, %v14
  %v136 = vcombine.high %v15, %v15
  %139 = vrot.lane.b32.xlu0 %v14, 17
  %v140 = vpop.permute.xlu0 %139
  %141 = vrot.lane.b32.xlu0 %v135, 17
  %v142 = vpop.permute.xlu0 %141
  %143 = vrot.lane.b32.xlu0 %v15, 17
  %v144 = vpop.permute.xlu0 %143
  %145 = vrot.lane.b32.xlu0 %v136, 17
  %v146 = vpop.permute.xlu0 %145
  %vm147 = vcmp.lt.s32.totalorder %v17, 17
  %v148 = vsel %vm147, %v144, %v146
  %v149 = vsel %vm147, %v142, %v144
  %v150 = vsel %vm147, %v140, %v142
  %v151 = vsel %vm147, %v146, %v140
  %vm152 = vmand %vm125, %vm117
  %vm153 = vmand %vm126, %vm118
  %vm154 = vmand %vm127, %vm119
  %vm155 = vmand %vm128, %vm120
  %v156 = vsel %vm152, 1, 0
  %v157 = vsel %vm153, 1, 0
  %v158 = vsel %vm154, 1, 0
  %v159 = vsel %vm155, 1, 0
  %vm160 = vcmp.eq.s32.totalorder %v156, 1
  %vm161 = vcmp.eq.s32.totalorder %v157, 1
  %vm162 = vcmp.eq.s32.totalorder %v158, 1
  %vm163 = vcmp.eq.s32.totalorder %v159, 1
  %v164 = vsel %vm160, %v151, 0.0
  %v165 = vsel %vm161, %v150, 0.0
  %v166 = vsel %vm162, %v149, 0.0
  %v167 = vsel %vm163, %v148, 0.0
  %v168 = vld [vmem:[%s1] sm:$0xff]
  %169 = vrot.lane.b32.xlu0 %v14, 16
  %v170 = vpop.permute.xlu0 %169
  %171 = vrot.lane.b32.xlu0 %v135, 16
  %v172 = vpop.permute.xlu0 %171
  %173 = vrot.lane.b32.xlu0 %v15, 16
  %v174 = vpop.permute.xlu0 %173
  %175 = vrot.lane.b32.xlu0 %v136, 16
  %v176 = vpop.permute.xlu0 %175
  %vm177 = vcmp.lt.s32.totalorder %v17, 16
  %v178 = vsel %vm177, %v174, %v176
  %v179 = vsel %vm177, %v172, %v174
  %v180 = vsel %vm177, %v170, %v172
  %v181 = vsel %vm177, %v176, %v170
  %v182 = vsel %vm125, 1, 0
  %v183 = vsel %vm126, 1, 0
  %v184 = vsel %vm127, 1, 0
  %v185 = vsel %vm128, 1, 0
  %vm186 = vcmp.eq.s32.totalorder %v182, 1
  %vm187 = vcmp.eq.s32.totalorder %v183, 1
  %vm188 = vcmp.eq.s32.totalorder %v184, 1
  %vm189 = vcmp.eq.s32.totalorder %v185, 1
  %v190 = vsel %vm186, %v181, 0.0
  %v191 = vsel %vm187, %v180, 0.0
  %v192 = vsel %vm188, %v179, 0.0
  %v193 = vsel %vm189, %v178, 0.0
  %s194 = scalar_lea.vmem %s1, 8
  %v195 = vld [vmem:[%s194] sm:$0xff]
  %vm196 = vcmask 31744
  %v198 = vsel %vm196, %v195, 0
  %vm200 = vcmask 1043456
  %v202 = vsel %vm200, %v190, 0
  %v205 = vsel %vm200, %v191, 0
  %v208 = vsel %vm200, %v192, 0
  %v211 = vsel %vm200, %v193, 0
  %213 = vmatprep.subr.mxu0 0.0
  %214 = vmatpush1.msra.mxu0 0.0
  %215 = vmatprep.subr.mxu0 0.0
  %216 = vmatpush1.msra.mxu0 0.0
  %217 = vmatprep.subr.mxu0 0.0
  %218 = vmatpush1.msra.mxu0 0.0
  %219 = vmatprep.subr.mxu0 0.0
  %220 = vmatpush1.msra.mxu0 0.0
  %221 = vmatprep.subr.mxu0 0.0
  %222 = vmatpush1.msra.mxu0 0.0
  %223 = vmatprep.subr.mxu0 0.0
  %224 = vmatpush1.msra.mxu0 0.0
  %225 = vmatprep.subr.mxu0 0.0
  %226 = vmatpush1.msra.mxu0 0.0
  %227 = vmatprep.subr.mxu0 0.0
  %228 = vmatpush1.msra.mxu0 0.0
  %229 = vmatprep.subr.mxu0 0.0
  %230 = vmatpush1.msra.mxu0 0.0
  %231 = vmatprep.subr.mxu0 0.0
  %232 = vmatpush1.msra.mxu0 0.0
  %233 = vmatprep.subr.mxu0 0.0
  %234 = vmatpush1.msra.mxu0 0.0
  %235 = vmatprep.subr.mxu0 0.0
  %236 = vmatpush1.msra.mxu0 0.0
  %237 = vmatprep.subr.mxu0 0.0
  %238 = vmatpush1.msra.mxu0 0.0
  %239 = vmatprep.subr.mxu0 0.0
  %240 = vmatpush1.msra.mxu0 0.0
  %241 = vmatprep.subr.mxu0 0.0
  %242 = vmatpush1.msra.mxu0 0.0
  %243 = vmatprep.subr.mxu0 %v205
  %244 = vmatpush1.msra.mxu0 %v202
  %245 = vmatprep.subr.mxu0 0.0
  %246 = vmatpush2.msra.mxu0 0.0
  %247 = vmatprep.subr.mxu0 0.0
  %248 = vmatpush2.msra.mxu0 0.0
  %249 = vmatprep.subr.mxu0 0.0
  %250 = vmatpush2.msra.mxu0 0.0
  %251 = vmatprep.subr.mxu0 0.0
  %252 = vmatpush2.msra.mxu0 0.0
  %253 = vmatprep.subr.mxu0 0.0
  %254 = vmatpush2.msra.mxu0 0.0
  %255 = vmatprep.subr.mxu0 0.0
  %256 = vmatpush2.msra.mxu0 0.0
  %257 = vmatprep.subr.mxu0 0.0
  %258 = vmatpush2.msra.mxu0 0.0
  %259 = vmatprep.subr.mxu0 0.0
  %260 = vmatpush2.msra.mxu0 0.0
  %261 = vmatprep.subr.mxu0 0.0
  %262 = vmatpush2.msra.mxu0 0.0
  %263 = vmatprep.subr.mxu0 0.0
  %264 = vmatpush2.msra.mxu0 0.0
  %265 = vmatprep.subr.mxu0 0.0
  %266 = vmatpush2.msra.mxu0 0.0
  %267 = vmatprep.subr.mxu0 0.0
  %268 = vmatpush2.msra.mxu0 0.0
  %269 = vmatprep.subr.mxu0 0.0
  %270 = vmatpush2.msra.mxu0 0.0
  %271 = vmatprep.subr.mxu0 0.0
  %272 = vmatpush2.msra.mxu0 0.0
  %273 = vmatprep.subr.mxu0 0.0
  %274 = vmatpush2.msra.mxu0 0.0
  %275 = vmatprep.subr.mxu0 0.0
  %276 = vmatpush2.msra.mxu0 0.0
  %277 = vmatprep.mubr.f32.mxu0 0.0
  %278 = vmatmul.mubr.f32.gmra.mxu0 %v198
  %v279 = vpop.f32.mrf.mxu0
  %v280 = vadd.f32 0.0, %v279
  %v281 = vpop.f32.mrf.mxu0
  %v282 = vadd.f32 0.0, %v281
  %283 = vdwg.mxu0
  %284 = vmatprep.subr.mxu0 0.0
  %285 = vmatpush1.msra.mxu0 0.0
  %286 = vmatprep.subr.mxu0 0.0
  %287 = vmatpush1.msra.mxu0 0.0
  %288 = vmatprep.subr.mxu0 0.0
  %289 = vmatpush1.msra.mxu0 0.0
  %290 = vmatprep.subr.mxu0 0.0
  %291 = vmatpush1.msra.mxu0 0.0
  %292 = vmatprep.subr.mxu0 0.0
  %293 = vmatpush1.msra.mxu0 0.0
  %294 = vmatprep.subr.mxu0 0.0
  %295 = vmatpush1.msra.mxu0 0.0
  %296 = vmatprep.subr.mxu0 0.0
  %297 = vmatpush1.msra.mxu0 0.0
  %298 = vmatprep.subr.mxu0 0.0
  %299 = vmatpush1.msra.mxu0 0.0
  %300 = vmatprep.subr.mxu0 0.0
  %301 = vmatpush1.msra.mxu0 0.0
  %302 = vmatprep.subr.mxu0 0.0
  %303 = vmatpush1.msra.mxu0 0.0
  %304 = vmatprep.subr.mxu0 0.0
  %305 = vmatpush1.msra.mxu0 0.0
  %306 = vmatprep.subr.mxu0 0.0
  %307 = vmatpush1.msra.mxu0 0.0
  %308 = vmatprep.subr.mxu0 0.0
  %309 = vmatpush1.msra.mxu0 0.0
  %310 = vmatprep.subr.mxu0 0.0
  %311 = vmatpush1.msra.mxu0 0.0
  %312 = vmatprep.subr.mxu0 0.0
  %313 = vmatpush1.msra.mxu0 0.0
  %314 = vmatprep.subr.mxu0 %v211
  %315 = vmatpush1.msra.mxu0 %v208
  %316 = vmatprep.subr.mxu0 0.0
  %317 = vmatpush2.msra.mxu0 0.0
  %318 = vmatprep.subr.mxu0 0.0
  %319 = vmatpush2.msra.mxu0 0.0
  %320 = vmatprep.subr.mxu0 0.0
  %321 = vmatpush2.msra.mxu0 0.0
  %322 = vmatprep.subr.mxu0 0.0
  %323 = vmatpush2.msra.mxu0 0.0
  %324 = vmatprep.subr.mxu0 0.0
  %325 = vmatpush2.msra.mxu0 0.0
  %326 = vmatprep.subr.mxu0 0.0
  %327 = vmatpush2.msra.mxu0 0.0
  %328 = vmatprep.subr.mxu0 0.0
  %329 = vmatpush2.msra.mxu0 0.0
  %330 = vmatprep.subr.mxu0 0.0
  %331 = vmatpush2.msra.mxu0 0.0
  %332 = vmatprep.subr.mxu0 0.0
  %333 = vmatpush2.msra.mxu0 0.0
  %334 = vmatprep.subr.mxu0 0.0
  %335 = vmatpush2.msra.mxu0 0.0
  %336 = vmatprep.subr.mxu0 0.0
  %337 = vmatpush2.msra.mxu0 0.0
  %338 = vmatprep.subr.mxu0 0.0
  %339 = vmatpush2.msra.mxu0 0.0
  %340 = vmatprep.subr.mxu0 0.0
  %341 = vmatpush2.msra.mxu0 0.0
  %342 = vmatprep.subr.mxu0 0.0
  %343 = vmatpush2.msra.mxu0 0.0
  %344 = vmatprep.subr.mxu0 0.0
  %345 = vmatpush2.msra.mxu0 0.0
  %346 = vmatprep.subr.mxu0 0.0
  %347 = vmatpush2.msra.mxu0 0.0
  %348 = vmatprep.mubr.f32.mxu0 0.0
  %349 = vmatmul.mubr.f32.gmra.mxu0 %v198
  %v350 = vpop.f32.mrf.mxu0
  %v351 = vadd.f32 0.0, %v350
  %v352 = vpop.f32.mrf.mxu0
  %v353 = vadd.f32 0.0, %v352
  %354 = vdwg.mxu0
  %v356 = vsel %vm196, %v168, 0
  %v359 = vsel %vm200, %v164, 0
  %v362 = vsel %vm200, %v165, 0
  %v365 = vsel %vm200, %v166, 0
  %v368 = vsel %vm200, %v167, 0
  %370 = vmatprep.subr.mxu0 0.0
  %371 = vmatpush1.msra.mxu0 0.0
  %372 = vmatprep.subr.mxu0 0.0
  %373 = vmatpush1.msra.mxu0 0.0
  %374 = vmatprep.subr.mxu0 0.0
  %375 = vmatpush1.msra.mxu0 0.0
  %376 = vmatprep.subr.mxu0 0.0
  %377 = vmatpush1.msra.mxu0 0.0
  %378 = vmatprep.subr.mxu0 0.0
  %379 = vmatpush1.msra.mxu0 0.0
  %380 = vmatprep.subr.mxu0 0.0
  %381 = vmatpush1.msra.mxu0 0.0
  %382 = vmatprep.subr.mxu0 0.0
  %383 = vmatpush1.msra.mxu0 0.0
  %384 = vmatprep.subr.mxu0 0.0
  %385 = vmatpush1.msra.mxu0 0.0
  %386 = vmatprep.subr.mxu0 0.0
  %387 = vmatpush1.msra.mxu0 0.0
  %388 = vmatprep.subr.mxu0 0.0
  %389 = vmatpush1.msra.mxu0 0.0
  %390 = vmatprep.subr.mxu0 0.0
  %391 = vmatpush1.msra.mxu0 0.0
  %392 = vmatprep.subr.mxu0 0.0
  %393 = vmatpush1.msra.mxu0 0.0
  %394 = vmatprep.subr.mxu0 0.0
  %395 = vmatpush1.msra.mxu0 0.0
  %396 = vmatprep.subr.mxu0 0.0
  %397 = vmatpush1.msra.mxu0 0.0
  %398 = vmatprep.subr.mxu0 0.0
  %399 = vmatpush1.msra.mxu0 0.0
  %400 = vmatprep.subr.mxu0 %v362
  %401 = vmatpush1.msra.mxu0 %v359
  %402 = vmatprep.subr.mxu0 0.0
  %403 = vmatpush2.msra.mxu0 0.0
  %404 = vmatprep.subr.mxu0 0.0
  %405 = vmatpush2.msra.mxu0 0.0
  %406 = vmatprep.subr.mxu0 0.0
  %407 = vmatpush2.msra.mxu0 0.0
  %408 = vmatprep.subr.mxu0 0.0
  %409 = vmatpush2.msra.mxu0 0.0
  %410 = vmatprep.subr.mxu0 0.0
  %411 = vmatpush2.msra.mxu0 0.0
  %412 = vmatprep.subr.mxu0 0.0
  %413 = vmatpush2.msra.mxu0 0.0
  %414 = vmatprep.subr.mxu0 0.0
  %415 = vmatpush2.msra.mxu0 0.0
  %416 = vmatprep.subr.mxu0 0.0
  %417 = vmatpush2.msra.mxu0 0.0
  %418 = vmatprep.subr.mxu0 0.0
  %419 = vmatpush2.msra.mxu0 0.0
  %420 = vmatprep.subr.mxu0 0.0
  %421 = vmatpush2.msra.mxu0 0.0
  %422 = vmatprep.subr.mxu0 0.0
  %423 = vmatpush2.msra.mxu0 0.0
  %424 = vmatprep.subr.mxu0 0.0
  %425 = vmatpush2.msra.mxu0 0.0
  %426 = vmatprep.subr.mxu0 0.0
  %427 = vmatpush2.msra.mxu0 0.0
  %428 = vmatprep.subr.mxu0 0.0
  %429 = vmatpush2.msra.mxu0 0.0
  %430 = vmatprep.subr.mxu0 0.0
  %431 = vmatpush2.msra.mxu0 0.0
  %432 = vmatprep.subr.mxu0 0.0
  %433 = vmatpush2.msra.mxu0 0.0
  %434 = vmatprep.mubr.f32.mxu0 0.0
  %435 = vmatmul.mubr.f32.gmra.mxu0 %v356
  %v436 = vpop.f32.mrf.mxu0
  %v437 = vadd.f32 %v280, %v436
  %v438 = vpop.f32.mrf.mxu0
  %v439 = vadd.f32 %v282, %v438
  %440 = vdwg.mxu0
  %441 = vmatprep.subr.mxu0 0.0
  %442 = vmatpush1.msra.mxu0 0.0
  %443 = vmatprep.subr.mxu0 0.0
  %444 = vmatpush1.msra.mxu0 0.0
  %445 = vmatprep.subr.mxu0 0.0
  %446 = vmatpush1.msra.mxu0 0.0
  %447 = vmatprep.subr.mxu0 0.0
  %448 = vmatpush1.msra.mxu0 0.0
  %449 = vmatprep.subr.mxu0 0.0
  %450 = vmatpush1.msra.mxu0 0.0
  %451 = vmatprep.subr.mxu0 0.0
  %452 = vmatpush1.msra.mxu0 0.0
  %453 = vmatprep.subr.mxu0 0.0
  %454 = vmatpush1.msra.mxu0 0.0
  %455 = vmatprep.subr.mxu0 0.0
  %456 = vmatpush1.msra.mxu0 0.0
  %457 = vmatprep.subr.mxu0 0.0
  %458 = vmatpush1.msra.mxu0 0.0
  %459 = vmatprep.subr.mxu0 0.0
  %460 = vmatpush1.msra.mxu0 0.0
  %461 = vmatprep.subr.mxu0 0.0
  %462 = vmatpush1.msra.mxu0 0.0
  %463 = vmatprep.subr.mxu0 0.0
  %464 = vmatpush1.msra.mxu0 0.0
  %465 = vmatprep.subr.mxu0 0.0
  %466 = vmatpush1.msra.mxu0 0.0
  %467 = vmatprep.subr.mxu0 0.0
  %468 = vmatpush1.msra.mxu0 0.0
  %469 = vmatprep.subr.mxu0 0.0
  %470 = vmatpush1.msra.mxu0 0.0
  %471 = vmatprep.subr.mxu0 %v368
  %472 = vmatpush1.msra.mxu0 %v365
  %473 = vmatprep.subr.mxu0 0.0
  %474 = vmatpush2.msra.mxu0 0.0
  %475 = vmatprep.subr.mxu0 0.0
  %476 = vmatpush2.msra.mxu0 0.0
  %477 = vmatprep.subr.mxu0 0.0
  %478 = vmatpush2.msra.mxu0 0.0
  %479 = vmatprep.subr.mxu0 0.0
  %480 = vmatpush2.msra.mxu0 0.0
  %481 = vmatprep.subr.mxu0 0.0
  %482 = vmatpush2.msra.mxu0 0.0
  %483 = vmatprep.subr.mxu0 0.0
  %484 = vmatpush2.msra.mxu0 0.0
  %485 = vmatprep.subr.mxu0 0.0
  %486 = vmatpush2.msra.mxu0 0.0
  %487 = vmatprep.subr.mxu0 0.0
  %488 = vmatpush2.msra.mxu0 0.0
  %489 = vmatprep.subr.mxu0 0.0
  %490 = vmatpush2.msra.mxu0 0.0
  %491 = vmatprep.subr.mxu0 0.0
  %492 = vmatpush2.msra.mxu0 0.0
  %493 = vmatprep.subr.mxu0 0.0
  %494 = vmatpush2.msra.mxu0 0.0
  %495 = vmatprep.subr.mxu0 0.0
  %496 = vmatpush2.msra.mxu0 0.0
  %497 = vmatprep.subr.mxu0 0.0
  %498 = vmatpush2.msra.mxu0 0.0
  %499 = vmatprep.subr.mxu0 0.0
  %500 = vmatpush2.msra.mxu0 0.0
  %501 = vmatprep.subr.mxu0 0.0
  %502 = vmatpush2.msra.mxu0 0.0
  %503 = vmatprep.subr.mxu0 0.0
  %504 = vmatpush2.msra.mxu0 0.0
  %505 = vmatprep.mubr.f32.mxu0 0.0
  %506 = vmatmul.mubr.f32.gmra.mxu0 %v356
  %v507 = vpop.f32.mrf.mxu0
  %v508 = vadd.f32 %v351, %v507
  %v509 = vpop.f32.mrf.mxu0
  %v510 = vadd.f32 %v353, %v509
  %511 = vdwg.mxu0
  %512 = vrot.lane.b32.xlu0 %v14, 15
  %v513 = vpop.permute.xlu0 %512
  %514 = vrot.lane.b32.xlu0 %v135, 15
  %v515 = vpop.permute.xlu0 %514
  %516 = vrot.lane.b32.xlu0 %v15, 15
  %v517 = vpop.permute.xlu0 %516
  %518 = vrot.lane.b32.xlu0 %v136, 15
  %v519 = vpop.permute.xlu0 %518
  %vm520 = vcmp.lt.s32.totalorder %v17, 15
  %v521 = vsel %vm520, %v517, %v519
  %v522 = vsel %vm520, %v515, %v517
  %v523 = vsel %vm520, %v513, %v515
  %v524 = vsel %vm520, %v519, %v513
  %vm525 = vmand %vm125, %vm121
  %vm526 = vmand %vm126, %vm122
  %vm527 = vmand %vm127, %vm123
  %vm528 = vmand %vm128, %vm124
  %v529 = vsel %vm525, 1, 0
  %v530 = vsel %vm526, 1, 0
  %v531 = vsel %vm527, 1, 0
  %v532 = vsel %vm528, 1, 0
  %vm533 = vcmp.eq.s32.totalorder %v529, 1
  %vm534 = vcmp.eq.s32.totalorder %v530, 1
  %vm535 = vcmp.eq.s32.totalorder %v531, 1
  %vm536 = vcmp.eq.s32.totalorder %v532, 1
  %v537 = vsel %vm533, %v524, 0.0
  %v538 = vsel %vm534, %v523, 0.0
  %v539 = vsel %vm535, %v522, 0.0
  %v540 = vsel %vm536, %v521, 0.0
  %s541 = scalar_lea.vmem %s1, 16
  %v542 = vld [vmem:[%s541] sm:$0xff]
  %v544 = vsel %vm196, %v542, 0
  %v547 = vsel %vm200, %v537, 0
  %v550 = vsel %vm200, %v538, 0
  %v553 = vsel %vm200, %v539, 0
  %v556 = vsel %vm200, %v540, 0
  %558 = vmatprep.subr.mxu0 0.0
  %559 = vmatpush1.msra.mxu0 0.0
  %560 = vmatprep.subr.mxu0 0.0
  %561 = vmatpush1.msra.mxu0 0.0
  %562 = vmatprep.subr.mxu0 0.0
  %563 = vmatpush1.msra.mxu0 0.0
  %564 = vmatprep.subr.mxu0 0.0
  %565 = vmatpush1.msra.mxu0 0.0
  %566 = vmatprep.subr.mxu0 0.0
  %567 = vmatpush1.msra.mxu0 0.0
  %568 = vmatprep.subr.mxu0 0.0
  %569 = vmatpush1.msra.mxu0 0.0
  %570 = vmatprep.subr.mxu0 0.0
  %571 = vmatpush1.msra.mxu0 0.0
  %572 = vmatprep.subr.mxu0 0.0
  %573 = vmatpush1.msra.mxu0 0.0
  %574 = vmatprep.subr.mxu0 0.0
  %575 = vmatpush1.msra.mxu0 0.0
  %576 = vmatprep.subr.mxu0 0.0
  %577 = vmatpush1.msra.mxu0 0.0
  %578 = vmatprep.subr.mxu0 0.0
  %579 = vmatpush1.msra.mxu0 0.0
  %580 = vmatprep.subr.mxu0 0.0
  %581 = vmatpush1.msra.mxu0 0.0
  %582 = vmatprep.subr.mxu0 0.0
  %583 = vmatpush1.msra.mxu0 0.0
  %584 = vmatprep.subr.mxu0 0.0
  %585 = vmatpush1.msra.mxu0 0.0
  %586 = vmatprep.subr.mxu0 0.0
  %587 = vmatpush1.msra.mxu0 0.0
  %588 = vmatprep.subr.mxu0 %v550
  %589 = vmatpush1.msra.mxu0 %v547
  %590 = vmatprep.subr.mxu0 0.0
  %591 = vmatpush2.msra.mxu0 0.0
  %592 = vmatprep.subr.mxu0 0.0
  %593 = vmatpush2.msra.mxu0 0.0
  %594 = vmatprep.subr.mxu0 0.0
  %595 = vmatpush2.msra.mxu0 0.0
  %596 = vmatprep.subr.mxu0 0.0
  %597 = vmatpush2.msra.mxu0 0.0
  %598 = vmatprep.subr.mxu0 0.0
  %599 = vmatpush2.msra.mxu0 0.0
  %600 = vmatprep.subr.mxu0 0.0
  %601 = vmatpush2.msra.mxu0 0.0
  %602 = vmatprep.subr.mxu0 0.0
  %603 = vmatpush2.msra.mxu0 0.0
  %604 = vmatprep.subr.mxu0 0.0
  %605 = vmatpush2.msra.mxu0 0.0
  %606 = vmatprep.subr.mxu0 0.0
  %607 = vmatpush2.msra.mxu0 0.0
  %608 = vmatprep.subr.mxu0 0.0
  %609 = vmatpush2.msra.mxu0 0.0
  %610 = vmatprep.subr.mxu0 0.0
  %611 = vmatpush2.msra.mxu0 0.0
  %612 = vmatprep.subr.mxu0 0.0
  %613 = vmatpush2.msra.mxu0 0.0
  %614 = vmatprep.subr.mxu0 0.0
  %615 = vmatpush2.msra.mxu0 0.0
  %616 = vmatprep.subr.mxu0 0.0
  %617 = vmatpush2.msra.mxu0 0.0
  %618 = vmatprep.subr.mxu0 0.0
  %619 = vmatpush2.msra.mxu0 0.0
  %620 = vmatprep.subr.mxu0 0.0
  %621 = vmatpush2.msra.mxu0 0.0
  %622 = vmatprep.mubr.f32.mxu0 0.0
  %623 = vmatmul.mubr.f32.gmra.mxu0 %v544
  %v624 = vpop.f32.mrf.mxu0
  %v625 = vadd.f32 0.0, %v624
  %v626 = vpop.f32.mrf.mxu0
  %v627 = vadd.f32 0.0, %v626
  %628 = vdwg.mxu0
  %629 = vmatprep.subr.mxu0 0.0
  %630 = vmatpush1.msra.mxu0 0.0
  %631 = vmatprep.subr.mxu0 0.0
  %632 = vmatpush1.msra.mxu0 0.0
  %633 = vmatprep.subr.mxu0 0.0
  %634 = vmatpush1.msra.mxu0 0.0
  %635 = vmatprep.subr.mxu0 0.0
  %636 = vmatpush1.msra.mxu0 0.0
  %637 = vmatprep.subr.mxu0 0.0
  %638 = vmatpush1.msra.mxu0 0.0
  %639 = vmatprep.subr.mxu0 0.0
  %640 = vmatpush1.msra.mxu0 0.0
  %641 = vmatprep.subr.mxu0 0.0
  %642 = vmatpush1.msra.mxu0 0.0
  %643 = vmatprep.subr.mxu0 0.0
  %644 = vmatpush1.msra.mxu0 0.0
  %645 = vmatprep.subr.mxu0 0.0
  %646 = vmatpush1.msra.mxu0 0.0
  %647 = vmatprep.subr.mxu0 0.0
  %648 = vmatpush1.msra.mxu0 0.0
  %649 = vmatprep.subr.mxu0 0.0
  %650 = vmatpush1.msra.mxu0 0.0
  %651 = vmatprep.subr.mxu0 0.0
  %652 = vmatpush1.msra.mxu0 0.0
  %653 = vmatprep.subr.mxu0 0.0
  %654 = vmatpush1.msra.mxu0 0.0
  %655 = vmatprep.subr.mxu0 0.0
  %656 = vmatpush1.msra.mxu0 0.0
  %657 = vmatprep.subr.mxu0 0.0
  %658 = vmatpush1.msra.mxu0 0.0
  %659 = vmatprep.subr.mxu0 %v556
  %660 = vmatpush1.msra.mxu0 %v553
  %661 = vmatprep.subr.mxu0 0.0
  %662 = vmatpush2.msra.mxu0 0.0
  %663 = vmatprep.subr.mxu0 0.0
  %664 = vmatpush2.msra.mxu0 0.0
  %665 = vmatprep.subr.mxu0 0.0
  %666 = vmatpush2.msra.mxu0 0.0
  %667 = vmatprep.subr.mxu0 0.0
  %668 = vmatpush2.msra.mxu0 0.0
  %669 = vmatprep.subr.mxu0 0.0
  %670 = vmatpush2.msra.mxu0 0.0
  %671 = vmatprep.subr.mxu0 0.0
  %672 = vmatpush2.msra.mxu0 0.0
  %673 = vmatprep.subr.mxu0 0.0
  %674 = vmatpush2.msra.mxu0 0.0
  %675 = vmatprep.subr.mxu0 0.0
  %676 = vmatpush2.msra.mxu0 0.0
  %677 = vmatprep.subr.mxu0 0.0
  %678 = vmatpush2.msra.mxu0 0.0
  %679 = vmatprep.subr.mxu0 0.0
  %680 = vmatpush2.msra.mxu0 0.0
  %681 = vmatprep.subr.mxu0 0.0
  %682 = vmatpush2.msra.mxu0 0.0
  %683 = vmatprep.subr.mxu0 0.0
  %684 = vmatpush2.msra.mxu0 0.0
  %685 = vmatprep.subr.mxu0 0.0
  %686 = vmatpush2.msra.mxu0 0.0
  %687 = vmatprep.subr.mxu0 0.0
  %688 = vmatpush2.msra.mxu0 0.0
  %689 = vmatprep.subr.mxu0 0.0
  %690 = vmatpush2.msra.mxu0 0.0
  %691 = vmatprep.subr.mxu0 0.0
  %692 = vmatpush2.msra.mxu0 0.0
  %693 = vmatprep.mubr.f32.mxu0 0.0
  %694 = vmatmul.mubr.f32.gmra.mxu0 %v544
  %v695 = vpop.f32.mrf.mxu0
  %v696 = vadd.f32 0.0, %v695
  %v697 = vpop.f32.mrf.mxu0
  %v698 = vadd.f32 0.0, %v697
  %699 = vdwg.mxu0
  %v700 = vadd.f32 %v437, %v625
  %v701 = vadd.f32 %v439, %v627
  %v702 = vadd.f32 %v508, %v696
  %v703 = vadd.f32 %v510, %v698
  %704 = vrot.lane.b32.xlu0 %v14, 1
  %v705 = vpop.permute.xlu0 %704
  %706 = vrot.lane.b32.xlu0 %v135, 1
  %v707 = vpop.permute.xlu0 %706
  %708 = vrot.lane.b32.xlu0 %v15, 1
  %v709 = vpop.permute.xlu0 %708
  %710 = vrot.lane.b32.xlu0 %v136, 1
  %v711 = vpop.permute.xlu0 %710
  %vm712 = vcmp.lt.s32.totalorder %v17, 1
  %v713 = vsel %vm712, %v709, %v711
  %v714 = vsel %vm712, %v707, %v709
  %v715 = vsel %vm712, %v705, %v707
  %v716 = vsel %vm712, %v711, %v705
  %v717 = vsel %vm117, 1, 0
  %v718 = vsel %vm118, 1, 0
  %v719 = vsel %vm119, 1, 0
  %v720 = vsel %vm120, 1, 0
  %vm721 = vcmp.eq.s32.totalorder %v717, 1
  %vm722 = vcmp.eq.s32.totalorder %v718, 1
  %vm723 = vcmp.eq.s32.totalorder %v719, 1
  %vm724 = vcmp.eq.s32.totalorder %v720, 1
  %v725 = vsel %vm721, %v716, 0.0
  %v726 = vsel %vm722, %v715, 0.0
  %v727 = vsel %vm723, %v714, 0.0
  %v728 = vsel %vm724, %v713, 0.0
  %s729 = scalar_lea.vmem %s1, 24
  %v730 = vld [vmem:[%s729] sm:$0xff]
  %v732 = vsel %vm196, %v730, 0
  %v735 = vsel %vm200, %v725, 0
  %v738 = vsel %vm200, %v726, 0
  %v741 = vsel %vm200, %v727, 0
  %v744 = vsel %vm200, %v728, 0
  %746 = vmatprep.subr.mxu0 0.0
  %747 = vmatpush1.msra.mxu0 0.0
  %748 = vmatprep.subr.mxu0 0.0
  %749 = vmatpush1.msra.mxu0 0.0
  %750 = vmatprep.subr.mxu0 0.0
  %751 = vmatpush1.msra.mxu0 0.0
  %752 = vmatprep.subr.mxu0 0.0
  %753 = vmatpush1.msra.mxu0 0.0
  %754 = vmatprep.subr.mxu0 0.0
  %755 = vmatpush1.msra.mxu0 0.0
  %756 = vmatprep.subr.mxu0 0.0
  %757 = vmatpush1.msra.mxu0 0.0
  %758 = vmatprep.subr.mxu0 0.0
  %759 = vmatpush1.msra.mxu0 0.0
  %760 = vmatprep.subr.mxu0 0.0
  %761 = vmatpush1.msra.mxu0 0.0
  %762 = vmatprep.subr.mxu0 0.0
  %763 = vmatpush1.msra.mxu0 0.0
  %764 = vmatprep.subr.mxu0 0.0
  %765 = vmatpush1.msra.mxu0 0.0
  %766 = vmatprep.subr.mxu0 0.0
  %767 = vmatpush1.msra.mxu0 0.0
  %768 = vmatprep.subr.mxu0 0.0
  %769 = vmatpush1.msra.mxu0 0.0
  %770 = vmatprep.subr.mxu0 0.0
  %771 = vmatpush1.msra.mxu0 0.0
  %772 = vmatprep.subr.mxu0 0.0
  %773 = vmatpush1.msra.mxu0 0.0
  %774 = vmatprep.subr.mxu0 0.0
  %775 = vmatpush1.msra.mxu0 0.0
  %776 = vmatprep.subr.mxu0 %v738
  %777 = vmatpush1.msra.mxu0 %v735
  %778 = vmatprep.subr.mxu0 0.0
  %779 = vmatpush2.msra.mxu0 0.0
  %780 = vmatprep.subr.mxu0 0.0
  %781 = vmatpush2.msra.mxu0 0.0
  %782 = vmatprep.subr.mxu0 0.0
  %783 = vmatpush2.msra.mxu0 0.0
  %784 = vmatprep.subr.mxu0 0.0
  %785 = vmatpush2.msra.mxu0 0.0
  %786 = vmatprep.subr.mxu0 0.0
  %787 = vmatpush2.msra.mxu0 0.0
  %788 = vmatprep.subr.mxu0 0.0
  %789 = vmatpush2.msra.mxu0 0.0
  %790 = vmatprep.subr.mxu0 0.0
  %791 = vmatpush2.msra.mxu0 0.0
  %792 = vmatprep.subr.mxu0 0.0
  %793 = vmatpush2.msra.mxu0 0.0
  %794 = vmatprep.subr.mxu0 0.0
  %795 = vmatpush2.msra.mxu0 0.0
  %796 = vmatprep.subr.mxu0 0.0
  %797 = vmatpush2.msra.mxu0 0.0
  %798 = vmatprep.subr.mxu0 0.0
  %799 = vmatpush2.msra.mxu0 0.0
  %800 = vmatprep.subr.mxu0 0.0
  %801 = vmatpush2.msra.mxu0 0.0
  %802 = vmatprep.subr.mxu0 0.0
  %803 = vmatpush2.msra.mxu0 0.0
  %804 = vmatprep.subr.mxu0 0.0
  %805 = vmatpush2.msra.mxu0 0.0
  %806 = vmatprep.subr.mxu0 0.0
  %807 = vmatpush2.msra.mxu0 0.0
  %808 = vmatprep.subr.mxu0 0.0
  %809 = vmatpush2.msra.mxu0 0.0
  %810 = vmatprep.mubr.f32.mxu0 0.0
  %811 = vmatmul.mubr.f32.gmra.mxu0 %v732
  %v812 = vpop.f32.mrf.mxu0
  %v813 = vadd.f32 0.0, %v812
  %v814 = vpop.f32.mrf.mxu0
  %v815 = vadd.f32 0.0, %v814
  %816 = vdwg.mxu0
  %817 = vmatprep.subr.mxu0 0.0
  %818 = vmatpush1.msra.mxu0 0.0
  %819 = vmatprep.subr.mxu0 0.0
  %820 = vmatpush1.msra.mxu0 0.0
  %821 = vmatprep.subr.mxu0 0.0
  %822 = vmatpush1.msra.mxu0 0.0
  %823 = vmatprep.subr.mxu0 0.0
  %824 = vmatpush1.msra.mxu0 0.0
  %825 = vmatprep.subr.mxu0 0.0
  %826 = vmatpush1.msra.mxu0 0.0
  %827 = vmatprep.subr.mxu0 0.0
  %828 = vmatpush1.msra.mxu0 0.0
  %829 = vmatprep.subr.mxu0 0.0
  %830 = vmatpush1.msra.mxu0 0.0
  %831 = vmatprep.subr.mxu0 0.0
  %832 = vmatpush1.msra.mxu0 0.0
  %833 = vmatprep.subr.mxu0 0.0
  %834 = vmatpush1.msra.mxu0 0.0
  %835 = vmatprep.subr.mxu0 0.0
  %836 = vmatpush1.msra.mxu0 0.0
  %837 = vmatprep.subr.mxu0 0.0
  %838 = vmatpush1.msra.mxu0 0.0
  %839 = vmatprep.subr.mxu0 0.0
  %840 = vmatpush1.msra.mxu0 0.0
  %841 = vmatprep.subr.mxu0 0.0
  %842 = vmatpush1.msra.mxu0 0.0
  %843 = vmatprep.subr.mxu0 0.0
  %844 = vmatpush1.msra.mxu0 0.0
  %845 = vmatprep.subr.mxu0 0.0
  %846 = vmatpush1.msra.mxu0 0.0
  %847 = vmatprep.subr.mxu0 %v744
  %848 = vmatpush1.msra.mxu0 %v741
  %849 = vmatprep.subr.mxu0 0.0
  %850 = vmatpush2.msra.mxu0 0.0
  %851 = vmatprep.subr.mxu0 0.0
  %852 = vmatpush2.msra.mxu0 0.0
  %853 = vmatprep.subr.mxu0 0.0
  %854 = vmatpush2.msra.mxu0 0.0
  %855 = vmatprep.subr.mxu0 0.0
  %856 = vmatpush2.msra.mxu0 0.0
  %857 = vmatprep.subr.mxu0 0.0
  %858 = vmatpush2.msra.mxu0 0.0
  %859 = vmatprep.subr.mxu0 0.0
  %860 = vmatpush2.msra.mxu0 0.0
  %861 = vmatprep.subr.mxu0 0.0
  %862 = vmatpush2.msra.mxu0 0.0
  %863 = vmatprep.subr.mxu0 0.0
  %864 = vmatpush2.msra.mxu0 0.0
  %865 = vmatprep.subr.mxu0 0.0
  %866 = vmatpush2.msra.mxu0 0.0
  %867 = vmatprep.subr.mxu0 0.0
  %868 = vmatpush2.msra.mxu0 0.0
  %869 = vmatprep.subr.mxu0 0.0
  %870 = vmatpush2.msra.mxu0 0.0
  %871 = vmatprep.subr.mxu0 0.0
  %872 = vmatpush2.msra.mxu0 0.0
  %873 = vmatprep.subr.mxu0 0.0
  %874 = vmatpush2.msra.mxu0 0.0
  %875 = vmatprep.subr.mxu0 0.0
  %876 = vmatpush2.msra.mxu0 0.0
  %877 = vmatprep.subr.mxu0 0.0
  %878 = vmatpush2.msra.mxu0 0.0
  %879 = vmatprep.subr.mxu0 0.0
  %880 = vmatpush2.msra.mxu0 0.0
  %881 = vmatprep.mubr.f32.mxu0 0.0
  %882 = vmatmul.mubr.f32.gmra.mxu0 %v732
  %v883 = vpop.f32.mrf.mxu0
  %v884 = vadd.f32 0.0, %v883
  %v885 = vpop.f32.mrf.mxu0
  %v886 = vadd.f32 0.0, %v885
  %887 = vdwg.mxu0
  %v888 = vadd.f32 %v700, %v813
  %v889 = vadd.f32 %v701, %v815
  %v890 = vadd.f32 %v702, %v884
  %v891 = vadd.f32 %v703, %v886
  %s892 = scalar_lea.vmem %s1, 32
  %v893 = vld [vmem:[%s892] sm:$0xff]
  %v895 = vsel %vm196, %v893, 0
  %v897 = vsel %vm200, %v14, 0
  %v899 = vsel %vm200, %v135, 0
  %v901 = vsel %vm200, %v15, 0
  %v903 = vsel %vm200, %v136, 0
  %905 = vmatprep.subr.mxu0 0.0
  %906 = vmatpush1.msra.mxu0 0.0
  %907 = vmatprep.subr.mxu0 0.0
  %908 = vmatpush1.msra.mxu0 0.0
  %909 = vmatprep.subr.mxu0 0.0
  %910 = vmatpush1.msra.mxu0 0.0
  %911 = vmatprep.subr.mxu0 0.0
  %912 = vmatpush1.msra.mxu0 0.0
  %913 = vmatprep.subr.mxu0 0.0
  %914 = vmatpush1.msra.mxu0 0.0
  %915 = vmatprep.subr.mxu0 0.0
  %916 = vmatpush1.msra.mxu0 0.0
  %917 = vmatprep.subr.mxu0 0.0
  %918 = vmatpush1.msra.mxu0 0.0
  %919 = vmatprep.subr.mxu0 0.0
  %920 = vmatpush1.msra.mxu0 0.0
  %921 = vmatprep.subr.mxu0 0.0
  %922 = vmatpush1.msra.mxu0 0.0
  %923 = vmatprep.subr.mxu0 0.0
  %924 = vmatpush1.msra.mxu0 0.0
  %925 = vmatprep.subr.mxu0 0.0
  %926 = vmatpush1.msra.mxu0 0.0
  %927 = vmatprep.subr.mxu0 0.0
  %928 = vmatpush1.msra.mxu0 0.0
  %929 = vmatprep.subr.mxu0 0.0
  %930 = vmatpush1.msra.mxu0 0.0
  %931 = vmatprep.subr.mxu0 0.0
  %932 = vmatpush1.msra.mxu0 0.0
  %933 = vmatprep.subr.mxu0 0.0
  %934 = vmatpush1.msra.mxu0 0.0
  %935 = vmatprep.subr.mxu0 %v899
  %936 = vmatpush1.msra.mxu0 %v897
  %937 = vmatprep.subr.mxu0 0.0
  %938 = vmatpush2.msra.mxu0 0.0
  %939 = vmatprep.subr.mxu0 0.0
  %940 = vmatpush2.msra.mxu0 0.0
  %941 = vmatprep.subr.mxu0 0.0
  %942 = vmatpush2.msra.mxu0 0.0
  %943 = vmatprep.subr.mxu0 0.0
  %944 = vmatpush2.msra.mxu0 0.0
  %945 = vmatprep.subr.mxu0 0.0
  %946 = vmatpush2.msra.mxu0 0.0
  %947 = vmatprep.subr.mxu0 0.0
  %948 = vmatpush2.msra.mxu0 0.0
  %949 = vmatprep.subr.mxu0 0.0
  %950 = vmatpush2.msra.mxu0 0.0
  %951 = vmatprep.subr.mxu0 0.0
  %952 = vmatpush2.msra.mxu0 0.0
  %953 = vmatprep.subr.mxu0 0.0
  %954 = vmatpush2.msra.mxu0 0.0
  %955 = vmatprep.subr.mxu0 0.0
  %956 = vmatpush2.msra.mxu0 0.0
  %957 = vmatprep.subr.mxu0 0.0
  %958 = vmatpush2.msra.mxu0 0.0
  %959 = vmatprep.subr.mxu0 0.0
  %960 = vmatpush2.msra.mxu0 0.0
  %961 = vmatprep.subr.mxu0 0.0
  %962 = vmatpush2.msra.mxu0 0.0
  %963 = vmatprep.subr.mxu0 0.0
  %964 = vmatpush2.msra.mxu0 0.0
  %965 = vmatprep.subr.mxu0 0.0
  %966 = vmatpush2.msra.mxu0 0.0
  %967 = vmatprep.subr.mxu0 0.0
  %968 = vmatpush2.msra.mxu0 0.0
  %969 = vmatprep.mubr.f32.mxu0 0.0
  %970 = vmatmul.mubr.f32.gmra.mxu0 %v895
  %v971 = vpop.f32.mrf.mxu0
  %v972 = vadd.f32 0.0, %v971
  %v973 = vpop.f32.mrf.mxu0
  %v974 = vadd.f32 0.0, %v973
  %975 = vdwg.mxu0
  %976 = vmatprep.subr.mxu0 0.0
  %977 = vmatpush1.msra.mxu0 0.0
  %978 = vmatprep.subr.mxu0 0.0
  %979 = vmatpush1.msra.mxu0 0.0
  %980 = vmatprep.subr.mxu0 0.0
  %981 = vmatpush1.msra.mxu0 0.0
  %982 = vmatprep.subr.mxu0 0.0
  %983 = vmatpush1.msra.mxu0 0.0
  %984 = vmatprep.subr.mxu0 0.0
  %985 = vmatpush1.msra.mxu0 0.0
  %986 = vmatprep.subr.mxu0 0.0
  %987 = vmatpush1.msra.mxu0 0.0
  %988 = vmatprep.subr.mxu0 0.0
  %989 = vmatpush1.msra.mxu0 0.0
  %990 = vmatprep.subr.mxu0 0.0
  %991 = vmatpush1.msra.mxu0 0.0
  %992 = vmatprep.subr.mxu0 0.0
  %993 = vmatpush1.msra.mxu0 0.0
  %994 = vmatprep.subr.mxu0 0.0
  %995 = vmatpush1.msra.mxu0 0.0
  %996 = vmatprep.subr.mxu0 0.0
  %997 = vmatpush1.msra.mxu0 0.0
  %998 = vmatprep.subr.mxu0 0.0
  %999 = vmatpush1.msra.mxu0 0.0
  %1000 = vmatprep.subr.mxu0 0.0
  %1001 = vmatpush1.msra.mxu0 0.0
  %1002 = vmatprep.subr.mxu0 0.0
  %1003 = vmatpush1.msra.mxu0 0.0
  %1004 = vmatprep.subr.mxu0 0.0
  %1005 = vmatpush1.msra.mxu0 0.0
  %1006 = vmatprep.subr.mxu0 %v903
  %1007 = vmatpush1.msra.mxu0 %v901
  %1008 = vmatprep.subr.mxu0 0.0
  %1009 = vmatpush2.msra.mxu0 0.0
  %1010 = vmatprep.subr.mxu0 0.0
  %1011 = vmatpush2.msra.mxu0 0.0
  %1012 = vmatprep.subr.mxu0 0.0
  %1013 = vmatpush2.msra.mxu0 0.0
  %1014 = vmatprep.subr.mxu0 0.0
  %1015 = vmatpush2.msra.mxu0 0.0
  %1016 = vmatprep.subr.mxu0 0.0
  %1017 = vmatpush2.msra.mxu0 0.0
  %1018 = vmatprep.subr.mxu0 0.0
  %1019 = vmatpush2.msra.mxu0 0.0
  %1020 = vmatprep.subr.mxu0 0.0
  %1021 = vmatpush2.msra.mxu0 0.0
  %1022 = vmatprep.subr.mxu0 0.0
  %1023 = vmatpush2.msra.mxu0 0.0
  %1024 = vmatprep.subr.mxu0 0.0
  %1025 = vmatpush2.msra.mxu0 0.0
  %1026 = vmatprep.subr.mxu0 0.0
  %1027 = vmatpush2.msra.mxu0 0.0
  %1028 = vmatprep.subr.mxu0 0.0
  %1029 = vmatpush2.msra.mxu0 0.0
  %1030 = vmatprep.subr.mxu0 0.0
  %1031 = vmatpush2.msra.mxu0 0.0
  %1032 = vmatprep.subr.mxu0 0.0
  %1033 = vmatpush2.msra.mxu0 0.0
  %1034 = vmatprep.subr.mxu0 0.0
  %1035 = vmatpush2.msra.mxu0 0.0
  %1036 = vmatprep.subr.mxu0 0.0
  %1037 = vmatpush2.msra.mxu0 0.0
  %1038 = vmatprep.subr.mxu0 0.0
  %1039 = vmatpush2.msra.mxu0 0.0
  %1040 = vmatprep.mubr.f32.mxu0 0.0
  %1041 = vmatmul.mubr.f32.gmra.mxu0 %v895
  %v1042 = vpop.f32.mrf.mxu0
  %v1043 = vadd.f32 0.0, %v1042
  %v1044 = vpop.f32.mrf.mxu0
  %v1045 = vadd.f32 0.0, %v1044
  %1046 = vdwg.mxu0
  %v1047 = vadd.f32 %v888, %v972
  %v1048 = vadd.f32 %v889, %v974
  %v1049 = vadd.f32 %v890, %v1043
  %v1050 = vadd.f32 %v891, %v1045
  %1051 = vrot.lane.b32.xlu0 %v14, 127
  %v1052 = vpop.permute.xlu0 %1051
  %1053 = vrot.lane.b32.xlu0 %v135, 127
  %v1054 = vpop.permute.xlu0 %1053
  %1055 = vrot.lane.b32.xlu0 %v15, 127
  %v1056 = vpop.permute.xlu0 %1055
  %1057 = vrot.lane.b32.xlu0 %v136, 127
  %v1058 = vpop.permute.xlu0 %1057
  %vm1059 = vcmp.lt.s32.totalorder %v17, 127
  %v1060 = vsel %vm1059, %v1056, %v1058
  %v1061 = vsel %vm1059, %v1054, %v1056
  %v1062 = vsel %vm1059, %v1052, %v1054
  %v1063 = vsel %vm1059, %v1058, %v1052
  %v1064 = vsel %vm121, 1, 0
  %v1065 = vsel %vm122, 1, 0
  %v1066 = vsel %vm123, 1, 0
  %v1067 = vsel %vm124, 1, 0
  %vm1068 = vcmp.eq.s32.totalorder %v1064, 1
  %vm1069 = vcmp.eq.s32.totalorder %v1065, 1
  %vm1070 = vcmp.eq.s32.totalorder %v1066, 1
  %vm1071 = vcmp.eq.s32.totalorder %v1067, 1
  %v1072 = vsel %vm1068, %v1062, 0.0
  %v1073 = vsel %vm1069, %v1061, 0.0
  %v1074 = vsel %vm1070, %v1060, 0.0
  %v1075 = vsel %vm1071, %v1063, 0.0
  %s1076 = scalar_lea.vmem %s1, 40
  %v1077 = vld [vmem:[%s1076] sm:$0xff]
  %v1079 = vsel %vm196, %v1077, 0
  %v1082 = vsel %vm200, %v1072, 0
  %v1085 = vsel %vm200, %v1073, 0
  %v1088 = vsel %vm200, %v1074, 0
  %v1091 = vsel %vm200, %v1075, 0
  %1093 = vmatprep.subr.mxu0 0.0
  %1094 = vmatpush1.msra.mxu0 0.0
  %1095 = vmatprep.subr.mxu0 0.0
  %1096 = vmatpush1.msra.mxu0 0.0
  %1097 = vmatprep.subr.mxu0 0.0
  %1098 = vmatpush1.msra.mxu0 0.0
  %1099 = vmatprep.subr.mxu0 0.0
  %1100 = vmatpush1.msra.mxu0 0.0
  %1101 = vmatprep.subr.mxu0 0.0
  %1102 = vmatpush1.msra.mxu0 0.0
  %1103 = vmatprep.subr.mxu0 0.0
  %1104 = vmatpush1.msra.mxu0 0.0
  %1105 = vmatprep.subr.mxu0 0.0
  %1106 = vmatpush1.msra.mxu0 0.0
  %1107 = vmatprep.subr.mxu0 0.0
  %1108 = vmatpush1.msra.mxu0 0.0
  %1109 = vmatprep.subr.mxu0 0.0
  %1110 = vmatpush1.msra.mxu0 0.0
  %1111 = vmatprep.subr.mxu0 0.0
  %1112 = vmatpush1.msra.mxu0 0.0
  %1113 = vmatprep.subr.mxu0 0.0
  %1114 = vmatpush1.msra.mxu0 0.0
  %1115 = vmatprep.subr.mxu0 0.0
  %1116 = vmatpush1.msra.mxu0 0.0
  %1117 = vmatprep.subr.mxu0 0.0
  %1118 = vmatpush1.msra.mxu0 0.0
  %1119 = vmatprep.subr.mxu0 0.0
  %1120 = vmatpush1.msra.mxu0 0.0
  %1121 = vmatprep.subr.mxu0 0.0
  %1122 = vmatpush1.msra.mxu0 0.0
  %1123 = vmatprep.subr.mxu0 %v1085
  %1124 = vmatpush1.msra.mxu0 %v1082
  %1125 = vmatprep.subr.mxu0 0.0
  %1126 = vmatpush2.msra.mxu0 0.0
  %1127 = vmatprep.subr.mxu0 0.0
  %1128 = vmatpush2.msra.mxu0 0.0
  %1129 = vmatprep.subr.mxu0 0.0
  %1130 = vmatpush2.msra.mxu0 0.0
  %1131 = vmatprep.subr.mxu0 0.0
  %1132 = vmatpush2.msra.mxu0 0.0
  %1133 = vmatprep.subr.mxu0 0.0
  %1134 = vmatpush2.msra.mxu0 0.0
  %1135 = vmatprep.subr.mxu0 0.0
  %1136 = vmatpush2.msra.mxu0 0.0
  %1137 = vmatprep.subr.mxu0 0.0
  %1138 = vmatpush2.msra.mxu0 0.0
  %1139 = vmatprep.subr.mxu0 0.0
  %1140 = vmatpush2.msra.mxu0 0.0
  %1141 = vmatprep.subr.mxu0 0.0
  %1142 = vmatpush2.msra.mxu0 0.0
  %1143 = vmatprep.subr.mxu0 0.0
  %1144 = vmatpush2.msra.mxu0 0.0
  %1145 = vmatprep.subr.mxu0 0.0
  %1146 = vmatpush2.msra.mxu0 0.0
  %1147 = vmatprep.subr.mxu0 0.0
  %1148 = vmatpush2.msra.mxu0 0.0
  %1149 = vmatprep.subr.mxu0 0.0
  %1150 = vmatpush2.msra.mxu0 0.0
  %1151 = vmatprep.subr.mxu0 0.0
  %1152 = vmatpush2.msra.mxu0 0.0
  %1153 = vmatprep.subr.mxu0 0.0
  %1154 = vmatpush2.msra.mxu0 0.0
  %1155 = vmatprep.subr.mxu0 0.0
  %1156 = vmatpush2.msra.mxu0 0.0
  %1157 = vmatprep.mubr.f32.mxu0 0.0
  %1158 = vmatmul.mubr.f32.gmra.mxu0 %v1079
  %v1159 = vpop.f32.mrf.mxu0
  %v1160 = vadd.f32 0.0, %v1159
  %v1161 = vpop.f32.mrf.mxu0
  %v1162 = vadd.f32 0.0, %v1161
  %1163 = vdwg.mxu0
  %1164 = vmatprep.subr.mxu0 0.0
  %1165 = vmatpush1.msra.mxu0 0.0
  %1166 = vmatprep.subr.mxu0 0.0
  %1167 = vmatpush1.msra.mxu0 0.0
  %1168 = vmatprep.subr.mxu0 0.0
  %1169 = vmatpush1.msra.mxu0 0.0
  %1170 = vmatprep.subr.mxu0 0.0
  %1171 = vmatpush1.msra.mxu0 0.0
  %1172 = vmatprep.subr.mxu0 0.0
  %1173 = vmatpush1.msra.mxu0 0.0
  %1174 = vmatprep.subr.mxu0 0.0
  %1175 = vmatpush1.msra.mxu0 0.0
  %1176 = vmatprep.subr.mxu0 0.0
  %1177 = vmatpush1.msra.mxu0 0.0
  %1178 = vmatprep.subr.mxu0 0.0
  %1179 = vmatpush1.msra.mxu0 0.0
  %1180 = vmatprep.subr.mxu0 0.0
  %1181 = vmatpush1.msra.mxu0 0.0
  %1182 = vmatprep.subr.mxu0 0.0
  %1183 = vmatpush1.msra.mxu0 0.0
  %1184 = vmatprep.subr.mxu0 0.0
  %1185 = vmatpush1.msra.mxu0 0.0
  %1186 = vmatprep.subr.mxu0 0.0
  %1187 = vmatpush1.msra.mxu0 0.0
  %1188 = vmatprep.subr.mxu0 0.0
  %1189 = vmatpush1.msra.mxu0 0.0
  %1190 = vmatprep.subr.mxu0 0.0
  %1191 = vmatpush1.msra.mxu0 0.0
  %1192 = vmatprep.subr.mxu0 0.0
  %1193 = vmatpush1.msra.mxu0 0.0
  %1194 = vmatprep.subr.mxu0 %v1091
  %1195 = vmatpush1.msra.mxu0 %v1088
  %1196 = vmatprep.subr.mxu0 0.0
  %1197 = vmatpush2.msra.mxu0 0.0
  %1198 = vmatprep.subr.mxu0 0.0
  %1199 = vmatpush2.msra.mxu0 0.0
  %1200 = vmatprep.subr.mxu0 0.0
  %1201 = vmatpush2.msra.mxu0 0.0
  %1202 = vmatprep.subr.mxu0 0.0
  %1203 = vmatpush2.msra.mxu0 0.0
  %1204 = vmatprep.subr.mxu0 0.0
  %1205 = vmatpush2.msra.mxu0 0.0
  %1206 = vmatprep.subr.mxu0 0.0
  %1207 = vmatpush2.msra.mxu0 0.0
  %1208 = vmatprep.subr.mxu0 0.0
  %1209 = vmatpush2.msra.mxu0 0.0
  %1210 = vmatprep.subr.mxu0 0.0
  %1211 = vmatpush2.msra.mxu0 0.0
  %1212 = vmatprep.subr.mxu0 0.0
  %1213 = vmatpush2.msra.mxu0 0.0
  %1214 = vmatprep.subr.mxu0 0.0
  %1215 = vmatpush2.msra.mxu0 0.0
  %1216 = vmatprep.subr.mxu0 0.0
  %1217 = vmatpush2.msra.mxu0 0.0
  %1218 = vmatprep.subr.mxu0 0.0
  %1219 = vmatpush2.msra.mxu0 0.0
  %1220 = vmatprep.subr.mxu0 0.0
  %1221 = vmatpush2.msra.mxu0 0.0
  %1222 = vmatprep.subr.mxu0 0.0
  %1223 = vmatpush2.msra.mxu0 0.0
  %1224 = vmatprep.subr.mxu0 0.0
  %1225 = vmatpush2.msra.mxu0 0.0
  %1226 = vmatprep.subr.mxu0 0.0
  %1227 = vmatpush2.msra.mxu0 0.0
  %1228 = vmatprep.mubr.f32.mxu0 0.0
  %1229 = vmatmul.mubr.f32.gmra.mxu0 %v1079
  %v1230 = vpop.f32.mrf.mxu0
  %v1231 = vadd.f32 0.0, %v1230
  %v1232 = vpop.f32.mrf.mxu0
  %v1233 = vadd.f32 0.0, %v1232
  %1234 = vdwg.mxu0
  %v1235 = vadd.f32 %v1047, %v1160
  %v1236 = vadd.f32 %v1048, %v1162
  %v1237 = vadd.f32 %v1049, %v1231
  %v1238 = vadd.f32 %v1050, %v1233
  %1239 = vrot.lane.b32.xlu0 %v14, 113
  %v1240 = vpop.permute.xlu0 %1239
  %1241 = vrot.lane.b32.xlu0 %v135, 113
  %v1242 = vpop.permute.xlu0 %1241
  %1243 = vrot.lane.b32.xlu0 %v15, 113
  %v1244 = vpop.permute.xlu0 %1243
  %1245 = vrot.lane.b32.xlu0 %v136, 113
  %v1246 = vpop.permute.xlu0 %1245
  %vm1247 = vcmp.lt.s32.totalorder %v17, 113
  %v1248 = vsel %vm1247, %v1244, %v1246
  %v1249 = vsel %vm1247, %v1242, %v1244
  %v1250 = vsel %vm1247, %v1240, %v1242
  %v1251 = vsel %vm1247, %v1246, %v1240
  %vm1252 = vmand %vm129, %vm117
  %vm1253 = vmand %vm130, %vm118
  %vm1254 = vmand %vm131, %vm119
  %vm1255 = vmand %vm132, %vm120
  %v1256 = vsel %vm1252, 1, 0
  %v1257 = vsel %vm1253, 1, 0
  %v1258 = vsel %vm1254, 1, 0
  %v1259 = vsel %vm1255, 1, 0
  %vm1260 = vcmp.eq.s32.totalorder %v1256, 1
  %vm1261 = vcmp.eq.s32.totalorder %v1257, 1
  %vm1262 = vcmp.eq.s32.totalorder %v1258, 1
  %vm1263 = vcmp.eq.s32.totalorder %v1259, 1
  %v1264 = vsel %vm1260, %v1250, 0.0
  %v1265 = vsel %vm1261, %v1249, 0.0
  %v1266 = vsel %vm1262, %v1248, 0.0
  %v1267 = vsel %vm1263, %v1251, 0.0
  %s1268 = scalar_lea.vmem %s1, 48
  %v1269 = vld [vmem:[%s1268] sm:$0xff]
  %v1271 = vsel %vm196, %v1269, 0
  %v1274 = vsel %vm200, %v1264, 0
  %v1277 = vsel %vm200, %v1265, 0
  %v1280 = vsel %vm200, %v1266, 0
  %v1283 = vsel %vm200, %v1267, 0
  %1285 = vmatprep.subr.mxu0 0.0
  %1286 = vmatpush1.msra.mxu0 0.0
  %1287 = vmatprep.subr.mxu0 0.0
  %1288 = vmatpush1.msra.mxu0 0.0
  %1289 = vmatprep.subr.mxu0 0.0
  %1290 = vmatpush1.msra.mxu0 0.0
  %1291 = vmatprep.subr.mxu0 0.0
  %1292 = vmatpush1.msra.mxu0 0.0
  %1293 = vmatprep.subr.mxu0 0.0
  %1294 = vmatpush1.msra.mxu0 0.0
  %1295 = vmatprep.subr.mxu0 0.0
  %1296 = vmatpush1.msra.mxu0 0.0
  %1297 = vmatprep.subr.mxu0 0.0
  %1298 = vmatpush1.msra.mxu0 0.0
  %1299 = vmatprep.subr.mxu0 0.0
  %1300 = vmatpush1.msra.mxu0 0.0
  %1301 = vmatprep.subr.mxu0 0.0
  %1302 = vmatpush1.msra.mxu0 0.0
  %1303 = vmatprep.subr.mxu0 0.0
  %1304 = vmatpush1.msra.mxu0 0.0
  %1305 = vmatprep.subr.mxu0 0.0
  %1306 = vmatpush1.msra.mxu0 0.0
  %1307 = vmatprep.subr.mxu0 0.0
  %1308 = vmatpush1.msra.mxu0 0.0
  %1309 = vmatprep.subr.mxu0 0.0
  %1310 = vmatpush1.msra.mxu0 0.0
  %1311 = vmatprep.subr.mxu0 0.0
  %1312 = vmatpush1.msra.mxu0 0.0
  %1313 = vmatprep.subr.mxu0 0.0
  %1314 = vmatpush1.msra.mxu0 0.0
  %1315 = vmatprep.subr.mxu0 %v1277
  %1316 = vmatpush1.msra.mxu0 %v1274
  %1317 = vmatprep.subr.mxu0 0.0
  %1318 = vmatpush2.msra.mxu0 0.0
  %1319 = vmatprep.subr.mxu0 0.0
  %1320 = vmatpush2.msra.mxu0 0.0
  %1321 = vmatprep.subr.mxu0 0.0
  %1322 = vmatpush2.msra.mxu0 0.0
  %1323 = vmatprep.subr.mxu0 0.0
  %1324 = vmatpush2.msra.mxu0 0.0
  %1325 = vmatprep.subr.mxu0 0.0
  %1326 = vmatpush2.msra.mxu0 0.0
  %1327 = vmatprep.subr.mxu0 0.0
  %1328 = vmatpush2.msra.mxu0 0.0
  %1329 = vmatprep.subr.mxu0 0.0
  %1330 = vmatpush2.msra.mxu0 0.0
  %1331 = vmatprep.subr.mxu0 0.0
  %1332 = vmatpush2.msra.mxu0 0.0
  %1333 = vmatprep.subr.mxu0 0.0
  %1334 = vmatpush2.msra.mxu0 0.0
  %1335 = vmatprep.subr.mxu0 0.0
  %1336 = vmatpush2.msra.mxu0 0.0
  %1337 = vmatprep.subr.mxu0 0.0
  %1338 = vmatpush2.msra.mxu0 0.0
  %1339 = vmatprep.subr.mxu0 0.0
  %1340 = vmatpush2.msra.mxu0 0.0
  %1341 = vmatprep.subr.mxu0 0.0
  %1342 = vmatpush2.msra.mxu0 0.0
  %1343 = vmatprep.subr.mxu0 0.0
  %1344 = vmatpush2.msra.mxu0 0.0
  %1345 = vmatprep.subr.mxu0 0.0
  %1346 = vmatpush2.msra.mxu0 0.0
  %1347 = vmatprep.subr.mxu0 0.0
  %1348 = vmatpush2.msra.mxu0 0.0
  %1349 = vmatprep.mubr.f32.mxu0 0.0
  %1350 = vmatmul.mubr.f32.gmra.mxu0 %v1271
  %v1351 = vpop.f32.mrf.mxu0
  %v1352 = vadd.f32 0.0, %v1351
  %v1353 = vpop.f32.mrf.mxu0
  %v1354 = vadd.f32 0.0, %v1353
  %1355 = vdwg.mxu0
  %1356 = vmatprep.subr.mxu0 0.0
  %1357 = vmatpush1.msra.mxu0 0.0
  %1358 = vmatprep.subr.mxu0 0.0
  %1359 = vmatpush1.msra.mxu0 0.0
  %1360 = vmatprep.subr.mxu0 0.0
  %1361 = vmatpush1.msra.mxu0 0.0
  %1362 = vmatprep.subr.mxu0 0.0
  %1363 = vmatpush1.msra.mxu0 0.0
  %1364 = vmatprep.subr.mxu0 0.0
  %1365 = vmatpush1.msra.mxu0 0.0
  %1366 = vmatprep.subr.mxu0 0.0
  %1367 = vmatpush1.msra.mxu0 0.0
  %1368 = vmatprep.subr.mxu0 0.0
  %1369 = vmatpush1.msra.mxu0 0.0
  %1370 = vmatprep.subr.mxu0 0.0
  %1371 = vmatpush1.msra.mxu0 0.0
  %1372 = vmatprep.subr.mxu0 0.0
  %1373 = vmatpush1.msra.mxu0 0.0
  %1374 = vmatprep.subr.mxu0 0.0
  %1375 = vmatpush1.msra.mxu0 0.0
  %1376 = vmatprep.subr.mxu0 0.0
  %1377 = vmatpush1.msra.mxu0 0.0
  %1378 = vmatprep.subr.mxu0 0.0
  %1379 = vmatpush1.msra.mxu0 0.0
  %1380 = vmatprep.subr.mxu0 0.0
  %1381 = vmatpush1.msra.mxu0 0.0
  %1382 = vmatprep.subr.mxu0 0.0
  %1383 = vmatpush1.msra.mxu0 0.0
  %1384 = vmatprep.subr.mxu0 0.0
  %1385 = vmatpush1.msra.mxu0 0.0
  %1386 = vmatprep.subr.mxu0 %v1283
  %1387 = vmatpush1.msra.mxu0 %v1280
  %1388 = vmatprep.subr.mxu0 0.0
  %1389 = vmatpush2.msra.mxu0 0.0
  %1390 = vmatprep.subr.mxu0 0.0
  %1391 = vmatpush2.msra.mxu0 0.0
  %1392 = vmatprep.subr.mxu0 0.0
  %1393 = vmatpush2.msra.mxu0 0.0
  %1394 = vmatprep.subr.mxu0 0.0
  %1395 = vmatpush2.msra.mxu0 0.0
  %1396 = vmatprep.subr.mxu0 0.0
  %1397 = vmatpush2.msra.mxu0 0.0
  %1398 = vmatprep.subr.mxu0 0.0
  %1399 = vmatpush2.msra.mxu0 0.0
  %1400 = vmatprep.subr.mxu0 0.0
  %1401 = vmatpush2.msra.mxu0 0.0
  %1402 = vmatprep.subr.mxu0 0.0
  %1403 = vmatpush2.msra.mxu0 0.0
  %1404 = vmatprep.subr.mxu0 0.0
  %1405 = vmatpush2.msra.mxu0 0.0
  %1406 = vmatprep.subr.mxu0 0.0
  %1407 = vmatpush2.msra.mxu0 0.0
  %1408 = vmatprep.subr.mxu0 0.0
  %1409 = vmatpush2.msra.mxu0 0.0
  %1410 = vmatprep.subr.mxu0 0.0
  %1411 = vmatpush2.msra.mxu0 0.0
  %1412 = vmatprep.subr.mxu0 0.0
  %1413 = vmatpush2.msra.mxu0 0.0
  %1414 = vmatprep.subr.mxu0 0.0
  %1415 = vmatpush2.msra.mxu0 0.0
  %1416 = vmatprep.subr.mxu0 0.0
  %1417 = vmatpush2.msra.mxu0 0.0
  %1418 = vmatprep.subr.mxu0 0.0
  %1419 = vmatpush2.msra.mxu0 0.0
  %1420 = vmatprep.mubr.f32.mxu0 0.0
  %1421 = vmatmul.mubr.f32.gmra.mxu0 %v1271
  %v1422 = vpop.f32.mrf.mxu0
  %v1423 = vadd.f32 0.0, %v1422
  %v1424 = vpop.f32.mrf.mxu0
  %v1425 = vadd.f32 0.0, %v1424
  %1426 = vdwg.mxu0
  %v1427 = vadd.f32 %v1235, %v1352
  %v1428 = vadd.f32 %v1236, %v1354
  %v1429 = vadd.f32 %v1237, %v1423
  %v1430 = vadd.f32 %v1238, %v1425
  %1431 = vrot.lane.b32.xlu0 %v14, 112
  %v1432 = vpop.permute.xlu0 %1431
  %1433 = vrot.lane.b32.xlu0 %v135, 112
  %v1434 = vpop.permute.xlu0 %1433
  %1435 = vrot.lane.b32.xlu0 %v15, 112
  %v1436 = vpop.permute.xlu0 %1435
  %1437 = vrot.lane.b32.xlu0 %v136, 112
  %v1438 = vpop.permute.xlu0 %1437
  %vm1439 = vcmp.lt.s32.totalorder %v17, 112
  %v1440 = vsel %vm1439, %v1436, %v1438
  %v1441 = vsel %vm1439, %v1434, %v1436
  %v1442 = vsel %vm1439, %v1432, %v1434
  %v1443 = vsel %vm1439, %v1438, %v1432
  %v1444 = vsel %vm129, 1, 0
  %v1445 = vsel %vm130, 1, 0
  %v1446 = vsel %vm131, 1, 0
  %v1447 = vsel %vm132, 1, 0
  %vm1448 = vcmp.eq.s32.totalorder %v1444, 1
  %vm1449 = vcmp.eq.s32.totalorder %v1445, 1
  %vm1450 = vcmp.eq.s32.totalorder %v1446, 1
  %vm1451 = vcmp.eq.s32.totalorder %v1447, 1
  %v1452 = vsel %vm1448, %v1442, 0.0
  %v1453 = vsel %vm1449, %v1441, 0.0
  %v1454 = vsel %vm1450, %v1440, 0.0
  %v1455 = vsel %vm1451, %v1443, 0.0
  %s1456 = scalar_lea.vmem %s1, 56
  %v1457 = vld [vmem:[%s1456] sm:$0xff]
  %v1459 = vsel %vm196, %v1457, 0
  %v1462 = vsel %vm200, %v1452, 0
  %v1465 = vsel %vm200, %v1453, 0
  %v1468 = vsel %vm200, %v1454, 0
  %v1471 = vsel %vm200, %v1455, 0
  %1473 = vmatprep.subr.mxu0 0.0
  %1474 = vmatpush1.msra.mxu0 0.0
  %1475 = vmatprep.subr.mxu0 0.0
  %1476 = vmatpush1.msra.mxu0 0.0
  %1477 = vmatprep.subr.mxu0 0.0
  %1478 = vmatpush1.msra.mxu0 0.0
  %1479 = vmatprep.subr.mxu0 0.0
  %1480 = vmatpush1.msra.mxu0 0.0
  %1481 = vmatprep.subr.mxu0 0.0
  %1482 = vmatpush1.msra.mxu0 0.0
  %1483 = vmatprep.subr.mxu0 0.0
  %1484 = vmatpush1.msra.mxu0 0.0
  %1485 = vmatprep.subr.mxu0 0.0
  %1486 = vmatpush1.msra.mxu0 0.0
  %1487 = vmatprep.subr.mxu0 0.0
  %1488 = vmatpush1.msra.mxu0 0.0
  %1489 = vmatprep.subr.mxu0 0.0
  %1490 = vmatpush1.msra.mxu0 0.0
  %1491 = vmatprep.subr.mxu0 0.0
  %1492 = vmatpush1.msra.mxu0 0.0
  %1493 = vmatprep.subr.mxu0 0.0
  %1494 = vmatpush1.msra.mxu0 0.0
  %1495 = vmatprep.subr.mxu0 0.0
  %1496 = vmatpush1.msra.mxu0 0.0
  %1497 = vmatprep.subr.mxu0 0.0
  %1498 = vmatpush1.msra.mxu0 0.0
  %1499 = vmatprep.subr.mxu0 0.0
  %1500 = vmatpush1.msra.mxu0 0.0
  %1501 = vmatprep.subr.mxu0 0.0
  %1502 = vmatpush1.msra.mxu0 0.0
  %1503 = vmatprep.subr.mxu0 %v1465
  %1504 = vmatpush1.msra.mxu0 %v1462
  %1505 = vmatprep.subr.mxu0 0.0
  %1506 = vmatpush2.msra.mxu0 0.0
  %1507 = vmatprep.subr.mxu0 0.0
  %1508 = vmatpush2.msra.mxu0 0.0
  %1509 = vmatprep.subr.mxu0 0.0
  %1510 = vmatpush2.msra.mxu0 0.0
  %1511 = vmatprep.subr.mxu0 0.0
  %1512 = vmatpush2.msra.mxu0 0.0
  %1513 = vmatprep.subr.mxu0 0.0
  %1514 = vmatpush2.msra.mxu0 0.0
  %1515 = vmatprep.subr.mxu0 0.0
  %1516 = vmatpush2.msra.mxu0 0.0
  %1517 = vmatprep.subr.mxu0 0.0
  %1518 = vmatpush2.msra.mxu0 0.0
  %1519 = vmatprep.subr.mxu0 0.0
  %1520 = vmatpush2.msra.mxu0 0.0
  %1521 = vmatprep.subr.mxu0 0.0
  %1522 = vmatpush2.msra.mxu0 0.0
  %1523 = vmatprep.subr.mxu0 0.0
  %1524 = vmatpush2.msra.mxu0 0.0
  %1525 = vmatprep.subr.mxu0 0.0
  %1526 = vmatpush2.msra.mxu0 0.0
  %1527 = vmatprep.subr.mxu0 0.0
  %1528 = vmatpush2.msra.mxu0 0.0
  %1529 = vmatprep.subr.mxu0 0.0
  %1530 = vmatpush2.msra.mxu0 0.0
  %1531 = vmatprep.subr.mxu0 0.0
  %1532 = vmatpush2.msra.mxu0 0.0
  %1533 = vmatprep.subr.mxu0 0.0
  %1534 = vmatpush2.msra.mxu0 0.0
  %1535 = vmatprep.subr.mxu0 0.0
  %1536 = vmatpush2.msra.mxu0 0.0
  %1537 = vmatprep.mubr.f32.mxu0 0.0
  %1538 = vmatmul.mubr.f32.gmra.mxu0 %v1459
  %v1539 = vpop.f32.mrf.mxu0
  %v1540 = vadd.f32 0.0, %v1539
  %v1541 = vpop.f32.mrf.mxu0
  %v1542 = vadd.f32 0.0, %v1541
  %1543 = vdwg.mxu0
  %1544 = vmatprep.subr.mxu0 0.0
  %1545 = vmatpush1.msra.mxu0 0.0
  %1546 = vmatprep.subr.mxu0 0.0
  %1547 = vmatpush1.msra.mxu0 0.0
  %1548 = vmatprep.subr.mxu0 0.0
  %1549 = vmatpush1.msra.mxu0 0.0
  %1550 = vmatprep.subr.mxu0 0.0
  %1551 = vmatpush1.msra.mxu0 0.0
  %1552 = vmatprep.subr.mxu0 0.0
  %1553 = vmatpush1.msra.mxu0 0.0
  %1554 = vmatprep.subr.mxu0 0.0
  %1555 = vmatpush1.msra.mxu0 0.0
  %1556 = vmatprep.subr.mxu0 0.0
  %1557 = vmatpush1.msra.mxu0 0.0
  %1558 = vmatprep.subr.mxu0 0.0
  %1559 = vmatpush1.msra.mxu0 0.0
  %1560 = vmatprep.subr.mxu0 0.0
  %1561 = vmatpush1.msra.mxu0 0.0
  %1562 = vmatprep.subr.mxu0 0.0
  %1563 = vmatpush1.msra.mxu0 0.0
  %1564 = vmatprep.subr.mxu0 0.0
  %1565 = vmatpush1.msra.mxu0 0.0
  %1566 = vmatprep.subr.mxu0 0.0
  %1567 = vmatpush1.msra.mxu0 0.0
  %1568 = vmatprep.subr.mxu0 0.0
  %1569 = vmatpush1.msra.mxu0 0.0
  %1570 = vmatprep.subr.mxu0 0.0
  %1571 = vmatpush1.msra.mxu0 0.0
  %1572 = vmatprep.subr.mxu0 0.0
  %1573 = vmatpush1.msra.mxu0 0.0
  %1574 = vmatprep.subr.mxu0 %v1471
  %1575 = vmatpush1.msra.mxu0 %v1468
  %1576 = vmatprep.subr.mxu0 0.0
  %1577 = vmatpush2.msra.mxu0 0.0
  %1578 = vmatprep.subr.mxu0 0.0
  %1579 = vmatpush2.msra.mxu0 0.0
  %1580 = vmatprep.subr.mxu0 0.0
  %1581 = vmatpush2.msra.mxu0 0.0
  %1582 = vmatprep.subr.mxu0 0.0
  %1583 = vmatpush2.msra.mxu0 0.0
  %1584 = vmatprep.subr.mxu0 0.0
  %1585 = vmatpush2.msra.mxu0 0.0
  %1586 = vmatprep.subr.mxu0 0.0
  %1587 = vmatpush2.msra.mxu0 0.0
  %1588 = vmatprep.subr.mxu0 0.0
  %1589 = vmatpush2.msra.mxu0 0.0
  %1590 = vmatprep.subr.mxu0 0.0
  %1591 = vmatpush2.msra.mxu0 0.0
  %1592 = vmatprep.subr.mxu0 0.0
  %1593 = vmatpush2.msra.mxu0 0.0
  %1594 = vmatprep.subr.mxu0 0.0
  %1595 = vmatpush2.msra.mxu0 0.0
  %1596 = vmatprep.subr.mxu0 0.0
  %1597 = vmatpush2.msra.mxu0 0.0
  %1598 = vmatprep.subr.mxu0 0.0
  %1599 = vmatpush2.msra.mxu0 0.0
  %1600 = vmatprep.subr.mxu0 0.0
  %1601 = vmatpush2.msra.mxu0 0.0
  %1602 = vmatprep.subr.mxu0 0.0
  %1603 = vmatpush2.msra.mxu0 0.0
  %1604 = vmatprep.subr.mxu0 0.0
  %1605 = vmatpush2.msra.mxu0 0.0
  %1606 = vmatprep.subr.mxu0 0.0
  %1607 = vmatpush2.msra.mxu0 0.0
  %1608 = vmatprep.mubr.f32.mxu0 0.0
  %1609 = vmatmul.mubr.f32.gmra.mxu0 %v1459
  %v1610 = vpop.f32.mrf.mxu0
  %v1611 = vadd.f32 0.0, %v1610
  %v1612 = vpop.f32.mrf.mxu0
  %v1613 = vadd.f32 0.0, %v1612
  %1614 = vdwg.mxu0
  %v1615 = vadd.f32 %v1427, %v1540
  %v1616 = vadd.f32 %v1428, %v1542
  %v1617 = vadd.f32 %v1429, %v1611
  %v1618 = vadd.f32 %v1430, %v1613
  %1619 = vrot.lane.b32.xlu0 %v14, 111
  %v1620 = vpop.permute.xlu0 %1619
  %1621 = vrot.lane.b32.xlu0 %v135, 111
  %v1622 = vpop.permute.xlu0 %1621
  %1623 = vrot.lane.b32.xlu0 %v15, 111
  %v1624 = vpop.permute.xlu0 %1623
  %1625 = vrot.lane.b32.xlu0 %v136, 111
  %v1626 = vpop.permute.xlu0 %1625
  %vm1627 = vcmp.lt.s32.totalorder %v17, 111
  %v1628 = vsel %vm1627, %v1624, %v1626
  %v1629 = vsel %vm1627, %v1622, %v1624
  %v1630 = vsel %vm1627, %v1620, %v1622
  %v1631 = vsel %vm1627, %v1626, %v1620
  %vm1632 = vmand %vm129, %vm121
  %vm1633 = vmand %vm130, %vm122
  %vm1634 = vmand %vm131, %vm123
  %vm1635 = vmand %vm132, %vm124
  %v1636 = vsel %vm1632, 1, 0
  %v1637 = vsel %vm1633, 1, 0
  %v1638 = vsel %vm1634, 1, 0
  %v1639 = vsel %vm1635, 1, 0
  %vm1640 = vcmp.eq.s32.totalorder %v1636, 1
  %vm1641 = vcmp.eq.s32.totalorder %v1637, 1
  %vm1642 = vcmp.eq.s32.totalorder %v1638, 1
  %vm1643 = vcmp.eq.s32.totalorder %v1639, 1
  %v1644 = vsel %vm1640, %v1630, 0.0
  %v1645 = vsel %vm1641, %v1629, 0.0
  %v1646 = vsel %vm1642, %v1628, 0.0
  %v1647 = vsel %vm1643, %v1631, 0.0
  %s1648 = scalar_lea.vmem %s1, 64
  %v1649 = vld [vmem:[%s1648] sm:$0xff]
  %v1651 = vsel %vm196, %v1649, 0
  %v1654 = vsel %vm200, %v1644, 0
  %v1657 = vsel %vm200, %v1645, 0
  %v1660 = vsel %vm200, %v1646, 0
  %v1663 = vsel %vm200, %v1647, 0
  %1665 = vmatprep.subr.mxu0 0.0
  %1666 = vmatpush1.msra.mxu0 0.0
  %1667 = vmatprep.subr.mxu0 0.0
  %1668 = vmatpush1.msra.mxu0 0.0
  %1669 = vmatprep.subr.mxu0 0.0
  %1670 = vmatpush1.msra.mxu0 0.0
  %1671 = vmatprep.subr.mxu0 0.0
  %1672 = vmatpush1.msra.mxu0 0.0
  %1673 = vmatprep.subr.mxu0 0.0
  %1674 = vmatpush1.msra.mxu0 0.0
  %1675 = vmatprep.subr.mxu0 0.0
  %1676 = vmatpush1.msra.mxu0 0.0
  %1677 = vmatprep.subr.mxu0 0.0
  %1678 = vmatpush1.msra.mxu0 0.0
  %1679 = vmatprep.subr.mxu0 0.0
  %1680 = vmatpush1.msra.mxu0 0.0
  %1681 = vmatprep.subr.mxu0 0.0
  %1682 = vmatpush1.msra.mxu0 0.0
  %1683 = vmatprep.subr.mxu0 0.0
  %1684 = vmatpush1.msra.mxu0 0.0
  %1685 = vmatprep.subr.mxu0 0.0
  %1686 = vmatpush1.msra.mxu0 0.0
  %1687 = vmatprep.subr.mxu0 0.0
  %1688 = vmatpush1.msra.mxu0 0.0
  %1689 = vmatprep.subr.mxu0 0.0
  %1690 = vmatpush1.msra.mxu0 0.0
  %1691 = vmatprep.subr.mxu0 0.0
  %1692 = vmatpush1.msra.mxu0 0.0
  %1693 = vmatprep.subr.mxu0 0.0
  %1694 = vmatpush1.msra.mxu0 0.0
  %1695 = vmatprep.subr.mxu0 %v1657
  %1696 = vmatpush1.msra.mxu0 %v1654
  %1697 = vmatprep.subr.mxu0 0.0
  %1698 = vmatpush2.msra.mxu0 0.0
  %1699 = vmatprep.subr.mxu0 0.0
  %1700 = vmatpush2.msra.mxu0 0.0
  %1701 = vmatprep.subr.mxu0 0.0
  %1702 = vmatpush2.msra.mxu0 0.0
  %1703 = vmatprep.subr.mxu0 0.0
  %1704 = vmatpush2.msra.mxu0 0.0
  %1705 = vmatprep.subr.mxu0 0.0
  %1706 = vmatpush2.msra.mxu0 0.0
  %1707 = vmatprep.subr.mxu0 0.0
  %1708 = vmatpush2.msra.mxu0 0.0
  %1709 = vmatprep.subr.mxu0 0.0
  %1710 = vmatpush2.msra.mxu0 0.0
  %1711 = vmatprep.subr.mxu0 0.0
  %1712 = vmatpush2.msra.mxu0 0.0
  %1713 = vmatprep.subr.mxu0 0.0
  %1714 = vmatpush2.msra.mxu0 0.0
  %1715 = vmatprep.subr.mxu0 0.0
  %1716 = vmatpush2.msra.mxu0 0.0
  %1717 = vmatprep.subr.mxu0 0.0
  %1718 = vmatpush2.msra.mxu0 0.0
  %1719 = vmatprep.subr.mxu0 0.0
  %1720 = vmatpush2.msra.mxu0 0.0
  %1721 = vmatprep.subr.mxu0 0.0
  %1722 = vmatpush2.msra.mxu0 0.0
  %1723 = vmatprep.subr.mxu0 0.0
  %1724 = vmatpush2.msra.mxu0 0.0
  %1725 = vmatprep.subr.mxu0 0.0
  %1726 = vmatpush2.msra.mxu0 0.0
  %1727 = vmatprep.subr.mxu0 0.0
  %1728 = vmatpush2.msra.mxu0 0.0
  %1729 = vmatprep.mubr.f32.mxu0 0.0
  %1730 = vmatmul.mubr.f32.gmra.mxu0 %v1651
  %v1731 = vpop.f32.mrf.mxu0
  %v1732 = vadd.f32 0.0, %v1731
  %v1733 = vpop.f32.mrf.mxu0
  %v1734 = vadd.f32 0.0, %v1733
  %1735 = vdwg.mxu0
  %1736 = vmatprep.subr.mxu0 0.0
  %1737 = vmatpush1.msra.mxu0 0.0
  %1738 = vmatprep.subr.mxu0 0.0
  %1739 = vmatpush1.msra.mxu0 0.0
  %1740 = vmatprep.subr.mxu0 0.0
  %1741 = vmatpush1.msra.mxu0 0.0
  %1742 = vmatprep.subr.mxu0 0.0
  %1743 = vmatpush1.msra.mxu0 0.0
  %1744 = vmatprep.subr.mxu0 0.0
  %1745 = vmatpush1.msra.mxu0 0.0
  %1746 = vmatprep.subr.mxu0 0.0
  %1747 = vmatpush1.msra.mxu0 0.0
  %1748 = vmatprep.subr.mxu0 0.0
  %1749 = vmatpush1.msra.mxu0 0.0
  %1750 = vmatprep.subr.mxu0 0.0
  %1751 = vmatpush1.msra.mxu0 0.0
  %1752 = vmatprep.subr.mxu0 0.0
  %1753 = vmatpush1.msra.mxu0 0.0
  %1754 = vmatprep.subr.mxu0 0.0
  %1755 = vmatpush1.msra.mxu0 0.0
  %1756 = vmatprep.subr.mxu0 0.0
  %1757 = vmatpush1.msra.mxu0 0.0
  %1758 = vmatprep.subr.mxu0 0.0
  %1759 = vmatpush1.msra.mxu0 0.0
  %1760 = vmatprep.subr.mxu0 0.0
  %1761 = vmatpush1.msra.mxu0 0.0
  %1762 = vmatprep.subr.mxu0 0.0
  %1763 = vmatpush1.msra.mxu0 0.0
  %1764 = vmatprep.subr.mxu0 0.0
  %1765 = vmatpush1.msra.mxu0 0.0
  %1766 = vmatprep.subr.mxu0 %v1663
  %1767 = vmatpush1.msra.mxu0 %v1660
  %1768 = vmatprep.subr.mxu0 0.0
  %1769 = vmatpush2.msra.mxu0 0.0
  %1770 = vmatprep.subr.mxu0 0.0
  %1771 = vmatpush2.msra.mxu0 0.0
  %1772 = vmatprep.subr.mxu0 0.0
  %1773 = vmatpush2.msra.mxu0 0.0
  %1774 = vmatprep.subr.mxu0 0.0
  %1775 = vmatpush2.msra.mxu0 0.0
  %1776 = vmatprep.subr.mxu0 0.0
  %1777 = vmatpush2.msra.mxu0 0.0
  %1778 = vmatprep.subr.mxu0 0.0
  %1779 = vmatpush2.msra.mxu0 0.0
  %1780 = vmatprep.subr.mxu0 0.0
  %1781 = vmatpush2.msra.mxu0 0.0
  %1782 = vmatprep.subr.mxu0 0.0
  %1783 = vmatpush2.msra.mxu0 0.0
  %1784 = vmatprep.subr.mxu0 0.0
  %1785 = vmatpush2.msra.mxu0 0.0
  %1786 = vmatprep.subr.mxu0 0.0
  %1787 = vmatpush2.msra.mxu0 0.0
  %1788 = vmatprep.subr.mxu0 0.0
  %1789 = vmatpush2.msra.mxu0 0.0
  %1790 = vmatprep.subr.mxu0 0.0
  %1791 = vmatpush2.msra.mxu0 0.0
  %1792 = vmatprep.subr.mxu0 0.0
  %1793 = vmatpush2.msra.mxu0 0.0
  %1794 = vmatprep.subr.mxu0 0.0
  %1795 = vmatpush2.msra.mxu0 0.0
  %1796 = vmatprep.subr.mxu0 0.0
  %1797 = vmatpush2.msra.mxu0 0.0
  %1798 = vmatprep.subr.mxu0 0.0
  %1799 = vmatpush2.msra.mxu0 0.0
  %1800 = vmatprep.mubr.f32.mxu0 0.0
  %1801 = vmatmul.mubr.f32.gmra.mxu0 %v1651
  %v1802 = vpop.f32.mrf.mxu0
  %v1803 = vadd.f32 0.0, %v1802
  %v1804 = vpop.f32.mrf.mxu0
  %v1805 = vadd.f32 0.0, %v1804
  %1806 = vdwg.mxu0
  %v1807 = vadd.f32 %v1615, %v1732
  %v1808 = vadd.f32 %v1616, %v1734
  %v1809 = vadd.f32 %v1617, %v1803
  %v1810 = vadd.f32 %v1618, %v1805
  %v1811 = vld [vmem:[%s2] sm:$0xff]
  %1813 = vset.pattern.permute.xlu0 0
  %1814 = vperm.xlu0 %1813, %v1811
  %v1815 = vpop.permute.xlu0 %1814
  %v1817 = vadd.f32 %v1807, %v1815
  %v1818 = vadd.f32 %v1808, %v1815
  %v1819 = vadd.f32 %v1809, %v1815
  %v1820 = vadd.f32 %v1810, %v1815
  %vm1821 = vcmp.ge.f32.partialorder %v1817, 0.0
  %vm1822 = vcmp.ge.f32.partialorder %v1818, 0.0
  %vm1823 = vcmp.ge.f32.partialorder %v1819, 0.0
  %vm1824 = vcmp.ge.f32.partialorder %v1820, 0.0
  %v1825 = vmul.f32 %v1817, 0.01
  %v1826 = vmul.f32 %v1818, 0.01
  %v1827 = vmul.f32 %v1819, 0.01
  %v1828 = vmul.f32 %v1820, 0.01
  %v1829 = vsel %vm1821, %v1817, %v1825
  %v1830 = vsel %vm1822, %v1818, %v1826
  %v1831 = vsel %vm1823, %v1819, %v1827
  %v1832 = vsel %vm1824, %v1820, %v1828
  %1833 = vst [vmem:[%s3] sm:$0xff] %v1829
  %1834 = vst [vmem:[%s3 + $0x8] sm:$0xff] %v1830
  %1835 = vst [vmem:[%s3 + $0x10] sm:$0xff] %v1831
  %1836 = vst [vmem:[%s3 + $0x18] sm:$0xff] %v1832
  // Predicated region
  $region14: #{automata_block_up.3} parent=0 // pred_check
    _
  $region15: #{automata_block_up.3} parent=0 // pred_check_branch
    %1838 = sbr.rel (0) target = $region17
  $region16: #{automata_block_up.3} parent=0 // pred_region
    _
  $region17: #{automata_block_up.3} parent=0 // pred_fallthru
    _
  // Predicated region
  $region18: #{automata_block_up.3} parent=0 // pred_check
    _
  $region19: #{automata_block_up.3} parent=0 // pred_check_branch
    %1840 = sbr.rel (0) target = $region21
  $region20: #{automata_block_up.3} parent=0 // pred_region
    _
  $region21: #{automata_block_up.3} parent=0 // pred_fallthru
    _

// kernel: automata_block_up.4
$region0: #{automata_block_up.4}
  #allocation0 [shape = 'u32[]', space=smem, size = 0x4, offset = 0x4, fixed_abs, tag = 'smem constant byte address 0x4 - core index']
  #allocation1 [shape = 'u32[144,128]{1,0:T(1,128)}', space=vmem, size = 0x12000, scoped, tag = 'internal scratch']
  %s0 = inlined_call_operand.vmem [shape: f32[8,512], index: 0, kind: input, shape index: {}]
  %s1 = inlined_call_operand.vmem [shape: f32[8,512], index: 1, kind: input, shape index: {}]
  %s2 = inlined_call_operand.vmem [shape: f32[8,1], index: 2, kind: input, shape index: {}]
  %s3 = inlined_call_operand.vmem [shape: f32[8,1], index: 3, kind: input, shape index: {}]
  %s4 = inlined_call_operand.vmem [shape: f32[8,8], index: 4, kind: input, shape index: {}]
  %s5 = inlined_call_operand.vmem [shape: f32[8,1], index: 5, kind: input, shape index: {}]
  %s6 = inlined_call_operand.vmem [shape: f32[48,8], index: 6, kind: input, shape index: {}]
  %s7 = inlined_call_operand.vmem [shape: f32[48,1], index: 7, kind: input, shape index: {}]
  %s8 = inlined_call_operand.vmem [shape: f32[8,1], index: 8, kind: input, shape index: {}]
  %s9 = inlined_call_operand.vmem [shape: f32[8,1], index: 9, kind: input, shape index: {}]
  %s10 = inlined_call_operand.vmem [shape: f32[8,8], index: 10, kind: input, shape index: {}]
  %s11 = inlined_call_operand.vmem [shape: f32[8,1], index: 11, kind: input, shape index: {}]
  %s12 = inlined_call_operand.vmem [shape: f32[8,8], index: 12, kind: input, shape index: {}]
  %s13 = inlined_call_operand.vmem [shape: f32[8,1], index: 13, kind: input, shape index: {}]
  %s14 = inlined_call_operand.vmem [shape: f32[8,1], index: 14, kind: input, shape index: {}]
  %s15 = inlined_call_operand.vmem [shape: f32[8,1], index: 15, kind: input, shape index: {}]
  %s16 = inlined_call_operand.vmem [shape: bf16[8,512], index: 16, kind: output, shape index: {}]
  %s17 = sld [smem:[#allocation0]]
  $region74: #{automata_block_up.4} parent=0
    _
  %s19 = ssub.s32 1, %s17
  %s20 = scalar_select 0, %s19, %s17
  // Predicated region
  $region2: #{automata_block_up.4} parent=0 // pred_check
    _
  $region3: #{automata_block_up.4} parent=0 // pred_check_branch
    %22 = sbr.rel (0) target = $region5
  $region4: #{automata_block_up.4} parent=0 // pred_region
    _
  $region5: #{automata_block_up.4} parent=0 // pred_fallthru
    _
  // Predicated region
  $region6: #{automata_block_up.4} parent=0 // pred_check
    _
  $region7: #{automata_block_up.4} parent=0 // pred_check_branch
    %24 = sbr.rel (0) target = $region9
  $region8: #{automata_block_up.4} parent=0 // pred_region
    _
  $region9: #{automata_block_up.4} parent=0 // pred_fallthru
    _
  // Predicated region
  $region10: #{automata_block_up.4} parent=0 // pred_check
    _
  $region11: #{automata_block_up.4} parent=0 // pred_check_branch
    %26 = sbr.rel (0) target = $region13
  $region12: #{automata_block_up.4} parent=0 // pred_region
    _
  $region13: #{automata_block_up.4} parent=0 // pred_fallthru
    _
  // Predicated region
  $region14: #{automata_block_up.4} parent=0 // pred_check
    _
  $region15: #{automata_block_up.4} parent=0 // pred_check_branch
    %28 = sbr.rel (0) target = $region17
  $region16: #{automata_block_up.4} parent=0 // pred_region
    _
  $region17: #{automata_block_up.4} parent=0 // pred_fallthru
    _
  // Predicated region
  $region18: #{automata_block_up.4} parent=0 // pred_check
    _
  $region19: #{automata_block_up.4} parent=0 // pred_check_branch
    %30 = sbr.rel (0) target = $region21
  $region20: #{automata_block_up.4} parent=0 // pred_region
    _
  $region21: #{automata_block_up.4} parent=0 // pred_fallthru
    _
  // Predicated region
  $region22: #{automata_block_up.4} parent=0 // pred_check
    _
  $region23: #{automata_block_up.4} parent=0 // pred_check_branch
    %32 = sbr.rel (0) target = $region25
  $region24: #{automata_block_up.4} parent=0 // pred_region
    _
  $region25: #{automata_block_up.4} parent=0 // pred_fallthru
    _
  // Predicated region
  $region26: #{automata_block_up.4} parent=0 // pred_check
    _
  $region27: #{automata_block_up.4} parent=0 // pred_check_branch
    %34 = sbr.rel (0) target = $region29
  $region28: #{automata_block_up.4} parent=0 // pred_region
    _
  $region29: #{automata_block_up.4} parent=0 // pred_fallthru
    _
  // Predicated region
  $region30: #{automata_block_up.4} parent=0 // pred_check
    _
  $region31: #{automata_block_up.4} parent=0 // pred_check_branch
    %36 = sbr.rel (0) target = $region33
  $region32: #{automata_block_up.4} parent=0 // pred_region
    _
  $region33: #{automata_block_up.4} parent=0 // pred_fallthru
    _
  // Predicated region
  $region34: #{automata_block_up.4} parent=0 // pred_check
    _
  $region35: #{automata_block_up.4} parent=0 // pred_check_branch
    %38 = sbr.rel (0) target = $region37
  $region36: #{automata_block_up.4} parent=0 // pred_region
    _
  $region37: #{automata_block_up.4} parent=0 // pred_fallthru
    _
  // Predicated region
  $region38: #{automata_block_up.4} parent=0 // pred_check
    _
  $region39: #{automata_block_up.4} parent=0 // pred_check_branch
    %40 = sbr.rel (0) target = $region41
  $region40: #{automata_block_up.4} parent=0 // pred_region
    _
  $region41: #{automata_block_up.4} parent=0 // pred_fallthru
    _
  // Predicated region
  $region42: #{automata_block_up.4} parent=0 // pred_check
    _
  $region43: #{automata_block_up.4} parent=0 // pred_check_branch
    %42 = sbr.rel (0) target = $region45
  $region44: #{automata_block_up.4} parent=0 // pred_region
    _
  $region45: #{automata_block_up.4} parent=0 // pred_fallthru
    _
  // Predicated region
  $region46: #{automata_block_up.4} parent=0 // pred_check
    _
  $region47: #{automata_block_up.4} parent=0 // pred_check_branch
    %44 = sbr.rel (0) target = $region49
  $region48: #{automata_block_up.4} parent=0 // pred_region
    _
  $region49: #{automata_block_up.4} parent=0 // pred_fallthru
    _
  // Predicated region
  $region50: #{automata_block_up.4} parent=0 // pred_check
    _
  $region51: #{automata_block_up.4} parent=0 // pred_check_branch
    %46 = sbr.rel (0) target = $region53
  $region52: #{automata_block_up.4} parent=0 // pred_region
    _
  $region53: #{automata_block_up.4} parent=0 // pred_fallthru
    _
  // Predicated region
  $region54: #{automata_block_up.4} parent=0 // pred_check
    _
  $region55: #{automata_block_up.4} parent=0 // pred_check_branch
    %48 = sbr.rel (0) target = $region57
  $region56: #{automata_block_up.4} parent=0 // pred_region
    _
  $region57: #{automata_block_up.4} parent=0 // pred_fallthru
    _
  // Predicated region
  $region58: #{automata_block_up.4} parent=0 // pred_check
    _
  $region59: #{automata_block_up.4} parent=0 // pred_check_branch
    %50 = sbr.rel (0) target = $region61
  $region60: #{automata_block_up.4} parent=0 // pred_region
    _
  $region61: #{automata_block_up.4} parent=0 // pred_fallthru
    _
  // Predicated region
  $region62: #{automata_block_up.4} parent=0 // pred_check
    _
  $region63: #{automata_block_up.4} parent=0 // pred_check_branch
    %52 = sbr.rel (0) target = $region65
  $region64: #{automata_block_up.4} parent=0 // pred_region
    _
  $region65: #{automata_block_up.4} parent=0 // pred_fallthru
    _
  %v53 = vld [vmem:[%s0] sm:$0xff]
  %v54 = vld [vmem:[%s0 + $0x8] sm:$0xff]
  %v55 = vld [vmem:[%s0 + $0x10] sm:$0xff]
  %v56 = vld [vmem:[%s0 + $0x18] sm:$0xff]
  %v57 = vld [vmem:[%s1] sm:$0xff]
  %v58 = vld [vmem:[%s1 + $0x8] sm:$0xff]
  %v59 = vld [vmem:[%s1 + $0x10] sm:$0xff]
  %v60 = vld [vmem:[%s1 + $0x18] sm:$0xff]
  %v61 = vld [vmem:[%s2] sm:$0xff]
  %v62 = vld [vmem:[%s3] sm:$0xff]
  %v63 = vld [vmem:[%s4] sm:$0xff]
  %v64 = vld [vmem:[%s5] sm:$0xff]
  %v65 = vld [vmem:[%s6] sm:$0xff]
  %v66 = vld [vmem:[%s6 + $0x8] sm:$0xff]
  %v67 = vld [vmem:[%s6 + $0x10] sm:$0xff]
  %v68 = vld [vmem:[%s6 + $0x18] sm:$0xff]
  %v69 = vld [vmem:[%s6 + $0x20] sm:$0xff]
  %v70 = vld [vmem:[%s6 + $0x28] sm:$0xff]
  %v71 = vld [vmem:[%s7] sm:$0xff]
  %v72 = vld [vmem:[%s7 + $0x8] sm:$0xff]
  %v73 = vld [vmem:[%s7 + $0x10] sm:$0xff]
  %v74 = vld [vmem:[%s7 + $0x18] sm:$0xff]
  %v75 = vld [vmem:[%s7 + $0x20] sm:$0xff]
  %v76 = vld [vmem:[%s7 + $0x28] sm:$0xff]
  %v77 = vld [vmem:[%s8] sm:$0xff]
  %v78 = vld [vmem:[%s9] sm:$0xff]
  %v79 = vld [vmem:[%s10] sm:$0xff]
  %v80 = vld [vmem:[%s11] sm:$0xff]
  %v81 = vld [vmem:[%s12] sm:$0xff]
  %v82 = vld [vmem:[%s13] sm:$0xff]
  %v83 = vld [vmem:[%s14] sm:$0xff]
  %v84 = vld [vmem:[%s15] sm:$0xff]
  %v85 = vrot.slane %v53, 4
  %v86 = vmax.f32 %v53, %v85
  %v87 = vrot.slane %v86, 2
  %v88 = vmax.f32 %v86, %v87
  %v89 = vrot.slane %v88, 1
  %v90 = vmax.f32 %v88, %v89
  %v91 = vrot.slane %v54, 4
  %v92 = vmax.f32 %v54, %v91
  %v93 = vrot.slane %v92, 2
  %v94 = vmax.f32 %v92, %v93
  %v95 = vrot.slane %v94, 1
  %v96 = vmax.f32 %v94, %v95
  %v97 = vrot.slane %v55, 4
  %v98 = vmax.f32 %v55, %v97
  %v99 = vrot.slane %v98, 2
  %v100 = vmax.f32 %v98, %v99
  %v101 = vrot.slane %v100, 1
  %v102 = vmax.f32 %v100, %v101
  %v103 = vrot.slane %v56, 4
  %v104 = vmax.f32 %v56, %v103
  %v105 = vrot.slane %v104, 2
  %v106 = vmax.f32 %v104, %v105
  %v107 = vrot.slane %v106, 1
  %v108 = vmax.f32 %v106, %v107
  %v109 = vsub.f32 %v53, %v90
  %v110 = vsub.f32 %v54, %v96
  %v111 = vsub.f32 %v55, %v102
  %v112 = vsub.f32 %v56, %v108
  %v113 = vmul.f32 %v109, 1.442695
  %v114 = vpow.pop %v113
  %v115 = vmul.f32 %v110, 1.442695
  %v116 = vpow.pop %v115
  %v117 = vmul.f32 %v111, 1.442695
  %v118 = vpow.pop %v117
  %v119 = vmul.f32 %v112, 1.442695
  %v120 = vpow.pop %v119
  %v121 = vrot.slane %v114, 4
  %v122 = vadd.f32 %v114, %v121
  %v123 = vrot.slane %v122, 2
  %v124 = vadd.f32 %v122, %v123
  %v125 = vrot.slane %v124, 1
  %v126 = vadd.f32 %v124, %v125
  %v127 = vrot.slane %v116, 4
  %v128 = vadd.f32 %v116, %v127
  %v129 = vrot.slane %v128, 2
  %v130 = vadd.f32 %v128, %v129
  %v131 = vrot.slane %v130, 1
  %v132 = vadd.f32 %v130, %v131
  %v133 = vrot.slane %v118, 4
  %v134 = vadd.f32 %v118, %v133
  %v135 = vrot.slane %v134, 2
  %v136 = vadd.f32 %v134, %v135
  %v137 = vrot.slane %v136, 1
  %v138 = vadd.f32 %v136, %v137
  %v139 = vrot.slane %v120, 4
  %v140 = vadd.f32 %v120, %v139
  %v141 = vrot.slane %v140, 2
  %v142 = vadd.f32 %v140, %v141
  %v143 = vrot.slane %v142, 1
  %v144 = vadd.f32 %v142, %v143
  %v145 = vrcp.pop %v126
  %v146 = vrcp.pop %v132
  %v147 = vrcp.pop %v138
  %v148 = vrcp.pop %v144
  %v149 = vmul.f32 %v114, %v145
  %v150 = vmul.f32 %v116, %v146
  %v151 = vmul.f32 %v118, %v147
  %v152 = vmul.f32 %v120, %v148
  %153 = vmatprep.subr.mxu0 0.0
  %154 = vmatpush1.msra.mxu0 1.0
  %155 = vmatprep.subr.mxu0 0.0
  %156 = vmatpush1.msra.mxu0 1.0
  %157 = vmatprep.subr.mxu0 0.0
  %158 = vmatpush1.msra.mxu0 1.0
  %159 = vmatprep.subr.mxu0 0.0
  %160 = vmatpush1.msra.mxu0 1.0
  %161 = vmatprep.subr.mxu0 0.0
  %162 = vmatpush1.msra.mxu0 1.0
  %163 = vmatprep.subr.mxu0 0.0
  %164 = vmatpush1.msra.mxu0 1.0
  %165 = vmatprep.subr.mxu0 0.0
  %166 = vmatpush1.msra.mxu0 1.0
  %167 = vmatprep.subr.mxu0 0.0
  %168 = vmatpush1.msra.mxu0 1.0
  %169 = vmatprep.subr.mxu0 0.0
  %170 = vmatpush1.msra.mxu0 1.0
  %171 = vmatprep.subr.mxu0 0.0
  %172 = vmatpush1.msra.mxu0 1.0
  %173 = vmatprep.subr.mxu0 0.0
  %174 = vmatpush1.msra.mxu0 1.0
  %175 = vmatprep.subr.mxu0 0.0
  %176 = vmatpush1.msra.mxu0 1.0
  %177 = vmatprep.subr.mxu0 0.0
  %178 = vmatpush1.msra.mxu0 1.0
  %179 = vmatprep.subr.mxu0 0.0
  %180 = vmatpush1.msra.mxu0 1.0
  %181 = vmatprep.subr.mxu0 0.0
  %182 = vmatpush1.msra.mxu0 1.0
  %183 = vmatprep.subr.mxu0 0.0
  %184 = vmatpush1.msra.mxu0 1.0
  %185 = vmatprep.subr.mxu0 0.0
  %186 = vmatpush2.msra.mxu0 1.0
  %187 = vmatprep.subr.mxu0 0.0
  %188 = vmatpush2.msra.mxu0 1.0
  %189 = vmatprep.subr.mxu0 0.0
  %190 = vmatpush2.msra.mxu0 1.0
  %191 = vmatprep.subr.mxu0 0.0
  %192 = vmatpush2.msra.mxu0 1.0
  %193 = vmatprep.subr.mxu0 0.0
  %194 = vmatpush2.msra.mxu0 1.0
  %195 = vmatprep.subr.mxu0 0.0
  %196 = vmatpush2.msra.mxu0 1.0
  %197 = vmatprep.subr.mxu0 0.0
  %198 = vmatpush2.msra.mxu0 1.0
  %199 = vmatprep.subr.mxu0 0.0
  %200 = vmatpush2.msra.mxu0 1.0
  %201 = vmatprep.subr.mxu0 0.0
  %202 = vmatpush2.msra.mxu0 1.0
  %203 = vmatprep.subr.mxu0 0.0
  %204 = vmatpush2.msra.mxu0 1.0
  %205 = vmatprep.subr.mxu0 0.0
  %206 = vmatpush2.msra.mxu0 1.0
  %207 = vmatprep.subr.mxu0 0.0
  %208 = vmatpush2.msra.mxu0 1.0
  %209 = vmatprep.subr.mxu0 0.0
  %210 = vmatpush2.msra.mxu0 1.0
  %211 = vmatprep.subr.mxu0 0.0
  %212 = vmatpush2.msra.mxu0 1.0
  %213 = vmatprep.subr.mxu0 0.0
  %214 = vmatpush2.msra.mxu0 1.0
  %215 = vmatprep.subr.mxu0 0.0
  %216 = vmatpush2.msra.mxu0 1.0
  %217 = vmatprep.mubr.f32.mxu0 %v150
  %218 = vmatmul.mubr.f32.gmra.mxu0 %v149
  %v219 = vpop.f32.mrf.mxu0
  %v220 = vadd.f32 0.0, %v219
  %v221 = vpop.f32.mrf.mxu0
  %222 = vdwg.mxu0
  %223 = vmatprep.subr.mxu0 0.0
  %224 = vmatpush1.msra.mxu0 1.0
  %225 = vmatprep.subr.mxu0 0.0
  %226 = vmatpush1.msra.mxu0 1.0
  %227 = vmatprep.subr.mxu0 0.0
  %228 = vmatpush1.msra.mxu0 1.0
  %229 = vmatprep.subr.mxu0 0.0
  %230 = vmatpush1.msra.mxu0 1.0
  %231 = vmatprep.subr.mxu0 0.0
  %232 = vmatpush1.msra.mxu0 1.0
  %233 = vmatprep.subr.mxu0 0.0
  %234 = vmatpush1.msra.mxu0 1.0
  %235 = vmatprep.subr.mxu0 0.0
  %236 = vmatpush1.msra.mxu0 1.0
  %237 = vmatprep.subr.mxu0 0.0
  %238 = vmatpush1.msra.mxu0 1.0
  %239 = vmatprep.subr.mxu0 0.0
  %240 = vmatpush1.msra.mxu0 1.0
  %241 = vmatprep.subr.mxu0 0.0
  %242 = vmatpush1.msra.mxu0 1.0
  %243 = vmatprep.subr.mxu0 0.0
  %244 = vmatpush1.msra.mxu0 1.0
  %245 = vmatprep.subr.mxu0 0.0
  %246 = vmatpush1.msra.mxu0 1.0
  %247 = vmatprep.subr.mxu0 0.0
  %248 = vmatpush1.msra.mxu0 1.0
  %249 = vmatprep.subr.mxu0 0.0
  %250 = vmatpush1.msra.mxu0 1.0
  %251 = vmatprep.subr.mxu0 0.0
  %252 = vmatpush1.msra.mxu0 1.0
  %253 = vmatprep.subr.mxu0 0.0
  %254 = vmatpush1.msra.mxu0 1.0
  %255 = vmatprep.subr.mxu0 0.0
  %256 = vmatpush2.msra.mxu0 1.0
  %257 = vmatprep.subr.mxu0 0.0
  %258 = vmatpush2.msra.mxu0 1.0
  %259 = vmatprep.subr.mxu0 0.0
  %260 = vmatpush2.msra.mxu0 1.0
  %261 = vmatprep.subr.mxu0 0.0
  %262 = vmatpush2.msra.mxu0 1.0
  %263 = vmatprep.subr.mxu0 0.0
  %264 = vmatpush2.msra.mxu0 1.0
  %265 = vmatprep.subr.mxu0 0.0
  %266 = vmatpush2.msra.mxu0 1.0
  %267 = vmatprep.subr.mxu0 0.0
  %268 = vmatpush2.msra.mxu0 1.0
  %269 = vmatprep.subr.mxu0 0.0
  %270 = vmatpush2.msra.mxu0 1.0
  %271 = vmatprep.subr.mxu0 0.0
  %272 = vmatpush2.msra.mxu0 1.0
  %273 = vmatprep.subr.mxu0 0.0
  %274 = vmatpush2.msra.mxu0 1.0
  %275 = vmatprep.subr.mxu0 0.0
  %276 = vmatpush2.msra.mxu0 1.0
  %277 = vmatprep.subr.mxu0 0.0
  %278 = vmatpush2.msra.mxu0 1.0
  %279 = vmatprep.subr.mxu0 0.0
  %280 = vmatpush2.msra.mxu0 1.0
  %281 = vmatprep.subr.mxu0 0.0
  %282 = vmatpush2.msra.mxu0 1.0
  %283 = vmatprep.subr.mxu0 0.0
  %284 = vmatpush2.msra.mxu0 1.0
  %285 = vmatprep.subr.mxu0 0.0
  %286 = vmatpush2.msra.mxu0 1.0
  %287 = vmatprep.mubr.f32.mxu0 %v152
  %288 = vmatmul.mubr.f32.gmra.mxu0 %v151
  %v289 = vpop.f32.mrf.mxu0
  %v290 = vadd.f32 %v220, %v289
  %v291 = vpop.f32.mrf.mxu0
  %292 = vdwg.mxu0
  %v293 = vmul.f32 %v149, %v149
  %v294 = vmul.f32 %v150, %v150
  %v295 = vmul.f32 %v151, %v151
  %v296 = vmul.f32 %v152, %v152
  %297 = vmatprep.subr.mxu0 0.0
  %298 = vmatpush1.msra.mxu0 1.0
  %299 = vmatprep.subr.mxu0 0.0
  %300 = vmatpush1.msra.mxu0 1.0
  %301 = vmatprep.subr.mxu0 0.0
  %302 = vmatpush1.msra.mxu0 1.0
  %303 = vmatprep.subr.mxu0 0.0
  %304 = vmatpush1.msra.mxu0 1.0
  %305 = vmatprep.subr.mxu0 0.0
  %306 = vmatpush1.msra.mxu0 1.0
  %307 = vmatprep.subr.mxu0 0.0
  %308 = vmatpush1.msra.mxu0 1.0
  %309 = vmatprep.subr.mxu0 0.0
  %310 = vmatpush1.msra.mxu0 1.0
  %311 = vmatprep.subr.mxu0 0.0
  %312 = vmatpush1.msra.mxu0 1.0
  %313 = vmatprep.subr.mxu0 0.0
  %314 = vmatpush1.msra.mxu0 1.0
  %315 = vmatprep.subr.mxu0 0.0
  %316 = vmatpush1.msra.mxu0 1.0
  %317 = vmatprep.subr.mxu0 0.0
  %318 = vmatpush1.msra.mxu0 1.0
  %319 = vmatprep.subr.mxu0 0.0
  %320 = vmatpush1.msra.mxu0 1.0
  %321 = vmatprep.subr.mxu0 0.0
  %322 = vmatpush1.msra.mxu0 1.0
  %323 = vmatprep.subr.mxu0 0.0
  %324 = vmatpush1.msra.mxu0 1.0
  %325 = vmatprep.subr.mxu0 0.0
  %326 = vmatpush1.msra.mxu0 1.0
  %327 = vmatprep.subr.mxu0 0.0
  %328 = vmatpush1.msra.mxu0 1.0
  %329 = vmatprep.subr.mxu0 0.0
  %330 = vmatpush2.msra.mxu0 1.0
  %331 = vmatprep.subr.mxu0 0.0
  %332 = vmatpush2.msra.mxu0 1.0
  %333 = vmatprep.subr.mxu0 0.0
  %334 = vmatpush2.msra.mxu0 1.0
  %335 = vmatprep.subr.mxu0 0.0
  %336 = vmatpush2.msra.mxu0 1.0
  %337 = vmatprep.subr.mxu0 0.0
  %338 = vmatpush2.msra.mxu0 1.0
  %339 = vmatprep.subr.mxu0 0.0
  %340 = vmatpush2.msra.mxu0 1.0
  %341 = vmatprep.subr.mxu0 0.0
  %342 = vmatpush2.msra.mxu0 1.0
  %343 = vmatprep.subr.mxu0 0.0
  %344 = vmatpush2.msra.mxu0 1.0
  %345 = vmatprep.subr.mxu0 0.0
  %346 = vmatpush2.msra.mxu0 1.0
  %347 = vmatprep.subr.mxu0 0.0
  %348 = vmatpush2.msra.mxu0 1.0
  %349 = vmatprep.subr.mxu0 0.0
  %350 = vmatpush2.msra.mxu0 1.0
  %351 = vmatprep.subr.mxu0 0.0
  %352 = vmatpush2.msra.mxu0 1.0
  %353 = vmatprep.subr.mxu0 0.0
  %354 = vmatpush2.msra.mxu0 1.0
  %355 = vmatprep.subr.mxu0 0.0
  %356 = vmatpush2.msra.mxu0 1.0
  %357 = vmatprep.subr.mxu0 0.0
  %358 = vmatpush2.msra.mxu0 1.0
  %359 = vmatprep.subr.mxu0 0.0
  %360 = vmatpush2.msra.mxu0 1.0
  %361 = vmatprep.mubr.f32.mxu0 %v294
  %362 = vmatmul.mubr.f32.gmra.mxu0 %v293
  %v363 = vpop.f32.mrf.mxu0
  %v364 = vadd.f32 0.0, %v363
  %v365 = vpop.f32.mrf.mxu0
  %366 = vdwg.mxu0
  %367 = vmatprep.subr.mxu0 0.0
  %368 = vmatpush1.msra.mxu0 1.0
  %369 = vmatprep.subr.mxu0 0.0
  %370 = vmatpush1.msra.mxu0 1.0
  %371 = vmatprep.subr.mxu0 0.0
  %372 = vmatpush1.msra.mxu0 1.0
  %373 = vmatprep.subr.mxu0 0.0
  %374 = vmatpush1.msra.mxu0 1.0
  %375 = vmatprep.subr.mxu0 0.0
  %376 = vmatpush1.msra.mxu0 1.0
  %377 = vmatprep.subr.mxu0 0.0
  %378 = vmatpush1.msra.mxu0 1.0
  %379 = vmatprep.subr.mxu0 0.0
  %380 = vmatpush1.msra.mxu0 1.0
  %381 = vmatprep.subr.mxu0 0.0
  %382 = vmatpush1.msra.mxu0 1.0
  %383 = vmatprep.subr.mxu0 0.0
  %384 = vmatpush1.msra.mxu0 1.0
  %385 = vmatprep.subr.mxu0 0.0
  %386 = vmatpush1.msra.mxu0 1.0
  %387 = vmatprep.subr.mxu0 0.0
  %388 = vmatpush1.msra.mxu0 1.0
  %389 = vmatprep.subr.mxu0 0.0
  %390 = vmatpush1.msra.mxu0 1.0
  %391 = vmatprep.subr.mxu0 0.0
  %392 = vmatpush1.msra.mxu0 1.0
  %393 = vmatprep.subr.mxu0 0.0
  %394 = vmatpush1.msra.mxu0 1.0
  %395 = vmatprep.subr.mxu0 0.0
  %396 = vmatpush1.msra.mxu0 1.0
  %397 = vmatprep.subr.mxu0 0.0
  %398 = vmatpush1.msra.mxu0 1.0
  %399 = vmatprep.subr.mxu0 0.0
  %400 = vmatpush2.msra.mxu0 1.0
  %401 = vmatprep.subr.mxu0 0.0
  %402 = vmatpush2.msra.mxu0 1.0
  %403 = vmatprep.subr.mxu0 0.0
  %404 = vmatpush2.msra.mxu0 1.0
  %405 = vmatprep.subr.mxu0 0.0
  %406 = vmatpush2.msra.mxu0 1.0
  %407 = vmatprep.subr.mxu0 0.0
  %408 = vmatpush2.msra.mxu0 1.0
  %409 = vmatprep.subr.mxu0 0.0
  %410 = vmatpush2.msra.mxu0 1.0
  %411 = vmatprep.subr.mxu0 0.0
  %412 = vmatpush2.msra.mxu0 1.0
  %413 = vmatprep.subr.mxu0 0.0
  %414 = vmatpush2.msra.mxu0 1.0
  %415 = vmatprep.subr.mxu0 0.0
  %416 = vmatpush2.msra.mxu0 1.0
  %417 = vmatprep.subr.mxu0 0.0
  %418 = vmatpush2.msra.mxu0 1.0
  %419 = vmatprep.subr.mxu0 0.0
  %420 = vmatpush2.msra.mxu0 1.0
  %421 = vmatprep.subr.mxu0 0.0
  %422 = vmatpush2.msra.mxu0 1.0
  %423 = vmatprep.subr.mxu0 0.0
  %424 = vmatpush2.msra.mxu0 1.0
  %425 = vmatprep.subr.mxu0 0.0
  %426 = vmatpush2.msra.mxu0 1.0
  %427 = vmatprep.subr.mxu0 0.0
  %428 = vmatpush2.msra.mxu0 1.0
  %429 = vmatprep.subr.mxu0 0.0
  %430 = vmatpush2.msra.mxu0 1.0
  %431 = vmatprep.mubr.f32.mxu0 %v296
  %432 = vmatmul.mubr.f32.gmra.mxu0 %v295
  %v433 = vpop.f32.mrf.mxu0
  %v434 = vadd.f32 %v364, %v433
  %v435 = vpop.f32.mrf.mxu0
  %436 = vdwg.mxu0
  %v437 = vmul.f32 %v290, 0.001953125
  %v438 = vmul.f32 %v434, 0.001953125
  %v439 = vmul.f32 %v437, %v437
  %v440 = vsub.f32 %v438, %v439
  %v441 = vmax.f32 %v440, 0.0
  %443 = vset.pattern.permute.xlu0 0
  %444 = vperm.xlu0 %443, %v437
  %v445 = vpop.permute.xlu0 %444
  %v447 = vsub.f32 %v149, %v445
  %v448 = vsub.f32 %v150, %v445
  %v449 = vsub.f32 %v151, %v445
  %v450 = vsub.f32 %v152, %v445
  %v451 = vadd.f32 %v441, 1e-05
  %v452 = vrsqrt.pop %v451
  %454 = vset.pattern.permute.xlu0 0
  %455 = vperm.xlu0 %454, %v452
  %v456 = vpop.permute.xlu0 %455
  %v458 = vmul.f32 %v447, %v456
  %v459 = vmul.f32 %v448, %v456
  %v460 = vmul.f32 %v449, %v456
  %v461 = vmul.f32 %v450, %v456
  %463 = vset.pattern.permute.xlu0 0
  %464 = vperm.xlu0 %463, %v61
  %v465 = vpop.permute.xlu0 %464
  %v467 = vmul.f32 %v458, %v465
  %v468 = vmul.f32 %v459, %v465
  %v469 = vmul.f32 %v460, %v465
  %v470 = vmul.f32 %v461, %v465
  %472 = vset.pattern.permute.xlu0 0
  %473 = vperm.xlu0 %472, %v62
  %v474 = vpop.permute.xlu0 %473
  %v476 = vadd.f32 %v467, %v474
  %v477 = vadd.f32 %v468, %v474
  %v478 = vadd.f32 %v469, %v474
  %v479 = vadd.f32 %v470, %v474
  %481 = vset.pattern.permute.xlu0 0
  %482 = vperm.xlu0 %481, %v64
  %v483 = vpop.permute.xlu0 %482
  %vm485 = vcmask 64512
  %v487 = vsel %vm485, %v63, 0
  %489 = vmatprep.subr.mxu0 0.0
  %490 = vmatpush1.msra.mxu0 0.0
  %491 = vmatprep.subr.mxu0 0.0
  %492 = vmatpush1.msra.mxu0 0.0
  %493 = vmatprep.subr.mxu0 0.0
  %494 = vmatpush1.msra.mxu0 0.0
  %495 = vmatprep.subr.mxu0 0.0
  %496 = vmatpush1.msra.mxu0 0.0
  %497 = vmatprep.subr.mxu0 0.0
  %498 = vmatpush1.msra.mxu0 0.0
  %499 = vmatprep.subr.mxu0 0.0
  %500 = vmatpush1.msra.mxu0 0.0
  %501 = vmatprep.subr.mxu0 0.0
  %502 = vmatpush1.msra.mxu0 0.0
  %503 = vmatprep.subr.mxu0 0.0
  %504 = vmatpush1.msra.mxu0 0.0
  %505 = vmatprep.subr.mxu0 0.0
  %506 = vmatpush1.msra.mxu0 0.0
  %507 = vmatprep.subr.mxu0 0.0
  %508 = vmatpush1.msra.mxu0 0.0
  %509 = vmatprep.subr.mxu0 0.0
  %510 = vmatpush1.msra.mxu0 0.0
  %511 = vmatprep.subr.mxu0 0.0
  %512 = vmatpush1.msra.mxu0 0.0
  %513 = vmatprep.subr.mxu0 0.0
  %514 = vmatpush1.msra.mxu0 0.0
  %515 = vmatprep.subr.mxu0 0.0
  %516 = vmatpush1.msra.mxu0 0.0
  %517 = vmatprep.subr.mxu0 0.0
  %518 = vmatpush1.msra.mxu0 0.0
  %519 = vmatprep.subr.mxu0 %v477
  %520 = vmatpush1.msra.mxu0 %v476
  %521 = vmatprep.subr.mxu0 0.0
  %522 = vmatpush2.msra.mxu0 0.0
  %523 = vmatprep.subr.mxu0 0.0
  %524 = vmatpush2.msra.mxu0 0.0
  %525 = vmatprep.subr.mxu0 0.0
  %526 = vmatpush2.msra.mxu0 0.0
  %527 = vmatprep.subr.mxu0 0.0
  %528 = vmatpush2.msra.mxu0 0.0
  %529 = vmatprep.subr.mxu0 0.0
  %530 = vmatpush2.msra.mxu0 0.0
  %531 = vmatprep.subr.mxu0 0.0
  %532 = vmatpush2.msra.mxu0 0.0
  %533 = vmatprep.subr.mxu0 0.0
  %534 = vmatpush2.msra.mxu0 0.0
  %535 = vmatprep.subr.mxu0 0.0
  %536 = vmatpush2.msra.mxu0 0.0
  %537 = vmatprep.subr.mxu0 0.0
  %538 = vmatpush2.msra.mxu0 0.0
  %539 = vmatprep.subr.mxu0 0.0
  %540 = vmatpush2.msra.mxu0 0.0
  %541 = vmatprep.subr.mxu0 0.0
  %542 = vmatpush2.msra.mxu0 0.0
  %543 = vmatprep.subr.mxu0 0.0
  %544 = vmatpush2.msra.mxu0 0.0
  %545 = vmatprep.subr.mxu0 0.0
  %546 = vmatpush2.msra.mxu0 0.0
  %547 = vmatprep.subr.mxu0 0.0
  %548 = vmatpush2.msra.mxu0 0.0
  %549 = vmatprep.subr.mxu0 0.0
  %550 = vmatpush2.msra.mxu0 0.0
  %551 = vmatprep.subr.mxu0 0.0
  %552 = vmatpush2.msra.mxu0 0.0
  %553 = vmatprep.mubr.f32.mxu0 0.0
  %554 = vmatmul.mubr.f32.gmra.mxu0 %v487
  %v555 = vpop.f32.mrf.mxu0
  %v556 = vadd.f32 %v483, %v555
  %v557 = vpop.f32.mrf.mxu0
  %v558 = vadd.f32 %v483, %v557
  %559 = vdwg.mxu0
  %560 = vmatprep.subr.mxu0 0.0
  %561 = vmatpush1.msra.mxu0 0.0
  %562 = vmatprep.subr.mxu0 0.0
  %563 = vmatpush1.msra.mxu0 0.0
  %564 = vmatprep.subr.mxu0 0.0
  %565 = vmatpush1.msra.mxu0 0.0
  %566 = vmatprep.subr.mxu0 0.0
  %567 = vmatpush1.msra.mxu0 0.0
  %568 = vmatprep.subr.mxu0 0.0
  %569 = vmatpush1.msra.mxu0 0.0
  %570 = vmatprep.subr.mxu0 0.0
  %571 = vmatpush1.msra.mxu0 0.0
  %572 = vmatprep.subr.mxu0 0.0
  %573 = vmatpush1.msra.mxu0 0.0
  %574 = vmatprep.subr.mxu0 0.0
  %575 = vmatpush1.msra.mxu0 0.0
  %576 = vmatprep.subr.mxu0 0.0
  %577 = vmatpush1.msra.mxu0 0.0
  %578 = vmatprep.subr.mxu0 0.0
  %579 = vmatpush1.msra.mxu0 0.0
  %580 = vmatprep.subr.mxu0 0.0
  %581 = vmatpush1.msra.mxu0 0.0
  %582 = vmatprep.subr.mxu0 0.0
  %583 = vmatpush1.msra.mxu0 0.0
  %584 = vmatprep.subr.mxu0 0.0
  %585 = vmatpush1.msra.mxu0 0.0
  %586 = vmatprep.subr.mxu0 0.0
  %587 = vmatpush1.msra.mxu0 0.0
  %588 = vmatprep.subr.mxu0 0.0
  %589 = vmatpush1.msra.mxu0 0.0
  %590 = vmatprep.subr.mxu0 %v479
  %591 = vmatpush1.msra.mxu0 %v478
  %592 = vmatprep.subr.mxu0 0.0
  %593 = vmatpush2.msra.mxu0 0.0
  %594 = vmatprep.subr.mxu0 0.0
  %595 = vmatpush2.msra.mxu0 0.0
  %596 = vmatprep.subr.mxu0 0.0
  %597 = vmatpush2.msra.mxu0 0.0
  %598 = vmatprep.subr.mxu0 0.0
  %599 = vmatpush2.msra.mxu0 0.0
  %600 = vmatprep.subr.mxu0 0.0
  %601 = vmatpush2.msra.mxu0 0.0
  %602 = vmatprep.subr.mxu0 0.0
  %603 = vmatpush2.msra.mxu0 0.0
  %604 = vmatprep.subr.mxu0 0.0
  %605 = vmatpush2.msra.mxu0 0.0
  %606 = vmatprep.subr.mxu0 0.0
  %607 = vmatpush2.msra.mxu0 0.0
  %608 = vmatprep.subr.mxu0 0.0
  %609 = vmatpush2.msra.mxu0 0.0
  %610 = vmatprep.subr.mxu0 0.0
  %611 = vmatpush2.msra.mxu0 0.0
  %612 = vmatprep.subr.mxu0 0.0
  %613 = vmatpush2.msra.mxu0 0.0
  %614 = vmatprep.subr.mxu0 0.0
  %615 = vmatpush2.msra.mxu0 0.0
  %616 = vmatprep.subr.mxu0 0.0
  %617 = vmatpush2.msra.mxu0 0.0
  %618 = vmatprep.subr.mxu0 0.0
  %619 = vmatpush2.msra.mxu0 0.0
  %620 = vmatprep.subr.mxu0 0.0
  %621 = vmatpush2.msra.mxu0 0.0
  %622 = vmatprep.subr.mxu0 0.0
  %623 = vmatpush2.msra.mxu0 0.0
  %624 = vmatprep.mubr.f32.mxu0 0.0
  %625 = vmatmul.mubr.f32.gmra.mxu0 %v487
  %v626 = vpop.f32.mrf.mxu0
  %v627 = vadd.f32 %v483, %v626
  %v628 = vpop.f32.mrf.mxu0
  %v629 = vadd.f32 %v483, %v628
  %630 = vdwg.mxu0
  %vm631 = vcmp.ge.f32.partialorder %v556, 0.0
  %vm632 = vcmp.ge.f32.partialorder %v558, 0.0
  %vm633 = vcmp.ge.f32.partialorder %v627, 0.0
  %vm634 = vcmp.ge.f32.partialorder %v629, 0.0
  %v635 = vmul.f32 %v556, 0.01
  %v636 = vmul.f32 %v558, 0.01
  %v637 = vmul.f32 %v627, 0.01
  %v638 = vmul.f32 %v629, 0.01
  %v639 = vsel %vm631, %v556, %v635
  %v640 = vsel %vm632, %v558, %v636
  %v641 = vsel %vm633, %v627, %v637
  %v642 = vsel %vm634, %v629, %v638
  %644 = vset.pattern.permute.xlu0 0
  %645 = vperm.xlu0 %644, %v71
  %v646 = vpop.permute.xlu0 %645
  %649 = vset.pattern.permute.xlu0 0
  %650 = vperm.xlu0 %649, %v72
  %v651 = vpop.permute.xlu0 %650
  %654 = vset.pattern.permute.xlu0 0
  %655 = vperm.xlu0 %654, %v73
  %v656 = vpop.permute.xlu0 %655
  %659 = vset.pattern.permute.xlu0 0
  %660 = vperm.xlu0 %659, %v74
  %v661 = vpop.permute.xlu0 %660
  %664 = vset.pattern.permute.xlu0 0
  %665 = vperm.xlu0 %664, %v75
  %v666 = vpop.permute.xlu0 %665
  %669 = vset.pattern.permute.xlu0 0
  %670 = vperm.xlu0 %669, %v76
  %v671 = vpop.permute.xlu0 %670
  %v674 = vsel %vm485, %v65, 0
  %v677 = vsel %vm485, %v66, 0
  %v680 = vsel %vm485, %v67, 0
  %v683 = vsel %vm485, %v68, 0
  %v686 = vsel %vm485, %v69, 0
  %v689 = vsel %vm485, %v70, 0
  %691 = vmatprep.subr.mxu0 0.0
  %692 = vmatpush1.msra.mxu0 0.0
  %693 = vmatprep.subr.mxu0 0.0
  %694 = vmatpush1.msra.mxu0 0.0
  %695 = vmatprep.subr.mxu0 0.0
  %696 = vmatpush1.msra.mxu0 0.0
  %697 = vmatprep.subr.mxu0 0.0
  %698 = vmatpush1.msra.mxu0 0.0
  %699 = vmatprep.subr.mxu0 0.0
  %700 = vmatpush1.msra.mxu0 0.0
  %701 = vmatprep.subr.mxu0 0.0
  %702 = vmatpush1.msra.mxu0 0.0
  %703 = vmatprep.subr.mxu0 0.0
  %704 = vmatpush1.msra.mxu0 0.0
  %705 = vmatprep.subr.mxu0 0.0
  %706 = vmatpush1.msra.mxu0 0.0
  %707 = vmatprep.subr.mxu0 0.0
  %708 = vmatpush1.msra.mxu0 0.0
  %709 = vmatprep.subr.mxu0 0.0
  %710 = vmatpush1.msra.mxu0 0.0
  %711 = vmatprep.subr.mxu0 0.0
  %712 = vmatpush1.msra.mxu0 0.0
  %713 = vmatprep.subr.mxu0 0.0
  %714 = vmatpush1.msra.mxu0 0.0
  %715 = vmatprep.subr.mxu0 0.0
  %716 = vmatpush1.msra.mxu0 0.0
  %717 = vmatprep.subr.mxu0 0.0
  %718 = vmatpush1.msra.mxu0 0.0
  %719 = vmatprep.subr.mxu0 0.0
  %720 = vmatpush1.msra.mxu0 0.0
  %721 = vmatprep.subr.mxu0 %v640
  %722 = vmatpush1.msra.mxu0 %v639
  %723 = vmatprep.subr.mxu0 0.0
  %724 = vmatpush2.msra.mxu0 0.0
  %725 = vmatprep.subr.mxu0 0.0
  %726 = vmatpush2.msra.mxu0 0.0
  %727 = vmatprep.subr.mxu0 0.0
  %728 = vmatpush2.msra.mxu0 0.0
  %729 = vmatprep.subr.mxu0 0.0
  %730 = vmatpush2.msra.mxu0 0.0
  %731 = vmatprep.subr.mxu0 0.0
  %732 = vmatpush2.msra.mxu0 0.0
  %733 = vmatprep.subr.mxu0 0.0
  %734 = vmatpush2.msra.mxu0 0.0
  %735 = vmatprep.subr.mxu0 0.0
  %736 = vmatpush2.msra.mxu0 0.0
  %737 = vmatprep.subr.mxu0 0.0
  %738 = vmatpush2.msra.mxu0 0.0
  %739 = vmatprep.subr.mxu0 0.0
  %740 = vmatpush2.msra.mxu0 0.0
  %741 = vmatprep.subr.mxu0 0.0
  %742 = vmatpush2.msra.mxu0 0.0
  %743 = vmatprep.subr.mxu0 0.0
  %744 = vmatpush2.msra.mxu0 0.0
  %745 = vmatprep.subr.mxu0 0.0
  %746 = vmatpush2.msra.mxu0 0.0
  %747 = vmatprep.subr.mxu0 0.0
  %748 = vmatpush2.msra.mxu0 0.0
  %749 = vmatprep.subr.mxu0 0.0
  %750 = vmatpush2.msra.mxu0 0.0
  %751 = vmatprep.subr.mxu0 0.0
  %752 = vmatpush2.msra.mxu0 0.0
  %753 = vmatprep.subr.mxu0 0.0
  %754 = vmatpush2.msra.mxu0 0.0
  %755 = vmatprep.mubr.f32.mxu0 0.0
  %756 = vmatmul.mubr.f32.gmra.mxu0 %v674
  %v757 = vpop.f32.mrf.mxu0
  %v758 = vadd.f32 %v646, %v757
  %v759 = vpop.f32.mrf.mxu0
  %v760 = vadd.f32 %v646, %v759
  %761 = vmatprep.mubr.f32.mxu0 0.0
  %762 = vmatmul.mubr.f32.gmra.mxu0 %v677
  %v763 = vpop.f32.mrf.mxu0
  %v764 = vadd.f32 %v651, %v763
  %v765 = vpop.f32.mrf.mxu0
  %v766 = vadd.f32 %v651, %v765
  %767 = vmatprep.mubr.f32.mxu0 0.0
  %768 = vmatmul.mubr.f32.gmra.mxu0 %v680
  %v769 = vpop.f32.mrf.mxu0
  %v770 = vadd.f32 %v656, %v769
  %v771 = vpop.f32.mrf.mxu0
  %v772 = vadd.f32 %v656, %v771
  %773 = vmatprep.mubr.f32.mxu0 0.0
  %774 = vmatmul.mubr.f32.gmra.mxu0 %v683
  %v775 = vpop.f32.mrf.mxu0
  %v776 = vadd.f32 %v661, %v775
  %v777 = vpop.f32.mrf.mxu0
  %v778 = vadd.f32 %v661, %v777
  %779 = vmatprep.mubr.f32.mxu0 0.0
  %780 = vmatmul.mubr.f32.gmra.mxu0 %v686
  %v781 = vpop.f32.mrf.mxu0
  %v782 = vadd.f32 %v666, %v781
  %v783 = vpop.f32.mrf.mxu0
  %v784 = vadd.f32 %v666, %v783
  %785 = vmatprep.mubr.f32.mxu0 0.0
  %786 = vmatmul.mubr.f32.gmra.mxu0 %v689
  %v787 = vpop.f32.mrf.mxu0
  %v788 = vadd.f32 %v671, %v787
  %v789 = vpop.f32.mrf.mxu0
  %v790 = vadd.f32 %v671, %v789
  %791 = vdwg.mxu0
  %792 = vmatprep.subr.mxu0 0.0
  %793 = vmatpush1.msra.mxu0 0.0
  %794 = vmatprep.subr.mxu0 0.0
  %795 = vmatpush1.msra.mxu0 0.0
  %796 = vmatprep.subr.mxu0 0.0
  %797 = vmatpush1.msra.mxu0 0.0
  %798 = vmatprep.subr.mxu0 0.0
  %799 = vmatpush1.msra.mxu0 0.0
  %800 = vmatprep.subr.mxu0 0.0
  %801 = vmatpush1.msra.mxu0 0.0
  %802 = vmatprep.subr.mxu0 0.0
  %803 = vmatpush1.msra.mxu0 0.0
  %804 = vmatprep.subr.mxu0 0.0
  %805 = vmatpush1.msra.mxu0 0.0
  %806 = vmatprep.subr.mxu0 0.0
  %807 = vmatpush1.msra.mxu0 0.0
  %808 = vmatprep.subr.mxu0 0.0
  %809 = vmatpush1.msra.mxu0 0.0
  %810 = vmatprep.subr.mxu0 0.0
  %811 = vmatpush1.msra.mxu0 0.0
  %812 = vmatprep.subr.mxu0 0.0
  %813 = vmatpush1.msra.mxu0 0.0
  %814 = vmatprep.subr.mxu0 0.0
  %815 = vmatpush1.msra.mxu0 0.0
  %816 = vmatprep.subr.mxu0 0.0
  %817 = vmatpush1.msra.mxu0 0.0
  %818 = vmatprep.subr.mxu0 0.0
  %819 = vmatpush1.msra.mxu0 0.0
  %820 = vmatprep.subr.mxu0 0.0
  %821 = vmatpush1.msra.mxu0 0.0
  %822 = vmatprep.subr.mxu0 %v642
  %823 = vmatpush1.msra.mxu0 %v641
  %824 = vmatprep.subr.mxu0 0.0
  %825 = vmatpush2.msra.mxu0 0.0
  %826 = vmatprep.subr.mxu0 0.0
  %827 = vmatpush2.msra.mxu0 0.0
  %828 = vmatprep.subr.mxu0 0.0
  %829 = vmatpush2.msra.mxu0 0.0
  %830 = vmatprep.subr.mxu0 0.0
  %831 = vmatpush2.msra.mxu0 0.0
  %832 = vmatprep.subr.mxu0 0.0
  %833 = vmatpush2.msra.mxu0 0.0
  %834 = vmatprep.subr.mxu0 0.0
  %835 = vmatpush2.msra.mxu0 0.0
  %836 = vmatprep.subr.mxu0 0.0
  %837 = vmatpush2.msra.mxu0 0.0
  %838 = vmatprep.subr.mxu0 0.0
  %839 = vmatpush2.msra.mxu0 0.0
  %840 = vmatprep.subr.mxu0 0.0
  %841 = vmatpush2.msra.mxu0 0.0
  %842 = vmatprep.subr.mxu0 0.0
  %843 = vmatpush2.msra.mxu0 0.0
  %844 = vmatprep.subr.mxu0 0.0
  %845 = vmatpush2.msra.mxu0 0.0
  %846 = vmatprep.subr.mxu0 0.0
  %847 = vmatpush2.msra.mxu0 0.0
  %848 = vmatprep.subr.mxu0 0.0
  %849 = vmatpush2.msra.mxu0 0.0
  %850 = vmatprep.subr.mxu0 0.0
  %851 = vmatpush2.msra.mxu0 0.0
  %852 = vmatprep.subr.mxu0 0.0
  %853 = vmatpush2.msra.mxu0 0.0
  %854 = vmatprep.subr.mxu0 0.0
  %855 = vmatpush2.msra.mxu0 0.0
  %856 = vmatprep.mubr.f32.mxu0 0.0
  %857 = vmatmul.mubr.f32.gmra.mxu0 %v674
  %v858 = vpop.f32.mrf.mxu0
  %v859 = vadd.f32 %v646, %v858
  %v860 = vpop.f32.mrf.mxu0
  %v861 = vadd.f32 %v646, %v860
  %862 = vmatprep.mubr.f32.mxu0 0.0
  %863 = vmatmul.mubr.f32.gmra.mxu0 %v677
  %v864 = vpop.f32.mrf.mxu0
  %v865 = vadd.f32 %v651, %v864
  %v866 = vpop.f32.mrf.mxu0
  %v867 = vadd.f32 %v651, %v866
  %868 = vmatprep.mubr.f32.mxu0 0.0
  %869 = vmatmul.mubr.f32.gmra.mxu0 %v680
  %v870 = vpop.f32.mrf.mxu0
  %v871 = vadd.f32 %v656, %v870
  %v872 = vpop.f32.mrf.mxu0
  %v873 = vadd.f32 %v656, %v872
  %874 = vmatprep.mubr.f32.mxu0 0.0
  %875 = vmatmul.mubr.f32.gmra.mxu0 %v683
  %v876 = vpop.f32.mrf.mxu0
  %v877 = vadd.f32 %v661, %v876
  %v878 = vpop.f32.mrf.mxu0
  %v879 = vadd.f32 %v661, %v878
  %880 = vmatprep.mubr.f32.mxu0 0.0
  %881 = vmatmul.mubr.f32.gmra.mxu0 %v686
  %v882 = vpop.f32.mrf.mxu0
  %v883 = vadd.f32 %v666, %v882
  %v884 = vpop.f32.mrf.mxu0
  %v885 = vadd.f32 %v666, %v884
  %886 = vmatprep.mubr.f32.mxu0 0.0
  %887 = vmatmul.mubr.f32.gmra.mxu0 %v689
  %v888 = vpop.f32.mrf.mxu0
  %v889 = vadd.f32 %v671, %v888
  %v890 = vpop.f32.mrf.mxu0
  %v891 = vadd.f32 %v671, %v890
  %892 = vdwg.mxu0
  %v893 = vlaneseq
  %v894 = vand.u32 %v893, 127
  %v895 = vadd.s32 %v894, 128
  %v896 = vadd.s32 %v894, 256
  %v897 = vadd.s32 %v894, 384
  %vm898 = vcmp.lt.s32.totalorder %v894, 0
  %v899 = vsub.s32 0, %v894
  %v900 = vsel %vm898, %v899, %v894
  %v901 = vshrl.u32 %v900, 4
  %v902 = vand.u32 %v900, 15
  %v903 = vsub.s32 0, %v902
  %v904 = vsel %vm898, %v903, %v902
  %vm905 = vcmp.lt.s32.totalorder %v895, 0
  %v906 = vsub.s32 0, %v895
  %v907 = vsel %vm905, %v906, %v895
  %v908 = vshrl.u32 %v907, 4
  %v909 = vand.u32 %v907, 15
  %v910 = vsub.s32 0, %v909
  %v911 = vsel %vm905, %v910, %v909
  %vm912 = vcmp.lt.s32.totalorder %v896, 0
  %v913 = vsub.s32 0, %v896
  %v914 = vsel %vm912, %v913, %v896
  %v915 = vshrl.u32 %v914, 4
  %v916 = vand.u32 %v914, 15
  %v917 = vsub.s32 0, %v916
  %v918 = vsel %vm912, %v917, %v916
  %vm919 = vcmp.lt.s32.totalorder %v897, 0
  %v920 = vsub.s32 0, %v897
  %v921 = vsel %vm919, %v920, %v897
  %v922 = vshrl.u32 %v921, 4
  %v923 = vand.u32 %v921, 15
  %v924 = vsub.s32 0, %v923
  %v925 = vsel %vm919, %v924, %v923
  %vm926 = vcmp.ne.s32.totalorder %v904, 0
  %vm927 = vcmp.ne.s32.totalorder %v911, 0
  %vm928 = vcmp.ne.s32.totalorder %v918, 0
  %vm929 = vcmp.ne.s32.totalorder %v925, 0
  %vm930 = vcmp.lt.s32.totalorder %v904, 0
  %vm931 = vcmp.lt.s32.totalorder %v911, 0
  %vm932 = vcmp.lt.s32.totalorder %v918, 0
  %vm933 = vcmp.lt.s32.totalorder %v925, 0
  %vm934 = vmand %vm930, %vm926
  %vm935 = vmand %vm931, %vm927
  %vm936 = vmand %vm932, %vm928
  %vm937 = vmand %vm933, %vm929
  %v938 = vadd.s32 %v904, 16
  %v939 = vadd.s32 %v911, 16
  %v940 = vadd.s32 %v918, 16
  %v941 = vadd.s32 %v925, 16
  %v942 = vsel %vm934, %v938, %v904
  %v943 = vsel %vm935, %v939, %v911
  %v944 = vsel %vm936, %v940, %v918
  %v945 = vsel %vm937, %v941, %v925
  %vm946 = vcmp.lt.s32.totalorder %v894, 0
  %v947 = vsub.s32 0, %v894
  %v948 = vsel %vm946, %v947, %v894
  %v949 = vshrl.u32 %v948, 8
  %v950 = vand.u32 %v948, 255
  %v951 = vsub.s32 0, %v950
  %v952 = vsel %vm946, %v951, %v950
  %vm953 = vcmp.lt.s32.totalorder %v895, 0
  %v954 = vsub.s32 0, %v895
  %v955 = vsel %vm953, %v954, %v895
  %v956 = vshrl.u32 %v955, 8
  %v957 = vand.u32 %v955, 255
  %v958 = vsub.s32 0, %v957
  %v959 = vsel %vm953, %v958, %v957
  %vm960 = vcmp.lt.s32.totalorder %v896, 0
  %v961 = vsub.s32 0, %v896
  %v962 = vsel %vm960, %v961, %v896
  %v963 = vshrl.u32 %v962, 8
  %v964 = vand.u32 %v962, 255
  %v965 = vsub.s32 0, %v964
  %v966 = vsel %vm960, %v965, %v964
  %vm967 = vcmp.lt.s32.totalorder %v897, 0
  %v968 = vsub.s32 0, %v897
  %v969 = vsel %vm967, %v968, %v897
  %v970 = vshrl.u32 %v969, 8
  %v971 = vand.u32 %v969, 255
  %v972 = vsub.s32 0, %v971
  %v973 = vsel %vm967, %v972, %v971
  %vm974 = vcmp.ne.s32.totalorder %v952, 0
  %vm975 = vcmp.ne.s32.totalorder %v959, 0
  %vm976 = vcmp.ne.s32.totalorder %v966, 0
  %vm977 = vcmp.ne.s32.totalorder %v973, 0
  %vm978 = vcmp.lt.s32.totalorder %v952, 0
  %vm979 = vcmp.lt.s32.totalorder %v959, 0
  %vm980 = vcmp.lt.s32.totalorder %v966, 0
  %vm981 = vcmp.lt.s32.totalorder %v973, 0
  %vm982 = vmand %vm978, %vm974
  %vm983 = vmand %vm979, %vm975
  %vm984 = vmand %vm980, %vm976
  %vm985 = vmand %vm981, %vm977
  %v986 = vadd.s32 %v952, 256
  %v987 = vadd.s32 %v959, 256
  %v988 = vadd.s32 %v966, 256
  %v989 = vadd.s32 %v973, 256
  %v990 = vsel %vm982, %v986, %v952
  %v991 = vsel %vm983, %v987, %v959
  %v992 = vsel %vm984, %v988, %v966
  %v993 = vsel %vm985, %v989, %v973
  %vm994 = vcmp.eq.s32.totalorder %v942, 0
  %vm995 = vcmp.eq.s32.totalorder %v943, 0
  %vm996 = vcmp.eq.s32.totalorder %v944, 0
  %vm997 = vcmp.eq.s32.totalorder %v945, 0
  %v998 = vsel %vm994, 1, 0
  %v999 = vsel %vm995, 1, 0
  %v1000 = vsel %vm996, 1, 0
  %v1001 = vsel %vm997, 1, 0
  %v1002 = vcvt.s32.f32 %v998
  %v1003 = vcvt.s32.f32 %v999
  %v1004 = vcvt.s32.f32 %v1000
  %v1005 = vcvt.s32.f32 %v1001
  %vm1006 = vcmp.eq.s32.totalorder %v942, 15
  %vm1007 = vcmp.eq.s32.totalorder %v943, 15
  %vm1008 = vcmp.eq.s32.totalorder %v944, 15
  %vm1009 = vcmp.eq.s32.totalorder %v945, 15
  %v1010 = vsel %vm1006, 1, 0
  %v1011 = vsel %vm1007, 1, 0
  %v1012 = vsel %vm1008, 1, 0
  %v1013 = vsel %vm1009, 1, 0
  %v1014 = vcvt.s32.f32 %v1010
  %v1015 = vcvt.s32.f32 %v1011
  %v1016 = vcvt.s32.f32 %v1012
  %v1017 = vcvt.s32.f32 %v1013
  %vm1018 = vcmp.lt.s32.totalorder %v990, 16
  %vm1019 = vcmp.lt.s32.totalorder %v991, 16
  %vm1020 = vcmp.lt.s32.totalorder %v992, 16
  %vm1021 = vcmp.lt.s32.totalorder %v993, 16
  %v1022 = vsel %vm1018, 1, 0
  %v1023 = vsel %vm1019, 1, 0
  %v1024 = vsel %vm1020, 1, 0
  %v1025 = vsel %vm1021, 1, 0
  %v1026 = vcvt.s32.f32 %v1022
  %v1027 = vcvt.s32.f32 %v1023
  %v1028 = vcvt.s32.f32 %v1024
  %v1029 = vcvt.s32.f32 %v1025
  %vm1030 = vcmp.ge.s32.totalorder %v990, 240
  %vm1031 = vcmp.ge.s32.totalorder %v991, 240
  %vm1032 = vcmp.ge.s32.totalorder %v992, 240
  %vm1033 = vcmp.ge.s32.totalorder %v993, 240
  %v1034 = vsel %vm1030, 1, 0
  %v1035 = vsel %vm1031, 1, 0
  %v1036 = vsel %vm1032, 1, 0
  %v1037 = vsel %vm1033, 1, 0
  %v1038 = vcvt.s32.f32 %v1034
  %v1039 = vcvt.s32.f32 %v1035
  %v1040 = vcvt.s32.f32 %v1036
  %v1041 = vcvt.s32.f32 %v1037
  %v1042 = vmul.f32 %v758, %v1002
  %v1043 = vmul.f32 %v760, %v1003
  %v1044 = vmul.f32 %v859, %v1004
  %v1045 = vmul.f32 %v861, %v1005
  %v1046 = vadd.f32 %v782, %v1042
  %v1047 = vadd.f32 %v784, %v1043
  %v1048 = vadd.f32 %v883, %v1044
  %v1049 = vadd.f32 %v885, %v1045
  %v1050 = vmul.f32 %v764, %v1014
  %v1051 = vmul.f32 %v766, %v1015
  %v1052 = vmul.f32 %v865, %v1016
  %v1053 = vmul.f32 %v867, %v1017
  %v1054 = vadd.f32 %v1046, %v1050
  %v1055 = vadd.f32 %v1047, %v1051
  %v1056 = vadd.f32 %v1048, %v1052
  %v1057 = vadd.f32 %v1049, %v1053
  %v1058 = vmul.f32 %v770, %v1026
  %v1059 = vmul.f32 %v772, %v1027
  %v1060 = vmul.f32 %v871, %v1028
  %v1061 = vmul.f32 %v873, %v1029
  %v1062 = vadd.f32 %v1054, %v1058
  %v1063 = vadd.f32 %v1055, %v1059
  %v1064 = vadd.f32 %v1056, %v1060
  %v1065 = vadd.f32 %v1057, %v1061
  %v1066 = vmul.f32 %v776, %v1038
  %v1067 = vmul.f32 %v778, %v1039
  %v1068 = vmul.f32 %v877, %v1040
  %v1069 = vmul.f32 %v879, %v1041
  %v1070 = vadd.f32 %v1062, %v1066
  %v1071 = vadd.f32 %v1063, %v1067
  %v1072 = vadd.f32 %v1064, %v1068
  %v1073 = vadd.f32 %v1065, %v1069
  %v1074 = vsub.f32 1.0, %v1002
  %v1075 = vsub.f32 1.0, %v1003
  %v1076 = vsub.f32 1.0, %v1004
  %v1077 = vsub.f32 1.0, %v1005
  %v1078 = vmul.f32 %v758, %v1074
  %v1079 = vmul.f32 %v760, %v1075
  %v1080 = vmul.f32 %v859, %v1076
  %v1081 = vmul.f32 %v861, %v1077
  %v1082 = vsub.f32 1.0, %v1014
  %v1083 = vsub.f32 1.0, %v1015
  %v1084 = vsub.f32 1.0, %v1016
  %v1085 = vsub.f32 1.0, %v1017
  %v1086 = vmul.f32 %v764, %v1082
  %v1087 = vmul.f32 %v766, %v1083
  %v1088 = vmul.f32 %v865, %v1084
  %v1089 = vmul.f32 %v867, %v1085
  %v1090 = vsub.f32 1.0, %v1026
  %v1091 = vsub.f32 1.0, %v1027
  %v1092 = vsub.f32 1.0, %v1028
  %v1093 = vsub.f32 1.0, %v1029
  %v1094 = vmul.f32 %v770, %v1090
  %v1095 = vmul.f32 %v772, %v1091
  %v1096 = vmul.f32 %v871, %v1092
  %v1097 = vmul.f32 %v873, %v1093
  %v1098 = vsub.f32 1.0, %v1038
  %v1099 = vsub.f32 1.0, %v1039
  %v1100 = vsub.f32 1.0, %v1040
  %v1101 = vsub.f32 1.0, %v1041
  %v1102 = vmul.f32 %v776, %v1098
  %v1103 = vmul.f32 %v778, %v1099
  %v1104 = vmul.f32 %v877, %v1100
  %v1105 = vmul.f32 %v879, %v1101
  %1106 = vrot.lane.b32.xlu0 %v57, 1
  %v1107 = vpop.permute.xlu0 %1106
  %1108 = vrot.lane.b32.xlu0 %v58, 1
  %v1109 = vpop.permute.xlu0 %1108
  %1110 = vrot.lane.b32.xlu0 %v59, 1
  %v1111 = vpop.permute.xlu0 %1110
  %1112 = vrot.lane.b32.xlu0 %v60, 1
  %v1113 = vpop.permute.xlu0 %1112
  %vm1114 = vcmp.lt.s32.totalorder %v894, 1
  %v1115 = vsel %vm1114, %v1111, %v1113
  %v1116 = vsel %vm1114, %v1109, %v1111
  %v1117 = vsel %vm1114, %v1107, %v1109
  %v1118 = vsel %vm1114, %v1113, %v1107
  %1119 = vrot.lane.b32.xlu0 %v57, 127
  %v1120 = vpop.permute.xlu0 %1119
  %1121 = vrot.lane.b32.xlu0 %v58, 127
  %v1122 = vpop.permute.xlu0 %1121
  %1123 = vrot.lane.b32.xlu0 %v59, 127
  %v1124 = vpop.permute.xlu0 %1123
  %1125 = vrot.lane.b32.xlu0 %v60, 127
  %v1126 = vpop.permute.xlu0 %1125
  %vm1127 = vcmp.lt.s32.totalorder %v894, 127
  %v1128 = vsel %vm1127, %v1124, %v1126
  %v1129 = vsel %vm1127, %v1122, %v1124
  %v1130 = vsel %vm1127, %v1120, %v1122
  %v1131 = vsel %vm1127, %v1126, %v1120
  %1132 = vrot.lane.b32.xlu0 %v57, 16
  %v1133 = vpop.permute.xlu0 %1132
  %1134 = vrot.lane.b32.xlu0 %v58, 16
  %v1135 = vpop.permute.xlu0 %1134
  %1136 = vrot.lane.b32.xlu0 %v59, 16
  %v1137 = vpop.permute.xlu0 %1136
  %1138 = vrot.lane.b32.xlu0 %v60, 16
  %v1139 = vpop.permute.xlu0 %1138
  %vm1140 = vcmp.lt.s32.totalorder %v894, 16
  %v1141 = vsel %vm1140, %v1137, %v1139
  %v1142 = vsel %vm1140, %v1135, %v1137
  %v1143 = vsel %vm1140, %v1133, %v1135
  %v1144 = vsel %vm1140, %v1139, %v1133
  %1145 = vrot.lane.b32.xlu0 %v57, 112
  %v1146 = vpop.permute.xlu0 %1145
  %1147 = vrot.lane.b32.xlu0 %v58, 112
  %v1148 = vpop.permute.xlu0 %1147
  %1149 = vrot.lane.b32.xlu0 %v59, 112
  %v1150 = vpop.permute.xlu0 %1149
  %1151 = vrot.lane.b32.xlu0 %v60, 112
  %v1152 = vpop.permute.xlu0 %1151
  %vm1153 = vcmp.lt.s32.totalorder %v894, 112
  %v1154 = vsel %vm1153, %v1150, %v1152
  %v1155 = vsel %vm1153, %v1148, %v1150
  %v1156 = vsel %vm1153, %v1146, %v1148
  %v1157 = vsel %vm1153, %v1152, %v1146
  %v1158 = vmul.f32 %v1078, %v1118
  %v1159 = vmul.f32 %v1079, %v1117
  %v1160 = vmul.f32 %v1080, %v1116
  %v1161 = vmul.f32 %v1081, %v1115
  %v1162 = vmul.f32 %v1086, %v1130
  %v1163 = vmul.f32 %v1087, %v1129
  %v1164 = vmul.f32 %v1088, %v1128
  %v1165 = vmul.f32 %v1089, %v1131
  %v1166 = vadd.f32 %v1158, %v1162
  %v1167 = vadd.f32 %v1159, %v1163
  %v1168 = vadd.f32 %v1160, %v1164
  %v1169 = vadd.f32 %v1161, %v1165
  %v1170 = vmul.f32 %v1094, %v1144
  %v1171 = vmul.f32 %v1095, %v1143
  %v1172 = vmul.f32 %v1096, %v1142
  %v1173 = vmul.f32 %v1097, %v1141
  %v1174 = vadd.f32 %v1166, %v1170
  %v1175 = vadd.f32 %v1167, %v1171
  %v1176 = vadd.f32 %v1168, %v1172
  %v1177 = vadd.f32 %v1169, %v1173
  %v1178 = vmul.f32 %v1102, %v1156
  %v1179 = vmul.f32 %v1103, %v1155
  %v1180 = vmul.f32 %v1104, %v1154
  %v1181 = vmul.f32 %v1105, %v1157
  %v1182 = vadd.f32 %v1174, %v1178
  %v1183 = vadd.f32 %v1175, %v1179
  %v1184 = vadd.f32 %v1176, %v1180
  %v1185 = vadd.f32 %v1177, %v1181
  %v1186 = vmul.f32 %v1070, %v57
  %v1187 = vmul.f32 %v1071, %v58
  %v1188 = vmul.f32 %v1072, %v59
  %v1189 = vmul.f32 %v1073, %v60
  %v1190 = vadd.f32 %v1182, %v1186
  %v1191 = vadd.f32 %v1183, %v1187
  %v1192 = vadd.f32 %v1184, %v1188
  %v1193 = vadd.f32 %v1185, %v1189
  %v1194 = vadd.f32 %v1190, %v788
  %v1195 = vadd.f32 %v1191, %v790
  %v1196 = vadd.f32 %v1192, %v889
  %v1197 = vadd.f32 %v1193, %v891
  %1198 = vmatprep.subr.mxu0 0.0
  %1199 = vmatpush1.msra.mxu0 1.0
  %1200 = vmatprep.subr.mxu0 0.0
  %1201 = vmatpush1.msra.mxu0 1.0
  %1202 = vmatprep.subr.mxu0 0.0
  %1203 = vmatpush1.msra.mxu0 1.0
  %1204 = vmatprep.subr.mxu0 0.0
  %1205 = vmatpush1.msra.mxu0 1.0
  %1206 = vmatprep.subr.mxu0 0.0
  %1207 = vmatpush1.msra.mxu0 1.0
  %1208 = vmatprep.subr.mxu0 0.0
  %1209 = vmatpush1.msra.mxu0 1.0
  %1210 = vmatprep.subr.mxu0 0.0
  %1211 = vmatpush1.msra.mxu0 1.0
  %1212 = vmatprep.subr.mxu0 0.0
  %1213 = vmatpush1.msra.mxu0 1.0
  %1214 = vmatprep.subr.mxu0 0.0
  %1215 = vmatpush1.msra.mxu0 1.0
  %1216 = vmatprep.subr.mxu0 0.0
  %1217 = vmatpush1.msra.mxu0 1.0
  %1218 = vmatprep.subr.mxu0 0.0
  %1219 = vmatpush1.msra.mxu0 1.0
  %1220 = vmatprep.subr.mxu0 0.0
  %1221 = vmatpush1.msra.mxu0 1.0
  %1222 = vmatprep.subr.mxu0 0.0
  %1223 = vmatpush1.msra.mxu0 1.0
  %1224 = vmatprep.subr.mxu0 0.0
  %1225 = vmatpush1.msra.mxu0 1.0
  %1226 = vmatprep.subr.mxu0 0.0
  %1227 = vmatpush1.msra.mxu0 1.0
  %1228 = vmatprep.subr.mxu0 0.0
  %1229 = vmatpush1.msra.mxu0 1.0
  %1230 = vmatprep.subr.mxu0 0.0
  %1231 = vmatpush2.msra.mxu0 1.0
  %1232 = vmatprep.subr.mxu0 0.0
  %1233 = vmatpush2.msra.mxu0 1.0
  %1234 = vmatprep.subr.mxu0 0.0
  %1235 = vmatpush2.msra.mxu0 1.0
  %1236 = vmatprep.subr.mxu0 0.0
  %1237 = vmatpush2.msra.mxu0 1.0
  %1238 = vmatprep.subr.mxu0 0.0
  %1239 = vmatpush2.msra.mxu0 1.0
  %1240 = vmatprep.subr.mxu0 0.0
  %1241 = vmatpush2.msra.mxu0 1.0
  %1242 = vmatprep.subr.mxu0 0.0
  %1243 = vmatpush2.msra.mxu0 1.0
  %1244 = vmatprep.subr.mxu0 0.0
  %1245 = vmatpush2.msra.mxu0 1.0
  %1246 = vmatprep.subr.mxu0 0.0
  %1247 = vmatpush2.msra.mxu0 1.0
  %1248 = vmatprep.subr.mxu0 0.0
  %1249 = vmatpush2.msra.mxu0 1.0
  %1250 = vmatprep.subr.mxu0 0.0
  %1251 = vmatpush2.msra.mxu0 1.0
  %1252 = vmatprep.subr.mxu0 0.0
  %1253 = vmatpush2.msra.mxu0 1.0
  %1254 = vmatprep.subr.mxu0 0.0
  %1255 = vmatpush2.msra.mxu0 1.0
  %1256 = vmatprep.subr.mxu0 0.0
  %1257 = vmatpush2.msra.mxu0 1.0
  %1258 = vmatprep.subr.mxu0 0.0
  %1259 = vmatpush2.msra.mxu0 1.0
  %1260 = vmatprep.subr.mxu0 0.0
  %1261 = vmatpush2.msra.mxu0 1.0
  %1262 = vmatprep.mubr.f32.mxu0 %v1195
  %1263 = vmatmul.mubr.f32.gmra.mxu0 %v1194
  %v1264 = vpop.f32.mrf.mxu0
  %v1265 = vadd.f32 0.0, %v1264
  %v1266 = vpop.f32.mrf.mxu0
  %1267 = vdwg.mxu0
  %1268 = vmatprep.subr.mxu0 0.0
  %1269 = vmatpush1.msra.mxu0 1.0
  %1270 = vmatprep.subr.mxu0 0.0
  %1271 = vmatpush1.msra.mxu0 1.0
  %1272 = vmatprep.subr.mxu0 0.0
  %1273 = vmatpush1.msra.mxu0 1.0
  %1274 = vmatprep.subr.mxu0 0.0
  %1275 = vmatpush1.msra.mxu0 1.0
  %1276 = vmatprep.subr.mxu0 0.0
  %1277 = vmatpush1.msra.mxu0 1.0
  %1278 = vmatprep.subr.mxu0 0.0
  %1279 = vmatpush1.msra.mxu0 1.0
  %1280 = vmatprep.subr.mxu0 0.0
  %1281 = vmatpush1.msra.mxu0 1.0
  %1282 = vmatprep.subr.mxu0 0.0
  %1283 = vmatpush1.msra.mxu0 1.0
  %1284 = vmatprep.subr.mxu0 0.0
  %1285 = vmatpush1.msra.mxu0 1.0
  %1286 = vmatprep.subr.mxu0 0.0
  %1287 = vmatpush1.msra.mxu0 1.0
  %1288 = vmatprep.subr.mxu0 0.0
  %1289 = vmatpush1.msra.mxu0 1.0
  %1290 = vmatprep.subr.mxu0 0.0
  %1291 = vmatpush1.msra.mxu0 1.0
  %1292 = vmatprep.subr.mxu0 0.0
  %1293 = vmatpush1.msra.mxu0 1.0
  %1294 = vmatprep.subr.mxu0 0.0
  %1295 = vmatpush1.msra.mxu0 1.0
  %1296 = vmatprep.subr.mxu0 0.0
  %1297 = vmatpush1.msra.mxu0 1.0
  %1298 = vmatprep.subr.mxu0 0.0
  %1299 = vmatpush1.msra.mxu0 1.0
  %1300 = vmatprep.subr.mxu0 0.0
  %1301 = vmatpush2.msra.mxu0 1.0
  %1302 = vmatprep.subr.mxu0 0.0
  %1303 = vmatpush2.msra.mxu0 1.0
  %1304 = vmatprep.subr.mxu0 0.0
  %1305 = vmatpush2.msra.mxu0 1.0
  %1306 = vmatprep.subr.mxu0 0.0
  %1307 = vmatpush2.msra.mxu0 1.0
  %1308 = vmatprep.subr.mxu0 0.0
  %1309 = vmatpush2.msra.mxu0 1.0
  %1310 = vmatprep.subr.mxu0 0.0
  %1311 = vmatpush2.msra.mxu0 1.0
  %1312 = vmatprep.subr.mxu0 0.0
  %1313 = vmatpush2.msra.mxu0 1.0
  %1314 = vmatprep.subr.mxu0 0.0
  %1315 = vmatpush2.msra.mxu0 1.0
  %1316 = vmatprep.subr.mxu0 0.0
  %1317 = vmatpush2.msra.mxu0 1.0
  %1318 = vmatprep.subr.mxu0 0.0
  %1319 = vmatpush2.msra.mxu0 1.0
  %1320 = vmatprep.subr.mxu0 0.0
  %1321 = vmatpush2.msra.mxu0 1.0
  %1322 = vmatprep.subr.mxu0 0.0
  %1323 = vmatpush2.msra.mxu0 1.0
  %1324 = vmatprep.subr.mxu0 0.0
  %1325 = vmatpush2.msra.mxu0 1.0
  %1326 = vmatprep.subr.mxu0 0.0
  %1327 = vmatpush2.msra.mxu0 1.0
  %1328 = vmatprep.subr.mxu0 0.0
  %1329 = vmatpush2.msra.mxu0 1.0
  %1330 = vmatprep.subr.mxu0 0.0
  %1331 = vmatpush2.msra.mxu0 1.0
  %1332 = vmatprep.mubr.f32.mxu0 %v1197
  %1333 = vmatmul.mubr.f32.gmra.mxu0 %v1196
  %v1334 = vpop.f32.mrf.mxu0
  %v1335 = vadd.f32 %v1265, %v1334
  %v1336 = vpop.f32.mrf.mxu0
  %1337 = vdwg.mxu0
  %v1338 = vmul.f32 %v1194, %v1194
  %v1339 = vmul.f32 %v1195, %v1195
  %v1340 = vmul.f32 %v1196, %v1196
  %v1341 = vmul.f32 %v1197, %v1197
  %1342 = vmatprep.subr.mxu0 0.0
  %1343 = vmatpush1.msra.mxu0 1.0
  %1344 = vmatprep.subr.mxu0 0.0
  %1345 = vmatpush1.msra.mxu0 1.0
  %1346 = vmatprep.subr.mxu0 0.0
  %1347 = vmatpush1.msra.mxu0 1.0
  %1348 = vmatprep.subr.mxu0 0.0
  %1349 = vmatpush1.msra.mxu0 1.0
  %1350 = vmatprep.subr.mxu0 0.0
  %1351 = vmatpush1.msra.mxu0 1.0
  %1352 = vmatprep.subr.mxu0 0.0
  %1353 = vmatpush1.msra.mxu0 1.0
  %1354 = vmatprep.subr.mxu0 0.0
  %1355 = vmatpush1.msra.mxu0 1.0
  %1356 = vmatprep.subr.mxu0 0.0
  %1357 = vmatpush1.msra.mxu0 1.0
  %1358 = vmatprep.subr.mxu0 0.0
  %1359 = vmatpush1.msra.mxu0 1.0
  %1360 = vmatprep.subr.mxu0 0.0
  %1361 = vmatpush1.msra.mxu0 1.0
  %1362 = vmatprep.subr.mxu0 0.0
  %1363 = vmatpush1.msra.mxu0 1.0
  %1364 = vmatprep.subr.mxu0 0.0
  %1365 = vmatpush1.msra.mxu0 1.0
  %1366 = vmatprep.subr.mxu0 0.0
  %1367 = vmatpush1.msra.mxu0 1.0
  %1368 = vmatprep.subr.mxu0 0.0
  %1369 = vmatpush1.msra.mxu0 1.0
  %1370 = vmatprep.subr.mxu0 0.0
  %1371 = vmatpush1.msra.mxu0 1.0
  %1372 = vmatprep.subr.mxu0 0.0
  %1373 = vmatpush1.msra.mxu0 1.0
  %1374 = vmatprep.subr.mxu0 0.0
  %1375 = vmatpush2.msra.mxu0 1.0
  %1376 = vmatprep.subr.mxu0 0.0
  %1377 = vmatpush2.msra.mxu0 1.0
  %1378 = vmatprep.subr.mxu0 0.0
  %1379 = vmatpush2.msra.mxu0 1.0
  %1380 = vmatprep.subr.mxu0 0.0
  %1381 = vmatpush2.msra.mxu0 1.0
  %1382 = vmatprep.subr.mxu0 0.0
  %1383 = vmatpush2.msra.mxu0 1.0
  %1384 = vmatprep.subr.mxu0 0.0
  %1385 = vmatpush2.msra.mxu0 1.0
  %1386 = vmatprep.subr.mxu0 0.0
  %1387 = vmatpush2.msra.mxu0 1.0
  %1388 = vmatprep.subr.mxu0 0.0
  %1389 = vmatpush2.msra.mxu0 1.0
  %1390 = vmatprep.subr.mxu0 0.0
  %1391 = vmatpush2.msra.mxu0 1.0
  %1392 = vmatprep.subr.mxu0 0.0
  %1393 = vmatpush2.msra.mxu0 1.0
  %1394 = vmatprep.subr.mxu0 0.0
  %1395 = vmatpush2.msra.mxu0 1.0
  %1396 = vmatprep.subr.mxu0 0.0
  %1397 = vmatpush2.msra.mxu0 1.0
  %1398 = vmatprep.subr.mxu0 0.0
  %1399 = vmatpush2.msra.mxu0 1.0
  %1400 = vmatprep.subr.mxu0 0.0
  %1401 = vmatpush2.msra.mxu0 1.0
  %1402 = vmatprep.subr.mxu0 0.0
  %1403 = vmatpush2.msra.mxu0 1.0
  %1404 = vmatprep.subr.mxu0 0.0
  %1405 = vmatpush2.msra.mxu0 1.0
  %1406 = vmatprep.mubr.f32.mxu0 %v1339
  %1407 = vmatmul.mubr.f32.gmra.mxu0 %v1338
  %v1408 = vpop.f32.mrf.mxu0
  %v1409 = vadd.f32 0.0, %v1408
  %v1410 = vpop.f32.mrf.mxu0
  %1411 = vdwg.mxu0
  %1412 = vmatprep.subr.mxu0 0.0
  %1413 = vmatpush1.msra.mxu0 1.0
  %1414 = vmatprep.subr.mxu0 0.0
  %1415 = vmatpush1.msra.mxu0 1.0
  %1416 = vmatprep.subr.mxu0 0.0
  %1417 = vmatpush1.msra.mxu0 1.0
  %1418 = vmatprep.subr.mxu0 0.0
  %1419 = vmatpush1.msra.mxu0 1.0
  %1420 = vmatprep.subr.mxu0 0.0
  %1421 = vmatpush1.msra.mxu0 1.0
  %1422 = vmatprep.subr.mxu0 0.0
  %1423 = vmatpush1.msra.mxu0 1.0
  %1424 = vmatprep.subr.mxu0 0.0
  %1425 = vmatpush1.msra.mxu0 1.0
  %1426 = vmatprep.subr.mxu0 0.0
  %1427 = vmatpush1.msra.mxu0 1.0
  %1428 = vmatprep.subr.mxu0 0.0
  %1429 = vmatpush1.msra.mxu0 1.0
  %1430 = vmatprep.subr.mxu0 0.0
  %1431 = vmatpush1.msra.mxu0 1.0
  %1432 = vmatprep.subr.mxu0 0.0
  %1433 = vmatpush1.msra.mxu0 1.0
  %1434 = vmatprep.subr.mxu0 0.0
  %1435 = vmatpush1.msra.mxu0 1.0
  %1436 = vmatprep.subr.mxu0 0.0
  %1437 = vmatpush1.msra.mxu0 1.0
  %1438 = vmatprep.subr.mxu0 0.0
  %1439 = vmatpush1.msra.mxu0 1.0
  %1440 = vmatprep.subr.mxu0 0.0
  %1441 = vmatpush1.msra.mxu0 1.0
  %1442 = vmatprep.subr.mxu0 0.0
  %1443 = vmatpush1.msra.mxu0 1.0
  %1444 = vmatprep.subr.mxu0 0.0
  %1445 = vmatpush2.msra.mxu0 1.0
  %1446 = vmatprep.subr.mxu0 0.0
  %1447 = vmatpush2.msra.mxu0 1.0
  %1448 = vmatprep.subr.mxu0 0.0
  %1449 = vmatpush2.msra.mxu0 1.0
  %1450 = vmatprep.subr.mxu0 0.0
  %1451 = vmatpush2.msra.mxu0 1.0
  %1452 = vmatprep.subr.mxu0 0.0
  %1453 = vmatpush2.msra.mxu0 1.0
  %1454 = vmatprep.subr.mxu0 0.0
  %1455 = vmatpush2.msra.mxu0 1.0
  %1456 = vmatprep.subr.mxu0 0.0
  %1457 = vmatpush2.msra.mxu0 1.0
  %1458 = vmatprep.subr.mxu0 0.0
  %1459 = vmatpush2.msra.mxu0 1.0
  %1460 = vmatprep.subr.mxu0 0.0
  %1461 = vmatpush2.msra.mxu0 1.0
  %1462 = vmatprep.subr.mxu0 0.0
  %1463 = vmatpush2.msra.mxu0 1.0
  %1464 = vmatprep.subr.mxu0 0.0
  %1465 = vmatpush2.msra.mxu0 1.0
  %1466 = vmatprep.subr.mxu0 0.0
  %1467 = vmatpush2.msra.mxu0 1.0
  %1468 = vmatprep.subr.mxu0 0.0
  %1469 = vmatpush2.msra.mxu0 1.0
  %1470 = vmatprep.subr.mxu0 0.0
  %1471 = vmatpush2.msra.mxu0 1.0
  %1472 = vmatprep.subr.mxu0 0.0
  %1473 = vmatpush2.msra.mxu0 1.0
  %1474 = vmatprep.subr.mxu0 0.0
  %1475 = vmatpush2.msra.mxu0 1.0
  %1476 = vmatprep.mubr.f32.mxu0 %v1341
  %1477 = vmatmul.mubr.f32.gmra.mxu0 %v1340
  %v1478 = vpop.f32.mrf.mxu0
  %v1479 = vadd.f32 %v1409, %v1478
  %v1480 = vpop.f32.mrf.mxu0
  %1481 = vdwg.mxu0
  %v1482 = vmul.f32 %v1335, 0.001953125
  %v1483 = vmul.f32 %v1479, 0.001953125
  %v1484 = vmul.f32 %v1482, %v1482
  %v1485 = vsub.f32 %v1483, %v1484
  %v1486 = vmax.f32 %v1485, 0.0
  %1488 = vset.pattern.permute.xlu0 0
  %1489 = vperm.xlu0 %1488, %v1482
  %v1490 = vpop.permute.xlu0 %1489
  %v1492 = vsub.f32 %v1194, %v1490
  %v1493 = vsub.f32 %v1195, %v1490
  %v1494 = vsub.f32 %v1196, %v1490
  %v1495 = vsub.f32 %v1197, %v1490
  %v1496 = vadd.f32 %v1486, 1e-05
  %v1497 = vrsqrt.pop %v1496
  %1499 = vset.pattern.permute.xlu0 0
  %1500 = vperm.xlu0 %1499, %v1497
  %v1501 = vpop.permute.xlu0 %1500
  %v1503 = vmul.f32 %v1492, %v1501
  %v1504 = vmul.f32 %v1493, %v1501
  %v1505 = vmul.f32 %v1494, %v1501
  %v1506 = vmul.f32 %v1495, %v1501
  %1508 = vset.pattern.permute.xlu0 0
  %1509 = vperm.xlu0 %1508, %v77
  %v1510 = vpop.permute.xlu0 %1509
  %v1512 = vmul.f32 %v1503, %v1510
  %v1513 = vmul.f32 %v1504, %v1510
  %v1514 = vmul.f32 %v1505, %v1510
  %v1515 = vmul.f32 %v1506, %v1510
  %1517 = vset.pattern.permute.xlu0 0
  %1518 = vperm.xlu0 %1517, %v78
  %v1519 = vpop.permute.xlu0 %1518
  %v1521 = vadd.f32 %v1512, %v1519
  %v1522 = vadd.f32 %v1513, %v1519
  %v1523 = vadd.f32 %v1514, %v1519
  %v1524 = vadd.f32 %v1515, %v1519
  %1526 = vset.pattern.permute.xlu0 0
  %1527 = vperm.xlu0 %1526, %v80
  %v1528 = vpop.permute.xlu0 %1527
  %v1531 = vsel %vm485, %v79, 0
  %1533 = vmatprep.subr.mxu0 0.0
  %1534 = vmatpush1.msra.mxu0 0.0
  %1535 = vmatprep.subr.mxu0 0.0
  %1536 = vmatpush1.msra.mxu0 0.0
  %1537 = vmatprep.subr.mxu0 0.0
  %1538 = vmatpush1.msra.mxu0 0.0
  %1539 = vmatprep.subr.mxu0 0.0
  %1540 = vmatpush1.msra.mxu0 0.0
  %1541 = vmatprep.subr.mxu0 0.0
  %1542 = vmatpush1.msra.mxu0 0.0
  %1543 = vmatprep.subr.mxu0 0.0
  %1544 = vmatpush1.msra.mxu0 0.0
  %1545 = vmatprep.subr.mxu0 0.0
  %1546 = vmatpush1.msra.mxu0 0.0
  %1547 = vmatprep.subr.mxu0 0.0
  %1548 = vmatpush1.msra.mxu0 0.0
  %1549 = vmatprep.subr.mxu0 0.0
  %1550 = vmatpush1.msra.mxu0 0.0
  %1551 = vmatprep.subr.mxu0 0.0
  %1552 = vmatpush1.msra.mxu0 0.0
  %1553 = vmatprep.subr.mxu0 0.0
  %1554 = vmatpush1.msra.mxu0 0.0
  %1555 = vmatprep.subr.mxu0 0.0
  %1556 = vmatpush1.msra.mxu0 0.0
  %1557 = vmatprep.subr.mxu0 0.0
  %1558 = vmatpush1.msra.mxu0 0.0
  %1559 = vmatprep.subr.mxu0 0.0
  %1560 = vmatpush1.msra.mxu0 0.0
  %1561 = vmatprep.subr.mxu0 0.0
  %1562 = vmatpush1.msra.mxu0 0.0
  %1563 = vmatprep.subr.mxu0 %v1522
  %1564 = vmatpush1.msra.mxu0 %v1521
  %1565 = vmatprep.subr.mxu0 0.0
  %1566 = vmatpush2.msra.mxu0 0.0
  %1567 = vmatprep.subr.mxu0 0.0
  %1568 = vmatpush2.msra.mxu0 0.0
  %1569 = vmatprep.subr.mxu0 0.0
  %1570 = vmatpush2.msra.mxu0 0.0
  %1571 = vmatprep.subr.mxu0 0.0
  %1572 = vmatpush2.msra.mxu0 0.0
  %1573 = vmatprep.subr.mxu0 0.0
  %1574 = vmatpush2.msra.mxu0 0.0
  %1575 = vmatprep.subr.mxu0 0.0
  %1576 = vmatpush2.msra.mxu0 0.0
  %1577 = vmatprep.subr.mxu0 0.0
  %1578 = vmatpush2.msra.mxu0 0.0
  %1579 = vmatprep.subr.mxu0 0.0
  %1580 = vmatpush2.msra.mxu0 0.0
  %1581 = vmatprep.subr.mxu0 0.0
  %1582 = vmatpush2.msra.mxu0 0.0
  %1583 = vmatprep.subr.mxu0 0.0
  %1584 = vmatpush2.msra.mxu0 0.0
  %1585 = vmatprep.subr.mxu0 0.0
  %1586 = vmatpush2.msra.mxu0 0.0
  %1587 = vmatprep.subr.mxu0 0.0
  %1588 = vmatpush2.msra.mxu0 0.0
  %1589 = vmatprep.subr.mxu0 0.0
  %1590 = vmatpush2.msra.mxu0 0.0
  %1591 = vmatprep.subr.mxu0 0.0
  %1592 = vmatpush2.msra.mxu0 0.0
  %1593 = vmatprep.subr.mxu0 0.0
  %1594 = vmatpush2.msra.mxu0 0.0
  %1595 = vmatprep.subr.mxu0 0.0
  %1596 = vmatpush2.msra.mxu0 0.0
  %1597 = vmatprep.mubr.f32.mxu0 0.0
  %1598 = vmatmul.mubr.f32.gmra.mxu0 %v1531
  %v1599 = vpop.f32.mrf.mxu0
  %v1600 = vadd.f32 %v1528, %v1599
  %v1601 = vpop.f32.mrf.mxu0
  %v1602 = vadd.f32 %v1528, %v1601
  %1603 = vdwg.mxu0
  %1604 = vmatprep.subr.mxu0 0.0
  %1605 = vmatpush1.msra.mxu0 0.0
  %1606 = vmatprep.subr.mxu0 0.0
  %1607 = vmatpush1.msra.mxu0 0.0
  %1608 = vmatprep.subr.mxu0 0.0
  %1609 = vmatpush1.msra.mxu0 0.0
  %1610 = vmatprep.subr.mxu0 0.0
  %1611 = vmatpush1.msra.mxu0 0.0
  %1612 = vmatprep.subr.mxu0 0.0
  %1613 = vmatpush1.msra.mxu0 0.0
  %1614 = vmatprep.subr.mxu0 0.0
  %1615 = vmatpush1.msra.mxu0 0.0
  %1616 = vmatprep.subr.mxu0 0.0
  %1617 = vmatpush1.msra.mxu0 0.0
  %1618 = vmatprep.subr.mxu0 0.0
  %1619 = vmatpush1.msra.mxu0 0.0
  %1620 = vmatprep.subr.mxu0 0.0
  %1621 = vmatpush1.msra.mxu0 0.0
  %1622 = vmatprep.subr.mxu0 0.0
  %1623 = vmatpush1.msra.mxu0 0.0
  %1624 = vmatprep.subr.mxu0 0.0
  %1625 = vmatpush1.msra.mxu0 0.0
  %1626 = vmatprep.subr.mxu0 0.0
  %1627 = vmatpush1.msra.mxu0 0.0
  %1628 = vmatprep.subr.mxu0 0.0
  %1629 = vmatpush1.msra.mxu0 0.0
  %1630 = vmatprep.subr.mxu0 0.0
  %1631 = vmatpush1.msra.mxu0 0.0
  %1632 = vmatprep.subr.mxu0 0.0
  %1633 = vmatpush1.msra.mxu0 0.0
  %1634 = vmatprep.subr.mxu0 %v1524
  %1635 = vmatpush1.msra.mxu0 %v1523
  %1636 = vmatprep.subr.mxu0 0.0
  %1637 = vmatpush2.msra.mxu0 0.0
  %1638 = vmatprep.subr.mxu0 0.0
  %1639 = vmatpush2.msra.mxu0 0.0
  %1640 = vmatprep.subr.mxu0 0.0
  %1641 = vmatpush2.msra.mxu0 0.0
  %1642 = vmatprep.subr.mxu0 0.0
  %1643 = vmatpush2.msra.mxu0 0.0
  %1644 = vmatprep.subr.mxu0 0.0
  %1645 = vmatpush2.msra.mxu0 0.0
  %1646 = vmatprep.subr.mxu0 0.0
  %1647 = vmatpush2.msra.mxu0 0.0
  %1648 = vmatprep.subr.mxu0 0.0
  %1649 = vmatpush2.msra.mxu0 0.0
  %1650 = vmatprep.subr.mxu0 0.0
  %1651 = vmatpush2.msra.mxu0 0.0
  %1652 = vmatprep.subr.mxu0 0.0
  %1653 = vmatpush2.msra.mxu0 0.0
  %1654 = vmatprep.subr.mxu0 0.0
  %1655 = vmatpush2.msra.mxu0 0.0
  %1656 = vmatprep.subr.mxu0 0.0
  %1657 = vmatpush2.msra.mxu0 0.0
  %1658 = vmatprep.subr.mxu0 0.0
  %1659 = vmatpush2.msra.mxu0 0.0
  %1660 = vmatprep.subr.mxu0 0.0
  %1661 = vmatpush2.msra.mxu0 0.0
  %1662 = vmatprep.subr.mxu0 0.0
  %1663 = vmatpush2.msra.mxu0 0.0
  %1664 = vmatprep.subr.mxu0 0.0
  %1665 = vmatpush2.msra.mxu0 0.0
  %1666 = vmatprep.subr.mxu0 0.0
  %1667 = vmatpush2.msra.mxu0 0.0
  %1668 = vmatprep.mubr.f32.mxu0 0.0
  %1669 = vmatmul.mubr.f32.gmra.mxu0 %v1531
  %v1670 = vpop.f32.mrf.mxu0
  %v1671 = vadd.f32 %v1528, %v1670
  %v1672 = vpop.f32.mrf.mxu0
  %v1673 = vadd.f32 %v1528, %v1672
  %1674 = vdwg.mxu0
  %vm1675 = vcmp.ge.f32.partialorder %v1600, 0.0
  %vm1676 = vcmp.ge.f32.partialorder %v1602, 0.0
  %vm1677 = vcmp.ge.f32.partialorder %v1671, 0.0
  %vm1678 = vcmp.ge.f32.partialorder %v1673, 0.0
  %v1679 = vmul.f32 %v1600, 0.01
  %v1680 = vmul.f32 %v1602, 0.01
  %v1681 = vmul.f32 %v1671, 0.01
  %v1682 = vmul.f32 %v1673, 0.01
  %v1683 = vsel %vm1675, %v1600, %v1679
  %v1684 = vsel %vm1676, %v1602, %v1680
  %v1685 = vsel %vm1677, %v1671, %v1681
  %v1686 = vsel %vm1678, %v1673, %v1682
  %1688 = vset.pattern.permute.xlu0 0
  %1689 = vperm.xlu0 %1688, %v82
  %v1690 = vpop.permute.xlu0 %1689
  %v1693 = vsel %vm485, %v81, 0
  %1695 = vmatprep.subr.mxu0 0.0
  %1696 = vmatpush1.msra.mxu0 0.0
  %1697 = vmatprep.subr.mxu0 0.0
  %1698 = vmatpush1.msra.mxu0 0.0
  %1699 = vmatprep.subr.mxu0 0.0
  %1700 = vmatpush1.msra.mxu0 0.0
  %1701 = vmatprep.subr.mxu0 0.0
  %1702 = vmatpush1.msra.mxu0 0.0
  %1703 = vmatprep.subr.mxu0 0.0
  %1704 = vmatpush1.msra.mxu0 0.0
  %1705 = vmatprep.subr.mxu0 0.0
  %1706 = vmatpush1.msra.mxu0 0.0
  %1707 = vmatprep.subr.mxu0 0.0
  %1708 = vmatpush1.msra.mxu0 0.0
  %1709 = vmatprep.subr.mxu0 0.0
  %1710 = vmatpush1.msra.mxu0 0.0
  %1711 = vmatprep.subr.mxu0 0.0
  %1712 = vmatpush1.msra.mxu0 0.0
  %1713 = vmatprep.subr.mxu0 0.0
  %1714 = vmatpush1.msra.mxu0 0.0
  %1715 = vmatprep.subr.mxu0 0.0
  %1716 = vmatpush1.msra.mxu0 0.0
  %1717 = vmatprep.subr.mxu0 0.0
  %1718 = vmatpush1.msra.mxu0 0.0
  %1719 = vmatprep.subr.mxu0 0.0
  %1720 = vmatpush1.msra.mxu0 0.0
  %1721 = vmatprep.subr.mxu0 0.0
  %1722 = vmatpush1.msra.mxu0 0.0
  %1723 = vmatprep.subr.mxu0 0.0
  %1724 = vmatpush1.msra.mxu0 0.0
  %1725 = vmatprep.subr.mxu0 %v1684
  %1726 = vmatpush1.msra.mxu0 %v1683
  %1727 = vmatprep.subr.mxu0 0.0
  %1728 = vmatpush2.msra.mxu0 0.0
  %1729 = vmatprep.subr.mxu0 0.0
  %1730 = vmatpush2.msra.mxu0 0.0
  %1731 = vmatprep.subr.mxu0 0.0
  %1732 = vmatpush2.msra.mxu0 0.0
  %1733 = vmatprep.subr.mxu0 0.0
  %1734 = vmatpush2.msra.mxu0 0.0
  %1735 = vmatprep.subr.mxu0 0.0
  %1736 = vmatpush2.msra.mxu0 0.0
  %1737 = vmatprep.subr.mxu0 0.0
  %1738 = vmatpush2.msra.mxu0 0.0
  %1739 = vmatprep.subr.mxu0 0.0
  %1740 = vmatpush2.msra.mxu0 0.0
  %1741 = vmatprep.subr.mxu0 0.0
  %1742 = vmatpush2.msra.mxu0 0.0
  %1743 = vmatprep.subr.mxu0 0.0
  %1744 = vmatpush2.msra.mxu0 0.0
  %1745 = vmatprep.subr.mxu0 0.0
  %1746 = vmatpush2.msra.mxu0 0.0
  %1747 = vmatprep.subr.mxu0 0.0
  %1748 = vmatpush2.msra.mxu0 0.0
  %1749 = vmatprep.subr.mxu0 0.0
  %1750 = vmatpush2.msra.mxu0 0.0
  %1751 = vmatprep.subr.mxu0 0.0
  %1752 = vmatpush2.msra.mxu0 0.0
  %1753 = vmatprep.subr.mxu0 0.0
  %1754 = vmatpush2.msra.mxu0 0.0
  %1755 = vmatprep.subr.mxu0 0.0
  %1756 = vmatpush2.msra.mxu0 0.0
  %1757 = vmatprep.subr.mxu0 0.0
  %1758 = vmatpush2.msra.mxu0 0.0
  %1759 = vmatprep.mubr.f32.mxu0 0.0
  %1760 = vmatmul.mubr.f32.gmra.mxu0 %v1693
  %v1761 = vpop.f32.mrf.mxu0
  %v1762 = vadd.f32 %v1690, %v1761
  %v1763 = vpop.f32.mrf.mxu0
  %v1764 = vadd.f32 %v1690, %v1763
  %1765 = vdwg.mxu0
  %1766 = vmatprep.subr.mxu0 0.0
  %1767 = vmatpush1.msra.mxu0 0.0
  %1768 = vmatprep.subr.mxu0 0.0
  %1769 = vmatpush1.msra.mxu0 0.0
  %1770 = vmatprep.subr.mxu0 0.0
  %1771 = vmatpush1.msra.mxu0 0.0
  %1772 = vmatprep.subr.mxu0 0.0
  %1773 = vmatpush1.msra.mxu0 0.0
  %1774 = vmatprep.subr.mxu0 0.0
  %1775 = vmatpush1.msra.mxu0 0.0
  %1776 = vmatprep.subr.mxu0 0.0
  %1777 = vmatpush1.msra.mxu0 0.0
  %1778 = vmatprep.subr.mxu0 0.0
  %1779 = vmatpush1.msra.mxu0 0.0
  %1780 = vmatprep.subr.mxu0 0.0
  %1781 = vmatpush1.msra.mxu0 0.0
  %1782 = vmatprep.subr.mxu0 0.0
  %1783 = vmatpush1.msra.mxu0 0.0
  %1784 = vmatprep.subr.mxu0 0.0
  %1785 = vmatpush1.msra.mxu0 0.0
  %1786 = vmatprep.subr.mxu0 0.0
  %1787 = vmatpush1.msra.mxu0 0.0
  %1788 = vmatprep.subr.mxu0 0.0
  %1789 = vmatpush1.msra.mxu0 0.0
  %1790 = vmatprep.subr.mxu0 0.0
  %1791 = vmatpush1.msra.mxu0 0.0
  %1792 = vmatprep.subr.mxu0 0.0
  %1793 = vmatpush1.msra.mxu0 0.0
  %1794 = vmatprep.subr.mxu0 0.0
  %1795 = vmatpush1.msra.mxu0 0.0
  %1796 = vmatprep.subr.mxu0 %v1686
  %1797 = vmatpush1.msra.mxu0 %v1685
  %1798 = vmatprep.subr.mxu0 0.0
  %1799 = vmatpush2.msra.mxu0 0.0
  %1800 = vmatprep.subr.mxu0 0.0
  %1801 = vmatpush2.msra.mxu0 0.0
  %1802 = vmatprep.subr.mxu0 0.0
  %1803 = vmatpush2.msra.mxu0 0.0
  %1804 = vmatprep.subr.mxu0 0.0
  %1805 = vmatpush2.msra.mxu0 0.0
  %1806 = vmatprep.subr.mxu0 0.0
  %1807 = vmatpush2.msra.mxu0 0.0
  %1808 = vmatprep.subr.mxu0 0.0
  %1809 = vmatpush2.msra.mxu0 0.0
  %1810 = vmatprep.subr.mxu0 0.0
  %1811 = vmatpush2.msra.mxu0 0.0
  %1812 = vmatprep.subr.mxu0 0.0
  %1813 = vmatpush2.msra.mxu0 0.0
  %1814 = vmatprep.subr.mxu0 0.0
  %1815 = vmatpush2.msra.mxu0 0.0
  %1816 = vmatprep.subr.mxu0 0.0
  %1817 = vmatpush2.msra.mxu0 0.0
  %1818 = vmatprep.subr.mxu0 0.0
  %1819 = vmatpush2.msra.mxu0 0.0
  %1820 = vmatprep.subr.mxu0 0.0
  %1821 = vmatpush2.msra.mxu0 0.0
  %1822 = vmatprep.subr.mxu0 0.0
  %1823 = vmatpush2.msra.mxu0 0.0
  %1824 = vmatprep.subr.mxu0 0.0
  %1825 = vmatpush2.msra.mxu0 0.0
  %1826 = vmatprep.subr.mxu0 0.0
  %1827 = vmatpush2.msra.mxu0 0.0
  %1828 = vmatprep.subr.mxu0 0.0
  %1829 = vmatpush2.msra.mxu0 0.0
  %1830 = vmatprep.mubr.f32.mxu0 0.0
  %1831 = vmatmul.mubr.f32.gmra.mxu0 %v1693
  %v1832 = vpop.f32.mrf.mxu0
  %v1833 = vadd.f32 %v1690, %v1832
  %v1834 = vpop.f32.mrf.mxu0
  %v1835 = vadd.f32 %v1690, %v1834
  %1836 = vdwg.mxu0
  %1837 = vmatprep.subr.mxu0 0.0
  %1838 = vmatpush1.msra.mxu0 1.0
  %1839 = vmatprep.subr.mxu0 0.0
  %1840 = vmatpush1.msra.mxu0 1.0
  %1841 = vmatprep.subr.mxu0 0.0
  %1842 = vmatpush1.msra.mxu0 1.0
  %1843 = vmatprep.subr.mxu0 0.0
  %1844 = vmatpush1.msra.mxu0 1.0
  %1845 = vmatprep.subr.mxu0 0.0
  %1846 = vmatpush1.msra.mxu0 1.0
  %1847 = vmatprep.subr.mxu0 0.0
  %1848 = vmatpush1.msra.mxu0 1.0
  %1849 = vmatprep.subr.mxu0 0.0
  %1850 = vmatpush1.msra.mxu0 1.0
  %1851 = vmatprep.subr.mxu0 0.0
  %1852 = vmatpush1.msra.mxu0 1.0
  %1853 = vmatprep.subr.mxu0 0.0
  %1854 = vmatpush1.msra.mxu0 1.0
  %1855 = vmatprep.subr.mxu0 0.0
  %1856 = vmatpush1.msra.mxu0 1.0
  %1857 = vmatprep.subr.mxu0 0.0
  %1858 = vmatpush1.msra.mxu0 1.0
  %1859 = vmatprep.subr.mxu0 0.0
  %1860 = vmatpush1.msra.mxu0 1.0
  %1861 = vmatprep.subr.mxu0 0.0
  %1862 = vmatpush1.msra.mxu0 1.0
  %1863 = vmatprep.subr.mxu0 0.0
  %1864 = vmatpush1.msra.mxu0 1.0
  %1865 = vmatprep.subr.mxu0 0.0
  %1866 = vmatpush1.msra.mxu0 1.0
  %1867 = vmatprep.subr.mxu0 0.0
  %1868 = vmatpush1.msra.mxu0 1.0
  %1869 = vmatprep.subr.mxu0 0.0
  %1870 = vmatpush2.msra.mxu0 1.0
  %1871 = vmatprep.subr.mxu0 0.0
  %1872 = vmatpush2.msra.mxu0 1.0
  %1873 = vmatprep.subr.mxu0 0.0
  %1874 = vmatpush2.msra.mxu0 1.0
  %1875 = vmatprep.subr.mxu0 0.0
  %1876 = vmatpush2.msra.mxu0 1.0
  %1877 = vmatprep.subr.mxu0 0.0
  %1878 = vmatpush2.msra.mxu0 1.0
  %1879 = vmatprep.subr.mxu0 0.0
  %1880 = vmatpush2.msra.mxu0 1.0
  %1881 = vmatprep.subr.mxu0 0.0
  %1882 = vmatpush2.msra.mxu0 1.0
  %1883 = vmatprep.subr.mxu0 0.0
  %1884 = vmatpush2.msra.mxu0 1.0
  %1885 = vmatprep.subr.mxu0 0.0
  %1886 = vmatpush2.msra.mxu0 1.0
  %1887 = vmatprep.subr.mxu0 0.0
  %1888 = vmatpush2.msra.mxu0 1.0
  %1889 = vmatprep.subr.mxu0 0.0
  %1890 = vmatpush2.msra.mxu0 1.0
  %1891 = vmatprep.subr.mxu0 0.0
  %1892 = vmatpush2.msra.mxu0 1.0
  %1893 = vmatprep.subr.mxu0 0.0
  %1894 = vmatpush2.msra.mxu0 1.0
  %1895 = vmatprep.subr.mxu0 0.0
  %1896 = vmatpush2.msra.mxu0 1.0
  %1897 = vmatprep.subr.mxu0 0.0
  %1898 = vmatpush2.msra.mxu0 1.0
  %1899 = vmatprep.subr.mxu0 0.0
  %1900 = vmatpush2.msra.mxu0 1.0
  %1901 = vmatprep.mubr.f32.mxu0 %v1764
  %1902 = vmatmul.mubr.f32.gmra.mxu0 %v1762
  %v1903 = vpop.f32.mrf.mxu0
  %v1904 = vadd.f32 0.0, %v1903
  %v1905 = vpop.f32.mrf.mxu0
  %1906 = vdwg.mxu0
  %1907 = vmatprep.subr.mxu0 0.0
  %1908 = vmatpush1.msra.mxu0 1.0
  %1909 = vmatprep.subr.mxu0 0.0
  %1910 = vmatpush1.msra.mxu0 1.0
  %1911 = vmatprep.subr.mxu0 0.0
  %1912 = vmatpush1.msra.mxu0 1.0
  %1913 = vmatprep.subr.mxu0 0.0
  %1914 = vmatpush1.msra.mxu0 1.0
  %1915 = vmatprep.subr.mxu0 0.0
  %1916 = vmatpush1.msra.mxu0 1.0
  %1917 = vmatprep.subr.mxu0 0.0
  %1918 = vmatpush1.msra.mxu0 1.0
  %1919 = vmatprep.subr.mxu0 0.0
  %1920 = vmatpush1.msra.mxu0 1.0
  %1921 = vmatprep.subr.mxu0 0.0
  %1922 = vmatpush1.msra.mxu0 1.0
  %1923 = vmatprep.subr.mxu0 0.0
  %1924 = vmatpush1.msra.mxu0 1.0
  %1925 = vmatprep.subr.mxu0 0.0
  %1926 = vmatpush1.msra.mxu0 1.0
  %1927 = vmatprep.subr.mxu0 0.0
  %1928 = vmatpush1.msra.mxu0 1.0
  %1929 = vmatprep.subr.mxu0 0.0
  %1930 = vmatpush1.msra.mxu0 1.0
  %1931 = vmatprep.subr.mxu0 0.0
  %1932 = vmatpush1.msra.mxu0 1.0
  %1933 = vmatprep.subr.mxu0 0.0
  %1934 = vmatpush1.msra.mxu0 1.0
  %1935 = vmatprep.subr.mxu0 0.0
  %1936 = vmatpush1.msra.mxu0 1.0
  %1937 = vmatprep.subr.mxu0 0.0
  %1938 = vmatpush1.msra.mxu0 1.0
  %1939 = vmatprep.subr.mxu0 0.0
  %1940 = vmatpush2.msra.mxu0 1.0
  %1941 = vmatprep.subr.mxu0 0.0
  %1942 = vmatpush2.msra.mxu0 1.0
  %1943 = vmatprep.subr.mxu0 0.0
  %1944 = vmatpush2.msra.mxu0 1.0
  %1945 = vmatprep.subr.mxu0 0.0
  %1946 = vmatpush2.msra.mxu0 1.0
  %1947 = vmatprep.subr.mxu0 0.0
  %1948 = vmatpush2.msra.mxu0 1.0
  %1949 = vmatprep.subr.mxu0 0.0
  %1950 = vmatpush2.msra.mxu0 1.0
  %1951 = vmatprep.subr.mxu0 0.0
  %1952 = vmatpush2.msra.mxu0 1.0
  %1953 = vmatprep.subr.mxu0 0.0
  %1954 = vmatpush2.msra.mxu0 1.0
  %1955 = vmatprep.subr.mxu0 0.0
  %1956 = vmatpush2.msra.mxu0 1.0
  %1957 = vmatprep.subr.mxu0 0.0
  %1958 = vmatpush2.msra.mxu0 1.0
  %1959 = vmatprep.subr.mxu0 0.0
  %1960 = vmatpush2.msra.mxu0 1.0
  %1961 = vmatprep.subr.mxu0 0.0
  %1962 = vmatpush2.msra.mxu0 1.0
  %1963 = vmatprep.subr.mxu0 0.0
  %1964 = vmatpush2.msra.mxu0 1.0
  %1965 = vmatprep.subr.mxu0 0.0
  %1966 = vmatpush2.msra.mxu0 1.0
  %1967 = vmatprep.subr.mxu0 0.0
  %1968 = vmatpush2.msra.mxu0 1.0
  %1969 = vmatprep.subr.mxu0 0.0
  %1970 = vmatpush2.msra.mxu0 1.0
  %1971 = vmatprep.mubr.f32.mxu0 %v1835
  %1972 = vmatmul.mubr.f32.gmra.mxu0 %v1833
  %v1973 = vpop.f32.mrf.mxu0
  %v1974 = vadd.f32 %v1904, %v1973
  %v1975 = vpop.f32.mrf.mxu0
  %1976 = vdwg.mxu0
  %v1977 = vmul.f32 %v1762, %v1762
  %v1978 = vmul.f32 %v1764, %v1764
  %v1979 = vmul.f32 %v1833, %v1833
  %v1980 = vmul.f32 %v1835, %v1835
  %1981 = vmatprep.subr.mxu0 0.0
  %1982 = vmatpush1.msra.mxu0 1.0
  %1983 = vmatprep.subr.mxu0 0.0
  %1984 = vmatpush1.msra.mxu0 1.0
  %1985 = vmatprep.subr.mxu0 0.0
  %1986 = vmatpush1.msra.mxu0 1.0
  %1987 = vmatprep.subr.mxu0 0.0
  %1988 = vmatpush1.msra.mxu0 1.0
  %1989 = vmatprep.subr.mxu0 0.0
  %1990 = vmatpush1.msra.mxu0 1.0
  %1991 = vmatprep.subr.mxu0 0.0
  %1992 = vmatpush1.msra.mxu0 1.0
  %1993 = vmatprep.subr.mxu0 0.0
  %1994 = vmatpush1.msra.mxu0 1.0
  %1995 = vmatprep.subr.mxu0 0.0
  %1996 = vmatpush1.msra.mxu0 1.0
  %1997 = vmatprep.subr.mxu0 0.0
  %1998 = vmatpush1.msra.mxu0 1.0
  %1999 = vmatprep.subr.mxu0 0.0
  %2000 = vmatpush1.msra.mxu0 1.0
  %2001 = vmatprep.subr.mxu0 0.0
  %2002 = vmatpush1.msra.mxu0 1.0
  %2003 = vmatprep.subr.mxu0 0.0
  %2004 = vmatpush1.msra.mxu0 1.0
  %2005 = vmatprep.subr.mxu0 0.0
  %2006 = vmatpush1.msra.mxu0 1.0
  %2007 = vmatprep.subr.mxu0 0.0
  %2008 = vmatpush1.msra.mxu0 1.0
  %2009 = vmatprep.subr.mxu0 0.0
  %2010 = vmatpush1.msra.mxu0 1.0
  %2011 = vmatprep.subr.mxu0 0.0
  %2012 = vmatpush1.msra.mxu0 1.0
  %2013 = vmatprep.subr.mxu0 0.0
  %2014 = vmatpush2.msra.mxu0 1.0
  %2015 = vmatprep.subr.mxu0 0.0
  %2016 = vmatpush2.msra.mxu0 1.0
  %2017 = vmatprep.subr.mxu0 0.0
  %2018 = vmatpush2.msra.mxu0 1.0
  %2019 = vmatprep.subr.mxu0 0.0
  %2020 = vmatpush2.msra.mxu0 1.0
  %2021 = vmatprep.subr.mxu0 0.0
  %2022 = vmatpush2.msra.mxu0 1.0
  %2023 = vmatprep.subr.mxu0 0.0
  %2024 = vmatpush2.msra.mxu0 1.0
  %2025 = vmatprep.subr.mxu0 0.0
  %2026 = vmatpush2.msra.mxu0 1.0
  %2027 = vmatprep.subr.mxu0 0.0
  %2028 = vmatpush2.msra.mxu0 1.0
  %2029 = vmatprep.subr.mxu0 0.0
  %2030 = vmatpush2.msra.mxu0 1.0
  %2031 = vmatprep.subr.mxu0 0.0
  %2032 = vmatpush2.msra.mxu0 1.0
  %2033 = vmatprep.subr.mxu0 0.0
  %2034 = vmatpush2.msra.mxu0 1.0
  %2035 = vmatprep.subr.mxu0 0.0
  %2036 = vmatpush2.msra.mxu0 1.0
  %2037 = vmatprep.subr.mxu0 0.0
  %2038 = vmatpush2.msra.mxu0 1.0
  %2039 = vmatprep.subr.mxu0 0.0
  %2040 = vmatpush2.msra.mxu0 1.0
  %2041 = vmatprep.subr.mxu0 0.0
  %2042 = vmatpush2.msra.mxu0 1.0
  %2043 = vmatprep.subr.mxu0 0.0
  %2044 = vmatpush2.msra.mxu0 1.0
  %2045 = vmatprep.mubr.f32.mxu0 %v1978
  %2046 = vmatmul.mubr.f32.gmra.mxu0 %v1977
  %v2047 = vpop.f32.mrf.mxu0
  %v2048 = vadd.f32 0.0, %v2047
  %v2049 = vpop.f32.mrf.mxu0
  %2050 = vdwg.mxu0
  %2051 = vmatprep.subr.mxu0 0.0
  %2052 = vmatpush1.msra.mxu0 1.0
  %2053 = vmatprep.subr.mxu0 0.0
  %2054 = vmatpush1.msra.mxu0 1.0
  %2055 = vmatprep.subr.mxu0 0.0
  %2056 = vmatpush1.msra.mxu0 1.0
  %2057 = vmatprep.subr.mxu0 0.0
  %2058 = vmatpush1.msra.mxu0 1.0
  %2059 = vmatprep.subr.mxu0 0.0
  %2060 = vmatpush1.msra.mxu0 1.0
  %2061 = vmatprep.subr.mxu0 0.0
  %2062 = vmatpush1.msra.mxu0 1.0
  %2063 = vmatprep.subr.mxu0 0.0
  %2064 = vmatpush1.msra.mxu0 1.0
  %2065 = vmatprep.subr.mxu0 0.0
  %2066 = vmatpush1.msra.mxu0 1.0
  %2067 = vmatprep.subr.mxu0 0.0
  %2068 = vmatpush1.msra.mxu0 1.0
  %2069 = vmatprep.subr.mxu0 0.0
  %2070 = vmatpush1.msra.mxu0 1.0
  %2071 = vmatprep.subr.mxu0 0.0
  %2072 = vmatpush1.msra.mxu0 1.0
  %2073 = vmatprep.subr.mxu0 0.0
  %2074 = vmatpush1.msra.mxu0 1.0
  %2075 = vmatprep.subr.mxu0 0.0
  %2076 = vmatpush1.msra.mxu0 1.0
  %2077 = vmatprep.subr.mxu0 0.0
  %2078 = vmatpush1.msra.mxu0 1.0
  %2079 = vmatprep.subr.mxu0 0.0
  %2080 = vmatpush1.msra.mxu0 1.0
  %2081 = vmatprep.subr.mxu0 0.0
  %2082 = vmatpush1.msra.mxu0 1.0
  %2083 = vmatprep.subr.mxu0 0.0
  %2084 = vmatpush2.msra.mxu0 1.0
  %2085 = vmatprep.subr.mxu0 0.0
  %2086 = vmatpush2.msra.mxu0 1.0
  %2087 = vmatprep.subr.mxu0 0.0
  %2088 = vmatpush2.msra.mxu0 1.0
  %2089 = vmatprep.subr.mxu0 0.0
  %2090 = vmatpush2.msra.mxu0 1.0
  %2091 = vmatprep.subr.mxu0 0.0
  %2092 = vmatpush2.msra.mxu0 1.0
  %2093 = vmatprep.subr.mxu0 0.0
  %2094 = vmatpush2.msra.mxu0 1.0
  %2095 = vmatprep.subr.mxu0 0.0
  %2096 = vmatpush2.msra.mxu0 1.0
  %2097 = vmatprep.subr.mxu0 0.0
  %2098 = vmatpush2.msra.mxu0 1.0
  %2099 = vmatprep.subr.mxu0 0.0
  %2100 = vmatpush2.msra.mxu0 1.0
  %2101 = vmatprep.subr.mxu0 0.0
  %2102 = vmatpush2.msra.mxu0 1.0
  %2103 = vmatprep.subr.mxu0 0.0
  %2104 = vmatpush2.msra.mxu0 1.0
  %2105 = vmatprep.subr.mxu0 0.0
  %2106 = vmatpush2.msra.mxu0 1.0
  %2107 = vmatprep.subr.mxu0 0.0
  %2108 = vmatpush2.msra.mxu0 1.0
  %2109 = vmatprep.subr.mxu0 0.0
  %2110 = vmatpush2.msra.mxu0 1.0
  %2111 = vmatprep.subr.mxu0 0.0
  %2112 = vmatpush2.msra.mxu0 1.0
  %2113 = vmatprep.subr.mxu0 0.0
  %2114 = vmatpush2.msra.mxu0 1.0
  %2115 = vmatprep.mubr.f32.mxu0 %v1980
  %2116 = vmatmul.mubr.f32.gmra.mxu0 %v1979
  %v2117 = vpop.f32.mrf.mxu0
  %v2118 = vadd.f32 %v2048, %v2117
  %v2119 = vpop.f32.mrf.mxu0
  %2120 = vdwg.mxu0
  %v2121 = vmul.f32 %v1974, 0.001953125
  %v2122 = vmul.f32 %v2118, 0.001953125
  %v2123 = vmul.f32 %v2121, %v2121
  %v2124 = vsub.f32 %v2122, %v2123
  %v2125 = vmax.f32 %v2124, 0.0
  %2127 = vset.pattern.permute.xlu0 0
  %2128 = vperm.xlu0 %2127, %v2121
  %v2129 = vpop.permute.xlu0 %2128
  %v2131 = vsub.f32 %v1762, %v2129
  %v2132 = vsub.f32 %v1764, %v2129
  %v2133 = vsub.f32 %v1833, %v2129
  %v2134 = vsub.f32 %v1835, %v2129
  %v2135 = vadd.f32 %v2125, 1e-05
  %v2136 = vrsqrt.pop %v2135
  %2138 = vset.pattern.permute.xlu0 0
  %2139 = vperm.xlu0 %2138, %v2136
  %v2140 = vpop.permute.xlu0 %2139
  %v2142 = vmul.f32 %v2131, %v2140
  %v2143 = vmul.f32 %v2132, %v2140
  %v2144 = vmul.f32 %v2133, %v2140
  %v2145 = vmul.f32 %v2134, %v2140
  %2147 = vset.pattern.permute.xlu0 0
  %2148 = vperm.xlu0 %2147, %v83
  %v2149 = vpop.permute.xlu0 %2148
  %v2151 = vmul.f32 %v2142, %v2149
  %v2152 = vmul.f32 %v2143, %v2149
  %v2153 = vmul.f32 %v2144, %v2149
  %v2154 = vmul.f32 %v2145, %v2149
  %2156 = vset.pattern.permute.xlu0 0
  %2157 = vperm.xlu0 %2156, %v84
  %v2158 = vpop.permute.xlu0 %2157
  %v2160 = vadd.f32 %v2151, %v2158
  %v2161 = vadd.f32 %v2152, %v2158
  %v2162 = vadd.f32 %v2153, %v2158
  %v2163 = vadd.f32 %v2154, %v2158
  %v2164 = vadd.f32 %v57, %v2160
  %v2165 = vadd.f32 %v58, %v2161
  %v2166 = vadd.f32 %v59, %v2162
  %v2167 = vadd.f32 %v60, %v2163
  %vm2168 = vcmp.ge.f32.partialorder %v2164, 0.0
  %vm2169 = vcmp.ge.f32.partialorder %v2165, 0.0
  %vm2170 = vcmp.ge.f32.partialorder %v2166, 0.0
  %vm2171 = vcmp.ge.f32.partialorder %v2167, 0.0
  %v2172 = vmul.f32 %v2164, 0.01
  %v2173 = vmul.f32 %v2165, 0.01
  %v2174 = vmul.f32 %v2166, 0.01
  %v2175 = vmul.f32 %v2167, 0.01
  %v2176 = vsel %vm2168, %v2164, %v2172
  %v2177 = vsel %vm2169, %v2165, %v2173
  %v2178 = vsel %vm2170, %v2166, %v2174
  %v2179 = vsel %vm2171, %v2167, %v2175
  %v2180 = vrot.slane %v2176, 4
  %v2181 = vmax.f32 %v2176, %v2180
  %v2182 = vrot.slane %v2181, 2
  %v2183 = vmax.f32 %v2181, %v2182
  %v2184 = vrot.slane %v2183, 1
  %v2185 = vmax.f32 %v2183, %v2184
  %v2186 = vrot.slane %v2177, 4
  %v2187 = vmax.f32 %v2177, %v2186
  %v2188 = vrot.slane %v2187, 2
  %v2189 = vmax.f32 %v2187, %v2188
  %v2190 = vrot.slane %v2189, 1
  %v2191 = vmax.f32 %v2189, %v2190
  %v2192 = vrot.slane %v2178, 4
  %v2193 = vmax.f32 %v2178, %v2192
  %v2194 = vrot.slane %v2193, 2
  %v2195 = vmax.f32 %v2193, %v2194
  %v2196 = vrot.slane %v2195, 1
  %v2197 = vmax.f32 %v2195, %v2196
  %v2198 = vrot.slane %v2179, 4
  %v2199 = vmax.f32 %v2179, %v2198
  %v2200 = vrot.slane %v2199, 2
  %v2201 = vmax.f32 %v2199, %v2200
  %v2202 = vrot.slane %v2201, 1
  %v2203 = vmax.f32 %v2201, %v2202
  %v2204 = vsub.f32 %v2176, %v2185
  %v2205 = vsub.f32 %v2177, %v2191
  %v2206 = vsub.f32 %v2178, %v2197
  %v2207 = vsub.f32 %v2179, %v2203
  %v2208 = vmul.f32 %v2204, 1.442695
  %v2209 = vpow.pop %v2208
  %v2210 = vmul.f32 %v2205, 1.442695
  %v2211 = vpow.pop %v2210
  %v2212 = vmul.f32 %v2206, 1.442695
  %v2213 = vpow.pop %v2212
  %v2214 = vmul.f32 %v2207, 1.442695
  %v2215 = vpow.pop %v2214
  %v2216 = vrot.slane %v2209, 4
  %v2217 = vadd.f32 %v2209, %v2216
  %v2218 = vrot.slane %v2217, 2
  %v2219 = vadd.f32 %v2217, %v2218
  %v2220 = vrot.slane %v2219, 1
  %v2221 = vadd.f32 %v2219, %v2220
  %v2222 = vrot.slane %v2211, 4
  %v2223 = vadd.f32 %v2211, %v2222
  %v2224 = vrot.slane %v2223, 2
  %v2225 = vadd.f32 %v2223, %v2224
  %v2226 = vrot.slane %v2225, 1
  %v2227 = vadd.f32 %v2225, %v2226
  %v2228 = vrot.slane %v2213, 4
  %v2229 = vadd.f32 %v2213, %v2228
  %v2230 = vrot.slane %v2229, 2
  %v2231 = vadd.f32 %v2229, %v2230
  %v2232 = vrot.slane %v2231, 1
  %v2233 = vadd.f32 %v2231, %v2232
  %v2234 = vrot.slane %v2215, 4
  %v2235 = vadd.f32 %v2215, %v2234
  %v2236 = vrot.slane %v2235, 2
  %v2237 = vadd.f32 %v2235, %v2236
  %v2238 = vrot.slane %v2237, 1
  %v2239 = vadd.f32 %v2237, %v2238
  %v2240 = vrcp.pop %v2221
  %v2241 = vrcp.pop %v2227
  %v2242 = vrcp.pop %v2233
  %v2243 = vrcp.pop %v2239
  %v2244 = vmul.f32 %v2209, %v2240
  %v2245 = vmul.f32 %v2211, %v2241
  %v2246 = vmul.f32 %v2213, %v2242
  %v2247 = vmul.f32 %v2215, %v2243
  %2248 = vrot.lane.b32.xlu0 %v2244, 1
  %v2249 = vpop.permute.xlu0 %2248
  %2250 = vrot.lane.b32.xlu0 %v2245, 1
  %v2251 = vpop.permute.xlu0 %2250
  %2252 = vrot.lane.b32.xlu0 %v2246, 1
  %v2253 = vpop.permute.xlu0 %2252
  %2254 = vrot.lane.b32.xlu0 %v2247, 1
  %v2255 = vpop.permute.xlu0 %2254
  %v2256 = vsel %vm1114, %v2253, %v2255
  %v2257 = vsel %vm1114, %v2251, %v2253
  %v2258 = vsel %vm1114, %v2249, %v2251
  %v2259 = vsel %vm1114, %v2255, %v2249
  %2260 = vrot.lane.b32.xlu0 %v2244, 127
  %v2261 = vpop.permute.xlu0 %2260
  %2262 = vrot.lane.b32.xlu0 %v2245, 127
  %v2263 = vpop.permute.xlu0 %2262
  %2264 = vrot.lane.b32.xlu0 %v2246, 127
  %v2265 = vpop.permute.xlu0 %2264
  %2266 = vrot.lane.b32.xlu0 %v2247, 127
  %v2267 = vpop.permute.xlu0 %2266
  %v2268 = vsel %vm1127, %v2265, %v2267
  %v2269 = vsel %vm1127, %v2263, %v2265
  %v2270 = vsel %vm1127, %v2261, %v2263
  %v2271 = vsel %vm1127, %v2267, %v2261
  %2272 = vrot.lane.b32.xlu0 %v2244, 16
  %v2273 = vpop.permute.xlu0 %2272
  %2274 = vrot.lane.b32.xlu0 %v2245, 16
  %v2275 = vpop.permute.xlu0 %2274
  %2276 = vrot.lane.b32.xlu0 %v2246, 16
  %v2277 = vpop.permute.xlu0 %2276
  %2278 = vrot.lane.b32.xlu0 %v2247, 16
  %v2279 = vpop.permute.xlu0 %2278
  %v2280 = vsel %vm1140, %v2277, %v2279
  %v2281 = vsel %vm1140, %v2275, %v2277
  %v2282 = vsel %vm1140, %v2273, %v2275
  %v2283 = vsel %vm1140, %v2279, %v2273
  %2284 = vrot.lane.b32.xlu0 %v2244, 112
  %v2285 = vpop.permute.xlu0 %2284
  %2286 = vrot.lane.b32.xlu0 %v2245, 112
  %v2287 = vpop.permute.xlu0 %2286
  %2288 = vrot.lane.b32.xlu0 %v2246, 112
  %v2289 = vpop.permute.xlu0 %2288
  %2290 = vrot.lane.b32.xlu0 %v2247, 112
  %v2291 = vpop.permute.xlu0 %2290
  %v2292 = vsel %vm1153, %v2289, %v2291
  %v2293 = vsel %vm1153, %v2287, %v2289
  %v2294 = vsel %vm1153, %v2285, %v2287
  %v2295 = vsel %vm1153, %v2291, %v2285
  %v2296 = vmul.f32 %v1078, %v2259
  %v2297 = vmul.f32 %v1079, %v2258
  %v2298 = vmul.f32 %v1080, %v2257
  %v2299 = vmul.f32 %v1081, %v2256
  %v2300 = vmul.f32 %v1086, %v2270
  %v2301 = vmul.f32 %v1087, %v2269
  %v2302 = vmul.f32 %v1088, %v2268
  %v2303 = vmul.f32 %v1089, %v2271
  %v2304 = vadd.f32 %v2296, %v2300
  %v2305 = vadd.f32 %v2297, %v2301
  %v2306 = vadd.f32 %v2298, %v2302
  %v2307 = vadd.f32 %v2299, %v2303
  %v2308 = vmul.f32 %v1094, %v2283
  %v2309 = vmul.f32 %v1095, %v2282
  %v2310 = vmul.f32 %v1096, %v2281
  %v2311 = vmul.f32 %v1097, %v2280
  %v2312 = vadd.f32 %v2304, %v2308
  %v2313 = vadd.f32 %v2305, %v2309
  %v2314 = vadd.f32 %v2306, %v2310
  %v2315 = vadd.f32 %v2307, %v2311
  %v2316 = vmul.f32 %v1102, %v2294
  %v2317 = vmul.f32 %v1103, %v2293
  %v2318 = vmul.f32 %v1104, %v2292
  %v2319 = vmul.f32 %v1105, %v2295
  %v2320 = vadd.f32 %v2312, %v2316
  %v2321 = vadd.f32 %v2313, %v2317
  %v2322 = vadd.f32 %v2314, %v2318
  %v2323 = vadd.f32 %v2315, %v2319
  %v2324 = vmul.f32 %v1070, %v2244
  %v2325 = vmul.f32 %v1071, %v2245
  %v2326 = vmul.f32 %v1072, %v2246
  %v2327 = vmul.f32 %v1073, %v2247
  %v2328 = vadd.f32 %v2320, %v2324
  %v2329 = vadd.f32 %v2321, %v2325
  %v2330 = vadd.f32 %v2322, %v2326
  %v2331 = vadd.f32 %v2323, %v2327
  %v2332 = vadd.f32 %v2328, %v788
  %v2333 = vadd.f32 %v2329, %v790
  %v2334 = vadd.f32 %v2330, %v889
  %v2335 = vadd.f32 %v2331, %v891
  %2336 = vmatprep.subr.mxu0 0.0
  %2337 = vmatpush1.msra.mxu0 1.0
  %2338 = vmatprep.subr.mxu0 0.0
  %2339 = vmatpush1.msra.mxu0 1.0
  %2340 = vmatprep.subr.mxu0 0.0
  %2341 = vmatpush1.msra.mxu0 1.0
  %2342 = vmatprep.subr.mxu0 0.0
  %2343 = vmatpush1.msra.mxu0 1.0
  %2344 = vmatprep.subr.mxu0 0.0
  %2345 = vmatpush1.msra.mxu0 1.0
  %2346 = vmatprep.subr.mxu0 0.0
  %2347 = vmatpush1.msra.mxu0 1.0
  %2348 = vmatprep.subr.mxu0 0.0
  %2349 = vmatpush1.msra.mxu0 1.0
  %2350 = vmatprep.subr.mxu0 0.0
  %2351 = vmatpush1.msra.mxu0 1.0
  %2352 = vmatprep.subr.mxu0 0.0
  %2353 = vmatpush1.msra.mxu0 1.0
  %2354 = vmatprep.subr.mxu0 0.0
  %2355 = vmatpush1.msra.mxu0 1.0
  %2356 = vmatprep.subr.mxu0 0.0
  %2357 = vmatpush1.msra.mxu0 1.0
  %2358 = vmatprep.subr.mxu0 0.0
  %2359 = vmatpush1.msra.mxu0 1.0
  %2360 = vmatprep.subr.mxu0 0.0
  %2361 = vmatpush1.msra.mxu0 1.0
  %2362 = vmatprep.subr.mxu0 0.0
  %2363 = vmatpush1.msra.mxu0 1.0
  %2364 = vmatprep.subr.mxu0 0.0
  %2365 = vmatpush1.msra.mxu0 1.0
  %2366 = vmatprep.subr.mxu0 0.0
  %2367 = vmatpush1.msra.mxu0 1.0
  %2368 = vmatprep.subr.mxu0 0.0
  %2369 = vmatpush2.msra.mxu0 1.0
  %2370 = vmatprep.subr.mxu0 0.0
  %2371 = vmatpush2.msra.mxu0 1.0
  %2372 = vmatprep.subr.mxu0 0.0
  %2373 = vmatpush2.msra.mxu0 1.0
  %2374 = vmatprep.subr.mxu0 0.0
  %2375 = vmatpush2.msra.mxu0 1.0
  %2376 = vmatprep.subr.mxu0 0.0
  %2377 = vmatpush2.msra.mxu0 1.0
  %2378 = vmatprep.subr.mxu0 0.0
  %2379 = vmatpush2.msra.mxu0 1.0
  %2380 = vmatprep.subr.mxu0 0.0
  %2381 = vmatpush2.msra.mxu0 1.0
  %2382 = vmatprep.subr.mxu0 0.0
  %2383 = vmatpush2.msra.mxu0 1.0
  %2384 = vmatprep.subr.mxu0 0.0
  %2385 = vmatpush2.msra.mxu0 1.0
  %2386 = vmatprep.subr.mxu0 0.0
  %2387 = vmatpush2.msra.mxu0 1.0
  %2388 = vmatprep.subr.mxu0 0.0
  %2389 = vmatpush2.msra.mxu0 1.0
  %2390 = vmatprep.subr.mxu0 0.0
  %2391 = vmatpush2.msra.mxu0 1.0
  %2392 = vmatprep.subr.mxu0 0.0
  %2393 = vmatpush2.msra.mxu0 1.0
  %2394 = vmatprep.subr.mxu0 0.0
  %2395 = vmatpush2.msra.mxu0 1.0
  %2396 = vmatprep.subr.mxu0 0.0
  %2397 = vmatpush2.msra.mxu0 1.0
  %2398 = vmatprep.subr.mxu0 0.0
  %2399 = vmatpush2.msra.mxu0 1.0
  %2400 = vmatprep.mubr.f32.mxu0 %v2333
  %2401 = vmatmul.mubr.f32.gmra.mxu0 %v2332
  %v2402 = vpop.f32.mrf.mxu0
  %v2403 = vadd.f32 0.0, %v2402
  %v2404 = vpop.f32.mrf.mxu0
  %2405 = vdwg.mxu0
  %2406 = vmatprep.subr.mxu0 0.0
  %2407 = vmatpush1.msra.mxu0 1.0
  %2408 = vmatprep.subr.mxu0 0.0
  %2409 = vmatpush1.msra.mxu0 1.0
  %2410 = vmatprep.subr.mxu0 0.0
  %2411 = vmatpush1.msra.mxu0 1.0
  %2412 = vmatprep.subr.mxu0 0.0
  %2413 = vmatpush1.msra.mxu0 1.0
  %2414 = vmatprep.subr.mxu0 0.0
  %2415 = vmatpush1.msra.mxu0 1.0
  %2416 = vmatprep.subr.mxu0 0.0
  %2417 = vmatpush1.msra.mxu0 1.0
  %2418 = vmatprep.subr.mxu0 0.0
  %2419 = vmatpush1.msra.mxu0 1.0
  %2420 = vmatprep.subr.mxu0 0.0
  %2421 = vmatpush1.msra.mxu0 1.0
  %2422 = vmatprep.subr.mxu0 0.0
  %2423 = vmatpush1.msra.mxu0 1.0
  %2424 = vmatprep.subr.mxu0 0.0
  %2425 = vmatpush1.msra.mxu0 1.0
  %2426 = vmatprep.subr.mxu0 0.0
  %2427 = vmatpush1.msra.mxu0 1.0
  %2428 = vmatprep.subr.mxu0 0.0
  %2429 = vmatpush1.msra.mxu0 1.0
  %2430 = vmatprep.subr.mxu0 0.0
  %2431 = vmatpush1.msra.mxu0 1.0
  %2432 = vmatprep.subr.mxu0 0.0
  %2433 = vmatpush1.msra.mxu0 1.0
  %2434 = vmatprep.subr.mxu0 0.0
  %2435 = vmatpush1.msra.mxu0 1.0
  %2436 = vmatprep.subr.mxu0 0.0
  %2437 = vmatpush1.msra.mxu0 1.0
  %2438 = vmatprep.subr.mxu0 0.0
  %2439 = vmatpush2.msra.mxu0 1.0
  %2440 = vmatprep.subr.mxu0 0.0
  %2441 = vmatpush2.msra.mxu0 1.0
  %2442 = vmatprep.subr.mxu0 0.0
  %2443 = vmatpush2.msra.mxu0 1.0
  %2444 = vmatprep.subr.mxu0 0.0
  %2445 = vmatpush2.msra.mxu0 1.0
  %2446 = vmatprep.subr.mxu0 0.0
  %2447 = vmatpush2.msra.mxu0 1.0
  %2448 = vmatprep.subr.mxu0 0.0
  %2449 = vmatpush2.msra.mxu0 1.0
  %2450 = vmatprep.subr.mxu0 0.0
  %2451 = vmatpush2.msra.mxu0 1.0
  %2452 = vmatprep.subr.mxu0 0.0
  %2453 = vmatpush2.msra.mxu0 1.0
  %2454 = vmatprep.subr.mxu0 0.0
  %2455 = vmatpush2.msra.mxu0 1.0
  %2456 = vmatprep.subr.mxu0 0.0
  %2457 = vmatpush2.msra.mxu0 1.0
  %2458 = vmatprep.subr.mxu0 0.0
  %2459 = vmatpush2.msra.mxu0 1.0
  %2460 = vmatprep.subr.mxu0 0.0
  %2461 = vmatpush2.msra.mxu0 1.0
  %2462 = vmatprep.subr.mxu0 0.0
  %2463 = vmatpush2.msra.mxu0 1.0
  %2464 = vmatprep.subr.mxu0 0.0
  %2465 = vmatpush2.msra.mxu0 1.0
  %2466 = vmatprep.subr.mxu0 0.0
  %2467 = vmatpush2.msra.mxu0 1.0
  %2468 = vmatprep.subr.mxu0 0.0
  %2469 = vmatpush2.msra.mxu0 1.0
  %2470 = vmatprep.mubr.f32.mxu0 %v2335
  %2471 = vmatmul.mubr.f32.gmra.mxu0 %v2334
  %v2472 = vpop.f32.mrf.mxu0
  %v2473 = vadd.f32 %v2403, %v2472
  %v2474 = vpop.f32.mrf.mxu0
  %2475 = vdwg.mxu0
  %v2476 = vmul.f32 %v2332, %v2332
  %v2477 = vmul.f32 %v2333, %v2333
  %v2478 = vmul.f32 %v2334, %v2334
  %v2479 = vmul.f32 %v2335, %v2335
  %2480 = vmatprep.subr.mxu0 0.0
  %2481 = vmatpush1.msra.mxu0 1.0
  %2482 = vmatprep.subr.mxu0 0.0
  %2483 = vmatpush1.msra.mxu0 1.0
  %2484 = vmatprep.subr.mxu0 0.0
  %2485 = vmatpush1.msra.mxu0 1.0
  %2486 = vmatprep.subr.mxu0 0.0
  %2487 = vmatpush1.msra.mxu0 1.0
  %2488 = vmatprep.subr.mxu0 0.0
  %2489 = vmatpush1.msra.mxu0 1.0
  %2490 = vmatprep.subr.mxu0 0.0
  %2491 = vmatpush1.msra.mxu0 1.0
  %2492 = vmatprep.subr.mxu0 0.0
  %2493 = vmatpush1.msra.mxu0 1.0
  %2494 = vmatprep.subr.mxu0 0.0
  %2495 = vmatpush1.msra.mxu0 1.0
  %2496 = vmatprep.subr.mxu0 0.0
  %2497 = vmatpush1.msra.mxu0 1.0
  %2498 = vmatprep.subr.mxu0 0.0
  %2499 = vmatpush1.msra.mxu0 1.0
  %2500 = vmatprep.subr.mxu0 0.0
  %2501 = vmatpush1.msra.mxu0 1.0
  %2502 = vmatprep.subr.mxu0 0.0
  %2503 = vmatpush1.msra.mxu0 1.0
  %2504 = vmatprep.subr.mxu0 0.0
  %2505 = vmatpush1.msra.mxu0 1.0
  %2506 = vmatprep.subr.mxu0 0.0
  %2507 = vmatpush1.msra.mxu0 1.0
  %2508 = vmatprep.subr.mxu0 0.0
  %2509 = vmatpush1.msra.mxu0 1.0
  %2510 = vmatprep.subr.mxu0 0.0
  %2511 = vmatpush1.msra.mxu0 1.0
  %2512 = vmatprep.subr.mxu0 0.0
  %2513 = vmatpush2.msra.mxu0 1.0
  %2514 = vmatprep.subr.mxu0 0.0
  %2515 = vmatpush2.msra.mxu0 1.0
  %2516 = vmatprep.subr.mxu0 0.0
  %2517 = vmatpush2.msra.mxu0 1.0
  %2518 = vmatprep.subr.mxu0 0.0
  %2519 = vmatpush2.msra.mxu0 1.0
  %2520 = vmatprep.subr.mxu0 0.0
  %2521 = vmatpush2.msra.mxu0 1.0
  %2522 = vmatprep.subr.mxu0 0.0
  %2523 = vmatpush2.msra.mxu0 1.0
  %2524 = vmatprep.subr.mxu0 0.0
  %2525 = vmatpush2.msra.mxu0 1.0
  %2526 = vmatprep.subr.mxu0 0.0
  %2527 = vmatpush2.msra.mxu0 1.0
  %2528 = vmatprep.subr.mxu0 0.0
  %2529 = vmatpush2.msra.mxu0 1.0
  %2530 = vmatprep.subr.mxu0 0.0
  %2531 = vmatpush2.msra.mxu0 1.0
  %2532 = vmatprep.subr.mxu0 0.0
  %2533 = vmatpush2.msra.mxu0 1.0
  %2534 = vmatprep.subr.mxu0 0.0
  %2535 = vmatpush2.msra.mxu0 1.0
  %2536 = vmatprep.subr.mxu0 0.0
  %2537 = vmatpush2.msra.mxu0 1.0
  %2538 = vmatprep.subr.mxu0 0.0
  %2539 = vmatpush2.msra.mxu0 1.0
  %2540 = vmatprep.subr.mxu0 0.0
  %2541 = vmatpush2.msra.mxu0 1.0
  %2542 = vmatprep.subr.mxu0 0.0
  %2543 = vmatpush2.msra.mxu0 1.0
  %2544 = vmatprep.mubr.f32.mxu0 %v2477
  %2545 = vmatmul.mubr.f32.gmra.mxu0 %v2476
  %v2546 = vpop.f32.mrf.mxu0
  %v2547 = vadd.f32 0.0, %v2546
  %v2548 = vpop.f32.mrf.mxu0
  %2549 = vdwg.mxu0
  %2550 = vmatprep.subr.mxu0 0.0
  %2551 = vmatpush1.msra.mxu0 1.0
  %2552 = vmatprep.subr.mxu0 0.0
  %2553 = vmatpush1.msra.mxu0 1.0
  %2554 = vmatprep.subr.mxu0 0.0
  %2555 = vmatpush1.msra.mxu0 1.0
  %2556 = vmatprep.subr.mxu0 0.0
  %2557 = vmatpush1.msra.mxu0 1.0
  %2558 = vmatprep.subr.mxu0 0.0
  %2559 = vmatpush1.msra.mxu0 1.0
  %2560 = vmatprep.subr.mxu0 0.0
  %2561 = vmatpush1.msra.mxu0 1.0
  %2562 = vmatprep.subr.mxu0 0.0
  %2563 = vmatpush1.msra.mxu0 1.0
  %2564 = vmatprep.subr.mxu0 0.0
  %2565 = vmatpush1.msra.mxu0 1.0
  %2566 = vmatprep.subr.mxu0 0.0
  %2567 = vmatpush1.msra.mxu0 1.0
  %2568 = vmatprep.subr.mxu0 0.0
  %2569 = vmatpush1.msra.mxu0 1.0
  %2570 = vmatprep.subr.mxu0 0.0
  %2571 = vmatpush1.msra.mxu0 1.0
  %2572 = vmatprep.subr.mxu0 0.0
  %2573 = vmatpush1.msra.mxu0 1.0
  %2574 = vmatprep.subr.mxu0 0.0
  %2575 = vmatpush1.msra.mxu0 1.0
  %2576 = vmatprep.subr.mxu0 0.0
  %2577 = vmatpush1.msra.mxu0 1.0
  %2578 = vmatprep.subr.mxu0 0.0
  %2579 = vmatpush1.msra.mxu0 1.0
  %2580 = vmatprep.subr.mxu0 0.0
  %2581 = vmatpush1.msra.mxu0 1.0
  %2582 = vmatprep.subr.mxu0 0.0
  %2583 = vmatpush2.msra.mxu0 1.0
  %2584 = vmatprep.subr.mxu0 0.0
  %2585 = vmatpush2.msra.mxu0 1.0
  %2586 = vmatprep.subr.mxu0 0.0
  %2587 = vmatpush2.msra.mxu0 1.0
  %2588 = vmatprep.subr.mxu0 0.0
  %2589 = vmatpush2.msra.mxu0 1.0
  %2590 = vmatprep.subr.mxu0 0.0
  %2591 = vmatpush2.msra.mxu0 1.0
  %2592 = vmatprep.subr.mxu0 0.0
  %2593 = vmatpush2.msra.mxu0 1.0
  %2594 = vmatprep.subr.mxu0 0.0
  %2595 = vmatpush2.msra.mxu0 1.0
  %2596 = vmatprep.subr.mxu0 0.0
  %2597 = vmatpush2.msra.mxu0 1.0
  %2598 = vmatprep.subr.mxu0 0.0
  %2599 = vmatpush2.msra.mxu0 1.0
  %2600 = vmatprep.subr.mxu0 0.0
  %2601 = vmatpush2.msra.mxu0 1.0
  %2602 = vmatprep.subr.mxu0 0.0
  %2603 = vmatpush2.msra.mxu0 1.0
  %2604 = vmatprep.subr.mxu0 0.0
  %2605 = vmatpush2.msra.mxu0 1.0
  %2606 = vmatprep.subr.mxu0 0.0
  %2607 = vmatpush2.msra.mxu0 1.0
  %2608 = vmatprep.subr.mxu0 0.0
  %2609 = vmatpush2.msra.mxu0 1.0
  %2610 = vmatprep.subr.mxu0 0.0
  %2611 = vmatpush2.msra.mxu0 1.0
  %2612 = vmatprep.subr.mxu0 0.0
  %2613 = vmatpush2.msra.mxu0 1.0
  %2614 = vmatprep.mubr.f32.mxu0 %v2479
  %2615 = vmatmul.mubr.f32.gmra.mxu0 %v2478
  %v2616 = vpop.f32.mrf.mxu0
  %v2617 = vadd.f32 %v2547, %v2616
  %v2618 = vpop.f32.mrf.mxu0
  %2619 = vdwg.mxu0
  %v2620 = vmul.f32 %v2473, 0.001953125
  %v2621 = vmul.f32 %v2617, 0.001953125
  %v2622 = vmul.f32 %v2620, %v2620
  %v2623 = vsub.f32 %v2621, %v2622
  %v2624 = vmax.f32 %v2623, 0.0
  %2626 = vset.pattern.permute.xlu0 0
  %2627 = vperm.xlu0 %2626, %v2620
  %v2628 = vpop.permute.xlu0 %2627
  %v2630 = vsub.f32 %v2332, %v2628
  %v2631 = vsub.f32 %v2333, %v2628
  %v2632 = vsub.f32 %v2334, %v2628
  %v2633 = vsub.f32 %v2335, %v2628
  %v2634 = vadd.f32 %v2624, 1e-05
  %v2635 = vrsqrt.pop %v2634
  %2637 = vset.pattern.permute.xlu0 0
  %2638 = vperm.xlu0 %2637, %v2635
  %v2639 = vpop.permute.xlu0 %2638
  %v2641 = vmul.f32 %v2630, %v2639
  %v2642 = vmul.f32 %v2631, %v2639
  %v2643 = vmul.f32 %v2632, %v2639
  %v2644 = vmul.f32 %v2633, %v2639
  %v2645 = vmul.f32 %v2641, %v1510
  %v2646 = vmul.f32 %v2642, %v1510
  %v2647 = vmul.f32 %v2643, %v1510
  %v2648 = vmul.f32 %v2644, %v1510
  %v2649 = vadd.f32 %v2645, %v1519
  %v2650 = vadd.f32 %v2646, %v1519
  %v2651 = vadd.f32 %v2647, %v1519
  %v2652 = vadd.f32 %v2648, %v1519
  %2653 = vmatprep.subr.mxu0 0.0
  %2654 = vmatpush1.msra.mxu0 0.0
  %2655 = vmatprep.subr.mxu0 0.0
  %2656 = vmatpush1.msra.mxu0 0.0
  %2657 = vmatprep.subr.mxu0 0.0
  %2658 = vmatpush1.msra.mxu0 0.0
  %2659 = vmatprep.subr.mxu0 0.0
  %2660 = vmatpush1.msra.mxu0 0.0
  %2661 = vmatprep.subr.mxu0 0.0
  %2662 = vmatpush1.msra.mxu0 0.0
  %2663 = vmatprep.subr.mxu0 0.0
  %2664 = vmatpush1.msra.mxu0 0.0
  %2665 = vmatprep.subr.mxu0 0.0
  %2666 = vmatpush1.msra.mxu0 0.0
  %2667 = vmatprep.subr.mxu0 0.0
  %2668 = vmatpush1.msra.mxu0 0.0
  %2669 = vmatprep.subr.mxu0 0.0
  %2670 = vmatpush1.msra.mxu0 0.0
  %2671 = vmatprep.subr.mxu0 0.0
  %2672 = vmatpush1.msra.mxu0 0.0
  %2673 = vmatprep.subr.mxu0 0.0
  %2674 = vmatpush1.msra.mxu0 0.0
  %2675 = vmatprep.subr.mxu0 0.0
  %2676 = vmatpush1.msra.mxu0 0.0
  %2677 = vmatprep.subr.mxu0 0.0
  %2678 = vmatpush1.msra.mxu0 0.0
  %2679 = vmatprep.subr.mxu0 0.0
  %2680 = vmatpush1.msra.mxu0 0.0
  %2681 = vmatprep.subr.mxu0 0.0
  %2682 = vmatpush1.msra.mxu0 0.0
  %2683 = vmatprep.subr.mxu0 %v2650
  %2684 = vmatpush1.msra.mxu0 %v2649
  %2685 = vmatprep.subr.mxu0 0.0
  %2686 = vmatpush2.msra.mxu0 0.0
  %2687 = vmatprep.subr.mxu0 0.0
  %2688 = vmatpush2.msra.mxu0 0.0
  %2689 = vmatprep.subr.mxu0 0.0
  %2690 = vmatpush2.msra.mxu0 0.0
  %2691 = vmatprep.subr.mxu0 0.0
  %2692 = vmatpush2.msra.mxu0 0.0
  %2693 = vmatprep.subr.mxu0 0.0
  %2694 = vmatpush2.msra.mxu0 0.0
  %2695 = vmatprep.subr.mxu0 0.0
  %2696 = vmatpush2.msra.mxu0 0.0
  %2697 = vmatprep.subr.mxu0 0.0
  %2698 = vmatpush2.msra.mxu0 0.0
  %2699 = vmatprep.subr.mxu0 0.0
  %2700 = vmatpush2.msra.mxu0 0.0
  %2701 = vmatprep.subr.mxu0 0.0
  %2702 = vmatpush2.msra.mxu0 0.0
  %2703 = vmatprep.subr.mxu0 0.0
  %2704 = vmatpush2.msra.mxu0 0.0
  %2705 = vmatprep.subr.mxu0 0.0
  %2706 = vmatpush2.msra.mxu0 0.0
  %2707 = vmatprep.subr.mxu0 0.0
  %2708 = vmatpush2.msra.mxu0 0.0
  %2709 = vmatprep.subr.mxu0 0.0
  %2710 = vmatpush2.msra.mxu0 0.0
  %2711 = vmatprep.subr.mxu0 0.0
  %2712 = vmatpush2.msra.mxu0 0.0
  %2713 = vmatprep.subr.mxu0 0.0
  %2714 = vmatpush2.msra.mxu0 0.0
  %2715 = vmatprep.subr.mxu0 0.0
  %2716 = vmatpush2.msra.mxu0 0.0
  %2717 = vmatprep.mubr.f32.mxu0 0.0
  %2718 = vmatmul.mubr.f32.gmra.mxu0 %v1531
  %v2719 = vpop.f32.mrf.mxu0
  %v2720 = vadd.f32 %v1528, %v2719
  %v2721 = vpop.f32.mrf.mxu0
  %v2722 = vadd.f32 %v1528, %v2721
  %2723 = vdwg.mxu0
  %2724 = vmatprep.subr.mxu0 0.0
  %2725 = vmatpush1.msra.mxu0 0.0
  %2726 = vmatprep.subr.mxu0 0.0
  %2727 = vmatpush1.msra.mxu0 0.0
  %2728 = vmatprep.subr.mxu0 0.0
  %2729 = vmatpush1.msra.mxu0 0.0
  %2730 = vmatprep.subr.mxu0 0.0
  %2731 = vmatpush1.msra.mxu0 0.0
  %2732 = vmatprep.subr.mxu0 0.0
  %2733 = vmatpush1.msra.mxu0 0.0
  %2734 = vmatprep.subr.mxu0 0.0
  %2735 = vmatpush1.msra.mxu0 0.0
  %2736 = vmatprep.subr.mxu0 0.0
  %2737 = vmatpush1.msra.mxu0 0.0
  %2738 = vmatprep.subr.mxu0 0.0
  %2739 = vmatpush1.msra.mxu0 0.0
  %2740 = vmatprep.subr.mxu0 0.0
  %2741 = vmatpush1.msra.mxu0 0.0
  %2742 = vmatprep.subr.mxu0 0.0
  %2743 = vmatpush1.msra.mxu0 0.0
  %2744 = vmatprep.subr.mxu0 0.0
  %2745 = vmatpush1.msra.mxu0 0.0
  %2746 = vmatprep.subr.mxu0 0.0
  %2747 = vmatpush1.msra.mxu0 0.0
  %2748 = vmatprep.subr.mxu0 0.0
  %2749 = vmatpush1.msra.mxu0 0.0
  %2750 = vmatprep.subr.mxu0 0.0
  %2751 = vmatpush1.msra.mxu0 0.0
  %2752 = vmatprep.subr.mxu0 0.0
  %2753 = vmatpush1.msra.mxu0 0.0
  %2754 = vmatprep.subr.mxu0 %v2652
  %2755 = vmatpush1.msra.mxu0 %v2651
  %2756 = vmatprep.subr.mxu0 0.0
  %2757 = vmatpush2.msra.mxu0 0.0
  %2758 = vmatprep.subr.mxu0 0.0
  %2759 = vmatpush2.msra.mxu0 0.0
  %2760 = vmatprep.subr.mxu0 0.0
  %2761 = vmatpush2.msra.mxu0 0.0
  %2762 = vmatprep.subr.mxu0 0.0
  %2763 = vmatpush2.msra.mxu0 0.0
  %2764 = vmatprep.subr.mxu0 0.0
  %2765 = vmatpush2.msra.mxu0 0.0
  %2766 = vmatprep.subr.mxu0 0.0
  %2767 = vmatpush2.msra.mxu0 0.0
  %2768 = vmatprep.subr.mxu0 0.0
  %2769 = vmatpush2.msra.mxu0 0.0
  %2770 = vmatprep.subr.mxu0 0.0
  %2771 = vmatpush2.msra.mxu0 0.0
  %2772 = vmatprep.subr.mxu0 0.0
  %2773 = vmatpush2.msra.mxu0 0.0
  %2774 = vmatprep.subr.mxu0 0.0
  %2775 = vmatpush2.msra.mxu0 0.0
  %2776 = vmatprep.subr.mxu0 0.0
  %2777 = vmatpush2.msra.mxu0 0.0
  %2778 = vmatprep.subr.mxu0 0.0
  %2779 = vmatpush2.msra.mxu0 0.0
  %2780 = vmatprep.subr.mxu0 0.0
  %2781 = vmatpush2.msra.mxu0 0.0
  %2782 = vmatprep.subr.mxu0 0.0
  %2783 = vmatpush2.msra.mxu0 0.0
  %2784 = vmatprep.subr.mxu0 0.0
  %2785 = vmatpush2.msra.mxu0 0.0
  %2786 = vmatprep.subr.mxu0 0.0
  %2787 = vmatpush2.msra.mxu0 0.0
  %2788 = vmatprep.mubr.f32.mxu0 0.0
  %2789 = vmatmul.mubr.f32.gmra.mxu0 %v1531
  %v2790 = vpop.f32.mrf.mxu0
  %v2791 = vadd.f32 %v1528, %v2790
  %v2792 = vpop.f32.mrf.mxu0
  %v2793 = vadd.f32 %v1528, %v2792
  %2794 = vdwg.mxu0
  %vm2795 = vcmp.ge.f32.partialorder %v2720, 0.0
  %vm2796 = vcmp.ge.f32.partialorder %v2722, 0.0
  %vm2797 = vcmp.ge.f32.partialorder %v2791, 0.0
  %vm2798 = vcmp.ge.f32.partialorder %v2793, 0.0
  %v2799 = vmul.f32 %v2720, 0.01
  %v2800 = vmul.f32 %v2722, 0.01
  %v2801 = vmul.f32 %v2791, 0.01
  %v2802 = vmul.f32 %v2793, 0.01
  %v2803 = vsel %vm2795, %v2720, %v2799
  %v2804 = vsel %vm2796, %v2722, %v2800
  %v2805 = vsel %vm2797, %v2791, %v2801
  %v2806 = vsel %vm2798, %v2793, %v2802
  %2807 = vmatprep.subr.mxu0 0.0
  %2808 = vmatpush1.msra.mxu0 0.0
  %2809 = vmatprep.subr.mxu0 0.0
  %2810 = vmatpush1.msra.mxu0 0.0
  %2811 = vmatprep.subr.mxu0 0.0
  %2812 = vmatpush1.msra.mxu0 0.0
  %2813 = vmatprep.subr.mxu0 0.0
  %2814 = vmatpush1.msra.mxu0 0.0
  %2815 = vmatprep.subr.mxu0 0.0
  %2816 = vmatpush1.msra.mxu0 0.0
  %2817 = vmatprep.subr.mxu0 0.0
  %2818 = vmatpush1.msra.mxu0 0.0
  %2819 = vmatprep.subr.mxu0 0.0
  %2820 = vmatpush1.msra.mxu0 0.0
  %2821 = vmatprep.subr.mxu0 0.0
  %2822 = vmatpush1.msra.mxu0 0.0
  %2823 = vmatprep.subr.mxu0 0.0
  %2824 = vmatpush1.msra.mxu0 0.0
  %2825 = vmatprep.subr.mxu0 0.0
  %2826 = vmatpush1.msra.mxu0 0.0
  %2827 = vmatprep.subr.mxu0 0.0
  %2828 = vmatpush1.msra.mxu0 0.0
  %2829 = vmatprep.subr.mxu0 0.0
  %2830 = vmatpush1.msra.mxu0 0.0
  %2831 = vmatprep.subr.mxu0 0.0
  %2832 = vmatpush1.msra.mxu0 0.0
  %2833 = vmatprep.subr.mxu0 0.0
  %2834 = vmatpush1.msra.mxu0 0.0
  %2835 = vmatprep.subr.mxu0 0.0
  %2836 = vmatpush1.msra.mxu0 0.0
  %2837 = vmatprep.subr.mxu0 %v2804
  %2838 = vmatpush1.msra.mxu0 %v2803
  %2839 = vmatprep.subr.mxu0 0.0
  %2840 = vmatpush2.msra.mxu0 0.0
  %2841 = vmatprep.subr.mxu0 0.0
  %2842 = vmatpush2.msra.mxu0 0.0
  %2843 = vmatprep.subr.mxu0 0.0
  %2844 = vmatpush2.msra.mxu0 0.0
  %2845 = vmatprep.subr.mxu0 0.0
  %2846 = vmatpush2.msra.mxu0 0.0
  %2847 = vmatprep.subr.mxu0 0.0
  %2848 = vmatpush2.msra.mxu0 0.0
  %2849 = vmatprep.subr.mxu0 0.0
  %2850 = vmatpush2.msra.mxu0 0.0
  %2851 = vmatprep.subr.mxu0 0.0
  %2852 = vmatpush2.msra.mxu0 0.0
  %2853 = vmatprep.subr.mxu0 0.0
  %2854 = vmatpush2.msra.mxu0 0.0
  %2855 = vmatprep.subr.mxu0 0.0
  %2856 = vmatpush2.msra.mxu0 0.0
  %2857 = vmatprep.subr.mxu0 0.0
  %2858 = vmatpush2.msra.mxu0 0.0
  %2859 = vmatprep.subr.mxu0 0.0
  %2860 = vmatpush2.msra.mxu0 0.0
  %2861 = vmatprep.subr.mxu0 0.0
  %2862 = vmatpush2.msra.mxu0 0.0
  %2863 = vmatprep.subr.mxu0 0.0
  %2864 = vmatpush2.msra.mxu0 0.0
  %2865 = vmatprep.subr.mxu0 0.0
  %2866 = vmatpush2.msra.mxu0 0.0
  %2867 = vmatprep.subr.mxu0 0.0
  %2868 = vmatpush2.msra.mxu0 0.0
  %2869 = vmatprep.subr.mxu0 0.0
  %2870 = vmatpush2.msra.mxu0 0.0
  %2871 = vmatprep.mubr.f32.mxu0 0.0
  %2872 = vmatmul.mubr.f32.gmra.mxu0 %v1693
  %v2873 = vpop.f32.mrf.mxu0
  %v2874 = vadd.f32 %v1690, %v2873
  %v2875 = vpop.f32.mrf.mxu0
  %v2876 = vadd.f32 %v1690, %v2875
  %2877 = vdwg.mxu0
  %2878 = vmatprep.subr.mxu0 0.0
  %2879 = vmatpush1.msra.mxu0 0.0
  %2880 = vmatprep.subr.mxu0 0.0
  %2881 = vmatpush1.msra.mxu0 0.0
  %2882 = vmatprep.subr.mxu0 0.0
  %2883 = vmatpush1.msra.mxu0 0.0
  %2884 = vmatprep.subr.mxu0 0.0
  %2885 = vmatpush1.msra.mxu0 0.0
  %2886 = vmatprep.subr.mxu0 0.0
  %2887 = vmatpush1.msra.mxu0 0.0
  %2888 = vmatprep.subr.mxu0 0.0
  %2889 = vmatpush1.msra.mxu0 0.0
  %2890 = vmatprep.subr.mxu0 0.0
  %2891 = vmatpush1.msra.mxu0 0.0
  %2892 = vmatprep.subr.mxu0 0.0
  %2893 = vmatpush1.msra.mxu0 0.0
  %2894 = vmatprep.subr.mxu0 0.0
  %2895 = vmatpush1.msra.mxu0 0.0
  %2896 = vmatprep.subr.mxu0 0.0
  %2897 = vmatpush1.msra.mxu0 0.0
  %2898 = vmatprep.subr.mxu0 0.0
  %2899 = vmatpush1.msra.mxu0 0.0
  %2900 = vmatprep.subr.mxu0 0.0
  %2901 = vmatpush1.msra.mxu0 0.0
  %2902 = vmatprep.subr.mxu0 0.0
  %2903 = vmatpush1.msra.mxu0 0.0
  %2904 = vmatprep.subr.mxu0 0.0
  %2905 = vmatpush1.msra.mxu0 0.0
  %2906 = vmatprep.subr.mxu0 0.0
  %2907 = vmatpush1.msra.mxu0 0.0
  %2908 = vmatprep.subr.mxu0 %v2806
  %2909 = vmatpush1.msra.mxu0 %v2805
  %2910 = vmatprep.subr.mxu0 0.0
  %2911 = vmatpush2.msra.mxu0 0.0
  %2912 = vmatprep.subr.mxu0 0.0
  %2913 = vmatpush2.msra.mxu0 0.0
  %2914 = vmatprep.subr.mxu0 0.0
  %2915 = vmatpush2.msra.mxu0 0.0
  %2916 = vmatprep.subr.mxu0 0.0
  %2917 = vmatpush2.msra.mxu0 0.0
  %2918 = vmatprep.subr.mxu0 0.0
  %2919 = vmatpush2.msra.mxu0 0.0
  %2920 = vmatprep.subr.mxu0 0.0
  %2921 = vmatpush2.msra.mxu0 0.0
  %2922 = vmatprep.subr.mxu0 0.0
  %2923 = vmatpush2.msra.mxu0 0.0
  %2924 = vmatprep.subr.mxu0 0.0
  %2925 = vmatpush2.msra.mxu0 0.0
  %2926 = vmatprep.subr.mxu0 0.0
  %2927 = vmatpush2.msra.mxu0 0.0
  %2928 = vmatprep.subr.mxu0 0.0
  %2929 = vmatpush2.msra.mxu0 0.0
  %2930 = vmatprep.subr.mxu0 0.0
  %2931 = vmatpush2.msra.mxu0 0.0
  %2932 = vmatprep.subr.mxu0 0.0
  %2933 = vmatpush2.msra.mxu0 0.0
  %2934 = vmatprep.subr.mxu0 0.0
  %2935 = vmatpush2.msra.mxu0 0.0
  %2936 = vmatprep.subr.mxu0 0.0
  %2937 = vmatpush2.msra.mxu0 0.0
  %2938 = vmatprep.subr.mxu0 0.0
  %2939 = vmatpush2.msra.mxu0 0.0
  %2940 = vmatprep.subr.mxu0 0.0
  %2941 = vmatpush2.msra.mxu0 0.0
  %2942 = vmatprep.mubr.f32.mxu0 0.0
  %2943 = vmatmul.mubr.f32.gmra.mxu0 %v1693
  %v2944 = vpop.f32.mrf.mxu0
  %v2945 = vadd.f32 %v1690, %v2944
  %v2946 = vpop.f32.mrf.mxu0
  %v2947 = vadd.f32 %v1690, %v2946
  %2948 = vdwg.mxu0
  %2949 = vmatprep.subr.mxu0 0.0
  %2950 = vmatpush1.msra.mxu0 1.0
  %2951 = vmatprep.subr.mxu0 0.0
  %2952 = vmatpush1.msra.mxu0 1.0
  %2953 = vmatprep.subr.mxu0 0.0
  %2954 = vmatpush1.msra.mxu0 1.0
  %2955 = vmatprep.subr.mxu0 0.0
  %2956 = vmatpush1.msra.mxu0 1.0
  %2957 = vmatprep.subr.mxu0 0.0
  %2958 = vmatpush1.msra.mxu0 1.0
  %2959 = vmatprep.subr.mxu0 0.0
  %2960 = vmatpush1.msra.mxu0 1.0
  %2961 = vmatprep.subr.mxu0 0.0
  %2962 = vmatpush1.msra.mxu0 1.0
  %2963 = vmatprep.subr.mxu0 0.0
  %2964 = vmatpush1.msra.mxu0 1.0
  %2965 = vmatprep.subr.mxu0 0.0
  %2966 = vmatpush1.msra.mxu0 1.0
  %2967 = vmatprep.subr.mxu0 0.0
  %2968 = vmatpush1.msra.mxu0 1.0
  %2969 = vmatprep.subr.mxu0 0.0
  %2970 = vmatpush1.msra.mxu0 1.0
  %2971 = vmatprep.subr.mxu0 0.0
  %2972 = vmatpush1.msra.mxu0 1.0
  %2973 = vmatprep.subr.mxu0 0.0
  %2974 = vmatpush1.msra.mxu0 1.0
  %2975 = vmatprep.subr.mxu0 0.0
  %2976 = vmatpush1.msra.mxu0 1.0
  %2977 = vmatprep.subr.mxu0 0.0
  %2978 = vmatpush1.msra.mxu0 1.0
  %2979 = vmatprep.subr.mxu0 0.0
  %2980 = vmatpush1.msra.mxu0 1.0
  %2981 = vmatprep.subr.mxu0 0.0
  %2982 = vmatpush2.msra.mxu0 1.0
  %2983 = vmatprep.subr.mxu0 0.0
  %2984 = vmatpush2.msra.mxu0 1.0
  %2985 = vmatprep.subr.mxu0 0.0
  %2986 = vmatpush2.msra.mxu0 1.0
  %2987 = vmatprep.subr.mxu0 0.0
  %2988 = vmatpush2.msra.mxu0 1.0
  %2989 = vmatprep.subr.mxu0 0.0
  %2990 = vmatpush2.msra.mxu0 1.0
  %2991 = vmatprep.subr.mxu0 0.0
  %2992 = vmatpush2.msra.mxu0 1.0
  %2993 = vmatprep.subr.mxu0 0.0
  %2994 = vmatpush2.msra.mxu0 1.0
  %2995 = vmatprep.subr.mxu0 0.0
  %2996 = vmatpush2.msra.mxu0 1.0
  %2997 = vmatprep.subr.mxu0 0.0
  %2998 = vmatpush2.msra.mxu0 1.0
  %2999 = vmatprep.subr.mxu0 0.0
  %3000 = vmatpush2.msra.mxu0 1.0
  %3001 = vmatprep.subr.mxu0 0.0
  %3002 = vmatpush2.msra.mxu0 1.0
  %3003 = vmatprep.subr.mxu0 0.0
  %3004 = vmatpush2.msra.mxu0 1.0
  %3005 = vmatprep.subr.mxu0 0.0
  %3006 = vmatpush2.msra.mxu0 1.0
  %3007 = vmatprep.subr.mxu0 0.0
  %3008 = vmatpush2.msra.mxu0 1.0
  %3009 = vmatprep.subr.mxu0 0.0
  %3010 = vmatpush2.msra.mxu0 1.0
  %3011 = vmatprep.subr.mxu0 0.0
  %3012 = vmatpush2.msra.mxu0 1.0
  %3013 = vmatprep.mubr.f32.mxu0 %v2876
  %3014 = vmatmul.mubr.f32.gmra.mxu0 %v2874
  %v3015 = vpop.f32.mrf.mxu0
  %v3016 = vadd.f32 0.0, %v3015
  %v3017 = vpop.f32.mrf.mxu0
  %3018 = vdwg.mxu0
  %3019 = vmatprep.subr.mxu0 0.0
  %3020 = vmatpush1.msra.mxu0 1.0
  %3021 = vmatprep.subr.mxu0 0.0
  %3022 = vmatpush1.msra.mxu0 1.0
  %3023 = vmatprep.subr.mxu0 0.0
  %3024 = vmatpush1.msra.mxu0 1.0
  %3025 = vmatprep.subr.mxu0 0.0
  %3026 = vmatpush1.msra.mxu0 1.0
  %3027 = vmatprep.subr.mxu0 0.0
  %3028 = vmatpush1.msra.mxu0 1.0
  %3029 = vmatprep.subr.mxu0 0.0
  %3030 = vmatpush1.msra.mxu0 1.0
  %3031 = vmatprep.subr.mxu0 0.0
  %3032 = vmatpush1.msra.mxu0 1.0
  %3033 = vmatprep.subr.mxu0 0.0
  %3034 = vmatpush1.msra.mxu0 1.0
  %3035 = vmatprep.subr.mxu0 0.0
  %3036 = vmatpush1.msra.mxu0 1.0
  %3037 = vmatprep.subr.mxu0 0.0
  %3038 = vmatpush1.msra.mxu0 1.0
  %3039 = vmatprep.subr.mxu0 0.0
  %3040 = vmatpush1.msra.mxu0 1.0
  %3041 = vmatprep.subr.mxu0 0.0
  %3042 = vmatpush1.msra.mxu0 1.0
  %3043 = vmatprep.subr.mxu0 0.0
  %3044 = vmatpush1.msra.mxu0 1.0
  %3045 = vmatprep.subr.mxu0 0.0
  %3046 = vmatpush1.msra.mxu0 1.0
  %3047 = vmatprep.subr.mxu0 0.0
  %3048 = vmatpush1.msra.mxu0 1.0
  %3049 = vmatprep.subr.mxu0 0.0
  %3050 = vmatpush1.msra.mxu0 1.0
  %3051 = vmatprep.subr.mxu0 0.0
  %3052 = vmatpush2.msra.mxu0 1.0
  %3053 = vmatprep.subr.mxu0 0.0
  %3054 = vmatpush2.msra.mxu0 1.0
  %3055 = vmatprep.subr.mxu0 0.0
  %3056 = vmatpush2.msra.mxu0 1.0
  %3057 = vmatprep.subr.mxu0 0.0
  %3058 = vmatpush2.msra.mxu0 1.0
  %3059 = vmatprep.subr.mxu0 0.0
  %3060 = vmatpush2.msra.mxu0 1.0
  %3061 = vmatprep.subr.mxu0 0.0
  %3062 = vmatpush2.msra.mxu0 1.0
  %3063 = vmatprep.subr.mxu0 0.0
  %3064 = vmatpush2.msra.mxu0 1.0
  %3065 = vmatprep.subr.mxu0 0.0
  %3066 = vmatpush2.msra.mxu0 1.0
  %3067 = vmatprep.subr.mxu0 0.0
  %3068 = vmatpush2.msra.mxu0 1.0
  %3069 = vmatprep.subr.mxu0 0.0
  %3070 = vmatpush2.msra.mxu0 1.0
  %3071 = vmatprep.subr.mxu0 0.0
  %3072 = vmatpush2.msra.mxu0 1.0
  %3073 = vmatprep.subr.mxu0 0.0
  %3074 = vmatpush2.msra.mxu0 1.0
  %3075 = vmatprep.subr.mxu0 0.0
  %3076 = vmatpush2.msra.mxu0 1.0
  %3077 = vmatprep.subr.mxu0 0.0
  %3078 = vmatpush2.msra.mxu0 1.0
  %3079 = vmatprep.subr.mxu0 0.0
  %3080 = vmatpush2.msra.mxu0 1.0
  %3081 = vmatprep.subr.mxu0 0.0
  %3082 = vmatpush2.msra.mxu0 1.0
  %3083 = vmatprep.mubr.f32.mxu0 %v2947
  %3084 = vmatmul.mubr.f32.gmra.mxu0 %v2945
  %v3085 = vpop.f32.mrf.mxu0
  %v3086 = vadd.f32 %v3016, %v3085
  %v3087 = vpop.f32.mrf.mxu0
  %3088 = vdwg.mxu0
  %v3089 = vmul.f32 %v2874, %v2874
  %v3090 = vmul.f32 %v2876, %v2876
  %v3091 = vmul.f32 %v2945, %v2945
  %v3092 = vmul.f32 %v2947, %v2947
  %3093 = vmatprep.subr.mxu0 0.0
  %3094 = vmatpush1.msra.mxu0 1.0
  %3095 = vmatprep.subr.mxu0 0.0
  %3096 = vmatpush1.msra.mxu0 1.0
  %3097 = vmatprep.subr.mxu0 0.0
  %3098 = vmatpush1.msra.mxu0 1.0
  %3099 = vmatprep.subr.mxu0 0.0
  %3100 = vmatpush1.msra.mxu0 1.0
  %3101 = vmatprep.subr.mxu0 0.0
  %3102 = vmatpush1.msra.mxu0 1.0
  %3103 = vmatprep.subr.mxu0 0.0
  %3104 = vmatpush1.msra.mxu0 1.0
  %3105 = vmatprep.subr.mxu0 0.0
  %3106 = vmatpush1.msra.mxu0 1.0
  %3107 = vmatprep.subr.mxu0 0.0
  %3108 = vmatpush1.msra.mxu0 1.0
  %3109 = vmatprep.subr.mxu0 0.0
  %3110 = vmatpush1.msra.mxu0 1.0
  %3111 = vmatprep.subr.mxu0 0.0
  %3112 = vmatpush1.msra.mxu0 1.0
  %3113 = vmatprep.subr.mxu0 0.0
  %3114 = vmatpush1.msra.mxu0 1.0
  %3115 = vmatprep.subr.mxu0 0.0
  %3116 = vmatpush1.msra.mxu0 1.0
  %3117 = vmatprep.subr.mxu0 0.0
  %3118 = vmatpush1.msra.mxu0 1.0
  %3119 = vmatprep.subr.mxu0 0.0
  %3120 = vmatpush1.msra.mxu0 1.0
  %3121 = vmatprep.subr.mxu0 0.0
  %3122 = vmatpush1.msra.mxu0 1.0
  %3123 = vmatprep.subr.mxu0 0.0
  %3124 = vmatpush1.msra.mxu0 1.0
  %3125 = vmatprep.subr.mxu0 0.0
  %3126 = vmatpush2.msra.mxu0 1.0
  %3127 = vmatprep.subr.mxu0 0.0
  %3128 = vmatpush2.msra.mxu0 1.0
  %3129 = vmatprep.subr.mxu0 0.0
  %3130 = vmatpush2.msra.mxu0 1.0
  %3131 = vmatprep.subr.mxu0 0.0
  %3132 = vmatpush2.msra.mxu0 1.0
  %3133 = vmatprep.subr.mxu0 0.0
  %3134 = vmatpush2.msra.mxu0 1.0
  %3135 = vmatprep.subr.mxu0 0.0
  %3136 = vmatpush2.msra.mxu0 1.0
  %3137 = vmatprep.subr.mxu0 0.0
  %3138 = vmatpush2.msra.mxu0 1.0
  %3139 = vmatprep.subr.mxu0 0.0
  %3140 = vmatpush2.msra.mxu0 1.0
  %3141 = vmatprep.subr.mxu0 0.0
  %3142 = vmatpush2.msra.mxu0 1.0
  %3143 = vmatprep.subr.mxu0 0.0
  %3144 = vmatpush2.msra.mxu0 1.0
  %3145 = vmatprep.subr.mxu0 0.0
  %3146 = vmatpush2.msra.mxu0 1.0
  %3147 = vmatprep.subr.mxu0 0.0
  %3148 = vmatpush2.msra.mxu0 1.0
  %3149 = vmatprep.subr.mxu0 0.0
  %3150 = vmatpush2.msra.mxu0 1.0
  %3151 = vmatprep.subr.mxu0 0.0
  %3152 = vmatpush2.msra.mxu0 1.0
  %3153 = vmatprep.subr.mxu0 0.0
  %3154 = vmatpush2.msra.mxu0 1.0
  %3155 = vmatprep.subr.mxu0 0.0
  %3156 = vmatpush2.msra.mxu0 1.0
  %3157 = vmatprep.mubr.f32.mxu0 %v3090
  %3158 = vmatmul.mubr.f32.gmra.mxu0 %v3089
  %v3159 = vpop.f32.mrf.mxu0
  %v3160 = vadd.f32 0.0, %v3159
  %v3161 = vpop.f32.mrf.mxu0
  %3162 = vdwg.mxu0
  %3163 = vmatprep.subr.mxu0 0.0
  %3164 = vmatpush1.msra.mxu0 1.0
  %3165 = vmatprep.subr.mxu0 0.0
  %3166 = vmatpush1.msra.mxu0 1.0
  %3167 = vmatprep.subr.mxu0 0.0
  %3168 = vmatpush1.msra.mxu0 1.0
  %3169 = vmatprep.subr.mxu0 0.0
  %3170 = vmatpush1.msra.mxu0 1.0
  %3171 = vmatprep.subr.mxu0 0.0
  %3172 = vmatpush1.msra.mxu0 1.0
  %3173 = vmatprep.subr.mxu0 0.0
  %3174 = vmatpush1.msra.mxu0 1.0
  %3175 = vmatprep.subr.mxu0 0.0
  %3176 = vmatpush1.msra.mxu0 1.0
  %3177 = vmatprep.subr.mxu0 0.0
  %3178 = vmatpush1.msra.mxu0 1.0
  %3179 = vmatprep.subr.mxu0 0.0
  %3180 = vmatpush1.msra.mxu0 1.0
  %3181 = vmatprep.subr.mxu0 0.0
  %3182 = vmatpush1.msra.mxu0 1.0
  %3183 = vmatprep.subr.mxu0 0.0
  %3184 = vmatpush1.msra.mxu0 1.0
  %3185 = vmatprep.subr.mxu0 0.0
  %3186 = vmatpush1.msra.mxu0 1.0
  %3187 = vmatprep.subr.mxu0 0.0
  %3188 = vmatpush1.msra.mxu0 1.0
  %3189 = vmatprep.subr.mxu0 0.0
  %3190 = vmatpush1.msra.mxu0 1.0
  %3191 = vmatprep.subr.mxu0 0.0
  %3192 = vmatpush1.msra.mxu0 1.0
  %3193 = vmatprep.subr.mxu0 0.0
  %3194 = vmatpush1.msra.mxu0 1.0
  %3195 = vmatprep.subr.mxu0 0.0
  %3196 = vmatpush2.msra.mxu0 1.0
  %3197 = vmatprep.subr.mxu0 0.0
  %3198 = vmatpush2.msra.mxu0 1.0
  %3199 = vmatprep.subr.mxu0 0.0
  %3200 = vmatpush2.msra.mxu0 1.0
  %3201 = vmatprep.subr.mxu0 0.0
  %3202 = vmatpush2.msra.mxu0 1.0
  %3203 = vmatprep.subr.mxu0 0.0
  %3204 = vmatpush2.msra.mxu0 1.0
  %3205 = vmatprep.subr.mxu0 0.0
  %3206 = vmatpush2.msra.mxu0 1.0
  %3207 = vmatprep.subr.mxu0 0.0
  %3208 = vmatpush2.msra.mxu0 1.0
  %3209 = vmatprep.subr.mxu0 0.0
  %3210 = vmatpush2.msra.mxu0 1.0
  %3211 = vmatprep.subr.mxu0 0.0
  %3212 = vmatpush2.msra.mxu0 1.0
  %3213 = vmatprep.subr.mxu0 0.0
  %3214 = vmatpush2.msra.mxu0 1.0
  %3215 = vmatprep.subr.mxu0 0.0
  %3216 = vmatpush2.msra.mxu0 1.0
  %3217 = vmatprep.subr.mxu0 0.0
  %3218 = vmatpush2.msra.mxu0 1.0
  %3219 = vmatprep.subr.mxu0 0.0
  %3220 = vmatpush2.msra.mxu0 1.0
  %3221 = vmatprep.subr.mxu0 0.0
  %3222 = vmatpush2.msra.mxu0 1.0
  %3223 = vmatprep.subr.mxu0 0.0
  %3224 = vmatpush2.msra.mxu0 1.0
  %3225 = vmatprep.subr.mxu0 0.0
  %3226 = vmatpush2.msra.mxu0 1.0
  %3227 = vmatprep.mubr.f32.mxu0 %v3092
  %3228 = vmatmul.mubr.f32.gmra.mxu0 %v3091
  %v3229 = vpop.f32.mrf.mxu0
  %v3230 = vadd.f32 %v3160, %v3229
  %v3231 = vpop.f32.mrf.mxu0
  %3232 = vdwg.mxu0
  %v3233 = vmul.f32 %v3086, 0.001953125
  %v3234 = vmul.f32 %v3230, 0.001953125
  %v3235 = vmul.f32 %v3233, %v3233
  %v3236 = vsub.f32 %v3234, %v3235
  %v3237 = vmax.f32 %v3236, 0.0
  %3239 = vset.pattern.permute.xlu0 0
  %3240 = vperm.xlu0 %3239, %v3233
  %v3241 = vpop.permute.xlu0 %3240
  %v3243 = vsub.f32 %v2874, %v3241
  %v3244 = vsub.f32 %v2876, %v3241
  %v3245 = vsub.f32 %v2945, %v3241
  %v3246 = vsub.f32 %v2947, %v3241
  %v3247 = vadd.f32 %v3237, 1e-05
  %v3248 = vrsqrt.pop %v3247
  %3250 = vset.pattern.permute.xlu0 0
  %3251 = vperm.xlu0 %3250, %v3248
  %v3252 = vpop.permute.xlu0 %3251
  %v3254 = vmul.f32 %v3243, %v3252
  %v3255 = vmul.f32 %v3244, %v3252
  %v3256 = vmul.f32 %v3245, %v3252
  %v3257 = vmul.f32 %v3246, %v3252
  %v3258 = vmul.f32 %v3254, %v2149
  %v3259 = vmul.f32 %v3255, %v2149
  %v3260 = vmul.f32 %v3256, %v2149
  %v3261 = vmul.f32 %v3257, %v2149
  %v3262 = vadd.f32 %v3258, %v2158
  %v3263 = vadd.f32 %v3259, %v2158
  %v3264 = vadd.f32 %v3260, %v2158
  %v3265 = vadd.f32 %v3261, %v2158
  %v3266 = vadd.f32 %v2244, %v3262
  %v3267 = vadd.f32 %v2245, %v3263
  %v3268 = vadd.f32 %v2246, %v3264
  %v3269 = vadd.f32 %v2247, %v3265
  %vm3270 = vcmp.ge.f32.partialorder %v3266, 0.0
  %vm3271 = vcmp.ge.f32.partialorder %v3267, 0.0
  %vm3272 = vcmp.ge.f32.partialorder %v3268, 0.0
  %vm3273 = vcmp.ge.f32.partialorder %v3269, 0.0
  %v3274 = vmul.f32 %v3266, 0.01
  %v3275 = vmul.f32 %v3267, 0.01
  %v3276 = vmul.f32 %v3268, 0.01
  %v3277 = vmul.f32 %v3269, 0.01
  %v3278 = vsel %vm3270, %v3266, %v3274
  %v3279 = vsel %vm3271, %v3267, %v3275
  %v3280 = vsel %vm3272, %v3268, %v3276
  %v3281 = vsel %vm3273, %v3269, %v3277
  %v3282 = vrot.slane %v3278, 4
  %v3283 = vmax.f32 %v3278, %v3282
  %v3284 = vrot.slane %v3283, 2
  %v3285 = vmax.f32 %v3283, %v3284
  %v3286 = vrot.slane %v3285, 1
  %v3287 = vmax.f32 %v3285, %v3286
  %v3288 = vrot.slane %v3279, 4
  %v3289 = vmax.f32 %v3279, %v3288
  %v3290 = vrot.slane %v3289, 2
  %v3291 = vmax.f32 %v3289, %v3290
  %v3292 = vrot.slane %v3291, 1
  %v3293 = vmax.f32 %v3291, %v3292
  %v3294 = vrot.slane %v3280, 4
  %v3295 = vmax.f32 %v3280, %v3294
  %v3296 = vrot.slane %v3295, 2
  %v3297 = vmax.f32 %v3295, %v3296
  %v3298 = vrot.slane %v3297, 1
  %v3299 = vmax.f32 %v3297, %v3298
  %v3300 = vrot.slane %v3281, 4
  %v3301 = vmax.f32 %v3281, %v3300
  %v3302 = vrot.slane %v3301, 2
  %v3303 = vmax.f32 %v3301, %v3302
  %v3304 = vrot.slane %v3303, 1
  %v3305 = vmax.f32 %v3303, %v3304
  %v3306 = vsub.f32 %v3278, %v3287
  %v3307 = vsub.f32 %v3279, %v3293
  %v3308 = vsub.f32 %v3280, %v3299
  %v3309 = vsub.f32 %v3281, %v3305
  %v3310 = vmul.f32 %v3306, 1.442695
  %v3311 = vpow.pop %v3310
  %v3312 = vmul.f32 %v3307, 1.442695
  %v3313 = vpow.pop %v3312
  %v3314 = vmul.f32 %v3308, 1.442695
  %v3315 = vpow.pop %v3314
  %v3316 = vmul.f32 %v3309, 1.442695
  %v3317 = vpow.pop %v3316
  %v3318 = vrot.slane %v3311, 4
  %v3319 = vadd.f32 %v3311, %v3318
  %v3320 = vrot.slane %v3319, 2
  %v3321 = vadd.f32 %v3319, %v3320
  %v3322 = vrot.slane %v3321, 1
  %v3323 = vadd.f32 %v3321, %v3322
  %v3324 = vrot.slane %v3313, 4
  %v3325 = vadd.f32 %v3313, %v3324
  %v3326 = vrot.slane %v3325, 2
  %v3327 = vadd.f32 %v3325, %v3326
  %v3328 = vrot.slane %v3327, 1
  %v3329 = vadd.f32 %v3327, %v3328
  %v3330 = vrot.slane %v3315, 4
  %v3331 = vadd.f32 %v3315, %v3330
  %v3332 = vrot.slane %v3331, 2
  %v3333 = vadd.f32 %v3331, %v3332
  %v3334 = vrot.slane %v3333, 1
  %v3335 = vadd.f32 %v3333, %v3334
  %v3336 = vrot.slane %v3317, 4
  %v3337 = vadd.f32 %v3317, %v3336
  %v3338 = vrot.slane %v3337, 2
  %v3339 = vadd.f32 %v3337, %v3338
  %v3340 = vrot.slane %v3339, 1
  %v3341 = vadd.f32 %v3339, %v3340
  %v3342 = vrcp.pop %v3323
  %v3343 = vrcp.pop %v3329
  %v3344 = vrcp.pop %v3335
  %v3345 = vrcp.pop %v3341
  %v3346 = vmul.f32 %v3311, %v3342
  %v3347 = vmul.f32 %v3313, %v3343
  %v3348 = vmul.f32 %v3315, %v3344
  %v3349 = vmul.f32 %v3317, %v3345
  %v3350 = vpack.c.bf16 %v3346, %v3346
  %v3351 = vpack.c.bf16 %v3347, %v3347
  %v3352 = vpack.c.bf16 %v3348, %v3348
  %v3353 = vpack.c.bf16 %v3349, %v3349
  %v3358 = vunpack.c.l.b16 %v3350
  %v3359 = vunpack.c.l.b16 %v3351
  %v3360 = vunpack.c.l.b16 %v3352
  %v3361 = vunpack.c.l.b16 %v3353
  %v3362 = vpack.c.b16 %v3359, %v3358
  %v3363 = vpack.c.b16 %v3361, %v3360
  %3366 = vst [vmem:[%s16] sm:$0xff] %v3362
  %3367 = vst [vmem:[%s16 + $0x8] sm:$0xff] %v3363
  // Predicated region
  $region66: #{automata_block_up.4} parent=0 // pred_check
    _
  $region67: #{automata_block_up.4} parent=0 // pred_check_branch
    %3369 = sbr.rel (0) target = $region69
  $region68: #{automata_block_up.4} parent=0 // pred_region
    _
  $region69: #{automata_block_up.4} parent=0 // pred_fallthru
    _
  // Predicated region
  $region70: #{automata_block_up.4} parent=0 // pred_check
    _
  $region71: #{automata_block_up.4} parent=0 // pred_check_branch
    %3371 = sbr.rel (0) target = $region73
  $region72: #{automata_block_up.4} parent=0 // pred_region
    _
  $region73: #{automata_block_up.4} parent=0 // pred_fallthru
    _

</llo_original>
